<compile_context>
chip_gen: v7x
topology: tpu7x:2x2x1
jax: 0.10.0
libtpu: 0.0.40
codegen_flags: <defaults>
</compile_context>

<pallas_src>
import functools

import jax
import jax.numpy as jnp
from jax.experimental import pallas as pl
from jax.experimental.pallas import tpu as pltpu

DIM = 256
HEADS = 8
DIM_HEAD = DIM // HEADS
N_BOTTLENECKS = 2
BRANCH_NUM = 4
CLS_PAD = 128          # cls head padded to a full lane tile

# ----- packed row-slab (f32 [N_ROWS, DIM]) indices --------------------------
R_TF_NW, R_TF_BO = 0, 1
R_A2_NW, R_A2_NB, R_A2_BO = 2, 3, 4
R_A1_NW, R_A1_NB, R_A1_BO = 5, 6, 7
R_AF_N1, R_AF_N2, R_AF_B1, R_AF_B2 = 8, 9, 10, 11
R_RT_B1, R_RT_N1, R_RT_B2, R_RT_N2 = 12, 13, 14, 15
R_RT_CB = 16
R_BN0 = 17                       # bottleneck tokens occupy rows 17, 18
R_TF_OM, R_A2_OM, R_A1_OM = 19, 20, 21
N_ROWS = 24                      # padded to a sublane-tile multiple

# ----- packed weight slab A (bf16 [DIM, N_COLS_A]) : routing + TransFusion --
CA_FC1, CA_FC2, CA_CLS = 0, 256, 512
CA_TF_QKV, CA_TF_WO = 640, 1408
N_COLS_A = 1664

# ----- packed weight slab B (bf16 [DIM, N_COLS_B]) : bottleneck + AddFusion -
CB_A2_QKV, CB_A2_WO = 0, 768
CB_A1_QKV, CB_A1_WO = 1024, 1792
CB_SNN1, CB_SNN2 = 2048, 2304
N_COLS_B = 2560


# --------------------------- in-kernel helpers ------------------------------

def _mm_w(a, w_bf16):
    """f32 activation @ bf16 weight on the MXU bf16 path, f32 accumulation."""
    return jnp.dot(a.astype(jnp.bfloat16), w_bf16,
                   preferred_element_type=jnp.float32)


def _mm_f(a, b):  # f32 activation x activation
    return jnp.dot(a, b, preferred_element_type=jnp.float32)


def _mm_ft(a, b):  # a @ b.T (contract last dims), f32
    return jax.lax.dot_general(a, b, (((1,), (1,)), ((), ())),
                               preferred_element_type=jnp.float32)


def _rmsnorm(x, w, eps=1e-6):
    ms = jnp.mean(x * x, axis=-1, keepdims=True)
    return x * jax.lax.rsqrt(ms + eps) * w


def _layernorm(x, w, b, eps=1e-5):  # nn.LayerNorm defaults
    mu = jnp.mean(x, axis=-1, keepdims=True)
    xc = x - mu
    var = jnp.mean(xc * xc, axis=-1, keepdims=True)
    return xc * jax.lax.rsqrt(var + eps) * w + b


def _gelu(x):  # exact (erf) GELU == nn.GELU()
    return 0.5 * x * (1.0 + jax.lax.erf(x * 0.7071067811865475))


def _elu(x):  # alpha=1 ELU (SNN_Block activation)
    # TODO(synk): torch ELU uses expm1; exp(x)-1 keeps the Mosaic lowering on
    # well-trodden primitives (drift vs expm1 is ~1e-7 near 0).
    return jnp.where(x > 0, x, jnp.exp(x) - 1.0)


def _attention(n, wqkv, wo, bo):
    """Softmax MHA on a [S, D] slab.

    Heads are split by static lane slices of the fused qkv result; the 8
    per-head p@v results stay in their natural 32-lane slots, are lane-
    concatenated, and hit the output projection with a single K=256 matmul.
    The 1/sqrt(dim_head) scale is pre-folded into the Q columns of wqkv.
    """
    qkv = _mm_w(n, wqkv)                                  # [S, 3*D] f32
    heads = []
    for h in range(HEADS):
        lo = h * DIM_HEAD
        q = qkv[:, lo:lo + DIM_HEAD]
        k = qkv[:, DIM + lo:DIM + lo + DIM_HEAD]
        v = qkv[:, 2 * DIM + lo:2 * DIM + lo + DIM_HEAD]
        s = _mm_ft(q, k)                                  # [S, S]
        m = jnp.max(s, axis=-1, keepdims=True)
        p = jnp.exp(s - m)
        p = p / jnp.sum(p, axis=-1, keepdims=True)        # exact division
        heads.append(_mm_f(p, v))                         # [S, DIM_HEAD]
    merged = jnp.concatenate(heads, axis=-1)              # [S, D]
    return _mm_w(merged, wo) + bo


def _trans_layer(x, norm_kind, nw, nb, wqkv, wo, bo, omega_row):
    # TODO(synk): NystromAttention internals (landmark pooling, Moore-Penrose
    # pinv iterations, depthwise residual conv, dropout) are an external
    # package; replaced by exact softmax MHA with the same qkv/out shapes.
    # TODO(synk): admin_torch.as_module(8) residual modeled as x*omega + f(x)
    # with omega deterministically initialized to 1.
    n = _rmsnorm(x, nw) if norm_kind == "rms" else _layernorm(x, nw, nb)
    return x * omega_row + _attention(n, wqkv, wo, bo)


# ------------------------------ fused kernel --------------------------------

def _mome_kernel(x_ref, rows_ref, wa_ref, wb_hbm_ref,       # inputs
                 out_ref, logits_ref,                        # outputs
                 wb_ref, dma_sem,                            # scratch
                 *, s1, s2):
    # Kick off the HBM->VMEM DMA of the late-use weights (bottleneck attn1/2 +
    # AddFusion); it overlaps with routing + TransFusion compute below.
    wb_copy = pltpu.make_async_copy(wb_hbm_ref, wb_ref, dma_sem)
    wb_copy.start()

    def row(i):
        return rows_ref[i:i + 1, :]                       # [1, D] f32

    xt = x_ref[...]                                       # [s1+s2, D] f32
    x1 = xt[:s1]
    x2 = xt[s1:]

    # ---- RoutingNetwork (soft path: logits returned but do not gate) -------
    h1 = _gelu(_rmsnorm(_mm_w(x1, wa_ref[:, CA_FC1:CA_FC1 + DIM]) + row(R_RT_B1),
                        row(R_RT_N1)))
    h2 = _gelu(_rmsnorm(_mm_w(x2, wa_ref[:, CA_FC2:CA_FC2 + DIM]) + row(R_RT_B2),
                        row(R_RT_N2)))
    pooled = (jnp.mean(h1, axis=0, keepdims=True)
              + jnp.mean(h2, axis=0, keepdims=True))      # [1, D]
    # cls weight is zero-padded to 128 lanes; bias lanes >= BRANCH_NUM hold
    # -1e30 so the padded lanes softmax to exactly 0.
    logits = (_mm_w(pooled, wa_ref[:, CA_CLS:CA_CLS + CLS_PAD])
              + rows_ref[R_RT_CB:R_RT_CB + 1, 0:CLS_PAD])  # [1, 128]
    # DiffSoftmax, soft path.  NOTE: MoME.forward passes `hard` (bool) as temp,
    # i.e. tau=0.0 (div-by-zero) — and the soft branch never consumes the
    # logits; we use tau=1.0 for a finite, meaningful value.
    mx = jnp.max(logits, axis=-1, keepdims=True)
    e = jnp.exp(logits - mx)
    probs = e / jnp.sum(e, axis=-1, keepdims=True)
    logits_ref[...] = jnp.broadcast_to(probs, (8, CLS_PAD)).astype(logits_ref.dtype)

    # ---- branch 0: TransFusion (x_ref already holds cat([x1, x2])) ---------
    tf = _trans_layer(xt, "rms", row(R_TF_NW), None,
                      wa_ref[:, CA_TF_QKV:CA_TF_QKV + 3 * DIM],
                      wa_ref[:, CA_TF_WO:CA_TF_WO + DIM],
                      row(R_TF_BO), row(R_TF_OM))[:s1]

    # ---- weights for branches 1 & 2 must be resident from here on ----------
    wb_copy.wait()

    # ---- branch 1: BottleneckTransFusion (B == 1, as in the reference) -----
    # Reference concatenates [bottleneck; x2].  Per-row norms/residual and
    # softmax attention are permutation-equivariant over the sequence, so we
    # concatenate [x2; bottleneck] instead to keep every sublane concat/slice
    # offset 8-aligned, and read the bottleneck rows from the tail.
    zin = jnp.concatenate(
        [x2, rows_ref[R_BN0:R_BN0 + N_BOTTLENECKS, :]], axis=0)
    z = _trans_layer(zin, "ln", row(R_A2_NW), row(R_A2_NB),
                     wb_ref[:, CB_A2_QKV:CB_A2_QKV + 3 * DIM],
                     wb_ref[:, CB_A2_WO:CB_A2_WO + DIM],
                     row(R_A2_BO), row(R_A2_OM))[s2:s2 + N_BOTTLENECKS]
    xb = jnp.concatenate([x1, z], axis=0)                 # [s1+nb, D]
    bn = _trans_layer(xb, "ln", row(R_A1_NW), row(R_A1_NB),
                      wb_ref[:, CB_A1_QKV:CB_A1_QKV + 3 * DIM],
                      wb_ref[:, CB_A1_WO:CB_A1_WO + DIM],
                      row(R_A1_BO), row(R_A1_OM))[:s1]

    # ---- branch 2: AddFusion (SNN_Block == Linear + ELU) --------------------
    # TODO(synk): SNN_Block is not defined in the reference source; modeled as
    # Linear + ELU (dropout omitted for inference).
    y1 = _elu(_mm_w(_rmsnorm(x1, row(R_AF_N1)),
                    wb_ref[:, CB_SNN1:CB_SNN1 + DIM]) + row(R_AF_B1))
    y2 = _elu(_mm_w(_rmsnorm(x2, row(R_AF_N2)),
                    wb_ref[:, CB_SNN2:CB_SNN2 + DIM]) + row(R_AF_B2))
    add = y1 + jnp.mean(y2, axis=0, keepdims=True)

    # ---- branch 3: DropX2Fusion == x1; soft routing sums all branches -------
    out_ref[...] = (tf + bn + add + x1).astype(out_ref.dtype)


# ------------------------------- wrapper ------------------------------------

def mome_forward(packed, x1, x2):
    b, s1, d = x1.shape
    _, s2, _ = x2.shape
    assert b == 1 and d == DIM       # batch 1 implied by the reference forward
    assert s1 % 8 == 0 and s2 % 8 == 0

    # Branch 0's concat is built once here; the kernel takes 8-aligned views.
    x = jnp.concatenate([x1[0], x2[0]], axis=0)           # [s1+s2, D]

    vmem = pl.BlockSpec(memory_space=pltpu.MemorySpace.VMEM)
    kernel = functools.partial(_mome_kernel, s1=s1, s2=s2)

    out2d, probs = pl.pallas_call(
        kernel,
        out_shape=(jax.ShapeDtypeStruct((s1, d), x1.dtype),
                   jax.ShapeDtypeStruct((8, CLS_PAD), jnp.float32)),
        in_specs=[vmem,                                   # activations
                  vmem,                                   # row-vector params
                  vmem,                                   # weights A (routing + TF)
                  pl.BlockSpec(memory_space=pl.ANY)],     # weights B (HBM, manual DMA)
        out_specs=(vmem, vmem),
        scratch_shapes=[pltpu.VMEM((DIM, N_COLS_B), jnp.bfloat16),
                        pltpu.SemaphoreType.DMA(())],
    )(x, packed["rows"], packed["w_a"], packed["w_b"])

    return out2d.reshape(b, s1, d), probs[0:1, :BRANCH_NUM]


# ------------------------------- parameters ---------------------------------

def init_params(key):
    keys = iter(jax.random.split(key, 32))

    def w(din, dout):
        return jax.random.normal(next(keys), (din, dout), jnp.float32) * 0.02

    def trans_layer_params(norm):
        p = {"norm_w": jnp.ones((DIM,), jnp.float32),
             "wqkv": w(DIM, 3 * DIM),
             "wo": w(DIM, DIM),
             "bo": jnp.zeros((DIM,), jnp.float32),
             "omega": jnp.array(1.0, jnp.float32)}
        if norm == "ln":
            p["norm_b"] = jnp.zeros((DIM,), jnp.float32)
        return p

    return {
        "trans_fusion": trans_layer_params("rms"),
        "bottleneck": {
            "bottleneck": jax.random.uniform(next(keys), (1, N_BOTTLENECKS, DIM),
                                             jnp.float32),
            "attn1": trans_layer_params("ln"),
            "attn2": trans_layer_params("ln"),
        },
        "add_fusion": {
            "norm1_w": jnp.ones((DIM,), jnp.float32),
            "norm2_w": jnp.ones((DIM,), jnp.float32),
            "snn1_w": w(DIM, DIM), "snn1_b": jnp.zeros((DIM,), jnp.float32),
            "snn2_w": w(DIM, DIM), "snn2_b": jnp.zeros((DIM,), jnp.float32),
        },
        "routing": {
            "fc1_w": w(DIM, DIM), "fc1_b": jnp.zeros((DIM,), jnp.float32),
            "fc1_norm_w": jnp.ones((DIM,), jnp.float32),
            "fc2_w": w(DIM, DIM), "fc2_b": jnp.zeros((DIM,), jnp.float32),
            "fc2_norm_w": jnp.ones((DIM,), jnp.float32),
            "cls_w": w(DIM, BRANCH_NUM),
            "cls_b": jnp.zeros((BRANCH_NUM,), jnp.float32),
        },
    }


def pack_params(params):
    """One-time repack of per-module params into the kernel's fused slabs."""
    tf = params["trans_fusion"]
    bn = params["bottleneck"]
    af = params["add_fusion"]
    rt = params["routing"]
    scale = DIM_HEAD ** -0.5

    def qkv_scaled(wqkv):   # fold the 1/sqrt(dim_head) attention scale into Q
        return jnp.concatenate([wqkv[:, :DIM] * scale, wqkv[:, DIM:]], axis=1)

    full = lambda v: jnp.full((DIM,), v, jnp.float32)
    row_vals = {
        R_TF_NW: tf["norm_w"], R_TF_BO: tf["bo"],
        R_A2_NW: bn["attn2"]["norm_w"], R_A2_NB: bn["attn2"]["norm_b"],
        R_A2_BO: bn["attn2"]["bo"],
        R_A1_NW: bn["attn1"]["norm_w"], R_A1_NB: bn["attn1"]["norm_b"],
        R_A1_BO: bn["attn1"]["bo"],
        R_AF_N1: af["norm1_w"], R_AF_N2: af["norm2_w"],
        R_AF_B1: af["snn1_b"], R_AF_B2: af["snn2_b"],
        R_RT_B1: rt["fc1_b"], R_RT_N1: rt["fc1_norm_w"],
        R_RT_B2: rt["fc2_b"], R_RT_N2: rt["fc2_norm_w"],
        # lanes >= BRANCH_NUM biased to -1e30 so padded cls lanes softmax to 0
        R_RT_CB: jnp.full((DIM,), -1e30, jnp.float32).at[:BRANCH_NUM].set(rt["cls_b"]),
        R_BN0: bn["bottleneck"][0, 0], R_BN0 + 1: bn["bottleneck"][0, 1],
        R_TF_OM: full(tf["omega"]),
        R_A2_OM: full(bn["attn2"]["omega"]),
        R_A1_OM: full(bn["attn1"]["omega"]),
    }
    rows = jnp.zeros((N_ROWS, DIM), jnp.float32)
    for i, v in row_vals.items():
        rows = rows.at[i].set(v)

    cls_pad = jnp.zeros((DIM, CLS_PAD), jnp.float32).at[:, :BRANCH_NUM].set(rt["cls_w"])
    w_a = jnp.concatenate(
        [rt["fc1_w"], rt["fc2_w"], cls_pad,
         qkv_scaled(tf["wqkv"]), tf["wo"]], axis=1).astype(jnp.bfloat16)
    w_b = jnp.concatenate(
        [qkv_scaled(bn["attn2"]["wqkv"]), bn["attn2"]["wo"],
         qkv_scaled(bn["attn1"]["wqkv"]), bn["attn1"]["wo"],
         af["snn1_w"], af["snn2_w"]], axis=1).astype(jnp.bfloat16)
    assert w_a.shape == (DIM, N_COLS_A) and w_b.shape == (DIM, N_COLS_B)

    return {"rows": rows, "w_a": w_a, "w_b": w_b}


if __name__ == "__main__":
    key = jax.random.PRNGKey(0)
    kp, kx1, kx2 = jax.random.split(key, 3)
    params = init_params(kp)
    packed = pack_params(params)              # one-time host-side repack

    B, S1, S2 = 1, 8, 8   # batch=1 is implied by the reference forward pass
    x1 = jax.random.normal(kx1, (B, S1, DIM), jnp.float32)
    x2 = jax.random.normal(kx2, (B, S2, DIM), jnp.float32)

    out, logits = jax.jit(mome_forward)(packed, x1, x2)
    jax.block_until_ready((out, logits))

    assert out.shape == (B, S1, DIM)
    assert logits.shape == (B, BRANCH_NUM)
    assert bool(jnp.all(jnp.isfinite(out)))
    assert bool(jnp.all(jnp.isfinite(logits)))
    print("KERNEL_OK")
</pallas_src>

<mosaic_0001>
module attributes {stable_mosaic.version = 11 : i64} {
  func.func @_mome_kernel(%arg0: memref<16x256xf32, #tpu.memory_space<vmem>>, %arg1: memref<24x256xf32, #tpu.memory_space<vmem>>, %arg2: memref<256x1664xbf16, #tpu.memory_space<vmem>>, %arg3: memref<256x2560xbf16, #tpu.memory_space<any>>, %arg4: memref<8x256xf32, #tpu.memory_space<vmem>>, %arg5: memref<8x128xf32, #tpu.memory_space<vmem>>, %arg6: memref<256x2560xbf16, #tpu.memory_space<vmem>>, %arg7: memref<!tpu.dma_semaphore, #tpu.memory_space<semaphore_mem>>) attributes {dimension_semantics = [], scalar_prefetch = 0 : i64, scratch_operands = 2 : i64, tpu.core_type = #tpu.core_type<tc>} {
    tpu.enqueue_dma source(%arg3 : memref<256x2560xbf16, #tpu.memory_space<any>>) target(%arg6 : memref<256x2560xbf16, #tpu.memory_space<vmem>>) target_semaphore(%arg7 : memref<!tpu.dma_semaphore, #tpu.memory_space<semaphore_mem>>)
    %c0 = arith.constant 0 : index
    %c0_0 = arith.constant 0 : index
    %0 = vector.load %arg0[%c0, %c0_0] : memref<16x256xf32, #tpu.memory_space<vmem>>, vector<16x256xf32>
    %1 = vector.extract_strided_slice %0 {offsets = [0, 0], sizes = [8, 256], strides = [1, 1]} : vector<16x256xf32> to vector<8x256xf32>
    %2 = vector.extract_strided_slice %0 {offsets = [8, 0], sizes = [8, 256], strides = [1, 1]} : vector<16x256xf32> to vector<8x256xf32>
    %c0_1 = arith.constant 0 : index
    %c0_2 = arith.constant 0 : index
    %3 = vector.load %arg2[%c0_1, %c0_2] : memref<256x1664xbf16, #tpu.memory_space<vmem>>, vector<256x256xbf16>
    %4 = arith.truncf %1 : vector<8x256xf32> to vector<8x256xbf16>
    %cst = arith.constant dense<0.000000e+00> : vector<8x256xf32>
    %5 = tpu.matmul %4, %3, %cst {dimension_numbers = #tpu.dot_dimension_numbers<[1], [0], [0], [1], [0, 0, 1, 1], [], []>} : vector<8x256xbf16>, vector<256x256xbf16>, vector<8x256xf32> -> vector<8x256xf32>
    %c12 = arith.constant 12 : index
    %c0_3 = arith.constant 0 : index
    %6 = vector.load %arg1[%c12, %c0_3] : memref<24x256xf32, #tpu.memory_space<vmem>>, vector<1x256xf32>
    %7 = vector.broadcast %6 : vector<1x256xf32> to vector<8x256xf32>
    %8 = arith.addf %5, %7 : vector<8x256xf32>
    %c13 = arith.constant 13 : index
    %c0_4 = arith.constant 0 : index
    %9 = vector.load %arg1[%c13, %c0_4] : memref<24x256xf32, #tpu.memory_space<vmem>>, vector<1x256xf32>
    %10 = arith.mulf %8, %8 : vector<8x256xf32>
    %cst_5 = arith.constant dense<0.000000e+00> : vector<8xf32>
    %11 = vector.multi_reduction <add>, %10, %cst_5 [1] : vector<8x256xf32> to vector<8xf32>
    %12 = vector.shape_cast %11 : vector<8xf32> to vector<8x1xf32>
    %cst_6 = arith.constant 2.560000e+02 : f32
    %13 = vector.broadcast %cst_6 : f32 to vector<8x1xf32>
    %14 = arith.divf %12, %13 : vector<8x1xf32>
    %cst_7 = arith.constant 9.99999997E-7 : f32
    %15 = vector.broadcast %cst_7 : f32 to vector<8x1xf32>
    %16 = arith.addf %14, %15 : vector<8x1xf32>
    %17 = math.rsqrt %16 : vector<8x1xf32>
    %18 = vector.broadcast %17 : vector<8x1xf32> to vector<8x256xf32>
    %19 = arith.mulf %8, %18 : vector<8x256xf32>
    %20 = vector.broadcast %9 : vector<1x256xf32> to vector<8x256xf32>
    %21 = arith.mulf %19, %20 : vector<8x256xf32>
    %cst_8 = arith.constant 5.000000e-01 : f32
    %22 = vector.broadcast %cst_8 : f32 to vector<8x256xf32>
    %23 = arith.mulf %22, %21 : vector<8x256xf32>
    %cst_9 = arith.constant 0.707106769 : f32
    %24 = vector.broadcast %cst_9 : f32 to vector<8x256xf32>
    %25 = arith.mulf %21, %24 : vector<8x256xf32>
    %26 = math.erf %25 : vector<8x256xf32>
    %cst_10 = arith.constant 1.000000e+00 : f32
    %27 = vector.broadcast %cst_10 : f32 to vector<8x256xf32>
    %28 = arith.addf %27, %26 : vector<8x256xf32>
    %29 = arith.mulf %23, %28 : vector<8x256xf32>
    %c0_11 = arith.constant 0 : index
    %c256 = arith.constant 256 : index
    %30 = vector.load %arg2[%c0_11, %c256] : memref<256x1664xbf16, #tpu.memory_space<vmem>>, vector<256x256xbf16>
    %31 = arith.truncf %2 : vector<8x256xf32> to vector<8x256xbf16>
    %cst_12 = arith.constant dense<0.000000e+00> : vector<8x256xf32>
    %32 = tpu.matmul %31, %30, %cst_12 {dimension_numbers = #tpu.dot_dimension_numbers<[1], [0], [0], [1], [0, 0, 1, 1], [], []>} : vector<8x256xbf16>, vector<256x256xbf16>, vector<8x256xf32> -> vector<8x256xf32>
    %c14 = arith.constant 14 : index
    %c0_13 = arith.constant 0 : index
    %33 = vector.load %arg1[%c14, %c0_13] : memref<24x256xf32, #tpu.memory_space<vmem>>, vector<1x256xf32>
    %34 = vector.broadcast %33 : vector<1x256xf32> to vector<8x256xf32>
    %35 = arith.addf %32, %34 : vector<8x256xf32>
    %c15 = arith.constant 15 : index
    %c0_14 = arith.constant 0 : index
    %36 = vector.load %arg1[%c15, %c0_14] : memref<24x256xf32, #tpu.memory_space<vmem>>, vector<1x256xf32>
    %37 = arith.mulf %35, %35 : vector<8x256xf32>
    %cst_15 = arith.constant dense<0.000000e+00> : vector<8xf32>
    %38 = vector.multi_reduction <add>, %37, %cst_15 [1] : vector<8x256xf32> to vector<8xf32>
    %39 = vector.shape_cast %38 : vector<8xf32> to vector<8x1xf32>
    %cst_16 = arith.constant 2.560000e+02 : f32
    %40 = vector.broadcast %cst_16 : f32 to vector<8x1xf32>
    %41 = arith.divf %39, %40 : vector<8x1xf32>
    %cst_17 = arith.constant 9.99999997E-7 : f32
    %42 = vector.broadcast %cst_17 : f32 to vector<8x1xf32>
    %43 = arith.addf %41, %42 : vector<8x1xf32>
    %44 = math.rsqrt %43 : vector<8x1xf32>
    %45 = vector.broadcast %44 : vector<8x1xf32> to vector<8x256xf32>
    %46 = arith.mulf %35, %45 : vector<8x256xf32>
    %47 = vector.broadcast %36 : vector<1x256xf32> to vector<8x256xf32>
    %48 = arith.mulf %46, %47 : vector<8x256xf32>
    %cst_18 = arith.constant 5.000000e-01 : f32
    %49 = vector.broadcast %cst_18 : f32 to vector<8x256xf32>
    %50 = arith.mulf %49, %48 : vector<8x256xf32>
    %cst_19 = arith.constant 0.707106769 : f32
    %51 = vector.broadcast %cst_19 : f32 to vector<8x256xf32>
    %52 = arith.mulf %48, %51 : vector<8x256xf32>
    %53 = math.erf %52 : vector<8x256xf32>
    %cst_20 = arith.constant 1.000000e+00 : f32
    %54 = vector.broadcast %cst_20 : f32 to vector<8x256xf32>
    %55 = arith.addf %54, %53 : vector<8x256xf32>
    %56 = arith.mulf %50, %55 : vector<8x256xf32>
    %cst_21 = arith.constant dense<0.000000e+00> : vector<256xf32>
    %57 = vector.multi_reduction <add>, %29, %cst_21 [0] : vector<8x256xf32> to vector<256xf32>
    %58 = vector.shape_cast %57 : vector<256xf32> to vector<1x256xf32>
    %cst_22 = arith.constant 8.000000e+00 : f32
    %59 = vector.broadcast %cst_22 : f32 to vector<1x256xf32>
    %60 = arith.divf %58, %59 : vector<1x256xf32>
    %cst_23 = arith.constant dense<0.000000e+00> : vector<256xf32>
    %61 = vector.multi_reduction <add>, %56, %cst_23 [0] : vector<8x256xf32> to vector<256xf32>
    %62 = vector.shape_cast %61 : vector<256xf32> to vector<1x256xf32>
    %cst_24 = arith.constant 8.000000e+00 : f32
    %63 = vector.broadcast %cst_24 : f32 to vector<1x256xf32>
    %64 = arith.divf %62, %63 : vector<1x256xf32>
    %65 = arith.addf %60, %64 : vector<1x256xf32>
    %c0_25 = arith.constant 0 : index
    %c512 = arith.constant 512 : index
    %66 = vector.load %arg2[%c0_25, %c512] : memref<256x1664xbf16, #tpu.memory_space<vmem>>, vector<256x128xbf16>
    %67 = arith.truncf %65 : vector<1x256xf32> to vector<1x256xbf16>
    %cst_26 = arith.constant dense<0.000000e+00> : vector<1x128xf32>
    %68 = tpu.matmul %67, %66, %cst_26 {dimension_numbers = #tpu.dot_dimension_numbers<[1], [0], [0], [1], [0, 0, 1, 1], [], []>} : vector<1x256xbf16>, vector<256x128xbf16>, vector<1x128xf32> -> vector<1x128xf32>
    %c16 = arith.constant 16 : index
    %c0_27 = arith.constant 0 : index
    %69 = vector.load %arg1[%c16, %c0_27] : memref<24x256xf32, #tpu.memory_space<vmem>>, vector<1x128xf32>
    %70 = arith.addf %68, %69 : vector<1x128xf32>
    %cst_28 = arith.constant dense<0xFF800000> : vector<1xf32>
    %71 = vector.multi_reduction <maximumf>, %70, %cst_28 [1] : vector<1x128xf32> to vector<1xf32>
    %72 = vector.shape_cast %71 : vector<1xf32> to vector<1x1xf32>
    %73 = vector.broadcast %72 : vector<1x1xf32> to vector<1x128xf32>
    %74 = arith.subf %70, %73 : vector<1x128xf32>
    %75 = math.exp %74 : vector<1x128xf32>
    %cst_29 = arith.constant dense<0.000000e+00> : vector<1xf32>
    %76 = vector.multi_reduction <add>, %75, %cst_29 [1] : vector<1x128xf32> to vector<1xf32>
    %77 = vector.shape_cast %76 : vector<1xf32> to vector<1x1xf32>
    %78 = vector.broadcast %77 : vector<1x1xf32> to vector<1x128xf32>
    %79 = arith.divf %75, %78 : vector<1x128xf32>
    %80 = vector.shape_cast %79 : vector<1x128xf32> to vector<1x128xf32>
    %81 = vector.broadcast %80 : vector<1x128xf32> to vector<8x128xf32>
    %c0_30 = arith.constant 0 : index
    %c0_31 = arith.constant 0 : index
    %82 = vector.load %arg5[%c0_30, %c0_31] : memref<8x128xf32, #tpu.memory_space<vmem>>, vector<8x128xf32>
    tpu.vector_store %arg5[%c0_30, %c0_31], %81 {strides = array<i32>} : memref<8x128xf32, #tpu.memory_space<vmem>>, vector<8x128xf32>,
    %c0_32 = arith.constant 0 : index
    %c0_33 = arith.constant 0 : index
    %83 = vector.load %arg1[%c0_32, %c0_33] : memref<24x256xf32, #tpu.memory_space<vmem>>, vector<1x256xf32>
    %c0_34 = arith.constant 0 : index
    %c640 = arith.constant 640 : index
    %84 = vector.load %arg2[%c0_34, %c640] : memref<256x1664xbf16, #tpu.memory_space<vmem>>, vector<256x768xbf16>
    %c0_35 = arith.constant 0 : index
    %c1408 = arith.constant 1408 : index
    %85 = vector.load %arg2[%c0_35, %c1408] : memref<256x1664xbf16, #tpu.memory_space<vmem>>, vector<256x256xbf16>
    %c1 = arith.constant 1 : index
    %c0_36 = arith.constant 0 : index
    %86 = vector.load %arg1[%c1, %c0_36] : memref<24x256xf32, #tpu.memory_space<vmem>>, vector<1x256xf32>
    %c19 = arith.constant 19 : index
    %c0_37 = arith.constant 0 : index
    %87 = vector.load %arg1[%c19, %c0_37] : memref<24x256xf32, #tpu.memory_space<vmem>>, vector<1x256xf32>
    %88 = arith.mulf %0, %0 : vector<16x256xf32>
    %cst_38 = arith.constant dense<0.000000e+00> : vector<16xf32>
    %89 = vector.multi_reduction <add>, %88, %cst_38 [1] : vector<16x256xf32> to vector<16xf32>
    %90 = vector.shape_cast %89 : vector<16xf32> to vector<16x1xf32>
    %cst_39 = arith.constant 2.560000e+02 : f32
    %91 = vector.broadcast %cst_39 : f32 to vector<16x1xf32>
    %92 = arith.divf %90, %91 : vector<16x1xf32>
    %cst_40 = arith.constant 9.99999997E-7 : f32
    %93 = vector.broadcast %cst_40 : f32 to vector<16x1xf32>
    %94 = arith.addf %92, %93 : vector<16x1xf32>
    %95 = math.rsqrt %94 : vector<16x1xf32>
    %96 = vector.broadcast %95 : vector<16x1xf32> to vector<16x256xf32>
    %97 = arith.mulf %0, %96 : vector<16x256xf32>
    %98 = vector.broadcast %83 : vector<1x256xf32> to vector<16x256xf32>
    %99 = arith.mulf %97, %98 : vector<16x256xf32>
    %100 = vector.broadcast %87 : vector<1x256xf32> to vector<16x256xf32>
    %101 = arith.mulf %0, %100 : vector<16x256xf32>
    %102 = arith.truncf %99 : vector<16x256xf32> to vector<16x256xbf16>
    %cst_41 = arith.constant dense<0.000000e+00> : vector<16x768xf32>
    %103 = tpu.matmul %102, %84, %cst_41 {dimension_numbers = #tpu.dot_dimension_numbers<[1], [0], [0], [1], [0, 0, 1, 1], [], []>} : vector<16x256xbf16>, vector<256x768xbf16>, vector<16x768xf32> -> vector<16x768xf32>
    %104 = vector.extract_strided_slice %103 {offsets = [0, 0], sizes = [16, 32], strides = [1, 1]} : vector<16x768xf32> to vector<16x32xf32>
    %105 = vector.extract_strided_slice %103 {offsets = [0, 256], sizes = [16, 32], strides = [1, 1]} : vector<16x768xf32> to vector<16x32xf32>
    %106 = vector.extract_strided_slice %103 {offsets = [0, 512], sizes = [16, 32], strides = [1, 1]} : vector<16x768xf32> to vector<16x32xf32>
    %cst_42 = arith.constant dense<0.000000e+00> : vector<16x16xf32>
    %107 = tpu.matmul %104, %105, %cst_42 {dimension_numbers = #tpu.dot_dimension_numbers<[1], [1], [0], [0], [0, 0, 1, 0], [], []>} : vector<16x32xf32>, vector<16x32xf32>, vector<16x16xf32> -> vector<16x16xf32>
    %cst_43 = arith.constant dense<0xFF800000> : vector<16xf32>
    %108 = vector.multi_reduction <maximumf>, %107, %cst_43 [1] : vector<16x16xf32> to vector<16xf32>
    %109 = vector.shape_cast %108 : vector<16xf32> to vector<16x1xf32>
    %110 = vector.broadcast %109 : vector<16x1xf32> to vector<16x16xf32>
    %111 = arith.subf %107, %110 : vector<16x16xf32>
    %112 = math.exp %111 : vector<16x16xf32>
    %cst_44 = arith.constant dense<0.000000e+00> : vector<16xf32>
    %113 = vector.multi_reduction <add>, %112, %cst_44 [1] : vector<16x16xf32> to vector<16xf32>
    %114 = vector.shape_cast %113 : vector<16xf32> to vector<16x1xf32>
    %115 = vector.broadcast %114 : vector<16x1xf32> to vector<16x16xf32>
    %116 = arith.divf %112, %115 : vector<16x16xf32>
    %cst_45 = arith.constant dense<0.000000e+00> : vector<16x32xf32>
    %117 = tpu.matmul %116, %106, %cst_45 {dimension_numbers = #tpu.dot_dimension_numbers<[1], [0], [0], [1], [0, 0, 1, 1], [], []>} : vector<16x16xf32>, vector<16x32xf32>, vector<16x32xf32> -> vector<16x32xf32>
    %118 = vector.extract_strided_slice %103 {offsets = [0, 32], sizes = [16, 32], strides = [1, 1]} : vector<16x768xf32> to vector<16x32xf32>
    %119 = vector.extract_strided_slice %103 {offsets = [0, 288], sizes = [16, 32], strides = [1, 1]} : vector<16x768xf32> to vector<16x32xf32>
    %120 = vector.extract_strided_slice %103 {offsets = [0, 544], sizes = [16, 32], strides = [1, 1]} : vector<16x768xf32> to vector<16x32xf32>
    %cst_46 = arith.constant dense<0.000000e+00> : vector<16x16xf32>
    %121 = tpu.matmul %118, %119, %cst_46 {dimension_numbers = #tpu.dot_dimension_numbers<[1], [1], [0], [0], [0, 0, 1, 0], [], []>} : vector<16x32xf32>, vector<16x32xf32>, vector<16x16xf32> -> vector<16x16xf32>
    %cst_47 = arith.constant dense<0xFF800000> : vector<16xf32>
    %122 = vector.multi_reduction <maximumf>, %121, %cst_47 [1] : vector<16x16xf32> to vector<16xf32>
    %123 = vector.shape_cast %122 : vector<16xf32> to vector<16x1xf32>
    %124 = vector.broadcast %123 : vector<16x1xf32> to vector<16x16xf32>
    %125 = arith.subf %121, %124 : vector<16x16xf32>
    %126 = math.exp %125 : vector<16x16xf32>
    %cst_48 = arith.constant dense<0.000000e+00> : vector<16xf32>
    %127 = vector.multi_reduction <add>, %126, %cst_48 [1] : vector<16x16xf32> to vector<16xf32>
    %128 = vector.shape_cast %127 : vector<16xf32> to vector<16x1xf32>
    %129 = vector.broadcast %128 : vector<16x1xf32> to vector<16x16xf32>
    %130 = arith.divf %126, %129 : vector<16x16xf32>
    %cst_49 = arith.constant dense<0.000000e+00> : vector<16x32xf32>
    %131 = tpu.matmul %130, %120, %cst_49 {dimension_numbers = #tpu.dot_dimension_numbers<[1], [0], [0], [1], [0, 0, 1, 1], [], []>} : vector<16x16xf32>, vector<16x32xf32>, vector<16x32xf32> -> vector<16x32xf32>
    %132 = vector.extract_strided_slice %103 {offsets = [0, 64], sizes = [16, 32], strides = [1, 1]} : vector<16x768xf32> to vector<16x32xf32>
    %133 = vector.extract_strided_slice %103 {offsets = [0, 320], sizes = [16, 32], strides = [1, 1]} : vector<16x768xf32> to vector<16x32xf32>
    %134 = vector.extract_strided_slice %103 {offsets = [0, 576], sizes = [16, 32], strides = [1, 1]} : vector<16x768xf32> to vector<16x32xf32>
    %cst_50 = arith.constant dense<0.000000e+00> : vector<16x16xf32>
    %135 = tpu.matmul %132, %133, %cst_50 {dimension_numbers = #tpu.dot_dimension_numbers<[1], [1], [0], [0], [0, 0, 1, 0], [], []>} : vector<16x32xf32>, vector<16x32xf32>, vector<16x16xf32> -> vector<16x16xf32>
    %cst_51 = arith.constant dense<0xFF800000> : vector<16xf32>
    %136 = vector.multi_reduction <maximumf>, %135, %cst_51 [1] : vector<16x16xf32> to vector<16xf32>
    %137 = vector.shape_cast %136 : vector<16xf32> to vector<16x1xf32>
    %138 = vector.broadcast %137 : vector<16x1xf32> to vector<16x16xf32>
    %139 = arith.subf %135, %138 : vector<16x16xf32>
    %140 = math.exp %139 : vector<16x16xf32>
    %cst_52 = arith.constant dense<0.000000e+00> : vector<16xf32>
    %141 = vector.multi_reduction <add>, %140, %cst_52 [1] : vector<16x16xf32> to vector<16xf32>
    %142 = vector.shape_cast %141 : vector<16xf32> to vector<16x1xf32>
    %143 = vector.broadcast %142 : vector<16x1xf32> to vector<16x16xf32>
    %144 = arith.divf %140, %143 : vector<16x16xf32>
    %cst_53 = arith.constant dense<0.000000e+00> : vector<16x32xf32>
    %145 = tpu.matmul %144, %134, %cst_53 {dimension_numbers = #tpu.dot_dimension_numbers<[1], [0], [0], [1], [0, 0, 1, 1], [], []>} : vector<16x16xf32>, vector<16x32xf32>, vector<16x32xf32> -> vector<16x32xf32>
    %146 = vector.extract_strided_slice %103 {offsets = [0, 96], sizes = [16, 32], strides = [1, 1]} : vector<16x768xf32> to vector<16x32xf32>
    %147 = vector.extract_strided_slice %103 {offsets = [0, 352], sizes = [16, 32], strides = [1, 1]} : vector<16x768xf32> to vector<16x32xf32>
    %148 = vector.extract_strided_slice %103 {offsets = [0, 608], sizes = [16, 32], strides = [1, 1]} : vector<16x768xf32> to vector<16x32xf32>
    %cst_54 = arith.constant dense<0.000000e+00> : vector<16x16xf32>
    %149 = tpu.matmul %146, %147, %cst_54 {dimension_numbers = #tpu.dot_dimension_numbers<[1], [1], [0], [0], [0, 0, 1, 0], [], []>} : vector<16x32xf32>, vector<16x32xf32>, vector<16x16xf32> -> vector<16x16xf32>
    %cst_55 = arith.constant dense<0xFF800000> : vector<16xf32>
    %150 = vector.multi_reduction <maximumf>, %149, %cst_55 [1] : vector<16x16xf32> to vector<16xf32>
    %151 = vector.shape_cast %150 : vector<16xf32> to vector<16x1xf32>
    %152 = vector.broadcast %151 : vector<16x1xf32> to vector<16x16xf32>
    %153 = arith.subf %149, %152 : vector<16x16xf32>
    %154 = math.exp %153 : vector<16x16xf32>
    %cst_56 = arith.constant dense<0.000000e+00> : vector<16xf32>
    %155 = vector.multi_reduction <add>, %154, %cst_56 [1] : vector<16x16xf32> to vector<16xf32>
    %156 = vector.shape_cast %155 : vector<16xf32> to vector<16x1xf32>
    %157 = vector.broadcast %156 : vector<16x1xf32> to vector<16x16xf32>
    %158 = arith.divf %154, %157 : vector<16x16xf32>
    %cst_57 = arith.constant dense<0.000000e+00> : vector<16x32xf32>
    %159 = tpu.matmul %158, %148, %cst_57 {dimension_numbers = #tpu.dot_dimension_numbers<[1], [0], [0], [1], [0, 0, 1, 1], [], []>} : vector<16x16xf32>, vector<16x32xf32>, vector<16x32xf32> -> vector<16x32xf32>
    %160 = vector.extract_strided_slice %103 {offsets = [0, 128], sizes = [16, 32], strides = [1, 1]} : vector<16x768xf32> to vector<16x32xf32>
    %161 = vector.extract_strided_slice %103 {offsets = [0, 384], sizes = [16, 32], strides = [1, 1]} : vector<16x768xf32> to vector<16x32xf32>
    %162 = vector.extract_strided_slice %103 {offsets = [0, 640], sizes = [16, 32], strides = [1, 1]} : vector<16x768xf32> to vector<16x32xf32>
    %cst_58 = arith.constant dense<0.000000e+00> : vector<16x16xf32>
    %163 = tpu.matmul %160, %161, %cst_58 {dimension_numbers = #tpu.dot_dimension_numbers<[1], [1], [0], [0], [0, 0, 1, 0], [], []>} : vector<16x32xf32>, vector<16x32xf32>, vector<16x16xf32> -> vector<16x16xf32>
    %cst_59 = arith.constant dense<0xFF800000> : vector<16xf32>
    %164 = vector.multi_reduction <maximumf>, %163, %cst_59 [1] : vector<16x16xf32> to vector<16xf32>
    %165 = vector.shape_cast %164 : vector<16xf32> to vector<16x1xf32>
    %166 = vector.broadcast %165 : vector<16x1xf32> to vector<16x16xf32>
    %167 = arith.subf %163, %166 : vector<16x16xf32>
    %168 = math.exp %167 : vector<16x16xf32>
    %cst_60 = arith.constant dense<0.000000e+00> : vector<16xf32>
    %169 = vector.multi_reduction <add>, %168, %cst_60 [1] : vector<16x16xf32> to vector<16xf32>
    %170 = vector.shape_cast %169 : vector<16xf32> to vector<16x1xf32>
    %171 = vector.broadcast %170 : vector<16x1xf32> to vector<16x16xf32>
    %172 = arith.divf %168, %171 : vector<16x16xf32>
    %cst_61 = arith.constant dense<0.000000e+00> : vector<16x32xf32>
    %173 = tpu.matmul %172, %162, %cst_61 {dimension_numbers = #tpu.dot_dimension_numbers<[1], [0], [0], [1], [0, 0, 1, 1], [], []>} : vector<16x16xf32>, vector<16x32xf32>, vector<16x32xf32> -> vector<16x32xf32>
    %174 = vector.extract_strided_slice %103 {offsets = [0, 160], sizes = [16, 32], strides = [1, 1]} : vector<16x768xf32> to vector<16x32xf32>
    %175 = vector.extract_strided_slice %103 {offsets = [0, 416], sizes = [16, 32], strides = [1, 1]} : vector<16x768xf32> to vector<16x32xf32>
    %176 = vector.extract_strided_slice %103 {offsets = [0, 672], sizes = [16, 32], strides = [1, 1]} : vector<16x768xf32> to vector<16x32xf32>
    %cst_62 = arith.constant dense<0.000000e+00> : vector<16x16xf32>
    %177 = tpu.matmul %174, %175, %cst_62 {dimension_numbers = #tpu.dot_dimension_numbers<[1], [1], [0], [0], [0, 0, 1, 0], [], []>} : vector<16x32xf32>, vector<16x32xf32>, vector<16x16xf32> -> vector<16x16xf32>
    %cst_63 = arith.constant dense<0xFF800000> : vector<16xf32>
    %178 = vector.multi_reduction <maximumf>, %177, %cst_63 [1] : vector<16x16xf32> to vector<16xf32>
    %179 = vector.shape_cast %178 : vector<16xf32> to vector<16x1xf32>
    %180 = vector.broadcast %179 : vector<16x1xf32> to vector<16x16xf32>
    %181 = arith.subf %177, %180 : vector<16x16xf32>
    %182 = math.exp %181 : vector<16x16xf32>
    %cst_64 = arith.constant dense<0.000000e+00> : vector<16xf32>
    %183 = vector.multi_reduction <add>, %182, %cst_64 [1] : vector<16x16xf32> to vector<16xf32>
    %184 = vector.shape_cast %183 : vector<16xf32> to vector<16x1xf32>
    %185 = vector.broadcast %184 : vector<16x1xf32> to vector<16x16xf32>
    %186 = arith.divf %182, %185 : vector<16x16xf32>
    %cst_65 = arith.constant dense<0.000000e+00> : vector<16x32xf32>
    %187 = tpu.matmul %186, %176, %cst_65 {dimension_numbers = #tpu.dot_dimension_numbers<[1], [0], [0], [1], [0, 0, 1, 1], [], []>} : vector<16x16xf32>, vector<16x32xf32>, vector<16x32xf32> -> vector<16x32xf32>
    %188 = vector.extract_strided_slice %103 {offsets = [0, 192], sizes = [16, 32], strides = [1, 1]} : vector<16x768xf32> to vector<16x32xf32>
    %189 = vector.extract_strided_slice %103 {offsets = [0, 448], sizes = [16, 32], strides = [1, 1]} : vector<16x768xf32> to vector<16x32xf32>
    %190 = vector.extract_strided_slice %103 {offsets = [0, 704], sizes = [16, 32], strides = [1, 1]} : vector<16x768xf32> to vector<16x32xf32>
    %cst_66 = arith.constant dense<0.000000e+00> : vector<16x16xf32>
    %191 = tpu.matmul %188, %189, %cst_66 {dimension_numbers = #tpu.dot_dimension_numbers<[1], [1], [0], [0], [0, 0, 1, 0], [], []>} : vector<16x32xf32>, vector<16x32xf32>, vector<16x16xf32> -> vector<16x16xf32>
    %cst_67 = arith.constant dense<0xFF800000> : vector<16xf32>
    %192 = vector.multi_reduction <maximumf>, %191, %cst_67 [1] : vector<16x16xf32> to vector<16xf32>
    %193 = vector.shape_cast %192 : vector<16xf32> to vector<16x1xf32>
    %194 = vector.broadcast %193 : vector<16x1xf32> to vector<16x16xf32>
    %195 = arith.subf %191, %194 : vector<16x16xf32>
    %196 = math.exp %195 : vector<16x16xf32>
    %cst_68 = arith.constant dense<0.000000e+00> : vector<16xf32>
    %197 = vector.multi_reduction <add>, %196, %cst_68 [1] : vector<16x16xf32> to vector<16xf32>
    %198 = vector.shape_cast %197 : vector<16xf32> to vector<16x1xf32>
    %199 = vector.broadcast %198 : vector<16x1xf32> to vector<16x16xf32>
    %200 = arith.divf %196, %199 : vector<16x16xf32>
    %cst_69 = arith.constant dense<0.000000e+00> : vector<16x32xf32>
    %201 = tpu.matmul %200, %190, %cst_69 {dimension_numbers = #tpu.dot_dimension_numbers<[1], [0], [0], [1], [0, 0, 1, 1], [], []>} : vector<16x16xf32>, vector<16x32xf32>, vector<16x32xf32> -> vector<16x32xf32>
    %202 = vector.extract_strided_slice %103 {offsets = [0, 224], sizes = [16, 32], strides = [1, 1]} : vector<16x768xf32> to vector<16x32xf32>
    %203 = vector.extract_strided_slice %103 {offsets = [0, 480], sizes = [16, 32], strides = [1, 1]} : vector<16x768xf32> to vector<16x32xf32>
    %204 = vector.extract_strided_slice %103 {offsets = [0, 736], sizes = [16, 32], strides = [1, 1]} : vector<16x768xf32> to vector<16x32xf32>
    %cst_70 = arith.constant dense<0.000000e+00> : vector<16x16xf32>
    %205 = tpu.matmul %202, %203, %cst_70 {dimension_numbers = #tpu.dot_dimension_numbers<[1], [1], [0], [0], [0, 0, 1, 0], [], []>} : vector<16x32xf32>, vector<16x32xf32>, vector<16x16xf32> -> vector<16x16xf32>
    %cst_71 = arith.constant dense<0xFF800000> : vector<16xf32>
    %206 = vector.multi_reduction <maximumf>, %205, %cst_71 [1] : vector<16x16xf32> to vector<16xf32>
    %207 = vector.shape_cast %206 : vector<16xf32> to vector<16x1xf32>
    %208 = vector.broadcast %207 : vector<16x1xf32> to vector<16x16xf32>
    %209 = arith.subf %205, %208 : vector<16x16xf32>
    %210 = math.exp %209 : vector<16x16xf32>
    %cst_72 = arith.constant dense<0.000000e+00> : vector<16xf32>
    %211 = vector.multi_reduction <add>, %210, %cst_72 [1] : vector<16x16xf32> to vector<16xf32>
    %212 = vector.shape_cast %211 : vector<16xf32> to vector<16x1xf32>
    %213 = vector.broadcast %212 : vector<16x1xf32> to vector<16x16xf32>
    %214 = arith.divf %210, %213 : vector<16x16xf32>
    %cst_73 = arith.constant dense<0.000000e+00> : vector<16x32xf32>
    %215 = tpu.matmul %214, %204, %cst_73 {dimension_numbers = #tpu.dot_dimension_numbers<[1], [0], [0], [1], [0, 0, 1, 1], [], []>} : vector<16x16xf32>, vector<16x32xf32>, vector<16x32xf32> -> vector<16x32xf32>
    %216 = tpu.concatenate %117, %131, %145, %159, %173, %187, %201, %215 in 1 : vector<16x32xf32>, vector<16x32xf32>, vector<16x32xf32>, vector<16x32xf32>, vector<16x32xf32>, vector<16x32xf32>, vector<16x32xf32>, vector<16x32xf32> -> vector<16x256xf32>
    %217 = arith.truncf %216 : vector<16x256xf32> to vector<16x256xbf16>
    %cst_74 = arith.constant dense<0.000000e+00> : vector<16x256xf32>
    %218 = tpu.matmul %217, %85, %cst_74 {dimension_numbers = #tpu.dot_dimension_numbers<[1], [0], [0], [1], [0, 0, 1, 1], [], []>} : vector<16x256xbf16>, vector<256x256xbf16>, vector<16x256xf32> -> vector<16x256xf32>
    %219 = vector.broadcast %86 : vector<1x256xf32> to vector<16x256xf32>
    %220 = arith.addf %218, %219 : vector<16x256xf32>
    %221 = arith.addf %101, %220 : vector<16x256xf32>
    %222 = vector.extract_strided_slice %221 {offsets = [0, 0], sizes = [8, 256], strides = [1, 1]} : vector<16x256xf32> to vector<8x256xf32>
    tpu.wait_dma2 semaphore(%arg7 : memref<!tpu.dma_semaphore, #tpu.memory_space<semaphore_mem>>) src(%arg3 : memref<256x2560xbf16, #tpu.memory_space<any>>) dst(%arg6 : memref<256x2560xbf16, #tpu.memory_space<vmem>>)
    %c17 = arith.constant 17 : index
    %c0_75 = arith.constant 0 : index
    %223 = vector.load %arg1[%c17, %c0_75] : memref<24x256xf32, #tpu.memory_space<vmem>>, vector<2x256xf32>
    %224 = tpu.concatenate %2, %223 in 0 : vector<8x256xf32>, vector<2x256xf32> -> vector<10x256xf32>
    %c2 = arith.constant 2 : index
    %c0_76 = arith.constant 0 : index
    %225 = vector.load %arg1[%c2, %c0_76] : memref<24x256xf32, #tpu.memory_space<vmem>>, vector<1x256xf32>
    %c3 = arith.constant 3 : index
    %c0_77 = arith.constant 0 : index
    %226 = vector.load %arg1[%c3, %c0_77] : memref<24x256xf32, #tpu.memory_space<vmem>>, vector<1x256xf32>
    %c0_78 = arith.constant 0 : index
    %c0_79 = arith.constant 0 : index
    %227 = vector.load %arg6[%c0_78, %c0_79] : memref<256x2560xbf16, #tpu.memory_space<vmem>>, vector<256x768xbf16>
    %c0_80 = arith.constant 0 : index
    %c768 = arith.constant 768 : index
    %228 = vector.load %arg6[%c0_80, %c768] : memref<256x2560xbf16, #tpu.memory_space<vmem>>, vector<256x256xbf16>
    %c4 = arith.constant 4 : index
    %c0_81 = arith.constant 0 : index
    %229 = vector.load %arg1[%c4, %c0_81] : memref<24x256xf32, #tpu.memory_space<vmem>>, vector<1x256xf32>
    %c20 = arith.constant 20 : index
    %c0_82 = arith.constant 0 : index
    %230 = vector.load %arg1[%c20, %c0_82] : memref<24x256xf32, #tpu.memory_space<vmem>>, vector<1x256xf32>
    %cst_83 = arith.constant dense<0.000000e+00> : vector<10xf32>
    %231 = vector.multi_reduction <add>, %224, %cst_83 [1] : vector<10x256xf32> to vector<10xf32>
    %232 = vector.shape_cast %231 : vector<10xf32> to vector<10x1xf32>
    %cst_84 = arith.constant 2.560000e+02 : f32
    %233 = vector.broadcast %cst_84 : f32 to vector<10x1xf32>
    %234 = arith.divf %232, %233 : vector<10x1xf32>
    %235 = vector.broadcast %234 : vector<10x1xf32> to vector<10x256xf32>
    %236 = arith.subf %224, %235 : vector<10x256xf32>
    %237 = arith.mulf %236, %236 : vector<10x256xf32>
    %cst_85 = arith.constant dense<0.000000e+00> : vector<10xf32>
    %238 = vector.multi_reduction <add>, %237, %cst_85 [1] : vector<10x256xf32> to vector<10xf32>
    %239 = vector.shape_cast %238 : vector<10xf32> to vector<10x1xf32>
    %cst_86 = arith.constant 2.560000e+02 : f32
    %240 = vector.broadcast %cst_86 : f32 to vector<10x1xf32>
    %241 = arith.divf %239, %240 : vector<10x1xf32>
    %cst_87 = arith.constant 9.99999974E-6 : f32
    %242 = vector.broadcast %cst_87 : f32 to vector<10x1xf32>
    %243 = arith.addf %241, %242 : vector<10x1xf32>
    %244 = math.rsqrt %243 : vector<10x1xf32>
    %245 = vector.broadcast %244 : vector<10x1xf32> to vector<10x256xf32>
    %246 = arith.mulf %236, %245 : vector<10x256xf32>
    %247 = vector.broadcast %225 : vector<1x256xf32> to vector<10x256xf32>
    %248 = arith.mulf %246, %247 : vector<10x256xf32>
    %249 = vector.broadcast %226 : vector<1x256xf32> to vector<10x256xf32>
    %250 = arith.addf %248, %249 : vector<10x256xf32>
    %251 = vector.broadcast %230 : vector<1x256xf32> to vector<10x256xf32>
    %252 = arith.mulf %224, %251 : vector<10x256xf32>
    %253 = arith.truncf %250 : vector<10x256xf32> to vector<10x256xbf16>
    %cst_88 = arith.constant dense<0.000000e+00> : vector<10x768xf32>
    %254 = tpu.matmul %253, %227, %cst_88 {dimension_numbers = #tpu.dot_dimension_numbers<[1], [0], [0], [1], [0, 0, 1, 1], [], []>} : vector<10x256xbf16>, vector<256x768xbf16>, vector<10x768xf32> -> vector<10x768xf32>
    %255 = vector.extract_strided_slice %254 {offsets = [0, 0], sizes = [10, 32], strides = [1, 1]} : vector<10x768xf32> to vector<10x32xf32>
    %256 = vector.extract_strided_slice %254 {offsets = [0, 256], sizes = [10, 32], strides = [1, 1]} : vector<10x768xf32> to vector<10x32xf32>
    %257 = vector.extract_strided_slice %254 {offsets = [0, 512], sizes = [10, 32], strides = [1, 1]} : vector<10x768xf32> to vector<10x32xf32>
    %cst_89 = arith.constant dense<0.000000e+00> : vector<10x10xf32>
    %258 = tpu.matmul %255, %256, %cst_89 {dimension_numbers = #tpu.dot_dimension_numbers<[1], [1], [0], [0], [0, 0, 1, 0], [], []>} : vector<10x32xf32>, vector<10x32xf32>, vector<10x10xf32> -> vector<10x10xf32>
    %cst_90 = arith.constant dense<0xFF800000> : vector<10xf32>
    %259 = vector.multi_reduction <maximumf>, %258, %cst_90 [1] : vector<10x10xf32> to vector<10xf32>
    %260 = vector.shape_cast %259 : vector<10xf32> to vector<10x1xf32>
    %261 = vector.broadcast %260 : vector<10x1xf32> to vector<10x10xf32>
    %262 = arith.subf %258, %261 : vector<10x10xf32>
    %263 = math.exp %262 : vector<10x10xf32>
    %cst_91 = arith.constant dense<0.000000e+00> : vector<10xf32>
    %264 = vector.multi_reduction <add>, %263, %cst_91 [1] : vector<10x10xf32> to vector<10xf32>
    %265 = vector.shape_cast %264 : vector<10xf32> to vector<10x1xf32>
    %266 = vector.broadcast %265 : vector<10x1xf32> to vector<10x10xf32>
    %267 = arith.divf %263, %266 : vector<10x10xf32>
    %cst_92 = arith.constant dense<0.000000e+00> : vector<10x32xf32>
    %268 = tpu.matmul %267, %257, %cst_92 {dimension_numbers = #tpu.dot_dimension_numbers<[1], [0], [0], [1], [0, 0, 1, 1], [], []>} : vector<10x10xf32>, vector<10x32xf32>, vector<10x32xf32> -> vector<10x32xf32>
    %269 = vector.extract_strided_slice %254 {offsets = [0, 32], sizes = [10, 32], strides = [1, 1]} : vector<10x768xf32> to vector<10x32xf32>
    %270 = vector.extract_strided_slice %254 {offsets = [0, 288], sizes = [10, 32], strides = [1, 1]} : vector<10x768xf32> to vector<10x32xf32>
    %271 = vector.extract_strided_slice %254 {offsets = [0, 544], sizes = [10, 32], strides = [1, 1]} : vector<10x768xf32> to vector<10x32xf32>
    %cst_93 = arith.constant dense<0.000000e+00> : vector<10x10xf32>
    %272 = tpu.matmul %269, %270, %cst_93 {dimension_numbers = #tpu.dot_dimension_numbers<[1], [1], [0], [0], [0, 0, 1, 0], [], []>} : vector<10x32xf32>, vector<10x32xf32>, vector<10x10xf32> -> vector<10x10xf32>
    %cst_94 = arith.constant dense<0xFF800000> : vector<10xf32>
    %273 = vector.multi_reduction <maximumf>, %272, %cst_94 [1] : vector<10x10xf32> to vector<10xf32>
    %274 = vector.shape_cast %273 : vector<10xf32> to vector<10x1xf32>
    %275 = vector.broadcast %274 : vector<10x1xf32> to vector<10x10xf32>
    %276 = arith.subf %272, %275 : vector<10x10xf32>
    %277 = math.exp %276 : vector<10x10xf32>
    %cst_95 = arith.constant dense<0.000000e+00> : vector<10xf32>
    %278 = vector.multi_reduction <add>, %277, %cst_95 [1] : vector<10x10xf32> to vector<10xf32>
    %279 = vector.shape_cast %278 : vector<10xf32> to vector<10x1xf32>
    %280 = vector.broadcast %279 : vector<10x1xf32> to vector<10x10xf32>
    %281 = arith.divf %277, %280 : vector<10x10xf32>
    %cst_96 = arith.constant dense<0.000000e+00> : vector<10x32xf32>
    %282 = tpu.matmul %281, %271, %cst_96 {dimension_numbers = #tpu.dot_dimension_numbers<[1], [0], [0], [1], [0, 0, 1, 1], [], []>} : vector<10x10xf32>, vector<10x32xf32>, vector<10x32xf32> -> vector<10x32xf32>
    %283 = vector.extract_strided_slice %254 {offsets = [0, 64], sizes = [10, 32], strides = [1, 1]} : vector<10x768xf32> to vector<10x32xf32>
    %284 = vector.extract_strided_slice %254 {offsets = [0, 320], sizes = [10, 32], strides = [1, 1]} : vector<10x768xf32> to vector<10x32xf32>
    %285 = vector.extract_strided_slice %254 {offsets = [0, 576], sizes = [10, 32], strides = [1, 1]} : vector<10x768xf32> to vector<10x32xf32>
    %cst_97 = arith.constant dense<0.000000e+00> : vector<10x10xf32>
    %286 = tpu.matmul %283, %284, %cst_97 {dimension_numbers = #tpu.dot_dimension_numbers<[1], [1], [0], [0], [0, 0, 1, 0], [], []>} : vector<10x32xf32>, vector<10x32xf32>, vector<10x10xf32> -> vector<10x10xf32>
    %cst_98 = arith.constant dense<0xFF800000> : vector<10xf32>
    %287 = vector.multi_reduction <maximumf>, %286, %cst_98 [1] : vector<10x10xf32> to vector<10xf32>
    %288 = vector.shape_cast %287 : vector<10xf32> to vector<10x1xf32>
    %289 = vector.broadcast %288 : vector<10x1xf32> to vector<10x10xf32>
    %290 = arith.subf %286, %289 : vector<10x10xf32>
    %291 = math.exp %290 : vector<10x10xf32>
    %cst_99 = arith.constant dense<0.000000e+00> : vector<10xf32>
    %292 = vector.multi_reduction <add>, %291, %cst_99 [1] : vector<10x10xf32> to vector<10xf32>
    %293 = vector.shape_cast %292 : vector<10xf32> to vector<10x1xf32>
    %294 = vector.broadcast %293 : vector<10x1xf32> to vector<10x10xf32>
    %295 = arith.divf %291, %294 : vector<10x10xf32>
    %cst_100 = arith.constant dense<0.000000e+00> : vector<10x32xf32>
    %296 = tpu.matmul %295, %285, %cst_100 {dimension_numbers = #tpu.dot_dimension_numbers<[1], [0], [0], [1], [0, 0, 1, 1], [], []>} : vector<10x10xf32>, vector<10x32xf32>, vector<10x32xf32> -> vector<10x32xf32>
    %297 = vector.extract_strided_slice %254 {offsets = [0, 96], sizes = [10, 32], strides = [1, 1]} : vector<10x768xf32> to vector<10x32xf32>
    %298 = vector.extract_strided_slice %254 {offsets = [0, 352], sizes = [10, 32], strides = [1, 1]} : vector<10x768xf32> to vector<10x32xf32>
    %299 = vector.extract_strided_slice %254 {offsets = [0, 608], sizes = [10, 32], strides = [1, 1]} : vector<10x768xf32> to vector<10x32xf32>
    %cst_101 = arith.constant dense<0.000000e+00> : vector<10x10xf32>
    %300 = tpu.matmul %297, %298, %cst_101 {dimension_numbers = #tpu.dot_dimension_numbers<[1], [1], [0], [0], [0, 0, 1, 0], [], []>} : vector<10x32xf32>, vector<10x32xf32>, vector<10x10xf32> -> vector<10x10xf32>
    %cst_102 = arith.constant dense<0xFF800000> : vector<10xf32>
    %301 = vector.multi_reduction <maximumf>, %300, %cst_102 [1] : vector<10x10xf32> to vector<10xf32>
    %302 = vector.shape_cast %301 : vector<10xf32> to vector<10x1xf32>
    %303 = vector.broadcast %302 : vector<10x1xf32> to vector<10x10xf32>
    %304 = arith.subf %300, %303 : vector<10x10xf32>
    %305 = math.exp %304 : vector<10x10xf32>
    %cst_103 = arith.constant dense<0.000000e+00> : vector<10xf32>
    %306 = vector.multi_reduction <add>, %305, %cst_103 [1] : vector<10x10xf32> to vector<10xf32>
    %307 = vector.shape_cast %306 : vector<10xf32> to vector<10x1xf32>
    %308 = vector.broadcast %307 : vector<10x1xf32> to vector<10x10xf32>
    %309 = arith.divf %305, %308 : vector<10x10xf32>
    %cst_104 = arith.constant dense<0.000000e+00> : vector<10x32xf32>
    %310 = tpu.matmul %309, %299, %cst_104 {dimension_numbers = #tpu.dot_dimension_numbers<[1], [0], [0], [1], [0, 0, 1, 1], [], []>} : vector<10x10xf32>, vector<10x32xf32>, vector<10x32xf32> -> vector<10x32xf32>
    %311 = vector.extract_strided_slice %254 {offsets = [0, 128], sizes = [10, 32], strides = [1, 1]} : vector<10x768xf32> to vector<10x32xf32>
    %312 = vector.extract_strided_slice %254 {offsets = [0, 384], sizes = [10, 32], strides = [1, 1]} : vector<10x768xf32> to vector<10x32xf32>
    %313 = vector.extract_strided_slice %254 {offsets = [0, 640], sizes = [10, 32], strides = [1, 1]} : vector<10x768xf32> to vector<10x32xf32>
    %cst_105 = arith.constant dense<0.000000e+00> : vector<10x10xf32>
    %314 = tpu.matmul %311, %312, %cst_105 {dimension_numbers = #tpu.dot_dimension_numbers<[1], [1], [0], [0], [0, 0, 1, 0], [], []>} : vector<10x32xf32>, vector<10x32xf32>, vector<10x10xf32> -> vector<10x10xf32>
    %cst_106 = arith.constant dense<0xFF800000> : vector<10xf32>
    %315 = vector.multi_reduction <maximumf>, %314, %cst_106 [1] : vector<10x10xf32> to vector<10xf32>
    %316 = vector.shape_cast %315 : vector<10xf32> to vector<10x1xf32>
    %317 = vector.broadcast %316 : vector<10x1xf32> to vector<10x10xf32>
    %318 = arith.subf %314, %317 : vector<10x10xf32>
    %319 = math.exp %318 : vector<10x10xf32>
    %cst_107 = arith.constant dense<0.000000e+00> : vector<10xf32>
    %320 = vector.multi_reduction <add>, %319, %cst_107 [1] : vector<10x10xf32> to vector<10xf32>
    %321 = vector.shape_cast %320 : vector<10xf32> to vector<10x1xf32>
    %322 = vector.broadcast %321 : vector<10x1xf32> to vector<10x10xf32>
    %323 = arith.divf %319, %322 : vector<10x10xf32>
    %cst_108 = arith.constant dense<0.000000e+00> : vector<10x32xf32>
    %324 = tpu.matmul %323, %313, %cst_108 {dimension_numbers = #tpu.dot_dimension_numbers<[1], [0], [0], [1], [0, 0, 1, 1], [], []>} : vector<10x10xf32>, vector<10x32xf32>, vector<10x32xf32> -> vector<10x32xf32>
    %325 = vector.extract_strided_slice %254 {offsets = [0, 160], sizes = [10, 32], strides = [1, 1]} : vector<10x768xf32> to vector<10x32xf32>
    %326 = vector.extract_strided_slice %254 {offsets = [0, 416], sizes = [10, 32], strides = [1, 1]} : vector<10x768xf32> to vector<10x32xf32>
    %327 = vector.extract_strided_slice %254 {offsets = [0, 672], sizes = [10, 32], strides = [1, 1]} : vector<10x768xf32> to vector<10x32xf32>
    %cst_109 = arith.constant dense<0.000000e+00> : vector<10x10xf32>
    %328 = tpu.matmul %325, %326, %cst_109 {dimension_numbers = #tpu.dot_dimension_numbers<[1], [1], [0], [0], [0, 0, 1, 0], [], []>} : vector<10x32xf32>, vector<10x32xf32>, vector<10x10xf32> -> vector<10x10xf32>
    %cst_110 = arith.constant dense<0xFF800000> : vector<10xf32>
    %329 = vector.multi_reduction <maximumf>, %328, %cst_110 [1] : vector<10x10xf32> to vector<10xf32>
    %330 = vector.shape_cast %329 : vector<10xf32> to vector<10x1xf32>
    %331 = vector.broadcast %330 : vector<10x1xf32> to vector<10x10xf32>
    %332 = arith.subf %328, %331 : vector<10x10xf32>
    %333 = math.exp %332 : vector<10x10xf32>
    %cst_111 = arith.constant dense<0.000000e+00> : vector<10xf32>
    %334 = vector.multi_reduction <add>, %333, %cst_111 [1] : vector<10x10xf32> to vector<10xf32>
    %335 = vector.shape_cast %334 : vector<10xf32> to vector<10x1xf32>
    %336 = vector.broadcast %335 : vector<10x1xf32> to vector<10x10xf32>
    %337 = arith.divf %333, %336 : vector<10x10xf32>
    %cst_112 = arith.constant dense<0.000000e+00> : vector<10x32xf32>
    %338 = tpu.matmul %337, %327, %cst_112 {dimension_numbers = #tpu.dot_dimension_numbers<[1], [0], [0], [1], [0, 0, 1, 1], [], []>} : vector<10x10xf32>, vector<10x32xf32>, vector<10x32xf32> -> vector<10x32xf32>
    %339 = vector.extract_strided_slice %254 {offsets = [0, 192], sizes = [10, 32], strides = [1, 1]} : vector<10x768xf32> to vector<10x32xf32>
    %340 = vector.extract_strided_slice %254 {offsets = [0, 448], sizes = [10, 32], strides = [1, 1]} : vector<10x768xf32> to vector<10x32xf32>
    %341 = vector.extract_strided_slice %254 {offsets = [0, 704], sizes = [10, 32], strides = [1, 1]} : vector<10x768xf32> to vector<10x32xf32>
    %cst_113 = arith.constant dense<0.000000e+00> : vector<10x10xf32>
    %342 = tpu.matmul %339, %340, %cst_113 {dimension_numbers = #tpu.dot_dimension_numbers<[1], [1], [0], [0], [0, 0, 1, 0], [], []>} : vector<10x32xf32>, vector<10x32xf32>, vector<10x10xf32> -> vector<10x10xf32>
    %cst_114 = arith.constant dense<0xFF800000> : vector<10xf32>
    %343 = vector.multi_reduction <maximumf>, %342, %cst_114 [1] : vector<10x10xf32> to vector<10xf32>
    %344 = vector.shape_cast %343 : vector<10xf32> to vector<10x1xf32>
    %345 = vector.broadcast %344 : vector<10x1xf32> to vector<10x10xf32>
    %346 = arith.subf %342, %345 : vector<10x10xf32>
    %347 = math.exp %346 : vector<10x10xf32>
    %cst_115 = arith.constant dense<0.000000e+00> : vector<10xf32>
    %348 = vector.multi_reduction <add>, %347, %cst_115 [1] : vector<10x10xf32> to vector<10xf32>
    %349 = vector.shape_cast %348 : vector<10xf32> to vector<10x1xf32>
    %350 = vector.broadcast %349 : vector<10x1xf32> to vector<10x10xf32>
    %351 = arith.divf %347, %350 : vector<10x10xf32>
    %cst_116 = arith.constant dense<0.000000e+00> : vector<10x32xf32>
    %352 = tpu.matmul %351, %341, %cst_116 {dimension_numbers = #tpu.dot_dimension_numbers<[1], [0], [0], [1], [0, 0, 1, 1], [], []>} : vector<10x10xf32>, vector<10x32xf32>, vector<10x32xf32> -> vector<10x32xf32>
    %353 = vector.extract_strided_slice %254 {offsets = [0, 224], sizes = [10, 32], strides = [1, 1]} : vector<10x768xf32> to vector<10x32xf32>
    %354 = vector.extract_strided_slice %254 {offsets = [0, 480], sizes = [10, 32], strides = [1, 1]} : vector<10x768xf32> to vector<10x32xf32>
    %355 = vector.extract_strided_slice %254 {offsets = [0, 736], sizes = [10, 32], strides = [1, 1]} : vector<10x768xf32> to vector<10x32xf32>
    %cst_117 = arith.constant dense<0.000000e+00> : vector<10x10xf32>
    %356 = tpu.matmul %353, %354, %cst_117 {dimension_numbers = #tpu.dot_dimension_numbers<[1], [1], [0], [0], [0, 0, 1, 0], [], []>} : vector<10x32xf32>, vector<10x32xf32>, vector<10x10xf32> -> vector<10x10xf32>
    %cst_118 = arith.constant dense<0xFF800000> : vector<10xf32>
    %357 = vector.multi_reduction <maximumf>, %356, %cst_118 [1] : vector<10x10xf32> to vector<10xf32>
    %358 = vector.shape_cast %357 : vector<10xf32> to vector<10x1xf32>
    %359 = vector.broadcast %358 : vector<10x1xf32> to vector<10x10xf32>
    %360 = arith.subf %356, %359 : vector<10x10xf32>
    %361 = math.exp %360 : vector<10x10xf32>
    %cst_119 = arith.constant dense<0.000000e+00> : vector<10xf32>
    %362 = vector.multi_reduction <add>, %361, %cst_119 [1] : vector<10x10xf32> to vector<10xf32>
    %363 = vector.shape_cast %362 : vector<10xf32> to vector<10x1xf32>
    %364 = vector.broadcast %363 : vector<10x1xf32> to vector<10x10xf32>
    %365 = arith.divf %361, %364 : vector<10x10xf32>
    %cst_120 = arith.constant dense<0.000000e+00> : vector<10x32xf32>
    %366 = tpu.matmul %365, %355, %cst_120 {dimension_numbers = #tpu.dot_dimension_numbers<[1], [0], [0], [1], [0, 0, 1, 1], [], []>} : vector<10x10xf32>, vector<10x32xf32>, vector<10x32xf32> -> vector<10x32xf32>
    %367 = tpu.concatenate %268, %282, %296, %310, %324, %338, %352, %366 in 1 : vector<10x32xf32>, vector<10x32xf32>, vector<10x32xf32>, vector<10x32xf32>, vector<10x32xf32>, vector<10x32xf32>, vector<10x32xf32>, vector<10x32xf32> -> vector<10x256xf32>
    %368 = arith.truncf %367 : vector<10x256xf32> to vector<10x256xbf16>
    %cst_121 = arith.constant dense<0.000000e+00> : vector<10x256xf32>
    %369 = tpu.matmul %368, %228, %cst_121 {dimension_numbers = #tpu.dot_dimension_numbers<[1], [0], [0], [1], [0, 0, 1, 1], [], []>} : vector<10x256xbf16>, vector<256x256xbf16>, vector<10x256xf32> -> vector<10x256xf32>
    %370 = vector.broadcast %229 : vector<1x256xf32> to vector<10x256xf32>
    %371 = arith.addf %369, %370 : vector<10x256xf32>
    %372 = arith.addf %252, %371 : vector<10x256xf32>
    %373 = vector.extract_strided_slice %372 {offsets = [8, 0], sizes = [2, 256], strides = [1, 1]} : vector<10x256xf32> to vector<2x256xf32>
    %374 = tpu.concatenate %1, %373 in 0 : vector<8x256xf32>, vector<2x256xf32> -> vector<10x256xf32>
    %c5 = arith.constant 5 : index
    %c0_122 = arith.constant 0 : index
    %375 = vector.load %arg1[%c5, %c0_122] : memref<24x256xf32, #tpu.memory_space<vmem>>, vector<1x256xf32>
    %c6 = arith.constant 6 : index
    %c0_123 = arith.constant 0 : index
    %376 = vector.load %arg1[%c6, %c0_123] : memref<24x256xf32, #tpu.memory_space<vmem>>, vector<1x256xf32>
    %c0_124 = arith.constant 0 : index
    %c1024 = arith.constant 1024 : index
    %377 = vector.load %arg6[%c0_124, %c1024] : memref<256x2560xbf16, #tpu.memory_space<vmem>>, vector<256x768xbf16>
    %c0_125 = arith.constant 0 : index
    %c1792 = arith.constant 1792 : index
    %378 = vector.load %arg6[%c0_125, %c1792] : memref<256x2560xbf16, #tpu.memory_space<vmem>>, vector<256x256xbf16>
    %c7 = arith.constant 7 : index
    %c0_126 = arith.constant 0 : index
    %379 = vector.load %arg1[%c7, %c0_126] : memref<24x256xf32, #tpu.memory_space<vmem>>, vector<1x256xf32>
    %c21 = arith.constant 21 : index
    %c0_127 = arith.constant 0 : index
    %380 = vector.load %arg1[%c21, %c0_127] : memref<24x256xf32, #tpu.memory_space<vmem>>, vector<1x256xf32>
    %cst_128 = arith.constant dense<0.000000e+00> : vector<10xf32>
    %381 = vector.multi_reduction <add>, %374, %cst_128 [1] : vector<10x256xf32> to vector<10xf32>
    %382 = vector.shape_cast %381 : vector<10xf32> to vector<10x1xf32>
    %cst_129 = arith.constant 2.560000e+02 : f32
    %383 = vector.broadcast %cst_129 : f32 to vector<10x1xf32>
    %384 = arith.divf %382, %383 : vector<10x1xf32>
    %385 = vector.broadcast %384 : vector<10x1xf32> to vector<10x256xf32>
    %386 = arith.subf %374, %385 : vector<10x256xf32>
    %387 = arith.mulf %386, %386 : vector<10x256xf32>
    %cst_130 = arith.constant dense<0.000000e+00> : vector<10xf32>
    %388 = vector.multi_reduction <add>, %387, %cst_130 [1] : vector<10x256xf32> to vector<10xf32>
    %389 = vector.shape_cast %388 : vector<10xf32> to vector<10x1xf32>
    %cst_131 = arith.constant 2.560000e+02 : f32
    %390 = vector.broadcast %cst_131 : f32 to vector<10x1xf32>
    %391 = arith.divf %389, %390 : vector<10x1xf32>
    %cst_132 = arith.constant 9.99999974E-6 : f32
    %392 = vector.broadcast %cst_132 : f32 to vector<10x1xf32>
    %393 = arith.addf %391, %392 : vector<10x1xf32>
    %394 = math.rsqrt %393 : vector<10x1xf32>
    %395 = vector.broadcast %394 : vector<10x1xf32> to vector<10x256xf32>
    %396 = arith.mulf %386, %395 : vector<10x256xf32>
    %397 = vector.broadcast %375 : vector<1x256xf32> to vector<10x256xf32>
    %398 = arith.mulf %396, %397 : vector<10x256xf32>
    %399 = vector.broadcast %376 : vector<1x256xf32> to vector<10x256xf32>
    %400 = arith.addf %398, %399 : vector<10x256xf32>
    %401 = vector.broadcast %380 : vector<1x256xf32> to vector<10x256xf32>
    %402 = arith.mulf %374, %401 : vector<10x256xf32>
    %403 = arith.truncf %400 : vector<10x256xf32> to vector<10x256xbf16>
    %cst_133 = arith.constant dense<0.000000e+00> : vector<10x768xf32>
    %404 = tpu.matmul %403, %377, %cst_133 {dimension_numbers = #tpu.dot_dimension_numbers<[1], [0], [0], [1], [0, 0, 1, 1], [], []>} : vector<10x256xbf16>, vector<256x768xbf16>, vector<10x768xf32> -> vector<10x768xf32>
    %405 = vector.extract_strided_slice %404 {offsets = [0, 0], sizes = [10, 32], strides = [1, 1]} : vector<10x768xf32> to vector<10x32xf32>
    %406 = vector.extract_strided_slice %404 {offsets = [0, 256], sizes = [10, 32], strides = [1, 1]} : vector<10x768xf32> to vector<10x32xf32>
    %407 = vector.extract_strided_slice %404 {offsets = [0, 512], sizes = [10, 32], strides = [1, 1]} : vector<10x768xf32> to vector<10x32xf32>
    %cst_134 = arith.constant dense<0.000000e+00> : vector<10x10xf32>
    %408 = tpu.matmul %405, %406, %cst_134 {dimension_numbers = #tpu.dot_dimension_numbers<[1], [1], [0], [0], [0, 0, 1, 0], [], []>} : vector<10x32xf32>, vector<10x32xf32>, vector<10x10xf32> -> vector<10x10xf32>
    %cst_135 = arith.constant dense<0xFF800000> : vector<10xf32>
    %409 = vector.multi_reduction <maximumf>, %408, %cst_135 [1] : vector<10x10xf32> to vector<10xf32>
    %410 = vector.shape_cast %409 : vector<10xf32> to vector<10x1xf32>
    %411 = vector.broadcast %410 : vector<10x1xf32> to vector<10x10xf32>
    %412 = arith.subf %408, %411 : vector<10x10xf32>
    %413 = math.exp %412 : vector<10x10xf32>
    %cst_136 = arith.constant dense<0.000000e+00> : vector<10xf32>
    %414 = vector.multi_reduction <add>, %413, %cst_136 [1] : vector<10x10xf32> to vector<10xf32>
    %415 = vector.shape_cast %414 : vector<10xf32> to vector<10x1xf32>
    %416 = vector.broadcast %415 : vector<10x1xf32> to vector<10x10xf32>
    %417 = arith.divf %413, %416 : vector<10x10xf32>
    %cst_137 = arith.constant dense<0.000000e+00> : vector<10x32xf32>
    %418 = tpu.matmul %417, %407, %cst_137 {dimension_numbers = #tpu.dot_dimension_numbers<[1], [0], [0], [1], [0, 0, 1, 1], [], []>} : vector<10x10xf32>, vector<10x32xf32>, vector<10x32xf32> -> vector<10x32xf32>
    %419 = vector.extract_strided_slice %404 {offsets = [0, 32], sizes = [10, 32], strides = [1, 1]} : vector<10x768xf32> to vector<10x32xf32>
    %420 = vector.extract_strided_slice %404 {offsets = [0, 288], sizes = [10, 32], strides = [1, 1]} : vector<10x768xf32> to vector<10x32xf32>
    %421 = vector.extract_strided_slice %404 {offsets = [0, 544], sizes = [10, 32], strides = [1, 1]} : vector<10x768xf32> to vector<10x32xf32>
    %cst_138 = arith.constant dense<0.000000e+00> : vector<10x10xf32>
    %422 = tpu.matmul %419, %420, %cst_138 {dimension_numbers = #tpu.dot_dimension_numbers<[1], [1], [0], [0], [0, 0, 1, 0], [], []>} : vector<10x32xf32>, vector<10x32xf32>, vector<10x10xf32> -> vector<10x10xf32>
    %cst_139 = arith.constant dense<0xFF800000> : vector<10xf32>
    %423 = vector.multi_reduction <maximumf>, %422, %cst_139 [1] : vector<10x10xf32> to vector<10xf32>
    %424 = vector.shape_cast %423 : vector<10xf32> to vector<10x1xf32>
    %425 = vector.broadcast %424 : vector<10x1xf32> to vector<10x10xf32>
    %426 = arith.subf %422, %425 : vector<10x10xf32>
    %427 = math.exp %426 : vector<10x10xf32>
    %cst_140 = arith.constant dense<0.000000e+00> : vector<10xf32>
    %428 = vector.multi_reduction <add>, %427, %cst_140 [1] : vector<10x10xf32> to vector<10xf32>
    %429 = vector.shape_cast %428 : vector<10xf32> to vector<10x1xf32>
    %430 = vector.broadcast %429 : vector<10x1xf32> to vector<10x10xf32>
    %431 = arith.divf %427, %430 : vector<10x10xf32>
    %cst_141 = arith.constant dense<0.000000e+00> : vector<10x32xf32>
    %432 = tpu.matmul %431, %421, %cst_141 {dimension_numbers = #tpu.dot_dimension_numbers<[1], [0], [0], [1], [0, 0, 1, 1], [], []>} : vector<10x10xf32>, vector<10x32xf32>, vector<10x32xf32> -> vector<10x32xf32>
    %433 = vector.extract_strided_slice %404 {offsets = [0, 64], sizes = [10, 32], strides = [1, 1]} : vector<10x768xf32> to vector<10x32xf32>
    %434 = vector.extract_strided_slice %404 {offsets = [0, 320], sizes = [10, 32], strides = [1, 1]} : vector<10x768xf32> to vector<10x32xf32>
    %435 = vector.extract_strided_slice %404 {offsets = [0, 576], sizes = [10, 32], strides = [1, 1]} : vector<10x768xf32> to vector<10x32xf32>
    %cst_142 = arith.constant dense<0.000000e+00> : vector<10x10xf32>
    %436 = tpu.matmul %433, %434, %cst_142 {dimension_numbers = #tpu.dot_dimension_numbers<[1], [1], [0], [0], [0, 0, 1, 0], [], []>} : vector<10x32xf32>, vector<10x32xf32>, vector<10x10xf32> -> vector<10x10xf32>
    %cst_143 = arith.constant dense<0xFF800000> : vector<10xf32>
    %437 = vector.multi_reduction <maximumf>, %436, %cst_143 [1] : vector<10x10xf32> to vector<10xf32>
    %438 = vector.shape_cast %437 : vector<10xf32> to vector<10x1xf32>
    %439 = vector.broadcast %438 : vector<10x1xf32> to vector<10x10xf32>
    %440 = arith.subf %436, %439 : vector<10x10xf32>
    %441 = math.exp %440 : vector<10x10xf32>
    %cst_144 = arith.constant dense<0.000000e+00> : vector<10xf32>
    %442 = vector.multi_reduction <add>, %441, %cst_144 [1] : vector<10x10xf32> to vector<10xf32>
    %443 = vector.shape_cast %442 : vector<10xf32> to vector<10x1xf32>
    %444 = vector.broadcast %443 : vector<10x1xf32> to vector<10x10xf32>
    %445 = arith.divf %441, %444 : vector<10x10xf32>
    %cst_145 = arith.constant dense<0.000000e+00> : vector<10x32xf32>
    %446 = tpu.matmul %445, %435, %cst_145 {dimension_numbers = #tpu.dot_dimension_numbers<[1], [0], [0], [1], [0, 0, 1, 1], [], []>} : vector<10x10xf32>, vector<10x32xf32>, vector<10x32xf32> -> vector<10x32xf32>
    %447 = vector.extract_strided_slice %404 {offsets = [0, 96], sizes = [10, 32], strides = [1, 1]} : vector<10x768xf32> to vector<10x32xf32>
    %448 = vector.extract_strided_slice %404 {offsets = [0, 352], sizes = [10, 32], strides = [1, 1]} : vector<10x768xf32> to vector<10x32xf32>
    %449 = vector.extract_strided_slice %404 {offsets = [0, 608], sizes = [10, 32], strides = [1, 1]} : vector<10x768xf32> to vector<10x32xf32>
    %cst_146 = arith.constant dense<0.000000e+00> : vector<10x10xf32>
    %450 = tpu.matmul %447, %448, %cst_146 {dimension_numbers = #tpu.dot_dimension_numbers<[1], [1], [0], [0], [0, 0, 1, 0], [], []>} : vector<10x32xf32>, vector<10x32xf32>, vector<10x10xf32> -> vector<10x10xf32>
    %cst_147 = arith.constant dense<0xFF800000> : vector<10xf32>
    %451 = vector.multi_reduction <maximumf>, %450, %cst_147 [1] : vector<10x10xf32> to vector<10xf32>
    %452 = vector.shape_cast %451 : vector<10xf32> to vector<10x1xf32>
    %453 = vector.broadcast %452 : vector<10x1xf32> to vector<10x10xf32>
    %454 = arith.subf %450, %453 : vector<10x10xf32>
    %455 = math.exp %454 : vector<10x10xf32>
    %cst_148 = arith.constant dense<0.000000e+00> : vector<10xf32>
    %456 = vector.multi_reduction <add>, %455, %cst_148 [1] : vector<10x10xf32> to vector<10xf32>
    %457 = vector.shape_cast %456 : vector<10xf32> to vector<10x1xf32>
    %458 = vector.broadcast %457 : vector<10x1xf32> to vector<10x10xf32>
    %459 = arith.divf %455, %458 : vector<10x10xf32>
    %cst_149 = arith.constant dense<0.000000e+00> : vector<10x32xf32>
    %460 = tpu.matmul %459, %449, %cst_149 {dimension_numbers = #tpu.dot_dimension_numbers<[1], [0], [0], [1], [0, 0, 1, 1], [], []>} : vector<10x10xf32>, vector<10x32xf32>, vector<10x32xf32> -> vector<10x32xf32>
    %461 = vector.extract_strided_slice %404 {offsets = [0, 128], sizes = [10, 32], strides = [1, 1]} : vector<10x768xf32> to vector<10x32xf32>
    %462 = vector.extract_strided_slice %404 {offsets = [0, 384], sizes = [10, 32], strides = [1, 1]} : vector<10x768xf32> to vector<10x32xf32>
    %463 = vector.extract_strided_slice %404 {offsets = [0, 640], sizes = [10, 32], strides = [1, 1]} : vector<10x768xf32> to vector<10x32xf32>
    %cst_150 = arith.constant dense<0.000000e+00> : vector<10x10xf32>
    %464 = tpu.matmul %461, %462, %cst_150 {dimension_numbers = #tpu.dot_dimension_numbers<[1], [1], [0], [0], [0, 0, 1, 0], [], []>} : vector<10x32xf32>, vector<10x32xf32>, vector<10x10xf32> -> vector<10x10xf32>
    %cst_151 = arith.constant dense<0xFF800000> : vector<10xf32>
    %465 = vector.multi_reduction <maximumf>, %464, %cst_151 [1] : vector<10x10xf32> to vector<10xf32>
    %466 = vector.shape_cast %465 : vector<10xf32> to vector<10x1xf32>
    %467 = vector.broadcast %466 : vector<10x1xf32> to vector<10x10xf32>
    %468 = arith.subf %464, %467 : vector<10x10xf32>
    %469 = math.exp %468 : vector<10x10xf32>
    %cst_152 = arith.constant dense<0.000000e+00> : vector<10xf32>
    %470 = vector.multi_reduction <add>, %469, %cst_152 [1] : vector<10x10xf32> to vector<10xf32>
    %471 = vector.shape_cast %470 : vector<10xf32> to vector<10x1xf32>
    %472 = vector.broadcast %471 : vector<10x1xf32> to vector<10x10xf32>
    %473 = arith.divf %469, %472 : vector<10x10xf32>
    %cst_153 = arith.constant dense<0.000000e+00> : vector<10x32xf32>
    %474 = tpu.matmul %473, %463, %cst_153 {dimension_numbers = #tpu.dot_dimension_numbers<[1], [0], [0], [1], [0, 0, 1, 1], [], []>} : vector<10x10xf32>, vector<10x32xf32>, vector<10x32xf32> -> vector<10x32xf32>
    %475 = vector.extract_strided_slice %404 {offsets = [0, 160], sizes = [10, 32], strides = [1, 1]} : vector<10x768xf32> to vector<10x32xf32>
    %476 = vector.extract_strided_slice %404 {offsets = [0, 416], sizes = [10, 32], strides = [1, 1]} : vector<10x768xf32> to vector<10x32xf32>
    %477 = vector.extract_strided_slice %404 {offsets = [0, 672], sizes = [10, 32], strides = [1, 1]} : vector<10x768xf32> to vector<10x32xf32>
    %cst_154 = arith.constant dense<0.000000e+00> : vector<10x10xf32>
    %478 = tpu.matmul %475, %476, %cst_154 {dimension_numbers = #tpu.dot_dimension_numbers<[1], [1], [0], [0], [0, 0, 1, 0], [], []>} : vector<10x32xf32>, vector<10x32xf32>, vector<10x10xf32> -> vector<10x10xf32>
    %cst_155 = arith.constant dense<0xFF800000> : vector<10xf32>
    %479 = vector.multi_reduction <maximumf>, %478, %cst_155 [1] : vector<10x10xf32> to vector<10xf32>
    %480 = vector.shape_cast %479 : vector<10xf32> to vector<10x1xf32>
    %481 = vector.broadcast %480 : vector<10x1xf32> to vector<10x10xf32>
    %482 = arith.subf %478, %481 : vector<10x10xf32>
    %483 = math.exp %482 : vector<10x10xf32>
    %cst_156 = arith.constant dense<0.000000e+00> : vector<10xf32>
    %484 = vector.multi_reduction <add>, %483, %cst_156 [1] : vector<10x10xf32> to vector<10xf32>
    %485 = vector.shape_cast %484 : vector<10xf32> to vector<10x1xf32>
    %486 = vector.broadcast %485 : vector<10x1xf32> to vector<10x10xf32>
    %487 = arith.divf %483, %486 : vector<10x10xf32>
    %cst_157 = arith.constant dense<0.000000e+00> : vector<10x32xf32>
    %488 = tpu.matmul %487, %477, %cst_157 {dimension_numbers = #tpu.dot_dimension_numbers<[1], [0], [0], [1], [0, 0, 1, 1], [], []>} : vector<10x10xf32>, vector<10x32xf32>, vector<10x32xf32> -> vector<10x32xf32>
    %489 = vector.extract_strided_slice %404 {offsets = [0, 192], sizes = [10, 32], strides = [1, 1]} : vector<10x768xf32> to vector<10x32xf32>
    %490 = vector.extract_strided_slice %404 {offsets = [0, 448], sizes = [10, 32], strides = [1, 1]} : vector<10x768xf32> to vector<10x32xf32>
    %491 = vector.extract_strided_slice %404 {offsets = [0, 704], sizes = [10, 32], strides = [1, 1]} : vector<10x768xf32> to vector<10x32xf32>
    %cst_158 = arith.constant dense<0.000000e+00> : vector<10x10xf32>
    %492 = tpu.matmul %489, %490, %cst_158 {dimension_numbers = #tpu.dot_dimension_numbers<[1], [1], [0], [0], [0, 0, 1, 0], [], []>} : vector<10x32xf32>, vector<10x32xf32>, vector<10x10xf32> -> vector<10x10xf32>
    %cst_159 = arith.constant dense<0xFF800000> : vector<10xf32>
    %493 = vector.multi_reduction <maximumf>, %492, %cst_159 [1] : vector<10x10xf32> to vector<10xf32>
    %494 = vector.shape_cast %493 : vector<10xf32> to vector<10x1xf32>
    %495 = vector.broadcast %494 : vector<10x1xf32> to vector<10x10xf32>
    %496 = arith.subf %492, %495 : vector<10x10xf32>
    %497 = math.exp %496 : vector<10x10xf32>
    %cst_160 = arith.constant dense<0.000000e+00> : vector<10xf32>
    %498 = vector.multi_reduction <add>, %497, %cst_160 [1] : vector<10x10xf32> to vector<10xf32>
    %499 = vector.shape_cast %498 : vector<10xf32> to vector<10x1xf32>
    %500 = vector.broadcast %499 : vector<10x1xf32> to vector<10x10xf32>
    %501 = arith.divf %497, %500 : vector<10x10xf32>
    %cst_161 = arith.constant dense<0.000000e+00> : vector<10x32xf32>
    %502 = tpu.matmul %501, %491, %cst_161 {dimension_numbers = #tpu.dot_dimension_numbers<[1], [0], [0], [1], [0, 0, 1, 1], [], []>} : vector<10x10xf32>, vector<10x32xf32>, vector<10x32xf32> -> vector<10x32xf32>
    %503 = vector.extract_strided_slice %404 {offsets = [0, 224], sizes = [10, 32], strides = [1, 1]} : vector<10x768xf32> to vector<10x32xf32>
    %504 = vector.extract_strided_slice %404 {offsets = [0, 480], sizes = [10, 32], strides = [1, 1]} : vector<10x768xf32> to vector<10x32xf32>
    %505 = vector.extract_strided_slice %404 {offsets = [0, 736], sizes = [10, 32], strides = [1, 1]} : vector<10x768xf32> to vector<10x32xf32>
    %cst_162 = arith.constant dense<0.000000e+00> : vector<10x10xf32>
    %506 = tpu.matmul %503, %504, %cst_162 {dimension_numbers = #tpu.dot_dimension_numbers<[1], [1], [0], [0], [0, 0, 1, 0], [], []>} : vector<10x32xf32>, vector<10x32xf32>, vector<10x10xf32> -> vector<10x10xf32>
    %cst_163 = arith.constant dense<0xFF800000> : vector<10xf32>
    %507 = vector.multi_reduction <maximumf>, %506, %cst_163 [1] : vector<10x10xf32> to vector<10xf32>
    %508 = vector.shape_cast %507 : vector<10xf32> to vector<10x1xf32>
    %509 = vector.broadcast %508 : vector<10x1xf32> to vector<10x10xf32>
    %510 = arith.subf %506, %509 : vector<10x10xf32>
    %511 = math.exp %510 : vector<10x10xf32>
    %cst_164 = arith.constant dense<0.000000e+00> : vector<10xf32>
    %512 = vector.multi_reduction <add>, %511, %cst_164 [1] : vector<10x10xf32> to vector<10xf32>
    %513 = vector.shape_cast %512 : vector<10xf32> to vector<10x1xf32>
    %514 = vector.broadcast %513 : vector<10x1xf32> to vector<10x10xf32>
    %515 = arith.divf %511, %514 : vector<10x10xf32>
    %cst_165 = arith.constant dense<0.000000e+00> : vector<10x32xf32>
    %516 = tpu.matmul %515, %505, %cst_165 {dimension_numbers = #tpu.dot_dimension_numbers<[1], [0], [0], [1], [0, 0, 1, 1], [], []>} : vector<10x10xf32>, vector<10x32xf32>, vector<10x32xf32> -> vector<10x32xf32>
    %517 = tpu.concatenate %418, %432, %446, %460, %474, %488, %502, %516 in 1 : vector<10x32xf32>, vector<10x32xf32>, vector<10x32xf32>, vector<10x32xf32>, vector<10x32xf32>, vector<10x32xf32>, vector<10x32xf32>, vector<10x32xf32> -> vector<10x256xf32>
    %518 = arith.truncf %517 : vector<10x256xf32> to vector<10x256xbf16>
    %cst_166 = arith.constant dense<0.000000e+00> : vector<10x256xf32>
    %519 = tpu.matmul %518, %378, %cst_166 {dimension_numbers = #tpu.dot_dimension_numbers<[1], [0], [0], [1], [0, 0, 1, 1], [], []>} : vector<10x256xbf16>, vector<256x256xbf16>, vector<10x256xf32> -> vector<10x256xf32>
    %520 = vector.broadcast %379 : vector<1x256xf32> to vector<10x256xf32>
    %521 = arith.addf %519, %520 : vector<10x256xf32>
    %522 = arith.addf %402, %521 : vector<10x256xf32>
    %523 = vector.extract_strided_slice %522 {offsets = [0, 0], sizes = [8, 256], strides = [1, 1]} : vector<10x256xf32> to vector<8x256xf32>
    %c8 = arith.constant 8 : index
    %c0_167 = arith.constant 0 : index
    %524 = vector.load %arg1[%c8, %c0_167] : memref<24x256xf32, #tpu.memory_space<vmem>>, vector<1x256xf32>
    %525 = arith.mulf %1, %1 : vector<8x256xf32>
    %cst_168 = arith.constant dense<0.000000e+00> : vector<8xf32>
    %526 = vector.multi_reduction <add>, %525, %cst_168 [1] : vector<8x256xf32> to vector<8xf32>
    %527 = vector.shape_cast %526 : vector<8xf32> to vector<8x1xf32>
    %cst_169 = arith.constant 2.560000e+02 : f32
    %528 = vector.broadcast %cst_169 : f32 to vector<8x1xf32>
    %529 = arith.divf %527, %528 : vector<8x1xf32>
    %cst_170 = arith.constant 9.99999997E-7 : f32
    %530 = vector.broadcast %cst_170 : f32 to vector<8x1xf32>
    %531 = arith.addf %529, %530 : vector<8x1xf32>
    %532 = math.rsqrt %531 : vector<8x1xf32>
    %533 = vector.broadcast %532 : vector<8x1xf32> to vector<8x256xf32>
    %534 = arith.mulf %1, %533 : vector<8x256xf32>
    %535 = vector.broadcast %524 : vector<1x256xf32> to vector<8x256xf32>
    %536 = arith.mulf %534, %535 : vector<8x256xf32>
    %c0_171 = arith.constant 0 : index
    %c2048 = arith.constant 2048 : index
    %537 = vector.load %arg6[%c0_171, %c2048] : memref<256x2560xbf16, #tpu.memory_space<vmem>>, vector<256x256xbf16>
    %538 = arith.truncf %536 : vector<8x256xf32> to vector<8x256xbf16>
    %cst_172 = arith.constant dense<0.000000e+00> : vector<8x256xf32>
    %539 = tpu.matmul %538, %537, %cst_172 {dimension_numbers = #tpu.dot_dimension_numbers<[1], [0], [0], [1], [0, 0, 1, 1], [], []>} : vector<8x256xbf16>, vector<256x256xbf16>, vector<8x256xf32> -> vector<8x256xf32>
    %c10 = arith.constant 10 : index
    %c0_173 = arith.constant 0 : index
    %540 = vector.load %arg1[%c10, %c0_173] : memref<24x256xf32, #tpu.memory_space<vmem>>, vector<1x256xf32>
    %541 = vector.broadcast %540 : vector<1x256xf32> to vector<8x256xf32>
    %542 = arith.addf %539, %541 : vector<8x256xf32>
    %cst_174 = arith.constant 0.000000e+00 : f32
    %543 = vector.broadcast %cst_174 : f32 to vector<8x256xf32>
    %544 = arith.cmpf ogt, %542, %543 : vector<8x256xf32>
    %545 = math.exp %542 : vector<8x256xf32>
    %cst_175 = arith.constant 1.000000e+00 : f32
    %546 = vector.broadcast %cst_175 : f32 to vector<8x256xf32>
    %547 = arith.subf %545, %546 : vector<8x256xf32>
    %548 = arith.select %544, %542, %547 : vector<8x256xi1>, vector<8x256xf32>
    %c9 = arith.constant 9 : index
    %c0_176 = arith.constant 0 : index
    %549 = vector.load %arg1[%c9, %c0_176] : memref<24x256xf32, #tpu.memory_space<vmem>>, vector<1x256xf32>
    %550 = arith.mulf %2, %2 : vector<8x256xf32>
    %cst_177 = arith.constant dense<0.000000e+00> : vector<8xf32>
    %551 = vector.multi_reduction <add>, %550, %cst_177 [1] : vector<8x256xf32> to vector<8xf32>
    %552 = vector.shape_cast %551 : vector<8xf32> to vector<8x1xf32>
    %cst_178 = arith.constant 2.560000e+02 : f32
    %553 = vector.broadcast %cst_178 : f32 to vector<8x1xf32>
    %554 = arith.divf %552, %553 : vector<8x1xf32>
    %cst_179 = arith.constant 9.99999997E-7 : f32
    %555 = vector.broadcast %cst_179 : f32 to vector<8x1xf32>
    %556 = arith.addf %554, %555 : vector<8x1xf32>
    %557 = math.rsqrt %556 : vector<8x1xf32>
    %558 = vector.broadcast %557 : vector<8x1xf32> to vector<8x256xf32>
    %559 = arith.mulf %2, %558 : vector<8x256xf32>
    %560 = vector.broadcast %549 : vector<1x256xf32> to vector<8x256xf32>
    %561 = arith.mulf %559, %560 : vector<8x256xf32>
    %c0_180 = arith.constant 0 : index
    %c2304 = arith.constant 2304 : index
    %562 = vector.load %arg6[%c0_180, %c2304] : memref<256x2560xbf16, #tpu.memory_space<vmem>>, vector<256x256xbf16>
    %563 = arith.truncf %561 : vector<8x256xf32> to vector<8x256xbf16>
    %cst_181 = arith.constant dense<0.000000e+00> : vector<8x256xf32>
    %564 = tpu.matmul %563, %562, %cst_181 {dimension_numbers = #tpu.dot_dimension_numbers<[1], [0], [0], [1], [0, 0, 1, 1], [], []>} : vector<8x256xbf16>, vector<256x256xbf16>, vector<8x256xf32> -> vector<8x256xf32>
    %c11 = arith.constant 11 : index
    %c0_182 = arith.constant 0 : index
    %565 = vector.load %arg1[%c11, %c0_182] : memref<24x256xf32, #tpu.memory_space<vmem>>, vector<1x256xf32>
    %566 = vector.broadcast %565 : vector<1x256xf32> to vector<8x256xf32>
    %567 = arith.addf %564, %566 : vector<8x256xf32>
    %cst_183 = arith.constant 0.000000e+00 : f32
    %568 = vector.broadcast %cst_183 : f32 to vector<8x256xf32>
    %569 = arith.cmpf ogt, %567, %568 : vector<8x256xf32>
    %570 = math.exp %567 : vector<8x256xf32>
    %cst_184 = arith.constant 1.000000e+00 : f32
    %571 = vector.broadcast %cst_184 : f32 to vector<8x256xf32>
    %572 = arith.subf %570, %571 : vector<8x256xf32>
    %573 = arith.select %569, %567, %572 : vector<8x256xi1>, vector<8x256xf32>
    %cst_185 = arith.constant dense<0.000000e+00> : vector<256xf32>
    %574 = vector.multi_reduction <add>, %573, %cst_185 [0] : vector<8x256xf32> to vector<256xf32>
    %575 = vector.shape_cast %574 : vector<256xf32> to vector<1x256xf32>
    %cst_186 = arith.constant 8.000000e+00 : f32
    %576 = vector.broadcast %cst_186 : f32 to vector<1x256xf32>
    %577 = arith.divf %575, %576 : vector<1x256xf32>
    %578 = vector.broadcast %577 : vector<1x256xf32> to vector<8x256xf32>
    %579 = arith.addf %548, %578 : vector<8x256xf32>
    %580 = arith.addf %222, %523 : vector<8x256xf32>
    %581 = arith.addf %580, %579 : vector<8x256xf32>
    %582 = arith.addf %581, %1 : vector<8x256xf32>
    %c0_187 = arith.constant 0 : index
    %c0_188 = arith.constant 0 : index
    %583 = vector.load %arg4[%c0_187, %c0_188] : memref<8x256xf32, #tpu.memory_space<vmem>>, vector<8x256xf32>
    tpu.vector_store %arg4[%c0_187, %c0_188], %582 {strides = array<i32>} : memref<8x256xf32, #tpu.memory_space<vmem>>, vector<8x256xf32>,
    return
  }
}

</mosaic_0001>

<llo_original>
// kernel: mome_forward.1
$region0: #{mome_forward.1}
  #allocation0 [shape = 'u32[]', space=smem, size = 0x4, offset = 0x4, fixed_abs, tag = 'smem constant byte address 0x4 - core index']
  #allocation1 [shape = 'u32[144,128]{1,0:T(1,128)}', space=vmem, size = 0x12000, scoped, tag = 'internal scratch']
  #allocation2 [shape = 'bf16[256,2560]{1,0:T(16,128)(2,1)}', space=vmem, size = 0x140000, scoped, tag = 'scratch operand']
  #allocation3 [shape = 's32[1]{0}', space=sflag, size = 0x4, scoped, tag = 'scratch operand']
  #allocation10 [shape = 's32[]', space=sflag, size = 0x4, offset = 0, fixed_abs, tag = 'sflag constant byte address 0x0 - dummy sync flag']
  %s0 = inlined_call_operand.vmem [shape: f32[16,256], index: 0, kind: input, shape index: {}]
  %s1 = inlined_call_operand.hbm [shape: f32[24,256], index: 1, kind: input, shape index: {}]
  %s2 = inlined_call_operand.hbm [shape: bf16[256,1664], index: 2, kind: input, shape index: {}]
  %s3 = inlined_call_operand.hbm [shape: bf16[256,2560], index: 3, kind: input, shape index: {}]
  %s4 = inlined_call_operand.hbm [shape: f32[8,256], index: 4, kind: output, shape index: {0}]
  %s5 = inlined_call_operand.vmem [shape: f32[8,128], index: 5, kind: output, shape index: {1}]
  %6 = xla_tuple %s4, %s5
  %s7 = sld [smem:[#allocation0]]
  $region38: #{mome_forward.1} parent=0
    _
  %s9 = ssub.s32 1, %s7
  %s10 = scalar_select 0, %s9, %s7
  $region1: #{mome_forward.1} parent=0
    #allocation4 [shape = 'u8[24576]{0}', space=vmem, size = 0x6000, scoped, tag = 'input window, operand 1, single buffered']
    #allocation5 [shape = 's32[1]{0}', space=sflag, size = 0x4, scoped, tag = 'scoped memory for mome_forward.1']
    #allocation6 [shape = 's32[1]{0}', space=sflag, size = 0x4, scoped, tag = 'scoped memory for mome_forward.1']
    #allocation7 [shape = 'u8[851968]{0}', space=vmem, size = 0xd0000, scoped, tag = 'input window, operand 2, single buffered']
    #allocation8 [shape = 's32[1]{0}', space=sflag, size = 0x4, scoped, tag = 'scoped memory for mome_forward.1']
    #allocation9 [shape = 'u8[8192]{0}', space=vmem, size = 0x2000, scoped, tag = 'output window, operand 0, single buffered']
    #allocation11 [shape = 'u32[9]{0}', space=smem, size = 0x24, scoped, tag = 'DMA stride descriptor']
    %11 = vsyncpa [#allocation5], 0
    %12 = vsyncpa [#allocation8], 0
    %13 = vsyncpa [#allocation6], 0
    // Predicated region
    $region2: #{mome_forward.1} parent=1 // pred_check
      _
    $region3: #{mome_forward.1} parent=1 // pred_check_branch
      %15 = sbr.rel (0) target = $region5
    $region4: #{mome_forward.1} parent=1 // pred_region
      _
    $region5: #{mome_forward.1} parent=1 // pred_fallthru
      _
    // Predicated region
    $region6: #{mome_forward.1} parent=1 // pred_check
      _
    $region7: #{mome_forward.1} parent=1 // pred_check_branch
      %17 = sbr.rel (0) target = $region9
    $region8: #{mome_forward.1} parent=1 // pred_region
      %s19 = ssub.s32 768, 768
      %20 = vsyncadd [#allocation5], %s19
      %s21 = sshll.u32 [#allocation4], 4
      %s22 = int_to_ptr.vmem [resolvable:$true] %s21
      %27 = dma.hbm_to_vmem [thread:$0]  %s1, 768, %s22, [#allocation5], 256, 256, 16
    $region9: #{mome_forward.1} parent=1 // pred_fallthru
      _
    // Predicated region
    $region10: #{mome_forward.1} parent=1 // pred_check
      _
    $region11: #{mome_forward.1} parent=1 // pred_check_branch
      %29 = sbr.rel (0) target = $region13
    $region12: #{mome_forward.1} parent=1 // pred_region
      %s31 = ssub.s32 26624, 26624
      %32 = vsyncadd [#allocation8], %s31
      %s33 = sshll.u32 [#allocation7], 4
      %s34 = int_to_ptr.vmem [resolvable:$true] %s33
      %39 = dma.hbm_to_vmem [thread:$0]  %s2, 26624, %s34, [#allocation8], 832, 832, 52
    $region13: #{mome_forward.1} parent=1 // pred_fallthru
      _
    // Predicated region
    $region14: #{mome_forward.1} parent=1 // pred_check
      _
    $region15: #{mome_forward.1} parent=1 // pred_check_branch
      %41 = sbr.rel (0) target = $region17
    $region16: #{mome_forward.1} parent=1 // pred_region
      %42 = dma.done [#allocation5], 768
    $region17: #{mome_forward.1} parent=1 // pred_fallthru
      _
    // Predicated region
    $region18: #{mome_forward.1} parent=1 // pred_check
      _
    $region19: #{mome_forward.1} parent=1 // pred_check_branch
      %44 = sbr.rel (0) target = $region21
    $region20: #{mome_forward.1} parent=1 // pred_region
      %45 = dma.done [#allocation8], 26624
    $region21: #{mome_forward.1} parent=1 // pred_fallthru
      _
    %s48 = sshll.u32 1, 14
    %s49 = sxor.u32 4294967295, %s48
    %s51 = sld [smem:[#allocation0]]
    %s52 = sadd.s32 2, %s51
    %s54 = sshll.u32 7, 26
    %s55 = sxor.u32 4294967295, %s54
    %s56 = sand.u32 0, %s55
    %s57 = sshll.u32 %s52, 26
    %s58 = sor.u32 %s56, %s57
    %s59 = sshll.u32 [#allocation2], 4
    %s60 = int_to_ptr.vmem [resolvable:$true] %s59
    %63 = sst [smem:[#allocation11]] 2560
    %s64 = scalar_lea.smem [#allocation11], 1
    %65 = sst [smem:[%s64]] 2560
    %s66 = scalar_lea.smem [#allocation11], 2
    %67 = sst [smem:[%s66]] 20
    %s68 = scalar_lea.smem [#allocation11], 3
    %69 = sst [smem:[%s68]] 64
    %s70 = scalar_lea.smem [#allocation11], 4
    %71 = sst [smem:[%s70]] 128
    %s72 = scalar_lea.smem [#allocation11], 5
    %73 = sst [smem:[%s72]] 2
    %s74 = scalar_lea.smem [#allocation11], 6
    %75 = sst [smem:[%s74]] 1280
    %s76 = scalar_lea.smem [#allocation11], 7
    %77 = sst [smem:[%s76]] 64
    %s78 = scalar_lea.smem [#allocation11], 8
    %79 = sst [smem:[%s78]] 4
    %81 = dma.general %s3, 40960, %s60, [#allocation3], [#allocation10], [#allocation11], %s58, 0
    %v82 = vld [vmem:[%s0] sm:$0xff]
    %v83 = vld [vmem:[%s0 + $0x8] sm:$0xff]
    %v84 = vld [vmem:[%s0 + $0x10] sm:$0xff]
    %v85 = vld [vmem:[%s0 + $0x18] sm:$0xff]
    %v86 = vld [vmem:[#allocation7] sm:$0xff]
    %v87 = vld [vmem:[#allocation7 + $0x34] sm:$0xff]
    %v88 = vld [vmem:[#allocation7 + $0x68] sm:$0xff]
    %v89 = vld [vmem:[#allocation7 + $0x9c] sm:$0xff]
    %v90 = vld [vmem:[#allocation7 + $0xd0] sm:$0xff]
    %v91 = vld [vmem:[#allocation7 + $0x104] sm:$0xff]
    %v92 = vld [vmem:[#allocation7 + $0x138] sm:$0xff]
    %v93 = vld [vmem:[#allocation7 + $0x16c] sm:$0xff]
    %v94 = vld [vmem:[#allocation7 + $0x1a0] sm:$0xff]
    %v95 = vld [vmem:[#allocation7 + $0x1d4] sm:$0xff]
    %v96 = vld [vmem:[#allocation7 + $0x208] sm:$0xff]
    %v97 = vld [vmem:[#allocation7 + $0x23c] sm:$0xff]
    %v98 = vld [vmem:[#allocation7 + $0x270] sm:$0xff]
    %v99 = vld [vmem:[#allocation7 + $0x2a4] sm:$0xff]
    %v100 = vld [vmem:[#allocation7 + $0x2d8] sm:$0xff]
    %v101 = vld [vmem:[#allocation7 + $0x30c] sm:$0xff]
    %v102 = vld [vmem:[#allocation7 + $0x340] sm:$0xff]
    %v103 = vld [vmem:[#allocation7 + $0x374] sm:$0xff]
    %v104 = vld [vmem:[#allocation7 + $0x3a8] sm:$0xff]
    %v105 = vld [vmem:[#allocation7 + $0x3dc] sm:$0xff]
    %v106 = vld [vmem:[#allocation7 + $0x410] sm:$0xff]
    %v107 = vld [vmem:[#allocation7 + $0x444] sm:$0xff]
    %v108 = vld [vmem:[#allocation7 + $0x478] sm:$0xff]
    %v109 = vld [vmem:[#allocation7 + $0x4ac] sm:$0xff]
    %v110 = vld [vmem:[#allocation7 + $0x4e0] sm:$0xff]
    %v111 = vld [vmem:[#allocation7 + $0x514] sm:$0xff]
    %v112 = vld [vmem:[#allocation7 + $0x548] sm:$0xff]
    %v113 = vld [vmem:[#allocation7 + $0x57c] sm:$0xff]
    %v114 = vld [vmem:[#allocation7 + $0x5b0] sm:$0xff]
    %v115 = vld [vmem:[#allocation7 + $0x5e4] sm:$0xff]
    %v116 = vld [vmem:[#allocation7 + $0x618] sm:$0xff]
    %v117 = vld [vmem:[#allocation7 + $0x64c] sm:$0xff]
    %v118 = vpack.c.bf16 %v82, %v82
    %v119 = vpack.c.bf16 %v83, %v83
    %s120 = scalar_lea.vmem [#allocation4], 20
    %v121 = vld [vmem:[%s120] ss:$8 sm:$0x3]
    %v123 = vlaneseq
    %v124 = vshrl.u32 %v123, 7
    %v125 = vsub.s32 0, %v124
    %v126 = vrot.slane %v121, %v125
    %v127 = vlaneseq
    %v128 = vshrl.u32 %v127, 7
    %v129 = vsub.s32 1, %v128
    %v130 = vrot.slane %v121, %v129
    %v165 = vunpack.c.l.b16 %v86
    %v166 = vunpack.c.h.b16 %v86
    %v167 = vunpack.c.l.b16 %v87
    %v168 = vunpack.c.h.b16 %v87
    %v169 = vunpack.c.l.b16 %v88
    %v170 = vunpack.c.h.b16 %v88
    %v171 = vunpack.c.l.b16 %v89
    %v172 = vunpack.c.h.b16 %v89
    %v173 = vunpack.c.l.b16 %v90
    %v174 = vunpack.c.h.b16 %v90
    %v175 = vunpack.c.l.b16 %v91
    %v176 = vunpack.c.h.b16 %v91
    %v177 = vunpack.c.l.b16 %v92
    %v178 = vunpack.c.h.b16 %v92
    %v179 = vunpack.c.l.b16 %v93
    %v180 = vunpack.c.h.b16 %v93
    %v181 = vunpack.c.l.b16 %v94
    %v182 = vunpack.c.h.b16 %v94
    %v183 = vunpack.c.l.b16 %v95
    %v184 = vunpack.c.h.b16 %v95
    %v185 = vunpack.c.l.b16 %v96
    %v186 = vunpack.c.h.b16 %v96
    %v187 = vunpack.c.l.b16 %v97
    %v188 = vunpack.c.h.b16 %v97
    %v189 = vunpack.c.l.b16 %v98
    %v190 = vunpack.c.h.b16 %v98
    %v191 = vunpack.c.l.b16 %v99
    %v192 = vunpack.c.h.b16 %v99
    %v193 = vunpack.c.l.b16 %v100
    %v194 = vunpack.c.h.b16 %v100
    %v195 = vunpack.c.l.b16 %v101
    %v196 = vunpack.c.h.b16 %v101
    %v197 = vunpack.c.l.b16 %v102
    %v198 = vunpack.c.h.b16 %v102
    %v199 = vunpack.c.l.b16 %v103
    %v200 = vunpack.c.h.b16 %v103
    %v201 = vunpack.c.l.b16 %v104
    %v202 = vunpack.c.h.b16 %v104
    %v203 = vunpack.c.l.b16 %v105
    %v204 = vunpack.c.h.b16 %v105
    %v205 = vunpack.c.l.b16 %v106
    %v206 = vunpack.c.h.b16 %v106
    %v207 = vunpack.c.l.b16 %v107
    %v208 = vunpack.c.h.b16 %v107
    %v209 = vunpack.c.l.b16 %v108
    %v210 = vunpack.c.h.b16 %v108
    %v211 = vunpack.c.l.b16 %v109
    %v212 = vunpack.c.h.b16 %v109
    %v213 = vunpack.c.l.b16 %v110
    %v214 = vunpack.c.h.b16 %v110
    %v215 = vunpack.c.l.b16 %v111
    %v216 = vunpack.c.h.b16 %v111
    %v217 = vunpack.c.l.b16 %v112
    %v218 = vunpack.c.h.b16 %v112
    %v219 = vunpack.c.l.b16 %v113
    %v220 = vunpack.c.h.b16 %v113
    %v221 = vunpack.c.l.b16 %v114
    %v222 = vunpack.c.h.b16 %v114
    %v223 = vunpack.c.l.b16 %v115
    %v224 = vunpack.c.h.b16 %v115
    %v225 = vunpack.c.l.b16 %v116
    %v226 = vunpack.c.h.b16 %v116
    %v227 = vunpack.c.l.b16 %v117
    %v228 = vunpack.c.h.b16 %v117
    %v229 = vpack.c.b16 %v167, %v165
    %v230 = vpack.c.b16 %v168, %v166
    %v231 = vpack.c.b16 %v171, %v169
    %v232 = vpack.c.b16 %v172, %v170
    %v233 = vpack.c.b16 %v175, %v173
    %v234 = vpack.c.b16 %v176, %v174
    %v235 = vpack.c.b16 %v179, %v177
    %v236 = vpack.c.b16 %v180, %v178
    %v237 = vpack.c.b16 %v183, %v181
    %v238 = vpack.c.b16 %v184, %v182
    %v239 = vpack.c.b16 %v187, %v185
    %v240 = vpack.c.b16 %v188, %v186
    %v241 = vpack.c.b16 %v191, %v189
    %v242 = vpack.c.b16 %v192, %v190
    %v243 = vpack.c.b16 %v195, %v193
    %v244 = vpack.c.b16 %v196, %v194
    %v245 = vpack.c.b16 %v199, %v197
    %v246 = vpack.c.b16 %v200, %v198
    %v247 = vpack.c.b16 %v203, %v201
    %v248 = vpack.c.b16 %v204, %v202
    %v249 = vpack.c.b16 %v207, %v205
    %v250 = vpack.c.b16 %v208, %v206
    %v251 = vpack.c.b16 %v211, %v209
    %v252 = vpack.c.b16 %v212, %v210
    %v253 = vpack.c.b16 %v215, %v213
    %v254 = vpack.c.b16 %v216, %v214
    %v255 = vpack.c.b16 %v219, %v217
    %v256 = vpack.c.b16 %v220, %v218
    %v257 = vpack.c.b16 %v223, %v221
    %v258 = vpack.c.b16 %v224, %v222
    %v259 = vpack.c.b16 %v227, %v225
    %v260 = vpack.c.b16 %v228, %v226
    %293 = vmatprep.subr.bf16.mxu0 %v230
    %294 = vmatpush1.bf16.msra.mxu0 %v229
    %295 = vmatprep.subr.bf16.mxu0 %v232
    %296 = vmatpush1.bf16.msra.mxu0 %v231
    %297 = vmatprep.subr.bf16.mxu0 %v234
    %298 = vmatpush1.bf16.msra.mxu0 %v233
    %299 = vmatprep.subr.bf16.mxu0 %v236
    %300 = vmatpush1.bf16.msra.mxu0 %v235
    %301 = vmatprep.subr.bf16.mxu0 %v238
    %302 = vmatpush1.bf16.msra.mxu0 %v237
    %303 = vmatprep.subr.bf16.mxu0 %v240
    %304 = vmatpush1.bf16.msra.mxu0 %v239
    %305 = vmatprep.subr.bf16.mxu0 %v242
    %306 = vmatpush1.bf16.msra.mxu0 %v241
    %307 = vmatprep.subr.bf16.mxu0 %v244
    %308 = vmatpush1.bf16.msra.mxu0 %v243
    %309 = vmatprep.subr.bf16.mxu0 %v246
    %310 = vmatpush1.bf16.msra.mxu0 %v245
    %311 = vmatprep.subr.bf16.mxu0 %v248
    %312 = vmatpush1.bf16.msra.mxu0 %v247
    %313 = vmatprep.subr.bf16.mxu0 %v250
    %314 = vmatpush1.bf16.msra.mxu0 %v249
    %315 = vmatprep.subr.bf16.mxu0 %v252
    %316 = vmatpush1.bf16.msra.mxu0 %v251
    %317 = vmatprep.subr.bf16.mxu0 %v254
    %318 = vmatpush1.bf16.msra.mxu0 %v253
    %319 = vmatprep.subr.bf16.mxu0 %v256
    %320 = vmatpush1.bf16.msra.mxu0 %v255
    %321 = vmatprep.subr.bf16.mxu0 %v258
    %322 = vmatpush1.bf16.msra.mxu0 %v257
    %323 = vmatprep.subr.bf16.mxu0 %v260
    %324 = vmatpush1.bf16.msra.mxu0 %v259
    %325 = vmatprep.mubr.bf16.mxu0 %v119
    %326 = vmatmul.mubr.bf16.gmra.mrb[0].mxu0 %v118
    %v327 = vpop.f32.mrb[0].mxu0
    %v328 = vadd.f32 %v126, %v327
    %v329 = vpop.f32.mrb[0].mxu0
    %v330 = vadd.f32 %v130, %v329
    %v331 = vpop.f32.mrb[0].mxu0
    %v332 = vpop.f32.mrb[0].mxu0
    %333 = vdwg.mxu0
    %s334 = scalar_lea.vmem [#allocation4], 21
    %v335 = vld [vmem:[%s334] ss:$8 sm:$0x3]
    %v336 = vmul.f32 %v328, %v328
    %v337 = vmul.f32 %v330, %v330
    %v338 = vadd.f32 %v336, %v337
    %339 = vadd.xlane.f32.xlu0 %v338
    %v340 = vpop.xlane.xlu0 %339
    %v341 = vrcp.pop 256.0
    %v342 = vmul.f32 %v340, %v341
    %v343 = vadd.f32 %v342, 1e-06
    %v344 = vrsqrt.pop %v343
    %v345 = vmul.f32 %v328, %v344
    %v346 = vmul.f32 %v330, %v344
    %v348 = vlaneseq
    %v349 = vshrl.u32 %v348, 7
    %v350 = vsub.s32 0, %v349
    %v351 = vrot.slane %v335, %v350
    %v352 = vlaneseq
    %v353 = vshrl.u32 %v352, 7
    %v354 = vsub.s32 1, %v353
    %v355 = vrot.slane %v335, %v354
    %v358 = vmul.f32 %v345, %v351
    %v359 = vmul.f32 %v346, %v355
    %v360 = vmul.f32 %v358, 0.5
    %v361 = vmul.f32 %v359, 0.5
    %v362 = vmul.f32 %v358, 0.70710677
    %v363 = vmul.f32 %v359, 0.70710677
    %v364 = verf.f32.pop %v362
    %v365 = verf.f32.pop %v363
    %v366 = vadd.f32 %v364, 1.0
    %v367 = vadd.f32 %v365, 1.0
    %v368 = vmul.f32 %v360, %v366
    %v369 = vmul.f32 %v361, %v367
    %v370 = vld [vmem:[#allocation7 + $0x8] sm:$0xff]
    %v371 = vld [vmem:[#allocation7 + $0x3c] sm:$0xff]
    %v372 = vld [vmem:[#allocation7 + $0x70] sm:$0xff]
    %v373 = vld [vmem:[#allocation7 + $0xa4] sm:$0xff]
    %v374 = vld [vmem:[#allocation7 + $0xd8] sm:$0xff]
    %v375 = vld [vmem:[#allocation7 + $0x10c] sm:$0xff]
    %v376 = vld [vmem:[#allocation7 + $0x140] sm:$0xff]
    %v377 = vld [vmem:[#allocation7 + $0x174] sm:$0xff]
    %v378 = vld [vmem:[#allocation7 + $0x1a8] sm:$0xff]
    %v379 = vld [vmem:[#allocation7 + $0x1dc] sm:$0xff]
    %v380 = vld [vmem:[#allocation7 + $0x210] sm:$0xff]
    %v381 = vld [vmem:[#allocation7 + $0x244] sm:$0xff]
    %v382 = vld [vmem:[#allocation7 + $0x278] sm:$0xff]
    %v383 = vld [vmem:[#allocation7 + $0x2ac] sm:$0xff]
    %v384 = vld [vmem:[#allocation7 + $0x2e0] sm:$0xff]
    %v385 = vld [vmem:[#allocation7 + $0x314] sm:$0xff]
    %v386 = vld [vmem:[#allocation7 + $0x348] sm:$0xff]
    %v387 = vld [vmem:[#allocation7 + $0x37c] sm:$0xff]
    %v388 = vld [vmem:[#allocation7 + $0x3b0] sm:$0xff]
    %v389 = vld [vmem:[#allocation7 + $0x3e4] sm:$0xff]
    %v390 = vld [vmem:[#allocation7 + $0x418] sm:$0xff]
    %v391 = vld [vmem:[#allocation7 + $0x44c] sm:$0xff]
    %v392 = vld [vmem:[#allocation7 + $0x480] sm:$0xff]
    %v393 = vld [vmem:[#allocation7 + $0x4b4] sm:$0xff]
    %v394 = vld [vmem:[#allocation7 + $0x4e8] sm:$0xff]
    %v395 = vld [vmem:[#allocation7 + $0x51c] sm:$0xff]
    %v396 = vld [vmem:[#allocation7 + $0x550] sm:$0xff]
    %v397 = vld [vmem:[#allocation7 + $0x584] sm:$0xff]
    %v398 = vld [vmem:[#allocation7 + $0x5b8] sm:$0xff]
    %v399 = vld [vmem:[#allocation7 + $0x5ec] sm:$0xff]
    %v400 = vld [vmem:[#allocation7 + $0x620] sm:$0xff]
    %v401 = vld [vmem:[#allocation7 + $0x654] sm:$0xff]
    %v402 = vpack.c.bf16 %v84, %v84
    %v403 = vpack.c.bf16 %v85, %v85
    %s404 = scalar_lea.vmem [#allocation4], 22
    %v405 = vld [vmem:[%s404] ss:$8 sm:$0x3]
    %v407 = vlaneseq
    %v408 = vshrl.u32 %v407, 7
    %v409 = vsub.s32 0, %v408
    %v410 = vrot.slane %v405, %v409
    %v411 = vlaneseq
    %v412 = vshrl.u32 %v411, 7
    %v413 = vsub.s32 1, %v412
    %v414 = vrot.slane %v405, %v413
    %v449 = vunpack.c.l.b16 %v370
    %v450 = vunpack.c.h.b16 %v370
    %v451 = vunpack.c.l.b16 %v371
    %v452 = vunpack.c.h.b16 %v371
    %v453 = vunpack.c.l.b16 %v372
    %v454 = vunpack.c.h.b16 %v372
    %v455 = vunpack.c.l.b16 %v373
    %v456 = vunpack.c.h.b16 %v373
    %v457 = vunpack.c.l.b16 %v374
    %v458 = vunpack.c.h.b16 %v374
    %v459 = vunpack.c.l.b16 %v375
    %v460 = vunpack.c.h.b16 %v375
    %v461 = vunpack.c.l.b16 %v376
    %v462 = vunpack.c.h.b16 %v376
    %v463 = vunpack.c.l.b16 %v377
    %v464 = vunpack.c.h.b16 %v377
    %v465 = vunpack.c.l.b16 %v378
    %v466 = vunpack.c.h.b16 %v378
    %v467 = vunpack.c.l.b16 %v379
    %v468 = vunpack.c.h.b16 %v379
    %v469 = vunpack.c.l.b16 %v380
    %v470 = vunpack.c.h.b16 %v380
    %v471 = vunpack.c.l.b16 %v381
    %v472 = vunpack.c.h.b16 %v381
    %v473 = vunpack.c.l.b16 %v382
    %v474 = vunpack.c.h.b16 %v382
    %v475 = vunpack.c.l.b16 %v383
    %v476 = vunpack.c.h.b16 %v383
    %v477 = vunpack.c.l.b16 %v384
    %v478 = vunpack.c.h.b16 %v384
    %v479 = vunpack.c.l.b16 %v385
    %v480 = vunpack.c.h.b16 %v385
    %v481 = vunpack.c.l.b16 %v386
    %v482 = vunpack.c.h.b16 %v386
    %v483 = vunpack.c.l.b16 %v387
    %v484 = vunpack.c.h.b16 %v387
    %v485 = vunpack.c.l.b16 %v388
    %v486 = vunpack.c.h.b16 %v388
    %v487 = vunpack.c.l.b16 %v389
    %v488 = vunpack.c.h.b16 %v389
    %v489 = vunpack.c.l.b16 %v390
    %v490 = vunpack.c.h.b16 %v390
    %v491 = vunpack.c.l.b16 %v391
    %v492 = vunpack.c.h.b16 %v391
    %v493 = vunpack.c.l.b16 %v392
    %v494 = vunpack.c.h.b16 %v392
    %v495 = vunpack.c.l.b16 %v393
    %v496 = vunpack.c.h.b16 %v393
    %v497 = vunpack.c.l.b16 %v394
    %v498 = vunpack.c.h.b16 %v394
    %v499 = vunpack.c.l.b16 %v395
    %v500 = vunpack.c.h.b16 %v395
    %v501 = vunpack.c.l.b16 %v396
    %v502 = vunpack.c.h.b16 %v396
    %v503 = vunpack.c.l.b16 %v397
    %v504 = vunpack.c.h.b16 %v397
    %v505 = vunpack.c.l.b16 %v398
    %v506 = vunpack.c.h.b16 %v398
    %v507 = vunpack.c.l.b16 %v399
    %v508 = vunpack.c.h.b16 %v399
    %v509 = vunpack.c.l.b16 %v400
    %v510 = vunpack.c.h.b16 %v400
    %v511 = vunpack.c.l.b16 %v401
    %v512 = vunpack.c.h.b16 %v401
    %v513 = vpack.c.b16 %v451, %v449
    %v514 = vpack.c.b16 %v452, %v450
    %v515 = vpack.c.b16 %v455, %v453
    %v516 = vpack.c.b16 %v456, %v454
    %v517 = vpack.c.b16 %v459, %v457
    %v518 = vpack.c.b16 %v460, %v458
    %v519 = vpack.c.b16 %v463, %v461
    %v520 = vpack.c.b16 %v464, %v462
    %v521 = vpack.c.b16 %v467, %v465
    %v522 = vpack.c.b16 %v468, %v466
    %v523 = vpack.c.b16 %v471, %v469
    %v524 = vpack.c.b16 %v472, %v470
    %v525 = vpack.c.b16 %v475, %v473
    %v526 = vpack.c.b16 %v476, %v474
    %v527 = vpack.c.b16 %v479, %v477
    %v528 = vpack.c.b16 %v480, %v478
    %v529 = vpack.c.b16 %v483, %v481
    %v530 = vpack.c.b16 %v484, %v482
    %v531 = vpack.c.b16 %v487, %v485
    %v532 = vpack.c.b16 %v488, %v486
    %v533 = vpack.c.b16 %v491, %v489
    %v534 = vpack.c.b16 %v492, %v490
    %v535 = vpack.c.b16 %v495, %v493
    %v536 = vpack.c.b16 %v496, %v494
    %v537 = vpack.c.b16 %v499, %v497
    %v538 = vpack.c.b16 %v500, %v498
    %v539 = vpack.c.b16 %v503, %v501
    %v540 = vpack.c.b16 %v504, %v502
    %v541 = vpack.c.b16 %v507, %v505
    %v542 = vpack.c.b16 %v508, %v506
    %v543 = vpack.c.b16 %v511, %v509
    %v544 = vpack.c.b16 %v512, %v510
    %577 = vmatprep.subr.bf16.mxu0 %v514
    %578 = vmatpush1.bf16.msra.mxu0 %v513
    %579 = vmatprep.subr.bf16.mxu0 %v516
    %580 = vmatpush1.bf16.msra.mxu0 %v515
    %581 = vmatprep.subr.bf16.mxu0 %v518
    %582 = vmatpush1.bf16.msra.mxu0 %v517
    %583 = vmatprep.subr.bf16.mxu0 %v520
    %584 = vmatpush1.bf16.msra.mxu0 %v519
    %585 = vmatprep.subr.bf16.mxu0 %v522
    %586 = vmatpush1.bf16.msra.mxu0 %v521
    %587 = vmatprep.subr.bf16.mxu0 %v524
    %588 = vmatpush1.bf16.msra.mxu0 %v523
    %589 = vmatprep.subr.bf16.mxu0 %v526
    %590 = vmatpush1.bf16.msra.mxu0 %v525
    %591 = vmatprep.subr.bf16.mxu0 %v528
    %592 = vmatpush1.bf16.msra.mxu0 %v527
    %593 = vmatprep.subr.bf16.mxu0 %v530
    %594 = vmatpush1.bf16.msra.mxu0 %v529
    %595 = vmatprep.subr.bf16.mxu0 %v532
    %596 = vmatpush1.bf16.msra.mxu0 %v531
    %597 = vmatprep.subr.bf16.mxu0 %v534
    %598 = vmatpush1.bf16.msra.mxu0 %v533
    %599 = vmatprep.subr.bf16.mxu0 %v536
    %600 = vmatpush1.bf16.msra.mxu0 %v535
    %601 = vmatprep.subr.bf16.mxu0 %v538
    %602 = vmatpush1.bf16.msra.mxu0 %v537
    %603 = vmatprep.subr.bf16.mxu0 %v540
    %604 = vmatpush1.bf16.msra.mxu0 %v539
    %605 = vmatprep.subr.bf16.mxu0 %v542
    %606 = vmatpush1.bf16.msra.mxu0 %v541
    %607 = vmatprep.subr.bf16.mxu0 %v544
    %608 = vmatpush1.bf16.msra.mxu0 %v543
    %609 = vmatprep.mubr.bf16.mxu0 %v403
    %610 = vmatmul.mubr.bf16.gmra.mrb[0].mxu0 %v402
    %v611 = vpop.f32.mrb[0].mxu0
    %v612 = vadd.f32 %v410, %v611
    %v613 = vpop.f32.mrb[0].mxu0
    %v614 = vadd.f32 %v414, %v613
    %v615 = vpop.f32.mrb[0].mxu0
    %v616 = vpop.f32.mrb[0].mxu0
    %617 = vdwg.mxu0
    %s618 = scalar_lea.vmem [#allocation4], 23
    %v619 = vld [vmem:[%s618] ss:$8 sm:$0x3]
    %v620 = vmul.f32 %v612, %v612
    %v621 = vmul.f32 %v614, %v614
    %v622 = vadd.f32 %v620, %v621
    %623 = vadd.xlane.f32.xlu0 %v622
    %v624 = vpop.xlane.xlu0 %623
    %v625 = vmul.f32 %v624, %v341
    %v626 = vadd.f32 %v625, 1e-06
    %v627 = vrsqrt.pop %v626
    %v628 = vmul.f32 %v612, %v627
    %v629 = vmul.f32 %v614, %v627
    %v631 = vlaneseq
    %v632 = vshrl.u32 %v631, 7
    %v633 = vsub.s32 0, %v632
    %v634 = vrot.slane %v619, %v633
    %v635 = vlaneseq
    %v636 = vshrl.u32 %v635, 7
    %v637 = vsub.s32 1, %v636
    %v638 = vrot.slane %v619, %v637
    %v641 = vmul.f32 %v628, %v634
    %v642 = vmul.f32 %v629, %v638
    %v643 = vmul.f32 %v641, 0.5
    %v644 = vmul.f32 %v642, 0.5
    %v645 = vmul.f32 %v641, 0.70710677
    %v646 = vmul.f32 %v642, 0.70710677
    %v647 = verf.f32.pop %v645
    %v648 = verf.f32.pop %v646
    %v649 = vadd.f32 %v647, 1.0
    %v650 = vadd.f32 %v648, 1.0
    %v651 = vmul.f32 %v643, %v649
    %v652 = vmul.f32 %v644, %v650
    %v653 = vrot.slane %v368, 4
    %v654 = vadd.f32 %v368, %v653
    %v655 = vrot.slane %v654, 2
    %v656 = vadd.f32 %v654, %v655
    %v657 = vrot.slane %v656, 1
    %v658 = vadd.f32 %v656, %v657
    %v659 = vrot.slane %v369, 4
    %v660 = vadd.f32 %v369, %v659
    %v661 = vrot.slane %v660, 2
    %v662 = vadd.f32 %v660, %v661
    %v663 = vrot.slane %v662, 1
    %v664 = vadd.f32 %v662, %v663
    %v665 = vrcp.pop 8.0
    %v666 = vmul.f32 %v658, %v665
    %v667 = vmul.f32 %v664, %v665
    %v668 = vrot.slane %v651, 4
    %v669 = vadd.f32 %v651, %v668
    %v670 = vrot.slane %v669, 2
    %v671 = vadd.f32 %v669, %v670
    %v672 = vrot.slane %v671, 1
    %v673 = vadd.f32 %v671, %v672
    %v674 = vrot.slane %v652, 4
    %v675 = vadd.f32 %v652, %v674
    %v676 = vrot.slane %v675, 2
    %v677 = vadd.f32 %v675, %v676
    %v678 = vrot.slane %v677, 1
    %v679 = vadd.f32 %v677, %v678
    %v680 = vmul.f32 %v673, %v665
    %v681 = vmul.f32 %v679, %v665
    %v682 = vadd.f32 %v666, %v680
    %v683 = vadd.f32 %v667, %v681
    %v684 = vld [vmem:[#allocation7 + $0x10] sm:$0xf]
    %v685 = vld [vmem:[#allocation7 + $0x44] sm:$0xf]
    %v686 = vld [vmem:[#allocation7 + $0x78] sm:$0xf]
    %v687 = vld [vmem:[#allocation7 + $0xac] sm:$0xf]
    %v688 = vld [vmem:[#allocation7 + $0xe0] sm:$0xf]
    %v689 = vld [vmem:[#allocation7 + $0x114] sm:$0xf]
    %v690 = vld [vmem:[#allocation7 + $0x148] sm:$0xf]
    %v691 = vld [vmem:[#allocation7 + $0x17c] sm:$0xf]
    %v692 = vld [vmem:[#allocation7 + $0x1b0] sm:$0xf]
    %v693 = vld [vmem:[#allocation7 + $0x1e4] sm:$0xf]
    %v694 = vld [vmem:[#allocation7 + $0x218] sm:$0xf]
    %v695 = vld [vmem:[#allocation7 + $0x24c] sm:$0xf]
    %v696 = vld [vmem:[#allocation7 + $0x280] sm:$0xf]
    %v697 = vld [vmem:[#allocation7 + $0x2b4] sm:$0xf]
    %v698 = vld [vmem:[#allocation7 + $0x2e8] sm:$0xf]
    %v699 = vld [vmem:[#allocation7 + $0x31c] sm:$0xf]
    %v700 = vld [vmem:[#allocation7 + $0x350] sm:$0xf]
    %v701 = vld [vmem:[#allocation7 + $0x384] sm:$0xf]
    %v702 = vld [vmem:[#allocation7 + $0x3b8] sm:$0xf]
    %v703 = vld [vmem:[#allocation7 + $0x3ec] sm:$0xf]
    %v704 = vld [vmem:[#allocation7 + $0x420] sm:$0xf]
    %v705 = vld [vmem:[#allocation7 + $0x454] sm:$0xf]
    %v706 = vld [vmem:[#allocation7 + $0x488] sm:$0xf]
    %v707 = vld [vmem:[#allocation7 + $0x4bc] sm:$0xf]
    %v708 = vld [vmem:[#allocation7 + $0x4f0] sm:$0xf]
    %v709 = vld [vmem:[#allocation7 + $0x524] sm:$0xf]
    %v710 = vld [vmem:[#allocation7 + $0x558] sm:$0xf]
    %v711 = vld [vmem:[#allocation7 + $0x58c] sm:$0xf]
    %v712 = vld [vmem:[#allocation7 + $0x5c0] sm:$0xf]
    %v713 = vld [vmem:[#allocation7 + $0x5f4] sm:$0xf]
    %v714 = vld [vmem:[#allocation7 + $0x628] sm:$0xf]
    %v715 = vld [vmem:[#allocation7 + $0x65c] sm:$0xf]
    %v716 = vpack.c.bf16 %v682, %v682
    %v717 = vpack.c.bf16 %v683, %v683
    %v718 = vld [vmem:[#allocation4 + $0x20] ss:$0 sm:$0xff]
    %v751 = vunpack.c.l.b16 %v684
    %v752 = vunpack.c.l.b16 %v685
    %v753 = vunpack.c.l.b16 %v686
    %v754 = vunpack.c.l.b16 %v687
    %v755 = vunpack.c.l.b16 %v688
    %v756 = vunpack.c.l.b16 %v689
    %v757 = vunpack.c.l.b16 %v690
    %v758 = vunpack.c.l.b16 %v691
    %v759 = vunpack.c.l.b16 %v692
    %v760 = vunpack.c.l.b16 %v693
    %v761 = vunpack.c.l.b16 %v694
    %v762 = vunpack.c.l.b16 %v695
    %v763 = vunpack.c.l.b16 %v696
    %v764 = vunpack.c.l.b16 %v697
    %v765 = vunpack.c.l.b16 %v698
    %v766 = vunpack.c.l.b16 %v699
    %v767 = vunpack.c.l.b16 %v700
    %v768 = vunpack.c.l.b16 %v701
    %v769 = vunpack.c.l.b16 %v702
    %v770 = vunpack.c.l.b16 %v703
    %v771 = vunpack.c.l.b16 %v704
    %v772 = vunpack.c.l.b16 %v705
    %v773 = vunpack.c.l.b16 %v706
    %v774 = vunpack.c.l.b16 %v707
    %v775 = vunpack.c.l.b16 %v708
    %v776 = vunpack.c.l.b16 %v709
    %v777 = vunpack.c.l.b16 %v710
    %v778 = vunpack.c.l.b16 %v711
    %v779 = vunpack.c.l.b16 %v712
    %v780 = vunpack.c.l.b16 %v713
    %v781 = vunpack.c.l.b16 %v714
    %v782 = vunpack.c.l.b16 %v715
    %v783 = vpack.c.b16 %v752, %v751
    %v784 = vpack.c.b16 %v754, %v753
    %v785 = vpack.c.b16 %v756, %v755
    %v786 = vpack.c.b16 %v758, %v757
    %v787 = vpack.c.b16 %v760, %v759
    %v788 = vpack.c.b16 %v762, %v761
    %v789 = vpack.c.b16 %v764, %v763
    %v790 = vpack.c.b16 %v766, %v765
    %v791 = vpack.c.b16 %v768, %v767
    %v792 = vpack.c.b16 %v770, %v769
    %v793 = vpack.c.b16 %v772, %v771
    %v794 = vpack.c.b16 %v774, %v773
    %v795 = vpack.c.b16 %v776, %v775
    %v796 = vpack.c.b16 %v778, %v777
    %v797 = vpack.c.b16 %v780, %v779
    %v798 = vpack.c.b16 %v782, %v781
    %815 = vmatprep.subr.bf16.mxu0 0
    %816 = vmatpush1.bf16.msra.mxu0 %v783
    %817 = vmatprep.subr.bf16.mxu0 0
    %818 = vmatpush1.bf16.msra.mxu0 %v784
    %819 = vmatprep.subr.bf16.mxu0 0
    %820 = vmatpush1.bf16.msra.mxu0 %v785
    %821 = vmatprep.subr.bf16.mxu0 0
    %822 = vmatpush1.bf16.msra.mxu0 %v786
    %823 = vmatprep.subr.bf16.mxu0 0
    %824 = vmatpush1.bf16.msra.mxu0 %v787
    %825 = vmatprep.subr.bf16.mxu0 0
    %826 = vmatpush1.bf16.msra.mxu0 %v788
    %827 = vmatprep.subr.bf16.mxu0 0
    %828 = vmatpush1.bf16.msra.mxu0 %v789
    %829 = vmatprep.subr.bf16.mxu0 0
    %830 = vmatpush1.bf16.msra.mxu0 %v790
    %831 = vmatprep.subr.bf16.mxu0 0
    %832 = vmatpush1.bf16.msra.mxu0 %v791
    %833 = vmatprep.subr.bf16.mxu0 0
    %834 = vmatpush1.bf16.msra.mxu0 %v792
    %835 = vmatprep.subr.bf16.mxu0 0
    %836 = vmatpush1.bf16.msra.mxu0 %v793
    %837 = vmatprep.subr.bf16.mxu0 0
    %838 = vmatpush1.bf16.msra.mxu0 %v794
    %839 = vmatprep.subr.bf16.mxu0 0
    %840 = vmatpush1.bf16.msra.mxu0 %v795
    %841 = vmatprep.subr.bf16.mxu0 0
    %842 = vmatpush1.bf16.msra.mxu0 %v796
    %843 = vmatprep.subr.bf16.mxu0 0
    %844 = vmatpush1.bf16.msra.mxu0 %v797
    %845 = vmatprep.subr.bf16.mxu0 0
    %846 = vmatpush1.bf16.msra.mxu0 %v798
    %847 = vmatprep.mubr.bf16.mxu0 %v717
    %848 = vmatmul.mubr.bf16.gmra.mrb[0].mxu0 %v716
    %v849 = vpop.f32.mrb[0].mxu0
    %v850 = vadd.f32 %v718, %v849
    %v851 = vpop.f32.mrb[0].mxu0
    %v852 = vpop.f32.mrb[0].mxu0
    %v853 = vpop.f32.mrb[0].mxu0
    %854 = vdwg.mxu0
    %vm855 = vcmask 1040384
    %v856 = vsel %vm855, %v850, -inf
    %857 = vmax.xlane.f32.xlu0 %v856
    %v858 = vpop.xlane.xlu0 %857
    %v859 = vsub.f32 %v850, %v858
    %v860 = vmul.f32 %v859, 1.442695
    %v861 = vpow.pop %v860
    %v862 = vsel %vm855, %v861, 0.0
    %863 = vadd.xlane.f32.xlu0 %v862
    %v864 = vpop.xlane.xlu0 %863
    %v865 = vrcp.pop %v864
    %v866 = vmul.f32 %v861, %v865
    %v867 = vlaneseq
    %v868 = vshrl.u32 %v867, 7
    %v869 = vsub.s32 0, %v868
    %v870 = vrot.slane %v866, %v869
    %871 = vst [vmem:[%s5] sm:$0xff] %v870
    %v872 = vld [vmem:[#allocation4] ss:$8 sm:$0x3]
    %v873 = vld [vmem:[#allocation7 + $0x14] sm:$0xff]
    %v874 = vld [vmem:[#allocation7 + $0x1c] sm:$0xff]
    %v875 = vld [vmem:[#allocation7 + $0x24] sm:$0xff]
    %v876 = vld [vmem:[#allocation7 + $0x48] sm:$0xff]
    %v877 = vld [vmem:[#allocation7 + $0x50] sm:$0xff]
    %v878 = vld [vmem:[#allocation7 + $0x58] sm:$0xff]
    %v879 = vld [vmem:[#allocation7 + $0x7c] sm:$0xff]
    %v880 = vld [vmem:[#allocation7 + $0x84] sm:$0xff]
    %v881 = vld [vmem:[#allocation7 + $0x8c] sm:$0xff]
    %v882 = vld [vmem:[#allocation7 + $0xb0] sm:$0xff]
    %v883 = vld [vmem:[#allocation7 + $0xb8] sm:$0xff]
    %v884 = vld [vmem:[#allocation7 + $0xc0] sm:$0xff]
    %v885 = vld [vmem:[#allocation7 + $0xe4] sm:$0xff]
    %v886 = vld [vmem:[#allocation7 + $0xec] sm:$0xff]
    %v887 = vld [vmem:[#allocation7 + $0xf4] sm:$0xff]
    %v888 = vld [vmem:[#allocation7 + $0x118] sm:$0xff]
    %v889 = vld [vmem:[#allocation7 + $0x120] sm:$0xff]
    %v890 = vld [vmem:[#allocation7 + $0x128] sm:$0xff]
    %v891 = vld [vmem:[#allocation7 + $0x14c] sm:$0xff]
    %v892 = vld [vmem:[#allocation7 + $0x154] sm:$0xff]
    %v893 = vld [vmem:[#allocation7 + $0x15c] sm:$0xff]
    %v894 = vld [vmem:[#allocation7 + $0x180] sm:$0xff]
    %v895 = vld [vmem:[#allocation7 + $0x188] sm:$0xff]
    %v896 = vld [vmem:[#allocation7 + $0x190] sm:$0xff]
    %v897 = vld [vmem:[#allocation7 + $0x1b4] sm:$0xff]
    %v898 = vld [vmem:[#allocation7 + $0x1bc] sm:$0xff]
    %v899 = vld [vmem:[#allocation7 + $0x1c4] sm:$0xff]
    %v900 = vld [vmem:[#allocation7 + $0x1e8] sm:$0xff]
    %v901 = vld [vmem:[#allocation7 + $0x1f0] sm:$0xff]
    %v902 = vld [vmem:[#allocation7 + $0x1f8] sm:$0xff]
    %v903 = vld [vmem:[#allocation7 + $0x21c] sm:$0xff]
    %v904 = vld [vmem:[#allocation7 + $0x224] sm:$0xff]
    %v905 = vld [vmem:[#allocation7 + $0x22c] sm:$0xff]
    %v906 = vld [vmem:[#allocation7 + $0x250] sm:$0xff]
    %v907 = vld [vmem:[#allocation7 + $0x258] sm:$0xff]
    %v908 = vld [vmem:[#allocation7 + $0x260] sm:$0xff]
    %v909 = vld [vmem:[#allocation7 + $0x284] sm:$0xff]
    %v910 = vld [vmem:[#allocation7 + $0x28c] sm:$0xff]
    %v911 = vld [vmem:[#allocation7 + $0x294] sm:$0xff]
    %v912 = vld [vmem:[#allocation7 + $0x2b8] sm:$0xff]
    %v913 = vld [vmem:[#allocation7 + $0x2c0] sm:$0xff]
    %v914 = vld [vmem:[#allocation7 + $0x2c8] sm:$0xff]
    %v915 = vld [vmem:[#allocation7 + $0x2ec] sm:$0xff]
    %v916 = vld [vmem:[#allocation7 + $0x2f4] sm:$0xff]
    %v917 = vld [vmem:[#allocation7 + $0x2fc] sm:$0xff]
    %v918 = vld [vmem:[#allocation7 + $0x320] sm:$0xff]
    %v919 = vld [vmem:[#allocation7 + $0x328] sm:$0xff]
    %v920 = vld [vmem:[#allocation7 + $0x330] sm:$0xff]
    %v921 = vld [vmem:[#allocation7 + $0x354] sm:$0xff]
    %v922 = vld [vmem:[#allocation7 + $0x35c] sm:$0xff]
    %v923 = vld [vmem:[#allocation7 + $0x364] sm:$0xff]
    %v924 = vld [vmem:[#allocation7 + $0x388] sm:$0xff]
    %v925 = vld [vmem:[#allocation7 + $0x390] sm:$0xff]
    %v926 = vld [vmem:[#allocation7 + $0x398] sm:$0xff]
    %v927 = vld [vmem:[#allocation7 + $0x3bc] sm:$0xff]
    %v928 = vld [vmem:[#allocation7 + $0x3c4] sm:$0xff]
    %v929 = vld [vmem:[#allocation7 + $0x3cc] sm:$0xff]
    %v930 = vld [vmem:[#allocation7 + $0x3f0] sm:$0xff]
    %v931 = vld [vmem:[#allocation7 + $0x3f8] sm:$0xff]
    %v932 = vld [vmem:[#allocation7 + $0x400] sm:$0xff]
    %v933 = vld [vmem:[#allocation7 + $0x424] sm:$0xff]
    %v934 = vld [vmem:[#allocation7 + $0x42c] sm:$0xff]
    %v935 = vld [vmem:[#allocation7 + $0x434] sm:$0xff]
    %v936 = vld [vmem:[#allocation7 + $0x458] sm:$0xff]
    %v937 = vld [vmem:[#allocation7 + $0x460] sm:$0xff]
    %v938 = vld [vmem:[#allocation7 + $0x468] sm:$0xff]
    %v939 = vld [vmem:[#allocation7 + $0x48c] sm:$0xff]
    %v940 = vld [vmem:[#allocation7 + $0x494] sm:$0xff]
    %v941 = vld [vmem:[#allocation7 + $0x49c] sm:$0xff]
    %v942 = vld [vmem:[#allocation7 + $0x4c0] sm:$0xff]
    %v943 = vld [vmem:[#allocation7 + $0x4c8] sm:$0xff]
    %v944 = vld [vmem:[#allocation7 + $0x4d0] sm:$0xff]
    %v945 = vld [vmem:[#allocation7 + $0x4f4] sm:$0xff]
    %v946 = vld [vmem:[#allocation7 + $0x4fc] sm:$0xff]
    %v947 = vld [vmem:[#allocation7 + $0x504] sm:$0xff]
    %v948 = vld [vmem:[#allocation7 + $0x528] sm:$0xff]
    %v949 = vld [vmem:[#allocation7 + $0x530] sm:$0xff]
    %v950 = vld [vmem:[#allocation7 + $0x538] sm:$0xff]
    %v951 = vld [vmem:[#allocation7 + $0x55c] sm:$0xff]
    %v952 = vld [vmem:[#allocation7 + $0x564] sm:$0xff]
    %v953 = vld [vmem:[#allocation7 + $0x56c] sm:$0xff]
    %v954 = vld [vmem:[#allocation7 + $0x590] sm:$0xff]
    %v955 = vld [vmem:[#allocation7 + $0x598] sm:$0xff]
    %v956 = vld [vmem:[#allocation7 + $0x5a0] sm:$0xff]
    %v957 = vld [vmem:[#allocation7 + $0x5c4] sm:$0xff]
    %v958 = vld [vmem:[#allocation7 + $0x5cc] sm:$0xff]
    %v959 = vld [vmem:[#allocation7 + $0x5d4] sm:$0xff]
    %v960 = vld [vmem:[#allocation7 + $0x5f8] sm:$0xff]
    %v961 = vld [vmem:[#allocation7 + $0x600] sm:$0xff]
    %v962 = vld [vmem:[#allocation7 + $0x608] sm:$0xff]
    %v963 = vld [vmem:[#allocation7 + $0x62c] sm:$0xff]
    %v964 = vld [vmem:[#allocation7 + $0x634] sm:$0xff]
    %v965 = vld [vmem:[#allocation7 + $0x63c] sm:$0xff]
    %v966 = vld [vmem:[#allocation7 + $0x660] sm:$0xff]
    %v967 = vld [vmem:[#allocation7 + $0x668] sm:$0xff]
    %v968 = vld [vmem:[#allocation7 + $0x670] sm:$0xff]
    %v969 = vld [vmem:[#allocation7 + $0x2c] sm:$0xff]
    %v970 = vld [vmem:[#allocation7 + $0x60] sm:$0xff]
    %v971 = vld [vmem:[#allocation7 + $0x94] sm:$0xff]
    %v972 = vld [vmem:[#allocation7 + $0xc8] sm:$0xff]
    %v973 = vld [vmem:[#allocation7 + $0xfc] sm:$0xff]
    %v974 = vld [vmem:[#allocation7 + $0x130] sm:$0xff]
    %v975 = vld [vmem:[#allocation7 + $0x164] sm:$0xff]
    %v976 = vld [vmem:[#allocation7 + $0x198] sm:$0xff]
    %v977 = vld [vmem:[#allocation7 + $0x1cc] sm:$0xff]
    %v978 = vld [vmem:[#allocation7 + $0x200] sm:$0xff]
    %v979 = vld [vmem:[#allocation7 + $0x234] sm:$0xff]
    %v980 = vld [vmem:[#allocation7 + $0x268] sm:$0xff]
    %v981 = vld [vmem:[#allocation7 + $0x29c] sm:$0xff]
    %v982 = vld [vmem:[#allocation7 + $0x2d0] sm:$0xff]
    %v983 = vld [vmem:[#allocation7 + $0x304] sm:$0xff]
    %v984 = vld [vmem:[#allocation7 + $0x338] sm:$0xff]
    %v985 = vld [vmem:[#allocation7 + $0x36c] sm:$0xff]
    %v986 = vld [vmem:[#allocation7 + $0x3a0] sm:$0xff]
    %v987 = vld [vmem:[#allocation7 + $0x3d4] sm:$0xff]
    %v988 = vld [vmem:[#allocation7 + $0x408] sm:$0xff]
    %v989 = vld [vmem:[#allocation7 + $0x43c] sm:$0xff]
    %v990 = vld [vmem:[#allocation7 + $0x470] sm:$0xff]
    %v991 = vld [vmem:[#allocation7 + $0x4a4] sm:$0xff]
    %v992 = vld [vmem:[#allocation7 + $0x4d8] sm:$0xff]
    %v993 = vld [vmem:[#allocation7 + $0x50c] sm:$0xff]
    %v994 = vld [vmem:[#allocation7 + $0x540] sm:$0xff]
    %v995 = vld [vmem:[#allocation7 + $0x574] sm:$0xff]
    %v996 = vld [vmem:[#allocation7 + $0x5a8] sm:$0xff]
    %v997 = vld [vmem:[#allocation7 + $0x5dc] sm:$0xff]
    %v998 = vld [vmem:[#allocation7 + $0x610] sm:$0xff]
    %v999 = vld [vmem:[#allocation7 + $0x644] sm:$0xff]
    %v1000 = vld [vmem:[#allocation7 + $0x678] sm:$0xff]
    %s1001 = scalar_lea.vmem [#allocation4], 1
    %v1002 = vld [vmem:[%s1001] ss:$8 sm:$0x3]
    %s1003 = scalar_lea.vmem [#allocation4], 35
    %v1004 = vld [vmem:[%s1003] ss:$8 sm:$0x3]
    %v1005 = vmul.f32 %v82, %v82
    %v1006 = vmul.f32 %v83, %v83
    %v1007 = vmul.f32 %v84, %v84
    %v1008 = vmul.f32 %v85, %v85
    %v1009 = vadd.f32 %v1005, %v1006
    %1010 = vadd.xlane.f32.xlu0 %v1009
    %v1011 = vpop.xlane.xlu0 %1010
    %v1012 = vadd.f32 %v1007, %v1008
    %1013 = vadd.xlane.f32.xlu0 %v1012
    %v1014 = vpop.xlane.xlu0 %1013
    %v1015 = vmul.f32 %v1011, %v341
    %v1016 = vmul.f32 %v1014, %v341
    %v1017 = vadd.f32 %v1015, 1e-06
    %v1018 = vadd.f32 %v1016, 1e-06
    %v1019 = vrsqrt.pop %v1017
    %v1020 = vrsqrt.pop %v1018
    %v1021 = vmul.f32 %v82, %v1019
    %v1022 = vmul.f32 %v83, %v1019
    %v1023 = vmul.f32 %v84, %v1020
    %v1024 = vmul.f32 %v85, %v1020
    %v1026 = vlaneseq
    %v1027 = vshrl.u32 %v1026, 7
    %v1028 = vsub.s32 0, %v1027
    %v1029 = vrot.slane %v872, %v1028
    %v1030 = vlaneseq
    %v1031 = vshrl.u32 %v1030, 7
    %v1032 = vsub.s32 1, %v1031
    %v1033 = vrot.slane %v872, %v1032
    %v1036 = vmul.f32 %v1021, %v1029
    %v1037 = vmul.f32 %v1022, %v1033
    %v1038 = vmul.f32 %v1023, %v1029
    %v1039 = vmul.f32 %v1024, %v1033
    %v1041 = vlaneseq
    %v1042 = vshrl.u32 %v1041, 7
    %v1043 = vsub.s32 0, %v1042
    %v1044 = vrot.slane %v1004, %v1043
    %v1045 = vlaneseq
    %v1046 = vshrl.u32 %v1045, 7
    %v1047 = vsub.s32 1, %v1046
    %v1048 = vrot.slane %v1004, %v1047
    %v1051 = vmul.f32 %v82, %v1044
    %v1052 = vmul.f32 %v83, %v1048
    %v1053 = vpack.c.bf16 %v1038, %v1036
    %v1054 = vpack.c.bf16 %v1039, %v1037
    %v1151 = vunpack.c.l.b16 %v873
    %v1152 = vunpack.c.h.b16 %v873
    %v1153 = vunpack.c.l.b16 %v874
    %v1154 = vunpack.c.h.b16 %v874
    %v1155 = vunpack.c.l.b16 %v875
    %v1156 = vunpack.c.h.b16 %v875
    %v1157 = vunpack.c.l.b16 %v876
    %v1158 = vunpack.c.h.b16 %v876
    %v1159 = vunpack.c.l.b16 %v877
    %v1160 = vunpack.c.h.b16 %v877
    %v1161 = vunpack.c.l.b16 %v878
    %v1162 = vunpack.c.h.b16 %v878
    %v1163 = vunpack.c.l.b16 %v879
    %v1164 = vunpack.c.h.b16 %v879
    %v1165 = vunpack.c.l.b16 %v880
    %v1166 = vunpack.c.h.b16 %v880
    %v1167 = vunpack.c.l.b16 %v881
    %v1168 = vunpack.c.h.b16 %v881
    %v1169 = vunpack.c.l.b16 %v882
    %v1170 = vunpack.c.h.b16 %v882
    %v1171 = vunpack.c.l.b16 %v883
    %v1172 = vunpack.c.h.b16 %v883
    %v1173 = vunpack.c.l.b16 %v884
    %v1174 = vunpack.c.h.b16 %v884
    %v1175 = vunpack.c.l.b16 %v885
    %v1176 = vunpack.c.h.b16 %v885
    %v1177 = vunpack.c.l.b16 %v886
    %v1178 = vunpack.c.h.b16 %v886
    %v1179 = vunpack.c.l.b16 %v887
    %v1180 = vunpack.c.h.b16 %v887
    %v1181 = vunpack.c.l.b16 %v888
    %v1182 = vunpack.c.h.b16 %v888
    %v1183 = vunpack.c.l.b16 %v889
    %v1184 = vunpack.c.h.b16 %v889
    %v1185 = vunpack.c.l.b16 %v890
    %v1186 = vunpack.c.h.b16 %v890
    %v1187 = vunpack.c.l.b16 %v891
    %v1188 = vunpack.c.h.b16 %v891
    %v1189 = vunpack.c.l.b16 %v892
    %v1190 = vunpack.c.h.b16 %v892
    %v1191 = vunpack.c.l.b16 %v893
    %v1192 = vunpack.c.h.b16 %v893
    %v1193 = vunpack.c.l.b16 %v894
    %v1194 = vunpack.c.h.b16 %v894
    %v1195 = vunpack.c.l.b16 %v895
    %v1196 = vunpack.c.h.b16 %v895
    %v1197 = vunpack.c.l.b16 %v896
    %v1198 = vunpack.c.h.b16 %v896
    %v1199 = vunpack.c.l.b16 %v897
    %v1200 = vunpack.c.h.b16 %v897
    %v1201 = vunpack.c.l.b16 %v898
    %v1202 = vunpack.c.h.b16 %v898
    %v1203 = vunpack.c.l.b16 %v899
    %v1204 = vunpack.c.h.b16 %v899
    %v1205 = vunpack.c.l.b16 %v900
    %v1206 = vunpack.c.h.b16 %v900
    %v1207 = vunpack.c.l.b16 %v901
    %v1208 = vunpack.c.h.b16 %v901
    %v1209 = vunpack.c.l.b16 %v902
    %v1210 = vunpack.c.h.b16 %v902
    %v1211 = vunpack.c.l.b16 %v903
    %v1212 = vunpack.c.h.b16 %v903
    %v1213 = vunpack.c.l.b16 %v904
    %v1214 = vunpack.c.h.b16 %v904
    %v1215 = vunpack.c.l.b16 %v905
    %v1216 = vunpack.c.h.b16 %v905
    %v1217 = vunpack.c.l.b16 %v906
    %v1218 = vunpack.c.h.b16 %v906
    %v1219 = vunpack.c.l.b16 %v907
    %v1220 = vunpack.c.h.b16 %v907
    %v1221 = vunpack.c.l.b16 %v908
    %v1222 = vunpack.c.h.b16 %v908
    %v1223 = vunpack.c.l.b16 %v909
    %v1224 = vunpack.c.h.b16 %v909
    %v1225 = vunpack.c.l.b16 %v910
    %v1226 = vunpack.c.h.b16 %v910
    %v1227 = vunpack.c.l.b16 %v911
    %v1228 = vunpack.c.h.b16 %v911
    %v1229 = vunpack.c.l.b16 %v912
    %v1230 = vunpack.c.h.b16 %v912
    %v1231 = vunpack.c.l.b16 %v913
    %v1232 = vunpack.c.h.b16 %v913
    %v1233 = vunpack.c.l.b16 %v914
    %v1234 = vunpack.c.h.b16 %v914
    %v1235 = vunpack.c.l.b16 %v915
    %v1236 = vunpack.c.h.b16 %v915
    %v1237 = vunpack.c.l.b16 %v916
    %v1238 = vunpack.c.h.b16 %v916
    %v1239 = vunpack.c.l.b16 %v917
    %v1240 = vunpack.c.h.b16 %v917
    %v1241 = vunpack.c.l.b16 %v918
    %v1242 = vunpack.c.h.b16 %v918
    %v1243 = vunpack.c.l.b16 %v919
    %v1244 = vunpack.c.h.b16 %v919
    %v1245 = vunpack.c.l.b16 %v920
    %v1246 = vunpack.c.h.b16 %v920
    %v1247 = vunpack.c.l.b16 %v921
    %v1248 = vunpack.c.h.b16 %v921
    %v1249 = vunpack.c.l.b16 %v922
    %v1250 = vunpack.c.h.b16 %v922
    %v1251 = vunpack.c.l.b16 %v923
    %v1252 = vunpack.c.h.b16 %v923
    %v1253 = vunpack.c.l.b16 %v924
    %v1254 = vunpack.c.h.b16 %v924
    %v1255 = vunpack.c.l.b16 %v925
    %v1256 = vunpack.c.h.b16 %v925
    %v1257 = vunpack.c.l.b16 %v926
    %v1258 = vunpack.c.h.b16 %v926
    %v1259 = vunpack.c.l.b16 %v927
    %v1260 = vunpack.c.h.b16 %v927
    %v1261 = vunpack.c.l.b16 %v928
    %v1262 = vunpack.c.h.b16 %v928
    %v1263 = vunpack.c.l.b16 %v929
    %v1264 = vunpack.c.h.b16 %v929
    %v1265 = vunpack.c.l.b16 %v930
    %v1266 = vunpack.c.h.b16 %v930
    %v1267 = vunpack.c.l.b16 %v931
    %v1268 = vunpack.c.h.b16 %v931
    %v1269 = vunpack.c.l.b16 %v932
    %v1270 = vunpack.c.h.b16 %v932
    %v1271 = vunpack.c.l.b16 %v933
    %v1272 = vunpack.c.h.b16 %v933
    %v1273 = vunpack.c.l.b16 %v934
    %v1274 = vunpack.c.h.b16 %v934
    %v1275 = vunpack.c.l.b16 %v935
    %v1276 = vunpack.c.h.b16 %v935
    %v1277 = vunpack.c.l.b16 %v936
    %v1278 = vunpack.c.h.b16 %v936
    %v1279 = vunpack.c.l.b16 %v937
    %v1280 = vunpack.c.h.b16 %v937
    %v1281 = vunpack.c.l.b16 %v938
    %v1282 = vunpack.c.h.b16 %v938
    %v1283 = vunpack.c.l.b16 %v939
    %v1284 = vunpack.c.h.b16 %v939
    %v1285 = vunpack.c.l.b16 %v940
    %v1286 = vunpack.c.h.b16 %v940
    %v1287 = vunpack.c.l.b16 %v941
    %v1288 = vunpack.c.h.b16 %v941
    %v1289 = vunpack.c.l.b16 %v942
    %v1290 = vunpack.c.h.b16 %v942
    %v1291 = vunpack.c.l.b16 %v943
    %v1292 = vunpack.c.h.b16 %v943
    %v1293 = vunpack.c.l.b16 %v944
    %v1294 = vunpack.c.h.b16 %v944
    %v1295 = vunpack.c.l.b16 %v945
    %v1296 = vunpack.c.h.b16 %v945
    %v1297 = vunpack.c.l.b16 %v946
    %v1298 = vunpack.c.h.b16 %v946
    %v1299 = vunpack.c.l.b16 %v947
    %v1300 = vunpack.c.h.b16 %v947
    %v1301 = vunpack.c.l.b16 %v948
    %v1302 = vunpack.c.h.b16 %v948
    %v1303 = vunpack.c.l.b16 %v949
    %v1304 = vunpack.c.h.b16 %v949
    %v1305 = vunpack.c.l.b16 %v950
    %v1306 = vunpack.c.h.b16 %v950
    %v1307 = vunpack.c.l.b16 %v951
    %v1308 = vunpack.c.h.b16 %v951
    %v1309 = vunpack.c.l.b16 %v952
    %v1310 = vunpack.c.h.b16 %v952
    %v1311 = vunpack.c.l.b16 %v953
    %v1312 = vunpack.c.h.b16 %v953
    %v1313 = vunpack.c.l.b16 %v954
    %v1314 = vunpack.c.h.b16 %v954
    %v1315 = vunpack.c.l.b16 %v955
    %v1316 = vunpack.c.h.b16 %v955
    %v1317 = vunpack.c.l.b16 %v956
    %v1318 = vunpack.c.h.b16 %v956
    %v1319 = vunpack.c.l.b16 %v957
    %v1320 = vunpack.c.h.b16 %v957
    %v1321 = vunpack.c.l.b16 %v958
    %v1322 = vunpack.c.h.b16 %v958
    %v1323 = vunpack.c.l.b16 %v959
    %v1324 = vunpack.c.h.b16 %v959
    %v1325 = vunpack.c.l.b16 %v960
    %v1326 = vunpack.c.h.b16 %v960
    %v1327 = vunpack.c.l.b16 %v961
    %v1328 = vunpack.c.h.b16 %v961
    %v1329 = vunpack.c.l.b16 %v962
    %v1330 = vunpack.c.h.b16 %v962
    %v1331 = vunpack.c.l.b16 %v963
    %v1332 = vunpack.c.h.b16 %v963
    %v1333 = vunpack.c.l.b16 %v964
    %v1334 = vunpack.c.h.b16 %v964
    %v1335 = vunpack.c.l.b16 %v965
    %v1336 = vunpack.c.h.b16 %v965
    %v1337 = vunpack.c.l.b16 %v966
    %v1338 = vunpack.c.h.b16 %v966
    %v1339 = vunpack.c.l.b16 %v967
    %v1340 = vunpack.c.h.b16 %v967
    %v1341 = vunpack.c.l.b16 %v968
    %v1342 = vunpack.c.h.b16 %v968
    %v1343 = vpack.c.b16 %v1157, %v1151
    %v1344 = vpack.c.b16 %v1158, %v1152
    %v1345 = vpack.c.b16 %v1159, %v1153
    %v1346 = vpack.c.b16 %v1160, %v1154
    %v1347 = vpack.c.b16 %v1161, %v1155
    %v1348 = vpack.c.b16 %v1162, %v1156
    %v1349 = vpack.c.b16 %v1169, %v1163
    %v1350 = vpack.c.b16 %v1170, %v1164
    %v1351 = vpack.c.b16 %v1171, %v1165
    %v1352 = vpack.c.b16 %v1172, %v1166
    %v1353 = vpack.c.b16 %v1173, %v1167
    %v1354 = vpack.c.b16 %v1174, %v1168
    %v1355 = vpack.c.b16 %v1181, %v1175
    %v1356 = vpack.c.b16 %v1182, %v1176
    %v1357 = vpack.c.b16 %v1183, %v1177
    %v1358 = vpack.c.b16 %v1184, %v1178
    %v1359 = vpack.c.b16 %v1185, %v1179
    %v1360 = vpack.c.b16 %v1186, %v1180
    %v1361 = vpack.c.b16 %v1193, %v1187
    %v1362 = vpack.c.b16 %v1194, %v1188
    %v1363 = vpack.c.b16 %v1195, %v1189
    %v1364 = vpack.c.b16 %v1196, %v1190
    %v1365 = vpack.c.b16 %v1197, %v1191
    %v1366 = vpack.c.b16 %v1198, %v1192
    %v1367 = vpack.c.b16 %v1205, %v1199
    %v1368 = vpack.c.b16 %v1206, %v1200
    %v1369 = vpack.c.b16 %v1207, %v1201
    %v1370 = vpack.c.b16 %v1208, %v1202
    %v1371 = vpack.c.b16 %v1209, %v1203
    %v1372 = vpack.c.b16 %v1210, %v1204
    %v1373 = vpack.c.b16 %v1217, %v1211
    %v1374 = vpack.c.b16 %v1218, %v1212
    %v1375 = vpack.c.b16 %v1219, %v1213
    %v1376 = vpack.c.b16 %v1220, %v1214
    %v1377 = vpack.c.b16 %v1221, %v1215
    %v1378 = vpack.c.b16 %v1222, %v1216
    %v1379 = vpack.c.b16 %v1229, %v1223
    %v1380 = vpack.c.b16 %v1230, %v1224
    %v1381 = vpack.c.b16 %v1231, %v1225
    %v1382 = vpack.c.b16 %v1232, %v1226
    %v1383 = vpack.c.b16 %v1233, %v1227
    %v1384 = vpack.c.b16 %v1234, %v1228
    %v1385 = vpack.c.b16 %v1241, %v1235
    %v1386 = vpack.c.b16 %v1242, %v1236
    %v1387 = vpack.c.b16 %v1243, %v1237
    %v1388 = vpack.c.b16 %v1244, %v1238
    %v1389 = vpack.c.b16 %v1245, %v1239
    %v1390 = vpack.c.b16 %v1246, %v1240
    %v1391 = vpack.c.b16 %v1253, %v1247
    %v1392 = vpack.c.b16 %v1254, %v1248
    %v1393 = vpack.c.b16 %v1255, %v1249
    %v1394 = vpack.c.b16 %v1256, %v1250
    %v1395 = vpack.c.b16 %v1257, %v1251
    %v1396 = vpack.c.b16 %v1258, %v1252
    %v1397 = vpack.c.b16 %v1265, %v1259
    %v1398 = vpack.c.b16 %v1266, %v1260
    %v1399 = vpack.c.b16 %v1267, %v1261
    %v1400 = vpack.c.b16 %v1268, %v1262
    %v1401 = vpack.c.b16 %v1269, %v1263
    %v1402 = vpack.c.b16 %v1270, %v1264
    %v1403 = vpack.c.b16 %v1277, %v1271
    %v1404 = vpack.c.b16 %v1278, %v1272
    %v1405 = vpack.c.b16 %v1279, %v1273
    %v1406 = vpack.c.b16 %v1280, %v1274
    %v1407 = vpack.c.b16 %v1281, %v1275
    %v1408 = vpack.c.b16 %v1282, %v1276
    %v1409 = vpack.c.b16 %v1289, %v1283
    %v1410 = vpack.c.b16 %v1290, %v1284
    %v1411 = vpack.c.b16 %v1291, %v1285
    %v1412 = vpack.c.b16 %v1292, %v1286
    %v1413 = vpack.c.b16 %v1293, %v1287
    %v1414 = vpack.c.b16 %v1294, %v1288
    %v1415 = vpack.c.b16 %v1301, %v1295
    %v1416 = vpack.c.b16 %v1302, %v1296
    %v1417 = vpack.c.b16 %v1303, %v1297
    %v1418 = vpack.c.b16 %v1304, %v1298
    %v1419 = vpack.c.b16 %v1305, %v1299
    %v1420 = vpack.c.b16 %v1306, %v1300
    %v1421 = vpack.c.b16 %v1313, %v1307
    %v1422 = vpack.c.b16 %v1314, %v1308
    %v1423 = vpack.c.b16 %v1315, %v1309
    %v1424 = vpack.c.b16 %v1316, %v1310
    %v1425 = vpack.c.b16 %v1317, %v1311
    %v1426 = vpack.c.b16 %v1318, %v1312
    %v1427 = vpack.c.b16 %v1325, %v1319
    %v1428 = vpack.c.b16 %v1326, %v1320
    %v1429 = vpack.c.b16 %v1327, %v1321
    %v1430 = vpack.c.b16 %v1328, %v1322
    %v1431 = vpack.c.b16 %v1329, %v1323
    %v1432 = vpack.c.b16 %v1330, %v1324
    %v1433 = vpack.c.b16 %v1337, %v1331
    %v1434 = vpack.c.b16 %v1338, %v1332
    %v1435 = vpack.c.b16 %v1339, %v1333
    %v1436 = vpack.c.b16 %v1340, %v1334
    %v1437 = vpack.c.b16 %v1341, %v1335
    %v1438 = vpack.c.b16 %v1342, %v1336
    %1535 = vmatprep.subr.bf16.mxu0 %v1344
    %1536 = vmatpush1.bf16.msra.mxu0 %v1343
    %1537 = vmatprep.subr.bf16.mxu0 %v1350
    %1538 = vmatpush1.bf16.msra.mxu0 %v1349
    %1539 = vmatprep.subr.bf16.mxu0 %v1356
    %1540 = vmatpush1.bf16.msra.mxu0 %v1355
    %1541 = vmatprep.subr.bf16.mxu0 %v1362
    %1542 = vmatpush1.bf16.msra.mxu0 %v1361
    %1543 = vmatprep.subr.bf16.mxu0 %v1368
    %1544 = vmatpush1.bf16.msra.mxu0 %v1367
    %1545 = vmatprep.subr.bf16.mxu0 %v1374
    %1546 = vmatpush1.bf16.msra.mxu0 %v1373
    %1547 = vmatprep.subr.bf16.mxu0 %v1380
    %1548 = vmatpush1.bf16.msra.mxu0 %v1379
    %1549 = vmatprep.subr.bf16.mxu0 %v1386
    %1550 = vmatpush1.bf16.msra.mxu0 %v1385
    %1551 = vmatprep.subr.bf16.mxu0 %v1392
    %1552 = vmatpush1.bf16.msra.mxu0 %v1391
    %1553 = vmatprep.subr.bf16.mxu0 %v1398
    %1554 = vmatpush1.bf16.msra.mxu0 %v1397
    %1555 = vmatprep.subr.bf16.mxu0 %v1404
    %1556 = vmatpush1.bf16.msra.mxu0 %v1403
    %1557 = vmatprep.subr.bf16.mxu0 %v1410
    %1558 = vmatpush1.bf16.msra.mxu0 %v1409
    %1559 = vmatprep.subr.bf16.mxu0 %v1416
    %1560 = vmatpush1.bf16.msra.mxu0 %v1415
    %1561 = vmatprep.subr.bf16.mxu0 %v1422
    %1562 = vmatpush1.bf16.msra.mxu0 %v1421
    %1563 = vmatprep.subr.bf16.mxu0 %v1428
    %1564 = vmatpush1.bf16.msra.mxu0 %v1427
    %1565 = vmatprep.subr.bf16.mxu0 %v1434
    %1566 = vmatpush1.bf16.msra.mxu0 %v1433
    %1567 = vmatprep.mubr.bf16.mxu0 %v1054
    %1568 = vmatmul.mubr.bf16.gmra.mrb[0].mxu0 %v1053
    %v1569 = vpop.f32.mrb[0].mxu0
    %v1570 = vadd.f32 0.0, %v1569
    %v1571 = vpop.f32.mrb[0].mxu0
    %v1572 = vadd.f32 0.0, %v1571
    %v1573 = vpop.f32.mrb[0].mxu0
    %v1574 = vadd.f32 0.0, %v1573
    %v1575 = vpop.f32.mrb[0].mxu0
    %v1576 = vadd.f32 0.0, %v1575
    %1577 = vdwg.mxu0
    %1578 = vmatprep.subr.bf16.mxu0 %v1346
    %1579 = vmatpush1.bf16.msra.mxu0 %v1345
    %1580 = vmatprep.subr.bf16.mxu0 %v1352
    %1581 = vmatpush1.bf16.msra.mxu0 %v1351
    %1582 = vmatprep.subr.bf16.mxu0 %v1358
    %1583 = vmatpush1.bf16.msra.mxu0 %v1357
    %1584 = vmatprep.subr.bf16.mxu0 %v1364
    %1585 = vmatpush1.bf16.msra.mxu0 %v1363
    %1586 = vmatprep.subr.bf16.mxu0 %v1370
    %1587 = vmatpush1.bf16.msra.mxu0 %v1369
    %1588 = vmatprep.subr.bf16.mxu0 %v1376
    %1589 = vmatpush1.bf16.msra.mxu0 %v1375
    %1590 = vmatprep.subr.bf16.mxu0 %v1382
    %1591 = vmatpush1.bf16.msra.mxu0 %v1381
    %1592 = vmatprep.subr.bf16.mxu0 %v1388
    %1593 = vmatpush1.bf16.msra.mxu0 %v1387
    %1594 = vmatprep.subr.bf16.mxu0 %v1394
    %1595 = vmatpush1.bf16.msra.mxu0 %v1393
    %1596 = vmatprep.subr.bf16.mxu0 %v1400
    %1597 = vmatpush1.bf16.msra.mxu0 %v1399
    %1598 = vmatprep.subr.bf16.mxu0 %v1406
    %1599 = vmatpush1.bf16.msra.mxu0 %v1405
    %1600 = vmatprep.subr.bf16.mxu0 %v1412
    %1601 = vmatpush1.bf16.msra.mxu0 %v1411
    %1602 = vmatprep.subr.bf16.mxu0 %v1418
    %1603 = vmatpush1.bf16.msra.mxu0 %v1417
    %1604 = vmatprep.subr.bf16.mxu0 %v1424
    %1605 = vmatpush1.bf16.msra.mxu0 %v1423
    %1606 = vmatprep.subr.bf16.mxu0 %v1430
    %1607 = vmatpush1.bf16.msra.mxu0 %v1429
    %1608 = vmatprep.subr.bf16.mxu0 %v1436
    %1609 = vmatpush1.bf16.msra.mxu0 %v1435
    %1610 = vmatprep.mubr.bf16.mxu0 %v1054
    %1611 = vmatmul.mubr.bf16.gmra.mrb[0].mxu0 %v1053
    %v1612 = vpop.f32.mrb[0].mxu0
    %v1613 = vadd.f32 0.0, %v1612
    %v1614 = vpop.f32.mrb[0].mxu0
    %v1615 = vadd.f32 0.0, %v1614
    %v1616 = vpop.f32.mrb[0].mxu0
    %v1617 = vadd.f32 0.0, %v1616
    %v1618 = vpop.f32.mrb[0].mxu0
    %v1619 = vadd.f32 0.0, %v1618
    %1620 = vdwg.mxu0
    %1621 = vmatprep.subr.bf16.mxu0 %v1348
    %1622 = vmatpush1.bf16.msra.mxu0 %v1347
    %1623 = vmatprep.subr.bf16.mxu0 %v1354
    %1624 = vmatpush1.bf16.msra.mxu0 %v1353
    %1625 = vmatprep.subr.bf16.mxu0 %v1360
    %1626 = vmatpush1.bf16.msra.mxu0 %v1359
    %1627 = vmatprep.subr.bf16.mxu0 %v1366
    %1628 = vmatpush1.bf16.msra.mxu0 %v1365
    %1629 = vmatprep.subr.bf16.mxu0 %v1372
    %1630 = vmatpush1.bf16.msra.mxu0 %v1371
    %1631 = vmatprep.subr.bf16.mxu0 %v1378
    %1632 = vmatpush1.bf16.msra.mxu0 %v1377
    %1633 = vmatprep.subr.bf16.mxu0 %v1384
    %1634 = vmatpush1.bf16.msra.mxu0 %v1383
    %1635 = vmatprep.subr.bf16.mxu0 %v1390
    %1636 = vmatpush1.bf16.msra.mxu0 %v1389
    %1637 = vmatprep.subr.bf16.mxu0 %v1396
    %1638 = vmatpush1.bf16.msra.mxu0 %v1395
    %1639 = vmatprep.subr.bf16.mxu0 %v1402
    %1640 = vmatpush1.bf16.msra.mxu0 %v1401
    %1641 = vmatprep.subr.bf16.mxu0 %v1408
    %1642 = vmatpush1.bf16.msra.mxu0 %v1407
    %1643 = vmatprep.subr.bf16.mxu0 %v1414
    %1644 = vmatpush1.bf16.msra.mxu0 %v1413
    %1645 = vmatprep.subr.bf16.mxu0 %v1420
    %1646 = vmatpush1.bf16.msra.mxu0 %v1419
    %1647 = vmatprep.subr.bf16.mxu0 %v1426
    %1648 = vmatpush1.bf16.msra.mxu0 %v1425
    %1649 = vmatprep.subr.bf16.mxu0 %v1432
    %1650 = vmatpush1.bf16.msra.mxu0 %v1431
    %1651 = vmatprep.subr.bf16.mxu0 %v1438
    %1652 = vmatpush1.bf16.msra.mxu0 %v1437
    %1653 = vmatprep.mubr.bf16.mxu0 %v1054
    %1654 = vmatmul.mubr.bf16.gmra.mrb[0].mxu0 %v1053
    %v1655 = vpop.f32.mrb[0].mxu0
    %v1656 = vadd.f32 0.0, %v1655
    %v1657 = vpop.f32.mrb[0].mxu0
    %v1658 = vadd.f32 0.0, %v1657
    %v1659 = vpop.f32.mrb[0].mxu0
    %v1660 = vadd.f32 0.0, %v1659
    %v1661 = vpop.f32.mrb[0].mxu0
    %v1662 = vadd.f32 0.0, %v1661
    %1663 = vdwg.mxu0
    %vm1664 = vcmask 261120
    %v1666 = vsel %vm1664, %v1570, 0
    %v1669 = vsel %vm1664, %v1574, 0
    %v1672 = vsel %vm1664, %v1613, 0
    %v1675 = vsel %vm1664, %v1617, 0
    %1677 = vmatprep.subr.mxu0 0.0
    %1678 = vmatpush1.xpose.msra.mxu0 %v1672
    %1679 = vmatprep.subr.mxu0 0.0
    %1680 = vmatpush1.xpose.msra.mxu0 %v1675
    %1681 = vmatprep.subr.mxu0 0.0
    %1682 = vmatpush1.xpose.msra.mxu0 0.0
    %1683 = vmatprep.subr.mxu0 0.0
    %1684 = vmatpush1.xpose.msra.mxu0 0.0
    %1685 = vmatprep.subr.mxu0 0.0
    %1686 = vmatpush1.xpose.msra.mxu0 0.0
    %1687 = vmatprep.subr.mxu0 0.0
    %1688 = vmatpush1.xpose.msra.mxu0 0.0
    %1689 = vmatprep.subr.mxu0 0.0
    %1690 = vmatpush1.xpose.msra.mxu0 0.0
    %1691 = vmatprep.subr.mxu0 0.0
    %1692 = vmatpush1.xpose.msra.mxu0 0.0
    %1693 = vmatprep.subr.mxu0 0.0
    %1694 = vmatpush1.xpose.msra.mxu0 0.0
    %1695 = vmatprep.subr.mxu0 0.0
    %1696 = vmatpush1.xpose.msra.mxu0 0.0
    %1697 = vmatprep.subr.mxu0 0.0
    %1698 = vmatpush1.xpose.msra.mxu0 0.0
    %1699 = vmatprep.subr.mxu0 0.0
    %1700 = vmatpush1.xpose.msra.mxu0 0.0
    %1701 = vmatprep.subr.mxu0 0.0
    %1702 = vmatpush1.xpose.msra.mxu0 0.0
    %1703 = vmatprep.subr.mxu0 0.0
    %1704 = vmatpush1.xpose.msra.mxu0 0.0
    %1705 = vmatprep.subr.mxu0 0.0
    %1706 = vmatpush1.xpose.msra.mxu0 0.0
    %1707 = vmatprep.subr.mxu0 0.0
    %1708 = vmatpush1.xpose.msra.mxu0 0.0
    %1709 = vmatprep.subr.mxu0 0.0
    %1710 = vmatpush1.xpose.msra.mxu0 0.0
    %1711 = vmatprep.subr.mxu0 0.0
    %1712 = vmatpush1.xpose.msra.mxu0 0.0
    %1713 = vmatprep.subr.mxu0 0.0
    %1714 = vmatpush1.xpose.msra.mxu0 0.0
    %1715 = vmatprep.subr.mxu0 0.0
    %1716 = vmatpush1.xpose.msra.mxu0 0.0
    %1717 = vmatprep.subr.mxu0 0.0
    %1718 = vmatpush1.xpose.msra.mxu0 0.0
    %1719 = vmatprep.subr.mxu0 0.0
    %1720 = vmatpush1.xpose.msra.mxu0 0.0
    %1721 = vmatprep.subr.mxu0 0.0
    %1722 = vmatpush1.xpose.msra.mxu0 0.0
    %1723 = vmatprep.subr.mxu0 0.0
    %1724 = vmatpush1.xpose.msra.mxu0 0.0
    %1725 = vmatprep.subr.mxu0 0.0
    %1726 = vmatpush1.xpose.msra.mxu0 0.0
    %1727 = vmatprep.subr.mxu0 0.0
    %1728 = vmatpush1.xpose.msra.mxu0 0.0
    %1729 = vmatprep.subr.mxu0 0.0
    %1730 = vmatpush1.xpose.msra.mxu0 0.0
    %1731 = vmatprep.subr.mxu0 0.0
    %1732 = vmatpush1.xpose.msra.mxu0 0.0
    %1733 = vmatprep.subr.mxu0 0.0
    %1734 = vmatpush1.xpose.msra.mxu0 0.0
    %1735 = vmatprep.subr.mxu0 0.0
    %1736 = vmatpush1.xpose.msra.mxu0 0.0
    %1737 = vmatprep.subr.mxu0 0.0
    %1738 = vmatpush1.xpose.msra.mxu0 0.0
    %1739 = vmatprep.subr.mxu0 0.0
    %1740 = vmatpush1.xpose.msra.mxu0 0.0
    %1741 = vmatprep.mubr.f32.mxu0 0.0
    %1742 = vmatmul.mubr.f32.gmra.mrb[0].mxu0 %v1666
    %v1743 = vpop.f32.mrb[0].mxu0
    %v1744 = vadd.f32 0.0, %v1743
    %v1745 = vpop.f32.mrb[0].mxu0
    %1746 = vmatprep.mubr.f32.mxu0 0.0
    %1747 = vmatmul.mubr.f32.gmra.mrb[0].mxu0 %v1669
    %v1748 = vpop.f32.mrb[0].mxu0
    %v1749 = vadd.f32 0.0, %v1748
    %v1750 = vpop.f32.mrb[0].mxu0
    %1751 = vdwg.mxu0
    %vm1752 = vcmask 130048
    %v1753 = vsel %vm1752, %v1744, -inf
    %1754 = vmax.xlane.f32.xlu0 %v1753
    %v1755 = vpop.xlane.xlu0 %1754
    %v1756 = vsel %vm1752, %v1749, -inf
    %1757 = vmax.xlane.f32.xlu0 %v1756
    %v1758 = vpop.xlane.xlu0 %1757
    %v1759 = vsub.f32 %v1744, %v1755
    %v1760 = vsub.f32 %v1749, %v1758
    %v1761 = vmul.f32 %v1759, 1.442695
    %v1762 = vpow.pop %v1761
    %v1763 = vmul.f32 %v1760, 1.442695
    %v1764 = vpow.pop %v1763
    %v1765 = vsel %vm1752, %v1762, 0.0
    %1766 = vadd.xlane.f32.xlu0 %v1765
    %v1767 = vpop.xlane.xlu0 %1766
    %v1768 = vsel %vm1752, %v1764, 0.0
    %1769 = vadd.xlane.f32.xlu0 %v1768
    %v1770 = vpop.xlane.xlu0 %1769
    %v1771 = vrcp.pop %v1767
    %v1772 = vmul.f32 %v1762, %v1771
    %v1773 = vrcp.pop %v1770
    %v1774 = vmul.f32 %v1764, %v1773
    %v1776 = vsel %vm1752, %v1772, 0
    %v1779 = vsel %vm1752, %v1774, 0
    %1781 = vmatprep.subr.mxu0 0.0
    %1782 = vmatpush1.msra.mxu0 %v1656
    %1783 = vmatprep.subr.mxu0 0.0
    %1784 = vmatpush1.msra.mxu0 %v1660
    %1785 = vmatprep.subr.mxu0 0.0
    %1786 = vmatpush1.msra.mxu0 0.0
    %1787 = vmatprep.subr.mxu0 0.0
    %1788 = vmatpush1.msra.mxu0 0.0
    %1789 = vmatprep.subr.mxu0 0.0
    %1790 = vmatpush1.msra.mxu0 0.0
    %1791 = vmatprep.subr.mxu0 0.0
    %1792 = vmatpush1.msra.mxu0 0.0
    %1793 = vmatprep.subr.mxu0 0.0
    %1794 = vmatpush1.msra.mxu0 0.0
    %1795 = vmatprep.subr.mxu0 0.0
    %1796 = vmatpush1.msra.mxu0 0.0
    %1797 = vmatprep.subr.mxu0 0.0
    %1798 = vmatpush1.msra.mxu0 0.0
    %1799 = vmatprep.subr.mxu0 0.0
    %1800 = vmatpush1.msra.mxu0 0.0
    %1801 = vmatprep.subr.mxu0 0.0
    %1802 = vmatpush1.msra.mxu0 0.0
    %1803 = vmatprep.subr.mxu0 0.0
    %1804 = vmatpush1.msra.mxu0 0.0
    %1805 = vmatprep.subr.mxu0 0.0
    %1806 = vmatpush1.msra.mxu0 0.0
    %1807 = vmatprep.subr.mxu0 0.0
    %1808 = vmatpush1.msra.mxu0 0.0
    %1809 = vmatprep.subr.mxu0 0.0
    %1810 = vmatpush1.msra.mxu0 0.0
    %1811 = vmatprep.subr.mxu0 0.0
    %1812 = vmatpush1.msra.mxu0 0.0
    %1813 = vmatprep.subr.mxu0 0.0
    %1814 = vmatpush1.msra.mxu0 0.0
    %1815 = vmatprep.subr.mxu0 0.0
    %1816 = vmatpush1.msra.mxu0 0.0
    %1817 = vmatprep.subr.mxu0 0.0
    %1818 = vmatpush1.msra.mxu0 0.0
    %1819 = vmatprep.subr.mxu0 0.0
    %1820 = vmatpush1.msra.mxu0 0.0
    %1821 = vmatprep.subr.mxu0 0.0
    %1822 = vmatpush1.msra.mxu0 0.0
    %1823 = vmatprep.subr.mxu0 0.0
    %1824 = vmatpush1.msra.mxu0 0.0
    %1825 = vmatprep.subr.mxu0 0.0
    %1826 = vmatpush1.msra.mxu0 0.0
    %1827 = vmatprep.subr.mxu0 0.0
    %1828 = vmatpush1.msra.mxu0 0.0
    %1829 = vmatprep.subr.mxu0 0.0
    %1830 = vmatpush1.msra.mxu0 0.0
    %1831 = vmatprep.subr.mxu0 0.0
    %1832 = vmatpush1.msra.mxu0 0.0
    %1833 = vmatprep.subr.mxu0 0.0
    %1834 = vmatpush1.msra.mxu0 0.0
    %1835 = vmatprep.subr.mxu0 0.0
    %1836 = vmatpush1.msra.mxu0 0.0
    %1837 = vmatprep.subr.mxu0 0.0
    %1838 = vmatpush1.msra.mxu0 0.0
    %1839 = vmatprep.subr.mxu0 0.0
    %1840 = vmatpush1.msra.mxu0 0.0
    %1841 = vmatprep.subr.mxu0 0.0
    %1842 = vmatpush1.msra.mxu0 0.0
    %1843 = vmatprep.subr.mxu0 0.0
    %1844 = vmatpush1.msra.mxu0 0.0
    %1845 = vmatprep.mubr.f32.mxu0 0.0
    %1846 = vmatmul.mubr.f32.gmra.mrb[0].mxu0 %v1776
    %v1847 = vpop.f32.mrb[0].mxu0
    %v1848 = vadd.f32 0.0, %v1847
    %v1849 = vpop.f32.mrb[0].mxu0
    %1850 = vmatprep.mubr.f32.mxu0 0.0
    %1851 = vmatmul.mubr.f32.gmra.mrb[0].mxu0 %v1779
    %v1852 = vpop.f32.mrb[0].mxu0
    %v1853 = vadd.f32 0.0, %v1852
    %v1854 = vpop.f32.mrb[0].mxu0
    %1855 = vdwg.mxu0
    %1856 = vrot.lane.b32.xlu0 %v1570, 96
    %v1857 = vpop.permute.xlu0 %1856
    %1858 = vrot.lane.b32.xlu0 %v1574, 96
    %v1859 = vpop.permute.xlu0 %1858
    %1860 = vrot.lane.b32.xlu0 %v1613, 96
    %v1861 = vpop.permute.xlu0 %1860
    %1862 = vrot.lane.b32.xlu0 %v1617, 96
    %v1863 = vpop.permute.xlu0 %1862
    %v1864 = vsel %vm1664, %v1857, 0
    %v1866 = vsel %vm1664, %v1859, 0
    %v1868 = vsel %vm1664, %v1861, 0
    %v1870 = vsel %vm1664, %v1863, 0
    %1872 = vmatprep.subr.mxu0 0.0
    %1873 = vmatpush1.xpose.msra.mxu0 %v1868
    %1874 = vmatprep.subr.mxu0 0.0
    %1875 = vmatpush1.xpose.msra.mxu0 %v1870
    %1876 = vmatprep.subr.mxu0 0.0
    %1877 = vmatpush1.xpose.msra.mxu0 0.0
    %1878 = vmatprep.subr.mxu0 0.0
    %1879 = vmatpush1.xpose.msra.mxu0 0.0
    %1880 = vmatprep.subr.mxu0 0.0
    %1881 = vmatpush1.xpose.msra.mxu0 0.0
    %1882 = vmatprep.subr.mxu0 0.0
    %1883 = vmatpush1.xpose.msra.mxu0 0.0
    %1884 = vmatprep.subr.mxu0 0.0
    %1885 = vmatpush1.xpose.msra.mxu0 0.0
    %1886 = vmatprep.subr.mxu0 0.0
    %1887 = vmatpush1.xpose.msra.mxu0 0.0
    %1888 = vmatprep.subr.mxu0 0.0
    %1889 = vmatpush1.xpose.msra.mxu0 0.0
    %1890 = vmatprep.subr.mxu0 0.0
    %1891 = vmatpush1.xpose.msra.mxu0 0.0
    %1892 = vmatprep.subr.mxu0 0.0
    %1893 = vmatpush1.xpose.msra.mxu0 0.0
    %1894 = vmatprep.subr.mxu0 0.0
    %1895 = vmatpush1.xpose.msra.mxu0 0.0
    %1896 = vmatprep.subr.mxu0 0.0
    %1897 = vmatpush1.xpose.msra.mxu0 0.0
    %1898 = vmatprep.subr.mxu0 0.0
    %1899 = vmatpush1.xpose.msra.mxu0 0.0
    %1900 = vmatprep.subr.mxu0 0.0
    %1901 = vmatpush1.xpose.msra.mxu0 0.0
    %1902 = vmatprep.subr.mxu0 0.0
    %1903 = vmatpush1.xpose.msra.mxu0 0.0
    %1904 = vmatprep.subr.mxu0 0.0
    %1905 = vmatpush1.xpose.msra.mxu0 0.0
    %1906 = vmatprep.subr.mxu0 0.0
    %1907 = vmatpush1.xpose.msra.mxu0 0.0
    %1908 = vmatprep.subr.mxu0 0.0
    %1909 = vmatpush1.xpose.msra.mxu0 0.0
    %1910 = vmatprep.subr.mxu0 0.0
    %1911 = vmatpush1.xpose.msra.mxu0 0.0
    %1912 = vmatprep.subr.mxu0 0.0
    %1913 = vmatpush1.xpose.msra.mxu0 0.0
    %1914 = vmatprep.subr.mxu0 0.0
    %1915 = vmatpush1.xpose.msra.mxu0 0.0
    %1916 = vmatprep.subr.mxu0 0.0
    %1917 = vmatpush1.xpose.msra.mxu0 0.0
    %1918 = vmatprep.subr.mxu0 0.0
    %1919 = vmatpush1.xpose.msra.mxu0 0.0
    %1920 = vmatprep.subr.mxu0 0.0
    %1921 = vmatpush1.xpose.msra.mxu0 0.0
    %1922 = vmatprep.subr.mxu0 0.0
    %1923 = vmatpush1.xpose.msra.mxu0 0.0
    %1924 = vmatprep.subr.mxu0 0.0
    %1925 = vmatpush1.xpose.msra.mxu0 0.0
    %1926 = vmatprep.subr.mxu0 0.0
    %1927 = vmatpush1.xpose.msra.mxu0 0.0
    %1928 = vmatprep.subr.mxu0 0.0
    %1929 = vmatpush1.xpose.msra.mxu0 0.0
    %1930 = vmatprep.subr.mxu0 0.0
    %1931 = vmatpush1.xpose.msra.mxu0 0.0
    %1932 = vmatprep.subr.mxu0 0.0
    %1933 = vmatpush1.xpose.msra.mxu0 0.0
    %1934 = vmatprep.subr.mxu0 0.0
    %1935 = vmatpush1.xpose.msra.mxu0 0.0
    %1936 = vmatprep.mubr.f32.mxu0 0.0
    %1937 = vmatmul.mubr.f32.gmra.mrb[0].mxu0 %v1864
    %v1938 = vpop.f32.mrb[0].mxu0
    %v1939 = vadd.f32 0.0, %v1938
    %v1940 = vpop.f32.mrb[0].mxu0
    %1941 = vmatprep.mubr.f32.mxu0 0.0
    %1942 = vmatmul.mubr.f32.gmra.mrb[0].mxu0 %v1866
    %v1943 = vpop.f32.mrb[0].mxu0
    %v1944 = vadd.f32 0.0, %v1943
    %v1945 = vpop.f32.mrb[0].mxu0
    %1946 = vdwg.mxu0
    %v1947 = vsel %vm1752, %v1939, -inf
    %1948 = vmax.xlane.f32.xlu0 %v1947
    %v1949 = vpop.xlane.xlu0 %1948
    %v1950 = vsel %vm1752, %v1944, -inf
    %1951 = vmax.xlane.f32.xlu0 %v1950
    %v1952 = vpop.xlane.xlu0 %1951
    %v1953 = vsub.f32 %v1939, %v1949
    %v1954 = vsub.f32 %v1944, %v1952
    %v1955 = vmul.f32 %v1953, 1.442695
    %v1956 = vpow.pop %v1955
    %v1957 = vmul.f32 %v1954, 1.442695
    %v1958 = vpow.pop %v1957
    %v1959 = vsel %vm1752, %v1956, 0.0
    %1960 = vadd.xlane.f32.xlu0 %v1959
    %v1961 = vpop.xlane.xlu0 %1960
    %v1962 = vsel %vm1752, %v1958, 0.0
    %1963 = vadd.xlane.f32.xlu0 %v1962
    %v1964 = vpop.xlane.xlu0 %1963
    %v1965 = vrcp.pop %v1961
    %v1966 = vmul.f32 %v1956, %v1965
    %v1967 = vrcp.pop %v1964
    %v1968 = vmul.f32 %v1958, %v1967
    %1971 = vrot.lane.b32.xlu0 %v1656, 96
    %v1972 = vpop.permute.xlu0 %1971
    %1973 = vrot.lane.b32.xlu0 %v1660, 96
    %v1974 = vpop.permute.xlu0 %1973
    %v1978 = vsel %vm1752, %v1966, 0
    %v1981 = vsel %vm1752, %v1968, 0
    %1983 = vmatprep.subr.mxu0 0.0
    %1984 = vmatpush1.msra.mxu0 %v1972
    %1985 = vmatprep.subr.mxu0 0.0
    %1986 = vmatpush1.msra.mxu0 %v1974
    %1987 = vmatprep.subr.mxu0 0.0
    %1988 = vmatpush1.msra.mxu0 0.0
    %1989 = vmatprep.subr.mxu0 0.0
    %1990 = vmatpush1.msra.mxu0 0.0
    %1991 = vmatprep.subr.mxu0 0.0
    %1992 = vmatpush1.msra.mxu0 0.0
    %1993 = vmatprep.subr.mxu0 0.0
    %1994 = vmatpush1.msra.mxu0 0.0
    %1995 = vmatprep.subr.mxu0 0.0
    %1996 = vmatpush1.msra.mxu0 0.0
    %1997 = vmatprep.subr.mxu0 0.0
    %1998 = vmatpush1.msra.mxu0 0.0
    %1999 = vmatprep.subr.mxu0 0.0
    %2000 = vmatpush1.msra.mxu0 0.0
    %2001 = vmatprep.subr.mxu0 0.0
    %2002 = vmatpush1.msra.mxu0 0.0
    %2003 = vmatprep.subr.mxu0 0.0
    %2004 = vmatpush1.msra.mxu0 0.0
    %2005 = vmatprep.subr.mxu0 0.0
    %2006 = vmatpush1.msra.mxu0 0.0
    %2007 = vmatprep.subr.mxu0 0.0
    %2008 = vmatpush1.msra.mxu0 0.0
    %2009 = vmatprep.subr.mxu0 0.0
    %2010 = vmatpush1.msra.mxu0 0.0
    %2011 = vmatprep.subr.mxu0 0.0
    %2012 = vmatpush1.msra.mxu0 0.0
    %2013 = vmatprep.subr.mxu0 0.0
    %2014 = vmatpush1.msra.mxu0 0.0
    %2015 = vmatprep.subr.mxu0 0.0
    %2016 = vmatpush1.msra.mxu0 0.0
    %2017 = vmatprep.subr.mxu0 0.0
    %2018 = vmatpush1.msra.mxu0 0.0
    %2019 = vmatprep.subr.mxu0 0.0
    %2020 = vmatpush1.msra.mxu0 0.0
    %2021 = vmatprep.subr.mxu0 0.0
    %2022 = vmatpush1.msra.mxu0 0.0
    %2023 = vmatprep.subr.mxu0 0.0
    %2024 = vmatpush1.msra.mxu0 0.0
    %2025 = vmatprep.subr.mxu0 0.0
    %2026 = vmatpush1.msra.mxu0 0.0
    %2027 = vmatprep.subr.mxu0 0.0
    %2028 = vmatpush1.msra.mxu0 0.0
    %2029 = vmatprep.subr.mxu0 0.0
    %2030 = vmatpush1.msra.mxu0 0.0
    %2031 = vmatprep.subr.mxu0 0.0
    %2032 = vmatpush1.msra.mxu0 0.0
    %2033 = vmatprep.subr.mxu0 0.0
    %2034 = vmatpush1.msra.mxu0 0.0
    %2035 = vmatprep.subr.mxu0 0.0
    %2036 = vmatpush1.msra.mxu0 0.0
    %2037 = vmatprep.subr.mxu0 0.0
    %2038 = vmatpush1.msra.mxu0 0.0
    %2039 = vmatprep.subr.mxu0 0.0
    %2040 = vmatpush1.msra.mxu0 0.0
    %2041 = vmatprep.subr.mxu0 0.0
    %2042 = vmatpush1.msra.mxu0 0.0
    %2043 = vmatprep.subr.mxu0 0.0
    %2044 = vmatpush1.msra.mxu0 0.0
    %2045 = vmatprep.subr.mxu0 0.0
    %2046 = vmatpush1.msra.mxu0 0.0
    %2047 = vmatprep.mubr.f32.mxu0 0.0
    %2048 = vmatmul.mubr.f32.gmra.mrb[0].mxu0 %v1978
    %v2049 = vpop.f32.mrb[0].mxu0
    %v2050 = vadd.f32 0.0, %v2049
    %v2051 = vpop.f32.mrb[0].mxu0
    %2052 = vmatprep.mubr.f32.mxu0 0.0
    %2053 = vmatmul.mubr.f32.gmra.mrb[0].mxu0 %v1981
    %v2054 = vpop.f32.mrb[0].mxu0
    %v2055 = vadd.f32 0.0, %v2054
    %v2056 = vpop.f32.mrb[0].mxu0
    %2057 = vdwg.mxu0
    %2058 = vrot.lane.b32.xlu0 %v1570, 64
    %v2059 = vpop.permute.xlu0 %2058
    %2060 = vrot.lane.b32.xlu0 %v1574, 64
    %v2061 = vpop.permute.xlu0 %2060
    %2062 = vrot.lane.b32.xlu0 %v1613, 64
    %v2063 = vpop.permute.xlu0 %2062
    %2064 = vrot.lane.b32.xlu0 %v1617, 64
    %v2065 = vpop.permute.xlu0 %2064
    %v2066 = vsel %vm1664, %v2059, 0
    %v2068 = vsel %vm1664, %v2061, 0
    %v2070 = vsel %vm1664, %v2063, 0
    %v2072 = vsel %vm1664, %v2065, 0
    %2074 = vmatprep.subr.mxu0 0.0
    %2075 = vmatpush1.xpose.msra.mxu0 %v2070
    %2076 = vmatprep.subr.mxu0 0.0
    %2077 = vmatpush1.xpose.msra.mxu0 %v2072
    %2078 = vmatprep.subr.mxu0 0.0
    %2079 = vmatpush1.xpose.msra.mxu0 0.0
    %2080 = vmatprep.subr.mxu0 0.0
    %2081 = vmatpush1.xpose.msra.mxu0 0.0
    %2082 = vmatprep.subr.mxu0 0.0
    %2083 = vmatpush1.xpose.msra.mxu0 0.0
    %2084 = vmatprep.subr.mxu0 0.0
    %2085 = vmatpush1.xpose.msra.mxu0 0.0
    %2086 = vmatprep.subr.mxu0 0.0
    %2087 = vmatpush1.xpose.msra.mxu0 0.0
    %2088 = vmatprep.subr.mxu0 0.0
    %2089 = vmatpush1.xpose.msra.mxu0 0.0
    %2090 = vmatprep.subr.mxu0 0.0
    %2091 = vmatpush1.xpose.msra.mxu0 0.0
    %2092 = vmatprep.subr.mxu0 0.0
    %2093 = vmatpush1.xpose.msra.mxu0 0.0
    %2094 = vmatprep.subr.mxu0 0.0
    %2095 = vmatpush1.xpose.msra.mxu0 0.0
    %2096 = vmatprep.subr.mxu0 0.0
    %2097 = vmatpush1.xpose.msra.mxu0 0.0
    %2098 = vmatprep.subr.mxu0 0.0
    %2099 = vmatpush1.xpose.msra.mxu0 0.0
    %2100 = vmatprep.subr.mxu0 0.0
    %2101 = vmatpush1.xpose.msra.mxu0 0.0
    %2102 = vmatprep.subr.mxu0 0.0
    %2103 = vmatpush1.xpose.msra.mxu0 0.0
    %2104 = vmatprep.subr.mxu0 0.0
    %2105 = vmatpush1.xpose.msra.mxu0 0.0
    %2106 = vmatprep.subr.mxu0 0.0
    %2107 = vmatpush1.xpose.msra.mxu0 0.0
    %2108 = vmatprep.subr.mxu0 0.0
    %2109 = vmatpush1.xpose.msra.mxu0 0.0
    %2110 = vmatprep.subr.mxu0 0.0
    %2111 = vmatpush1.xpose.msra.mxu0 0.0
    %2112 = vmatprep.subr.mxu0 0.0
    %2113 = vmatpush1.xpose.msra.mxu0 0.0
    %2114 = vmatprep.subr.mxu0 0.0
    %2115 = vmatpush1.xpose.msra.mxu0 0.0
    %2116 = vmatprep.subr.mxu0 0.0
    %2117 = vmatpush1.xpose.msra.mxu0 0.0
    %2118 = vmatprep.subr.mxu0 0.0
    %2119 = vmatpush1.xpose.msra.mxu0 0.0
    %2120 = vmatprep.subr.mxu0 0.0
    %2121 = vmatpush1.xpose.msra.mxu0 0.0
    %2122 = vmatprep.subr.mxu0 0.0
    %2123 = vmatpush1.xpose.msra.mxu0 0.0
    %2124 = vmatprep.subr.mxu0 0.0
    %2125 = vmatpush1.xpose.msra.mxu0 0.0
    %2126 = vmatprep.subr.mxu0 0.0
    %2127 = vmatpush1.xpose.msra.mxu0 0.0
    %2128 = vmatprep.subr.mxu0 0.0
    %2129 = vmatpush1.xpose.msra.mxu0 0.0
    %2130 = vmatprep.subr.mxu0 0.0
    %2131 = vmatpush1.xpose.msra.mxu0 0.0
    %2132 = vmatprep.subr.mxu0 0.0
    %2133 = vmatpush1.xpose.msra.mxu0 0.0
    %2134 = vmatprep.subr.mxu0 0.0
    %2135 = vmatpush1.xpose.msra.mxu0 0.0
    %2136 = vmatprep.subr.mxu0 0.0
    %2137 = vmatpush1.xpose.msra.mxu0 0.0
    %2138 = vmatprep.mubr.f32.mxu0 0.0
    %2139 = vmatmul.mubr.f32.gmra.mrb[0].mxu0 %v2066
    %v2140 = vpop.f32.mrb[0].mxu0
    %v2141 = vadd.f32 0.0, %v2140
    %v2142 = vpop.f32.mrb[0].mxu0
    %2143 = vmatprep.mubr.f32.mxu0 0.0
    %2144 = vmatmul.mubr.f32.gmra.mrb[0].mxu0 %v2068
    %v2145 = vpop.f32.mrb[0].mxu0
    %v2146 = vadd.f32 0.0, %v2145
    %v2147 = vpop.f32.mrb[0].mxu0
    %2148 = vdwg.mxu0
    %v2149 = vsel %vm1752, %v2141, -inf
    %2150 = vmax.xlane.f32.xlu0 %v2149
    %v2151 = vpop.xlane.xlu0 %2150
    %v2152 = vsel %vm1752, %v2146, -inf
    %2153 = vmax.xlane.f32.xlu0 %v2152
    %v2154 = vpop.xlane.xlu0 %2153
    %v2155 = vsub.f32 %v2141, %v2151
    %v2156 = vsub.f32 %v2146, %v2154
    %v2157 = vmul.f32 %v2155, 1.442695
    %v2158 = vpow.pop %v2157
    %v2159 = vmul.f32 %v2156, 1.442695
    %v2160 = vpow.pop %v2159
    %v2161 = vsel %vm1752, %v2158, 0.0
    %2162 = vadd.xlane.f32.xlu0 %v2161
    %v2163 = vpop.xlane.xlu0 %2162
    %v2164 = vsel %vm1752, %v2160, 0.0
    %2165 = vadd.xlane.f32.xlu0 %v2164
    %v2166 = vpop.xlane.xlu0 %2165
    %v2167 = vrcp.pop %v2163
    %v2168 = vmul.f32 %v2158, %v2167
    %v2169 = vrcp.pop %v2166
    %v2170 = vmul.f32 %v2160, %v2169
    %2171 = vrot.lane.b32.xlu0 %v1656, 64
    %v2172 = vpop.permute.xlu0 %2171
    %2173 = vrot.lane.b32.xlu0 %v1660, 64
    %v2174 = vpop.permute.xlu0 %2173
    %v2178 = vsel %vm1752, %v2168, 0
    %v2181 = vsel %vm1752, %v2170, 0
    %2183 = vmatprep.subr.mxu0 0.0
    %2184 = vmatpush1.msra.mxu0 %v2172
    %2185 = vmatprep.subr.mxu0 0.0
    %2186 = vmatpush1.msra.mxu0 %v2174
    %2187 = vmatprep.subr.mxu0 0.0
    %2188 = vmatpush1.msra.mxu0 0.0
    %2189 = vmatprep.subr.mxu0 0.0
    %2190 = vmatpush1.msra.mxu0 0.0
    %2191 = vmatprep.subr.mxu0 0.0
    %2192 = vmatpush1.msra.mxu0 0.0
    %2193 = vmatprep.subr.mxu0 0.0
    %2194 = vmatpush1.msra.mxu0 0.0
    %2195 = vmatprep.subr.mxu0 0.0
    %2196 = vmatpush1.msra.mxu0 0.0
    %2197 = vmatprep.subr.mxu0 0.0
    %2198 = vmatpush1.msra.mxu0 0.0
    %2199 = vmatprep.subr.mxu0 0.0
    %2200 = vmatpush1.msra.mxu0 0.0
    %2201 = vmatprep.subr.mxu0 0.0
    %2202 = vmatpush1.msra.mxu0 0.0
    %2203 = vmatprep.subr.mxu0 0.0
    %2204 = vmatpush1.msra.mxu0 0.0
    %2205 = vmatprep.subr.mxu0 0.0
    %2206 = vmatpush1.msra.mxu0 0.0
    %2207 = vmatprep.subr.mxu0 0.0
    %2208 = vmatpush1.msra.mxu0 0.0
    %2209 = vmatprep.subr.mxu0 0.0
    %2210 = vmatpush1.msra.mxu0 0.0
    %2211 = vmatprep.subr.mxu0 0.0
    %2212 = vmatpush1.msra.mxu0 0.0
    %2213 = vmatprep.subr.mxu0 0.0
    %2214 = vmatpush1.msra.mxu0 0.0
    %2215 = vmatprep.subr.mxu0 0.0
    %2216 = vmatpush1.msra.mxu0 0.0
    %2217 = vmatprep.subr.mxu0 0.0
    %2218 = vmatpush1.msra.mxu0 0.0
    %2219 = vmatprep.subr.mxu0 0.0
    %2220 = vmatpush1.msra.mxu0 0.0
    %2221 = vmatprep.subr.mxu0 0.0
    %2222 = vmatpush1.msra.mxu0 0.0
    %2223 = vmatprep.subr.mxu0 0.0
    %2224 = vmatpush1.msra.mxu0 0.0
    %2225 = vmatprep.subr.mxu0 0.0
    %2226 = vmatpush1.msra.mxu0 0.0
    %2227 = vmatprep.subr.mxu0 0.0
    %2228 = vmatpush1.msra.mxu0 0.0
    %2229 = vmatprep.subr.mxu0 0.0
    %2230 = vmatpush1.msra.mxu0 0.0
    %2231 = vmatprep.subr.mxu0 0.0
    %2232 = vmatpush1.msra.mxu0 0.0
    %2233 = vmatprep.subr.mxu0 0.0
    %2234 = vmatpush1.msra.mxu0 0.0
    %2235 = vmatprep.subr.mxu0 0.0
    %2236 = vmatpush1.msra.mxu0 0.0
    %2237 = vmatprep.subr.mxu0 0.0
    %2238 = vmatpush1.msra.mxu0 0.0
    %2239 = vmatprep.subr.mxu0 0.0
    %2240 = vmatpush1.msra.mxu0 0.0
    %2241 = vmatprep.subr.mxu0 0.0
    %2242 = vmatpush1.msra.mxu0 0.0
    %2243 = vmatprep.subr.mxu0 0.0
    %2244 = vmatpush1.msra.mxu0 0.0
    %2245 = vmatprep.subr.mxu0 0.0
    %2246 = vmatpush1.msra.mxu0 0.0
    %2247 = vmatprep.mubr.f32.mxu0 0.0
    %2248 = vmatmul.mubr.f32.gmra.mrb[0].mxu0 %v2178
    %v2249 = vpop.f32.mrb[0].mxu0
    %v2250 = vadd.f32 0.0, %v2249
    %v2251 = vpop.f32.mrb[0].mxu0
    %2252 = vmatprep.mubr.f32.mxu0 0.0
    %2253 = vmatmul.mubr.f32.gmra.mrb[0].mxu0 %v2181
    %v2254 = vpop.f32.mrb[0].mxu0
    %v2255 = vadd.f32 0.0, %v2254
    %v2256 = vpop.f32.mrb[0].mxu0
    %2257 = vdwg.mxu0
    %2258 = vrot.lane.b32.xlu0 %v1570, 32
    %v2259 = vpop.permute.xlu0 %2258
    %2260 = vrot.lane.b32.xlu0 %v1574, 32
    %v2261 = vpop.permute.xlu0 %2260
    %2262 = vrot.lane.b32.xlu0 %v1613, 32
    %v2263 = vpop.permute.xlu0 %2262
    %2264 = vrot.lane.b32.xlu0 %v1617, 32
    %v2265 = vpop.permute.xlu0 %2264
    %v2266 = vsel %vm1664, %v2259, 0
    %v2268 = vsel %vm1664, %v2261, 0
    %v2270 = vsel %vm1664, %v2263, 0
    %v2272 = vsel %vm1664, %v2265, 0
    %2274 = vmatprep.subr.mxu0 0.0
    %2275 = vmatpush1.xpose.msra.mxu0 %v2270
    %2276 = vmatprep.subr.mxu0 0.0
    %2277 = vmatpush1.xpose.msra.mxu0 %v2272
    %2278 = vmatprep.subr.mxu0 0.0
    %2279 = vmatpush1.xpose.msra.mxu0 0.0
    %2280 = vmatprep.subr.mxu0 0.0
    %2281 = vmatpush1.xpose.msra.mxu0 0.0
    %2282 = vmatprep.subr.mxu0 0.0
    %2283 = vmatpush1.xpose.msra.mxu0 0.0
    %2284 = vmatprep.subr.mxu0 0.0
    %2285 = vmatpush1.xpose.msra.mxu0 0.0
    %2286 = vmatprep.subr.mxu0 0.0
    %2287 = vmatpush1.xpose.msra.mxu0 0.0
    %2288 = vmatprep.subr.mxu0 0.0
    %2289 = vmatpush1.xpose.msra.mxu0 0.0
    %2290 = vmatprep.subr.mxu0 0.0
    %2291 = vmatpush1.xpose.msra.mxu0 0.0
    %2292 = vmatprep.subr.mxu0 0.0
    %2293 = vmatpush1.xpose.msra.mxu0 0.0
    %2294 = vmatprep.subr.mxu0 0.0
    %2295 = vmatpush1.xpose.msra.mxu0 0.0
    %2296 = vmatprep.subr.mxu0 0.0
    %2297 = vmatpush1.xpose.msra.mxu0 0.0
    %2298 = vmatprep.subr.mxu0 0.0
    %2299 = vmatpush1.xpose.msra.mxu0 0.0
    %2300 = vmatprep.subr.mxu0 0.0
    %2301 = vmatpush1.xpose.msra.mxu0 0.0
    %2302 = vmatprep.subr.mxu0 0.0
    %2303 = vmatpush1.xpose.msra.mxu0 0.0
    %2304 = vmatprep.subr.mxu0 0.0
    %2305 = vmatpush1.xpose.msra.mxu0 0.0
    %2306 = vmatprep.subr.mxu0 0.0
    %2307 = vmatpush1.xpose.msra.mxu0 0.0
    %2308 = vmatprep.subr.mxu0 0.0
    %2309 = vmatpush1.xpose.msra.mxu0 0.0
    %2310 = vmatprep.subr.mxu0 0.0
    %2311 = vmatpush1.xpose.msra.mxu0 0.0
    %2312 = vmatprep.subr.mxu0 0.0
    %2313 = vmatpush1.xpose.msra.mxu0 0.0
    %2314 = vmatprep.subr.mxu0 0.0
    %2315 = vmatpush1.xpose.msra.mxu0 0.0
    %2316 = vmatprep.subr.mxu0 0.0
    %2317 = vmatpush1.xpose.msra.mxu0 0.0
    %2318 = vmatprep.subr.mxu0 0.0
    %2319 = vmatpush1.xpose.msra.mxu0 0.0
    %2320 = vmatprep.subr.mxu0 0.0
    %2321 = vmatpush1.xpose.msra.mxu0 0.0
    %2322 = vmatprep.subr.mxu0 0.0
    %2323 = vmatpush1.xpose.msra.mxu0 0.0
    %2324 = vmatprep.subr.mxu0 0.0
    %2325 = vmatpush1.xpose.msra.mxu0 0.0
    %2326 = vmatprep.subr.mxu0 0.0
    %2327 = vmatpush1.xpose.msra.mxu0 0.0
    %2328 = vmatprep.subr.mxu0 0.0
    %2329 = vmatpush1.xpose.msra.mxu0 0.0
    %2330 = vmatprep.subr.mxu0 0.0
    %2331 = vmatpush1.xpose.msra.mxu0 0.0
    %2332 = vmatprep.subr.mxu0 0.0
    %2333 = vmatpush1.xpose.msra.mxu0 0.0
    %2334 = vmatprep.subr.mxu0 0.0
    %2335 = vmatpush1.xpose.msra.mxu0 0.0
    %2336 = vmatprep.subr.mxu0 0.0
    %2337 = vmatpush1.xpose.msra.mxu0 0.0
    %2338 = vmatprep.mubr.f32.mxu0 0.0
    %2339 = vmatmul.mubr.f32.gmra.mrb[0].mxu0 %v2266
    %v2340 = vpop.f32.mrb[0].mxu0
    %v2341 = vadd.f32 0.0, %v2340
    %v2342 = vpop.f32.mrb[0].mxu0
    %2343 = vmatprep.mubr.f32.mxu0 0.0
    %2344 = vmatmul.mubr.f32.gmra.mrb[0].mxu0 %v2268
    %v2345 = vpop.f32.mrb[0].mxu0
    %v2346 = vadd.f32 0.0, %v2345
    %v2347 = vpop.f32.mrb[0].mxu0
    %2348 = vdwg.mxu0
    %v2349 = vsel %vm1752, %v2341, -inf
    %2350 = vmax.xlane.f32.xlu0 %v2349
    %v2351 = vpop.xlane.xlu0 %2350
    %v2352 = vsel %vm1752, %v2346, -inf
    %2353 = vmax.xlane.f32.xlu0 %v2352
    %v2354 = vpop.xlane.xlu0 %2353
    %v2355 = vsub.f32 %v2341, %v2351
    %v2356 = vsub.f32 %v2346, %v2354
    %v2357 = vmul.f32 %v2355, 1.442695
    %v2358 = vpow.pop %v2357
    %v2359 = vmul.f32 %v2356, 1.442695
    %v2360 = vpow.pop %v2359
    %v2361 = vsel %vm1752, %v2358, 0.0
    %2362 = vadd.xlane.f32.xlu0 %v2361
    %v2363 = vpop.xlane.xlu0 %2362
    %v2364 = vsel %vm1752, %v2360, 0.0
    %2365 = vadd.xlane.f32.xlu0 %v2364
    %v2366 = vpop.xlane.xlu0 %2365
    %v2367 = vrcp.pop %v2363
    %v2368 = vmul.f32 %v2358, %v2367
    %v2369 = vrcp.pop %v2366
    %v2370 = vmul.f32 %v2360, %v2369
    %2371 = vrot.lane.b32.xlu0 %v1656, 32
    %v2372 = vpop.permute.xlu0 %2371
    %2373 = vrot.lane.b32.xlu0 %v1660, 32
    %v2374 = vpop.permute.xlu0 %2373
    %v2378 = vsel %vm1752, %v2368, 0
    %v2381 = vsel %vm1752, %v2370, 0
    %2383 = vmatprep.subr.mxu0 0.0
    %2384 = vmatpush1.msra.mxu0 %v2372
    %2385 = vmatprep.subr.mxu0 0.0
    %2386 = vmatpush1.msra.mxu0 %v2374
    %2387 = vmatprep.subr.mxu0 0.0
    %2388 = vmatpush1.msra.mxu0 0.0
    %2389 = vmatprep.subr.mxu0 0.0
    %2390 = vmatpush1.msra.mxu0 0.0
    %2391 = vmatprep.subr.mxu0 0.0
    %2392 = vmatpush1.msra.mxu0 0.0
    %2393 = vmatprep.subr.mxu0 0.0
    %2394 = vmatpush1.msra.mxu0 0.0
    %2395 = vmatprep.subr.mxu0 0.0
    %2396 = vmatpush1.msra.mxu0 0.0
    %2397 = vmatprep.subr.mxu0 0.0
    %2398 = vmatpush1.msra.mxu0 0.0
    %2399 = vmatprep.subr.mxu0 0.0
    %2400 = vmatpush1.msra.mxu0 0.0
    %2401 = vmatprep.subr.mxu0 0.0
    %2402 = vmatpush1.msra.mxu0 0.0
    %2403 = vmatprep.subr.mxu0 0.0
    %2404 = vmatpush1.msra.mxu0 0.0
    %2405 = vmatprep.subr.mxu0 0.0
    %2406 = vmatpush1.msra.mxu0 0.0
    %2407 = vmatprep.subr.mxu0 0.0
    %2408 = vmatpush1.msra.mxu0 0.0
    %2409 = vmatprep.subr.mxu0 0.0
    %2410 = vmatpush1.msra.mxu0 0.0
    %2411 = vmatprep.subr.mxu0 0.0
    %2412 = vmatpush1.msra.mxu0 0.0
    %2413 = vmatprep.subr.mxu0 0.0
    %2414 = vmatpush1.msra.mxu0 0.0
    %2415 = vmatprep.subr.mxu0 0.0
    %2416 = vmatpush1.msra.mxu0 0.0
    %2417 = vmatprep.subr.mxu0 0.0
    %2418 = vmatpush1.msra.mxu0 0.0
    %2419 = vmatprep.subr.mxu0 0.0
    %2420 = vmatpush1.msra.mxu0 0.0
    %2421 = vmatprep.subr.mxu0 0.0
    %2422 = vmatpush1.msra.mxu0 0.0
    %2423 = vmatprep.subr.mxu0 0.0
    %2424 = vmatpush1.msra.mxu0 0.0
    %2425 = vmatprep.subr.mxu0 0.0
    %2426 = vmatpush1.msra.mxu0 0.0
    %2427 = vmatprep.subr.mxu0 0.0
    %2428 = vmatpush1.msra.mxu0 0.0
    %2429 = vmatprep.subr.mxu0 0.0
    %2430 = vmatpush1.msra.mxu0 0.0
    %2431 = vmatprep.subr.mxu0 0.0
    %2432 = vmatpush1.msra.mxu0 0.0
    %2433 = vmatprep.subr.mxu0 0.0
    %2434 = vmatpush1.msra.mxu0 0.0
    %2435 = vmatprep.subr.mxu0 0.0
    %2436 = vmatpush1.msra.mxu0 0.0
    %2437 = vmatprep.subr.mxu0 0.0
    %2438 = vmatpush1.msra.mxu0 0.0
    %2439 = vmatprep.subr.mxu0 0.0
    %2440 = vmatpush1.msra.mxu0 0.0
    %2441 = vmatprep.subr.mxu0 0.0
    %2442 = vmatpush1.msra.mxu0 0.0
    %2443 = vmatprep.subr.mxu0 0.0
    %2444 = vmatpush1.msra.mxu0 0.0
    %2445 = vmatprep.subr.mxu0 0.0
    %2446 = vmatpush1.msra.mxu0 0.0
    %2447 = vmatprep.mubr.f32.mxu0 0.0
    %2448 = vmatmul.mubr.f32.gmra.mrb[0].mxu0 %v2378
    %v2449 = vpop.f32.mrb[0].mxu0
    %v2450 = vadd.f32 0.0, %v2449
    %v2451 = vpop.f32.mrb[0].mxu0
    %2452 = vmatprep.mubr.f32.mxu0 0.0
    %2453 = vmatmul.mubr.f32.gmra.mrb[0].mxu0 %v2381
    %v2454 = vpop.f32.mrb[0].mxu0
    %v2455 = vadd.f32 0.0, %v2454
    %v2456 = vpop.f32.mrb[0].mxu0
    %2457 = vdwg.mxu0
    %v2459 = vsel %vm1664, %v1572, 0
    %v2462 = vsel %vm1664, %v1576, 0
    %v2465 = vsel %vm1664, %v1615, 0
    %v2468 = vsel %vm1664, %v1619, 0
    %2470 = vmatprep.subr.mxu0 0.0
    %2471 = vmatpush1.xpose.msra.mxu0 %v2465
    %2472 = vmatprep.subr.mxu0 0.0
    %2473 = vmatpush1.xpose.msra.mxu0 %v2468
    %2474 = vmatprep.subr.mxu0 0.0
    %2475 = vmatpush1.xpose.msra.mxu0 0.0
    %2476 = vmatprep.subr.mxu0 0.0
    %2477 = vmatpush1.xpose.msra.mxu0 0.0
    %2478 = vmatprep.subr.mxu0 0.0
    %2479 = vmatpush1.xpose.msra.mxu0 0.0
    %2480 = vmatprep.subr.mxu0 0.0
    %2481 = vmatpush1.xpose.msra.mxu0 0.0
    %2482 = vmatprep.subr.mxu0 0.0
    %2483 = vmatpush1.xpose.msra.mxu0 0.0
    %2484 = vmatprep.subr.mxu0 0.0
    %2485 = vmatpush1.xpose.msra.mxu0 0.0
    %2486 = vmatprep.subr.mxu0 0.0
    %2487 = vmatpush1.xpose.msra.mxu0 0.0
    %2488 = vmatprep.subr.mxu0 0.0
    %2489 = vmatpush1.xpose.msra.mxu0 0.0
    %2490 = vmatprep.subr.mxu0 0.0
    %2491 = vmatpush1.xpose.msra.mxu0 0.0
    %2492 = vmatprep.subr.mxu0 0.0
    %2493 = vmatpush1.xpose.msra.mxu0 0.0
    %2494 = vmatprep.subr.mxu0 0.0
    %2495 = vmatpush1.xpose.msra.mxu0 0.0
    %2496 = vmatprep.subr.mxu0 0.0
    %2497 = vmatpush1.xpose.msra.mxu0 0.0
    %2498 = vmatprep.subr.mxu0 0.0
    %2499 = vmatpush1.xpose.msra.mxu0 0.0
    %2500 = vmatprep.subr.mxu0 0.0
    %2501 = vmatpush1.xpose.msra.mxu0 0.0
    %2502 = vmatprep.subr.mxu0 0.0
    %2503 = vmatpush1.xpose.msra.mxu0 0.0
    %2504 = vmatprep.subr.mxu0 0.0
    %2505 = vmatpush1.xpose.msra.mxu0 0.0
    %2506 = vmatprep.subr.mxu0 0.0
    %2507 = vmatpush1.xpose.msra.mxu0 0.0
    %2508 = vmatprep.subr.mxu0 0.0
    %2509 = vmatpush1.xpose.msra.mxu0 0.0
    %2510 = vmatprep.subr.mxu0 0.0
    %2511 = vmatpush1.xpose.msra.mxu0 0.0
    %2512 = vmatprep.subr.mxu0 0.0
    %2513 = vmatpush1.xpose.msra.mxu0 0.0
    %2514 = vmatprep.subr.mxu0 0.0
    %2515 = vmatpush1.xpose.msra.mxu0 0.0
    %2516 = vmatprep.subr.mxu0 0.0
    %2517 = vmatpush1.xpose.msra.mxu0 0.0
    %2518 = vmatprep.subr.mxu0 0.0
    %2519 = vmatpush1.xpose.msra.mxu0 0.0
    %2520 = vmatprep.subr.mxu0 0.0
    %2521 = vmatpush1.xpose.msra.mxu0 0.0
    %2522 = vmatprep.subr.mxu0 0.0
    %2523 = vmatpush1.xpose.msra.mxu0 0.0
    %2524 = vmatprep.subr.mxu0 0.0
    %2525 = vmatpush1.xpose.msra.mxu0 0.0
    %2526 = vmatprep.subr.mxu0 0.0
    %2527 = vmatpush1.xpose.msra.mxu0 0.0
    %2528 = vmatprep.subr.mxu0 0.0
    %2529 = vmatpush1.xpose.msra.mxu0 0.0
    %2530 = vmatprep.subr.mxu0 0.0
    %2531 = vmatpush1.xpose.msra.mxu0 0.0
    %2532 = vmatprep.subr.mxu0 0.0
    %2533 = vmatpush1.xpose.msra.mxu0 0.0
    %2534 = vmatprep.mubr.f32.mxu0 0.0
    %2535 = vmatmul.mubr.f32.gmra.mrb[0].mxu0 %v2459
    %v2536 = vpop.f32.mrb[0].mxu0
    %v2537 = vadd.f32 0.0, %v2536
    %v2538 = vpop.f32.mrb[0].mxu0
    %2539 = vmatprep.mubr.f32.mxu0 0.0
    %2540 = vmatmul.mubr.f32.gmra.mrb[0].mxu0 %v2462
    %v2541 = vpop.f32.mrb[0].mxu0
    %v2542 = vadd.f32 0.0, %v2541
    %v2543 = vpop.f32.mrb[0].mxu0
    %2544 = vdwg.mxu0
    %v2545 = vsel %vm1752, %v2537, -inf
    %2546 = vmax.xlane.f32.xlu0 %v2545
    %v2547 = vpop.xlane.xlu0 %2546
    %v2548 = vsel %vm1752, %v2542, -inf
    %2549 = vmax.xlane.f32.xlu0 %v2548
    %v2550 = vpop.xlane.xlu0 %2549
    %v2551 = vsub.f32 %v2537, %v2547
    %v2552 = vsub.f32 %v2542, %v2550
    %v2553 = vmul.f32 %v2551, 1.442695
    %v2554 = vpow.pop %v2553
    %v2555 = vmul.f32 %v2552, 1.442695
    %v2556 = vpow.pop %v2555
    %v2557 = vsel %vm1752, %v2554, 0.0
    %2558 = vadd.xlane.f32.xlu0 %v2557
    %v2559 = vpop.xlane.xlu0 %2558
    %v2560 = vsel %vm1752, %v2556, 0.0
    %2561 = vadd.xlane.f32.xlu0 %v2560
    %v2562 = vpop.xlane.xlu0 %2561
    %v2563 = vrcp.pop %v2559
    %v2564 = vmul.f32 %v2554, %v2563
    %v2565 = vrcp.pop %v2562
    %v2566 = vmul.f32 %v2556, %v2565
    %v2568 = vsel %vm1752, %v2564, 0
    %v2571 = vsel %vm1752, %v2566, 0
    %2573 = vmatprep.subr.mxu0 0.0
    %2574 = vmatpush1.msra.mxu0 %v1658
    %2575 = vmatprep.subr.mxu0 0.0
    %2576 = vmatpush1.msra.mxu0 %v1662
    %2577 = vmatprep.subr.mxu0 0.0
    %2578 = vmatpush1.msra.mxu0 0.0
    %2579 = vmatprep.subr.mxu0 0.0
    %2580 = vmatpush1.msra.mxu0 0.0
    %2581 = vmatprep.subr.mxu0 0.0
    %2582 = vmatpush1.msra.mxu0 0.0
    %2583 = vmatprep.subr.mxu0 0.0
    %2584 = vmatpush1.msra.mxu0 0.0
    %2585 = vmatprep.subr.mxu0 0.0
    %2586 = vmatpush1.msra.mxu0 0.0
    %2587 = vmatprep.subr.mxu0 0.0
    %2588 = vmatpush1.msra.mxu0 0.0
    %2589 = vmatprep.subr.mxu0 0.0
    %2590 = vmatpush1.msra.mxu0 0.0
    %2591 = vmatprep.subr.mxu0 0.0
    %2592 = vmatpush1.msra.mxu0 0.0
    %2593 = vmatprep.subr.mxu0 0.0
    %2594 = vmatpush1.msra.mxu0 0.0
    %2595 = vmatprep.subr.mxu0 0.0
    %2596 = vmatpush1.msra.mxu0 0.0
    %2597 = vmatprep.subr.mxu0 0.0
    %2598 = vmatpush1.msra.mxu0 0.0
    %2599 = vmatprep.subr.mxu0 0.0
    %2600 = vmatpush1.msra.mxu0 0.0
    %2601 = vmatprep.subr.mxu0 0.0
    %2602 = vmatpush1.msra.mxu0 0.0
    %2603 = vmatprep.subr.mxu0 0.0
    %2604 = vmatpush1.msra.mxu0 0.0
    %2605 = vmatprep.subr.mxu0 0.0
    %2606 = vmatpush1.msra.mxu0 0.0
    %2607 = vmatprep.subr.mxu0 0.0
    %2608 = vmatpush1.msra.mxu0 0.0
    %2609 = vmatprep.subr.mxu0 0.0
    %2610 = vmatpush1.msra.mxu0 0.0
    %2611 = vmatprep.subr.mxu0 0.0
    %2612 = vmatpush1.msra.mxu0 0.0
    %2613 = vmatprep.subr.mxu0 0.0
    %2614 = vmatpush1.msra.mxu0 0.0
    %2615 = vmatprep.subr.mxu0 0.0
    %2616 = vmatpush1.msra.mxu0 0.0
    %2617 = vmatprep.subr.mxu0 0.0
    %2618 = vmatpush1.msra.mxu0 0.0
    %2619 = vmatprep.subr.mxu0 0.0
    %2620 = vmatpush1.msra.mxu0 0.0
    %2621 = vmatprep.subr.mxu0 0.0
    %2622 = vmatpush1.msra.mxu0 0.0
    %2623 = vmatprep.subr.mxu0 0.0
    %2624 = vmatpush1.msra.mxu0 0.0
    %2625 = vmatprep.subr.mxu0 0.0
    %2626 = vmatpush1.msra.mxu0 0.0
    %2627 = vmatprep.subr.mxu0 0.0
    %2628 = vmatpush1.msra.mxu0 0.0
    %2629 = vmatprep.subr.mxu0 0.0
    %2630 = vmatpush1.msra.mxu0 0.0
    %2631 = vmatprep.subr.mxu0 0.0
    %2632 = vmatpush1.msra.mxu0 0.0
    %2633 = vmatprep.subr.mxu0 0.0
    %2634 = vmatpush1.msra.mxu0 0.0
    %2635 = vmatprep.subr.mxu0 0.0
    %2636 = vmatpush1.msra.mxu0 0.0
    %2637 = vmatprep.mubr.f32.mxu0 0.0
    %2638 = vmatmul.mubr.f32.gmra.mrb[0].mxu0 %v2568
    %v2639 = vpop.f32.mrb[0].mxu0
    %v2640 = vadd.f32 0.0, %v2639
    %v2641 = vpop.f32.mrb[0].mxu0
    %2642 = vmatprep.mubr.f32.mxu0 0.0
    %2643 = vmatmul.mubr.f32.gmra.mrb[0].mxu0 %v2571
    %v2644 = vpop.f32.mrb[0].mxu0
    %v2645 = vadd.f32 0.0, %v2644
    %v2646 = vpop.f32.mrb[0].mxu0
    %2647 = vdwg.mxu0
    %2648 = vrot.lane.b32.xlu0 %v1572, 96
    %v2649 = vpop.permute.xlu0 %2648
    %2650 = vrot.lane.b32.xlu0 %v1576, 96
    %v2651 = vpop.permute.xlu0 %2650
    %2652 = vrot.lane.b32.xlu0 %v1615, 96
    %v2653 = vpop.permute.xlu0 %2652
    %2654 = vrot.lane.b32.xlu0 %v1619, 96
    %v2655 = vpop.permute.xlu0 %2654
    %v2656 = vsel %vm1664, %v2649, 0
    %v2658 = vsel %vm1664, %v2651, 0
    %v2660 = vsel %vm1664, %v2653, 0
    %v2662 = vsel %vm1664, %v2655, 0
    %2664 = vmatprep.subr.mxu0 0.0
    %2665 = vmatpush1.xpose.msra.mxu0 %v2660
    %2666 = vmatprep.subr.mxu0 0.0
    %2667 = vmatpush1.xpose.msra.mxu0 %v2662
    %2668 = vmatprep.subr.mxu0 0.0
    %2669 = vmatpush1.xpose.msra.mxu0 0.0
    %2670 = vmatprep.subr.mxu0 0.0
    %2671 = vmatpush1.xpose.msra.mxu0 0.0
    %2672 = vmatprep.subr.mxu0 0.0
    %2673 = vmatpush1.xpose.msra.mxu0 0.0
    %2674 = vmatprep.subr.mxu0 0.0
    %2675 = vmatpush1.xpose.msra.mxu0 0.0
    %2676 = vmatprep.subr.mxu0 0.0
    %2677 = vmatpush1.xpose.msra.mxu0 0.0
    %2678 = vmatprep.subr.mxu0 0.0
    %2679 = vmatpush1.xpose.msra.mxu0 0.0
    %2680 = vmatprep.subr.mxu0 0.0
    %2681 = vmatpush1.xpose.msra.mxu0 0.0
    %2682 = vmatprep.subr.mxu0 0.0
    %2683 = vmatpush1.xpose.msra.mxu0 0.0
    %2684 = vmatprep.subr.mxu0 0.0
    %2685 = vmatpush1.xpose.msra.mxu0 0.0
    %2686 = vmatprep.subr.mxu0 0.0
    %2687 = vmatpush1.xpose.msra.mxu0 0.0
    %2688 = vmatprep.subr.mxu0 0.0
    %2689 = vmatpush1.xpose.msra.mxu0 0.0
    %2690 = vmatprep.subr.mxu0 0.0
    %2691 = vmatpush1.xpose.msra.mxu0 0.0
    %2692 = vmatprep.subr.mxu0 0.0
    %2693 = vmatpush1.xpose.msra.mxu0 0.0
    %2694 = vmatprep.subr.mxu0 0.0
    %2695 = vmatpush1.xpose.msra.mxu0 0.0
    %2696 = vmatprep.subr.mxu0 0.0
    %2697 = vmatpush1.xpose.msra.mxu0 0.0
    %2698 = vmatprep.subr.mxu0 0.0
    %2699 = vmatpush1.xpose.msra.mxu0 0.0
    %2700 = vmatprep.subr.mxu0 0.0
    %2701 = vmatpush1.xpose.msra.mxu0 0.0
    %2702 = vmatprep.subr.mxu0 0.0
    %2703 = vmatpush1.xpose.msra.mxu0 0.0
    %2704 = vmatprep.subr.mxu0 0.0
    %2705 = vmatpush1.xpose.msra.mxu0 0.0
    %2706 = vmatprep.subr.mxu0 0.0
    %2707 = vmatpush1.xpose.msra.mxu0 0.0
    %2708 = vmatprep.subr.mxu0 0.0
    %2709 = vmatpush1.xpose.msra.mxu0 0.0
    %2710 = vmatprep.subr.mxu0 0.0
    %2711 = vmatpush1.xpose.msra.mxu0 0.0
    %2712 = vmatprep.subr.mxu0 0.0
    %2713 = vmatpush1.xpose.msra.mxu0 0.0
    %2714 = vmatprep.subr.mxu0 0.0
    %2715 = vmatpush1.xpose.msra.mxu0 0.0
    %2716 = vmatprep.subr.mxu0 0.0
    %2717 = vmatpush1.xpose.msra.mxu0 0.0
    %2718 = vmatprep.subr.mxu0 0.0
    %2719 = vmatpush1.xpose.msra.mxu0 0.0
    %2720 = vmatprep.subr.mxu0 0.0
    %2721 = vmatpush1.xpose.msra.mxu0 0.0
    %2722 = vmatprep.subr.mxu0 0.0
    %2723 = vmatpush1.xpose.msra.mxu0 0.0
    %2724 = vmatprep.subr.mxu0 0.0
    %2725 = vmatpush1.xpose.msra.mxu0 0.0
    %2726 = vmatprep.subr.mxu0 0.0
    %2727 = vmatpush1.xpose.msra.mxu0 0.0
    %2728 = vmatprep.mubr.f32.mxu0 0.0
    %2729 = vmatmul.mubr.f32.gmra.mrb[0].mxu0 %v2656
    %v2730 = vpop.f32.mrb[0].mxu0
    %v2731 = vadd.f32 0.0, %v2730
    %v2732 = vpop.f32.mrb[0].mxu0
    %2733 = vmatprep.mubr.f32.mxu0 0.0
    %2734 = vmatmul.mubr.f32.gmra.mrb[0].mxu0 %v2658
    %v2735 = vpop.f32.mrb[0].mxu0
    %v2736 = vadd.f32 0.0, %v2735
    %v2737 = vpop.f32.mrb[0].mxu0
    %2738 = vdwg.mxu0
    %v2739 = vsel %vm1752, %v2731, -inf
    %2740 = vmax.xlane.f32.xlu0 %v2739
    %v2741 = vpop.xlane.xlu0 %2740
    %v2742 = vsel %vm1752, %v2736, -inf
    %2743 = vmax.xlane.f32.xlu0 %v2742
    %v2744 = vpop.xlane.xlu0 %2743
    %v2745 = vsub.f32 %v2731, %v2741
    %v2746 = vsub.f32 %v2736, %v2744
    %v2747 = vmul.f32 %v2745, 1.442695
    %v2748 = vpow.pop %v2747
    %v2749 = vmul.f32 %v2746, 1.442695
    %v2750 = vpow.pop %v2749
    %v2751 = vsel %vm1752, %v2748, 0.0
    %2752 = vadd.xlane.f32.xlu0 %v2751
    %v2753 = vpop.xlane.xlu0 %2752
    %v2754 = vsel %vm1752, %v2750, 0.0
    %2755 = vadd.xlane.f32.xlu0 %v2754
    %v2756 = vpop.xlane.xlu0 %2755
    %v2757 = vrcp.pop %v2753
    %v2758 = vmul.f32 %v2748, %v2757
    %v2759 = vrcp.pop %v2756
    %v2760 = vmul.f32 %v2750, %v2759
    %2763 = vrot.lane.b32.xlu0 %v1658, 96
    %v2764 = vpop.permute.xlu0 %2763
    %2765 = vrot.lane.b32.xlu0 %v1662, 96
    %v2766 = vpop.permute.xlu0 %2765
    %v2770 = vsel %vm1752, %v2758, 0
    %v2773 = vsel %vm1752, %v2760, 0
    %2775 = vmatprep.subr.mxu0 0.0
    %2776 = vmatpush1.msra.mxu0 %v2764
    %2777 = vmatprep.subr.mxu0 0.0
    %2778 = vmatpush1.msra.mxu0 %v2766
    %2779 = vmatprep.subr.mxu0 0.0
    %2780 = vmatpush1.msra.mxu0 0.0
    %2781 = vmatprep.subr.mxu0 0.0
    %2782 = vmatpush1.msra.mxu0 0.0
    %2783 = vmatprep.subr.mxu0 0.0
    %2784 = vmatpush1.msra.mxu0 0.0
    %2785 = vmatprep.subr.mxu0 0.0
    %2786 = vmatpush1.msra.mxu0 0.0
    %2787 = vmatprep.subr.mxu0 0.0
    %2788 = vmatpush1.msra.mxu0 0.0
    %2789 = vmatprep.subr.mxu0 0.0
    %2790 = vmatpush1.msra.mxu0 0.0
    %2791 = vmatprep.subr.mxu0 0.0
    %2792 = vmatpush1.msra.mxu0 0.0
    %2793 = vmatprep.subr.mxu0 0.0
    %2794 = vmatpush1.msra.mxu0 0.0
    %2795 = vmatprep.subr.mxu0 0.0
    %2796 = vmatpush1.msra.mxu0 0.0
    %2797 = vmatprep.subr.mxu0 0.0
    %2798 = vmatpush1.msra.mxu0 0.0
    %2799 = vmatprep.subr.mxu0 0.0
    %2800 = vmatpush1.msra.mxu0 0.0
    %2801 = vmatprep.subr.mxu0 0.0
    %2802 = vmatpush1.msra.mxu0 0.0
    %2803 = vmatprep.subr.mxu0 0.0
    %2804 = vmatpush1.msra.mxu0 0.0
    %2805 = vmatprep.subr.mxu0 0.0
    %2806 = vmatpush1.msra.mxu0 0.0
    %2807 = vmatprep.subr.mxu0 0.0
    %2808 = vmatpush1.msra.mxu0 0.0
    %2809 = vmatprep.subr.mxu0 0.0
    %2810 = vmatpush1.msra.mxu0 0.0
    %2811 = vmatprep.subr.mxu0 0.0
    %2812 = vmatpush1.msra.mxu0 0.0
    %2813 = vmatprep.subr.mxu0 0.0
    %2814 = vmatpush1.msra.mxu0 0.0
    %2815 = vmatprep.subr.mxu0 0.0
    %2816 = vmatpush1.msra.mxu0 0.0
    %2817 = vmatprep.subr.mxu0 0.0
    %2818 = vmatpush1.msra.mxu0 0.0
    %2819 = vmatprep.subr.mxu0 0.0
    %2820 = vmatpush1.msra.mxu0 0.0
    %2821 = vmatprep.subr.mxu0 0.0
    %2822 = vmatpush1.msra.mxu0 0.0
    %2823 = vmatprep.subr.mxu0 0.0
    %2824 = vmatpush1.msra.mxu0 0.0
    %2825 = vmatprep.subr.mxu0 0.0
    %2826 = vmatpush1.msra.mxu0 0.0
    %2827 = vmatprep.subr.mxu0 0.0
    %2828 = vmatpush1.msra.mxu0 0.0
    %2829 = vmatprep.subr.mxu0 0.0
    %2830 = vmatpush1.msra.mxu0 0.0
    %2831 = vmatprep.subr.mxu0 0.0
    %2832 = vmatpush1.msra.mxu0 0.0
    %2833 = vmatprep.subr.mxu0 0.0
    %2834 = vmatpush1.msra.mxu0 0.0
    %2835 = vmatprep.subr.mxu0 0.0
    %2836 = vmatpush1.msra.mxu0 0.0
    %2837 = vmatprep.subr.mxu0 0.0
    %2838 = vmatpush1.msra.mxu0 0.0
    %2839 = vmatprep.mubr.f32.mxu0 0.0
    %2840 = vmatmul.mubr.f32.gmra.mrb[0].mxu0 %v2770
    %v2841 = vpop.f32.mrb[0].mxu0
    %v2842 = vadd.f32 0.0, %v2841
    %v2843 = vpop.f32.mrb[0].mxu0
    %2844 = vmatprep.mubr.f32.mxu0 0.0
    %2845 = vmatmul.mubr.f32.gmra.mrb[0].mxu0 %v2773
    %v2846 = vpop.f32.mrb[0].mxu0
    %v2847 = vadd.f32 0.0, %v2846
    %v2848 = vpop.f32.mrb[0].mxu0
    %2849 = vdwg.mxu0
    %2850 = vrot.lane.b32.xlu0 %v1572, 64
    %v2851 = vpop.permute.xlu0 %2850
    %2852 = vrot.lane.b32.xlu0 %v1576, 64
    %v2853 = vpop.permute.xlu0 %2852
    %2854 = vrot.lane.b32.xlu0 %v1615, 64
    %v2855 = vpop.permute.xlu0 %2854
    %2856 = vrot.lane.b32.xlu0 %v1619, 64
    %v2857 = vpop.permute.xlu0 %2856
    %v2858 = vsel %vm1664, %v2851, 0
    %v2860 = vsel %vm1664, %v2853, 0
    %v2862 = vsel %vm1664, %v2855, 0
    %v2864 = vsel %vm1664, %v2857, 0
    %2866 = vmatprep.subr.mxu0 0.0
    %2867 = vmatpush1.xpose.msra.mxu0 %v2862
    %2868 = vmatprep.subr.mxu0 0.0
    %2869 = vmatpush1.xpose.msra.mxu0 %v2864
    %2870 = vmatprep.subr.mxu0 0.0
    %2871 = vmatpush1.xpose.msra.mxu0 0.0
    %2872 = vmatprep.subr.mxu0 0.0
    %2873 = vmatpush1.xpose.msra.mxu0 0.0
    %2874 = vmatprep.subr.mxu0 0.0
    %2875 = vmatpush1.xpose.msra.mxu0 0.0
    %2876 = vmatprep.subr.mxu0 0.0
    %2877 = vmatpush1.xpose.msra.mxu0 0.0
    %2878 = vmatprep.subr.mxu0 0.0
    %2879 = vmatpush1.xpose.msra.mxu0 0.0
    %2880 = vmatprep.subr.mxu0 0.0
    %2881 = vmatpush1.xpose.msra.mxu0 0.0
    %2882 = vmatprep.subr.mxu0 0.0
    %2883 = vmatpush1.xpose.msra.mxu0 0.0
    %2884 = vmatprep.subr.mxu0 0.0
    %2885 = vmatpush1.xpose.msra.mxu0 0.0
    %2886 = vmatprep.subr.mxu0 0.0
    %2887 = vmatpush1.xpose.msra.mxu0 0.0
    %2888 = vmatprep.subr.mxu0 0.0
    %2889 = vmatpush1.xpose.msra.mxu0 0.0
    %2890 = vmatprep.subr.mxu0 0.0
    %2891 = vmatpush1.xpose.msra.mxu0 0.0
    %2892 = vmatprep.subr.mxu0 0.0
    %2893 = vmatpush1.xpose.msra.mxu0 0.0
    %2894 = vmatprep.subr.mxu0 0.0
    %2895 = vmatpush1.xpose.msra.mxu0 0.0
    %2896 = vmatprep.subr.mxu0 0.0
    %2897 = vmatpush1.xpose.msra.mxu0 0.0
    %2898 = vmatprep.subr.mxu0 0.0
    %2899 = vmatpush1.xpose.msra.mxu0 0.0
    %2900 = vmatprep.subr.mxu0 0.0
    %2901 = vmatpush1.xpose.msra.mxu0 0.0
    %2902 = vmatprep.subr.mxu0 0.0
    %2903 = vmatpush1.xpose.msra.mxu0 0.0
    %2904 = vmatprep.subr.mxu0 0.0
    %2905 = vmatpush1.xpose.msra.mxu0 0.0
    %2906 = vmatprep.subr.mxu0 0.0
    %2907 = vmatpush1.xpose.msra.mxu0 0.0
    %2908 = vmatprep.subr.mxu0 0.0
    %2909 = vmatpush1.xpose.msra.mxu0 0.0
    %2910 = vmatprep.subr.mxu0 0.0
    %2911 = vmatpush1.xpose.msra.mxu0 0.0
    %2912 = vmatprep.subr.mxu0 0.0
    %2913 = vmatpush1.xpose.msra.mxu0 0.0
    %2914 = vmatprep.subr.mxu0 0.0
    %2915 = vmatpush1.xpose.msra.mxu0 0.0
    %2916 = vmatprep.subr.mxu0 0.0
    %2917 = vmatpush1.xpose.msra.mxu0 0.0
    %2918 = vmatprep.subr.mxu0 0.0
    %2919 = vmatpush1.xpose.msra.mxu0 0.0
    %2920 = vmatprep.subr.mxu0 0.0
    %2921 = vmatpush1.xpose.msra.mxu0 0.0
    %2922 = vmatprep.subr.mxu0 0.0
    %2923 = vmatpush1.xpose.msra.mxu0 0.0
    %2924 = vmatprep.subr.mxu0 0.0
    %2925 = vmatpush1.xpose.msra.mxu0 0.0
    %2926 = vmatprep.subr.mxu0 0.0
    %2927 = vmatpush1.xpose.msra.mxu0 0.0
    %2928 = vmatprep.subr.mxu0 0.0
    %2929 = vmatpush1.xpose.msra.mxu0 0.0
    %2930 = vmatprep.mubr.f32.mxu0 0.0
    %2931 = vmatmul.mubr.f32.gmra.mrb[0].mxu0 %v2858
    %v2932 = vpop.f32.mrb[0].mxu0
    %v2933 = vadd.f32 0.0, %v2932
    %v2934 = vpop.f32.mrb[0].mxu0
    %2935 = vmatprep.mubr.f32.mxu0 0.0
    %2936 = vmatmul.mubr.f32.gmra.mrb[0].mxu0 %v2860
    %v2937 = vpop.f32.mrb[0].mxu0
    %v2938 = vadd.f32 0.0, %v2937
    %v2939 = vpop.f32.mrb[0].mxu0
    %2940 = vdwg.mxu0
    %v2941 = vsel %vm1752, %v2933, -inf
    %2942 = vmax.xlane.f32.xlu0 %v2941
    %v2943 = vpop.xlane.xlu0 %2942
    %v2944 = vsel %vm1752, %v2938, -inf
    %2945 = vmax.xlane.f32.xlu0 %v2944
    %v2946 = vpop.xlane.xlu0 %2945
    %v2947 = vsub.f32 %v2933, %v2943
    %v2948 = vsub.f32 %v2938, %v2946
    %v2949 = vmul.f32 %v2947, 1.442695
    %v2950 = vpow.pop %v2949
    %v2951 = vmul.f32 %v2948, 1.442695
    %v2952 = vpow.pop %v2951
    %v2953 = vsel %vm1752, %v2950, 0.0
    %2954 = vadd.xlane.f32.xlu0 %v2953
    %v2955 = vpop.xlane.xlu0 %2954
    %v2956 = vsel %vm1752, %v2952, 0.0
    %2957 = vadd.xlane.f32.xlu0 %v2956
    %v2958 = vpop.xlane.xlu0 %2957
    %v2959 = vrcp.pop %v2955
    %v2960 = vmul.f32 %v2950, %v2959
    %v2961 = vrcp.pop %v2958
    %v2962 = vmul.f32 %v2952, %v2961
    %2963 = vrot.lane.b32.xlu0 %v1658, 64
    %v2964 = vpop.permute.xlu0 %2963
    %2965 = vrot.lane.b32.xlu0 %v1662, 64
    %v2966 = vpop.permute.xlu0 %2965
    %v2970 = vsel %vm1752, %v2960, 0
    %v2973 = vsel %vm1752, %v2962, 0
    %2975 = vmatprep.subr.mxu0 0.0
    %2976 = vmatpush1.msra.mxu0 %v2964
    %2977 = vmatprep.subr.mxu0 0.0
    %2978 = vmatpush1.msra.mxu0 %v2966
    %2979 = vmatprep.subr.mxu0 0.0
    %2980 = vmatpush1.msra.mxu0 0.0
    %2981 = vmatprep.subr.mxu0 0.0
    %2982 = vmatpush1.msra.mxu0 0.0
    %2983 = vmatprep.subr.mxu0 0.0
    %2984 = vmatpush1.msra.mxu0 0.0
    %2985 = vmatprep.subr.mxu0 0.0
    %2986 = vmatpush1.msra.mxu0 0.0
    %2987 = vmatprep.subr.mxu0 0.0
    %2988 = vmatpush1.msra.mxu0 0.0
    %2989 = vmatprep.subr.mxu0 0.0
    %2990 = vmatpush1.msra.mxu0 0.0
    %2991 = vmatprep.subr.mxu0 0.0
    %2992 = vmatpush1.msra.mxu0 0.0
    %2993 = vmatprep.subr.mxu0 0.0
    %2994 = vmatpush1.msra.mxu0 0.0
    %2995 = vmatprep.subr.mxu0 0.0
    %2996 = vmatpush1.msra.mxu0 0.0
    %2997 = vmatprep.subr.mxu0 0.0
    %2998 = vmatpush1.msra.mxu0 0.0
    %2999 = vmatprep.subr.mxu0 0.0
    %3000 = vmatpush1.msra.mxu0 0.0
    %3001 = vmatprep.subr.mxu0 0.0
    %3002 = vmatpush1.msra.mxu0 0.0
    %3003 = vmatprep.subr.mxu0 0.0
    %3004 = vmatpush1.msra.mxu0 0.0
    %3005 = vmatprep.subr.mxu0 0.0
    %3006 = vmatpush1.msra.mxu0 0.0
    %3007 = vmatprep.subr.mxu0 0.0
    %3008 = vmatpush1.msra.mxu0 0.0
    %3009 = vmatprep.subr.mxu0 0.0
    %3010 = vmatpush1.msra.mxu0 0.0
    %3011 = vmatprep.subr.mxu0 0.0
    %3012 = vmatpush1.msra.mxu0 0.0
    %3013 = vmatprep.subr.mxu0 0.0
    %3014 = vmatpush1.msra.mxu0 0.0
    %3015 = vmatprep.subr.mxu0 0.0
    %3016 = vmatpush1.msra.mxu0 0.0
    %3017 = vmatprep.subr.mxu0 0.0
    %3018 = vmatpush1.msra.mxu0 0.0
    %3019 = vmatprep.subr.mxu0 0.0
    %3020 = vmatpush1.msra.mxu0 0.0
    %3021 = vmatprep.subr.mxu0 0.0
    %3022 = vmatpush1.msra.mxu0 0.0
    %3023 = vmatprep.subr.mxu0 0.0
    %3024 = vmatpush1.msra.mxu0 0.0
    %3025 = vmatprep.subr.mxu0 0.0
    %3026 = vmatpush1.msra.mxu0 0.0
    %3027 = vmatprep.subr.mxu0 0.0
    %3028 = vmatpush1.msra.mxu0 0.0
    %3029 = vmatprep.subr.mxu0 0.0
    %3030 = vmatpush1.msra.mxu0 0.0
    %3031 = vmatprep.subr.mxu0 0.0
    %3032 = vmatpush1.msra.mxu0 0.0
    %3033 = vmatprep.subr.mxu0 0.0
    %3034 = vmatpush1.msra.mxu0 0.0
    %3035 = vmatprep.subr.mxu0 0.0
    %3036 = vmatpush1.msra.mxu0 0.0
    %3037 = vmatprep.subr.mxu0 0.0
    %3038 = vmatpush1.msra.mxu0 0.0
    %3039 = vmatprep.mubr.f32.mxu0 0.0
    %3040 = vmatmul.mubr.f32.gmra.mrb[0].mxu0 %v2970
    %v3041 = vpop.f32.mrb[0].mxu0
    %v3042 = vadd.f32 0.0, %v3041
    %v3043 = vpop.f32.mrb[0].mxu0
    %3044 = vmatprep.mubr.f32.mxu0 0.0
    %3045 = vmatmul.mubr.f32.gmra.mrb[0].mxu0 %v2973
    %v3046 = vpop.f32.mrb[0].mxu0
    %v3047 = vadd.f32 0.0, %v3046
    %v3048 = vpop.f32.mrb[0].mxu0
    %3049 = vdwg.mxu0
    %3050 = vrot.lane.b32.xlu0 %v1572, 32
    %v3051 = vpop.permute.xlu0 %3050
    %3052 = vrot.lane.b32.xlu0 %v1576, 32
    %v3053 = vpop.permute.xlu0 %3052
    %3054 = vrot.lane.b32.xlu0 %v1615, 32
    %v3055 = vpop.permute.xlu0 %3054
    %3056 = vrot.lane.b32.xlu0 %v1619, 32
    %v3057 = vpop.permute.xlu0 %3056
    %v3058 = vsel %vm1664, %v3051, 0
    %v3060 = vsel %vm1664, %v3053, 0
    %v3062 = vsel %vm1664, %v3055, 0
    %v3064 = vsel %vm1664, %v3057, 0
    %3066 = vmatprep.subr.mxu0 0.0
    %3067 = vmatpush1.xpose.msra.mxu0 %v3062
    %3068 = vmatprep.subr.mxu0 0.0
    %3069 = vmatpush1.xpose.msra.mxu0 %v3064
    %3070 = vmatprep.subr.mxu0 0.0
    %3071 = vmatpush1.xpose.msra.mxu0 0.0
    %3072 = vmatprep.subr.mxu0 0.0
    %3073 = vmatpush1.xpose.msra.mxu0 0.0
    %3074 = vmatprep.subr.mxu0 0.0
    %3075 = vmatpush1.xpose.msra.mxu0 0.0
    %3076 = vmatprep.subr.mxu0 0.0
    %3077 = vmatpush1.xpose.msra.mxu0 0.0
    %3078 = vmatprep.subr.mxu0 0.0
    %3079 = vmatpush1.xpose.msra.mxu0 0.0
    %3080 = vmatprep.subr.mxu0 0.0
    %3081 = vmatpush1.xpose.msra.mxu0 0.0
    %3082 = vmatprep.subr.mxu0 0.0
    %3083 = vmatpush1.xpose.msra.mxu0 0.0
    %3084 = vmatprep.subr.mxu0 0.0
    %3085 = vmatpush1.xpose.msra.mxu0 0.0
    %3086 = vmatprep.subr.mxu0 0.0
    %3087 = vmatpush1.xpose.msra.mxu0 0.0
    %3088 = vmatprep.subr.mxu0 0.0
    %3089 = vmatpush1.xpose.msra.mxu0 0.0
    %3090 = vmatprep.subr.mxu0 0.0
    %3091 = vmatpush1.xpose.msra.mxu0 0.0
    %3092 = vmatprep.subr.mxu0 0.0
    %3093 = vmatpush1.xpose.msra.mxu0 0.0
    %3094 = vmatprep.subr.mxu0 0.0
    %3095 = vmatpush1.xpose.msra.mxu0 0.0
    %3096 = vmatprep.subr.mxu0 0.0
    %3097 = vmatpush1.xpose.msra.mxu0 0.0
    %3098 = vmatprep.subr.mxu0 0.0
    %3099 = vmatpush1.xpose.msra.mxu0 0.0
    %3100 = vmatprep.subr.mxu0 0.0
    %3101 = vmatpush1.xpose.msra.mxu0 0.0
    %3102 = vmatprep.subr.mxu0 0.0
    %3103 = vmatpush1.xpose.msra.mxu0 0.0
    %3104 = vmatprep.subr.mxu0 0.0
    %3105 = vmatpush1.xpose.msra.mxu0 0.0
    %3106 = vmatprep.subr.mxu0 0.0
    %3107 = vmatpush1.xpose.msra.mxu0 0.0
    %3108 = vmatprep.subr.mxu0 0.0
    %3109 = vmatpush1.xpose.msra.mxu0 0.0
    %3110 = vmatprep.subr.mxu0 0.0
    %3111 = vmatpush1.xpose.msra.mxu0 0.0
    %3112 = vmatprep.subr.mxu0 0.0
    %3113 = vmatpush1.xpose.msra.mxu0 0.0
    %3114 = vmatprep.subr.mxu0 0.0
    %3115 = vmatpush1.xpose.msra.mxu0 0.0
    %3116 = vmatprep.subr.mxu0 0.0
    %3117 = vmatpush1.xpose.msra.mxu0 0.0
    %3118 = vmatprep.subr.mxu0 0.0
    %3119 = vmatpush1.xpose.msra.mxu0 0.0
    %3120 = vmatprep.subr.mxu0 0.0
    %3121 = vmatpush1.xpose.msra.mxu0 0.0
    %3122 = vmatprep.subr.mxu0 0.0
    %3123 = vmatpush1.xpose.msra.mxu0 0.0
    %3124 = vmatprep.subr.mxu0 0.0
    %3125 = vmatpush1.xpose.msra.mxu0 0.0
    %3126 = vmatprep.subr.mxu0 0.0
    %3127 = vmatpush1.xpose.msra.mxu0 0.0
    %3128 = vmatprep.subr.mxu0 0.0
    %3129 = vmatpush1.xpose.msra.mxu0 0.0
    %3130 = vmatprep.mubr.f32.mxu0 0.0
    %3131 = vmatmul.mubr.f32.gmra.mrb[0].mxu0 %v3058
    %v3132 = vpop.f32.mrb[0].mxu0
    %v3133 = vadd.f32 0.0, %v3132
    %v3134 = vpop.f32.mrb[0].mxu0
    %3135 = vmatprep.mubr.f32.mxu0 0.0
    %3136 = vmatmul.mubr.f32.gmra.mrb[0].mxu0 %v3060
    %v3137 = vpop.f32.mrb[0].mxu0
    %v3138 = vadd.f32 0.0, %v3137
    %v3139 = vpop.f32.mrb[0].mxu0
    %3140 = vdwg.mxu0
    %v3141 = vsel %vm1752, %v3133, -inf
    %3142 = vmax.xlane.f32.xlu0 %v3141
    %v3143 = vpop.xlane.xlu0 %3142
    %v3144 = vsel %vm1752, %v3138, -inf
    %3145 = vmax.xlane.f32.xlu0 %v3144
    %v3146 = vpop.xlane.xlu0 %3145
    %v3147 = vsub.f32 %v3133, %v3143
    %v3148 = vsub.f32 %v3138, %v3146
    %v3149 = vmul.f32 %v3147, 1.442695
    %v3150 = vpow.pop %v3149
    %v3151 = vmul.f32 %v3148, 1.442695
    %v3152 = vpow.pop %v3151
    %v3153 = vsel %vm1752, %v3150, 0.0
    %3154 = vadd.xlane.f32.xlu0 %v3153
    %v3155 = vpop.xlane.xlu0 %3154
    %v3156 = vsel %vm1752, %v3152, 0.0
    %3157 = vadd.xlane.f32.xlu0 %v3156
    %v3158 = vpop.xlane.xlu0 %3157
    %v3159 = vrcp.pop %v3155
    %v3160 = vmul.f32 %v3150, %v3159
    %v3161 = vrcp.pop %v3158
    %v3162 = vmul.f32 %v3152, %v3161
    %3163 = vrot.lane.b32.xlu0 %v1658, 32
    %v3164 = vpop.permute.xlu0 %3163
    %3165 = vrot.lane.b32.xlu0 %v1662, 32
    %v3166 = vpop.permute.xlu0 %3165
    %v3170 = vsel %vm1752, %v3160, 0
    %v3173 = vsel %vm1752, %v3162, 0
    %3175 = vmatprep.subr.mxu0 0.0
    %3176 = vmatpush1.msra.mxu0 %v3164
    %3177 = vmatprep.subr.mxu0 0.0
    %3178 = vmatpush1.msra.mxu0 %v3166
    %3179 = vmatprep.subr.mxu0 0.0
    %3180 = vmatpush1.msra.mxu0 0.0
    %3181 = vmatprep.subr.mxu0 0.0
    %3182 = vmatpush1.msra.mxu0 0.0
    %3183 = vmatprep.subr.mxu0 0.0
    %3184 = vmatpush1.msra.mxu0 0.0
    %3185 = vmatprep.subr.mxu0 0.0
    %3186 = vmatpush1.msra.mxu0 0.0
    %3187 = vmatprep.subr.mxu0 0.0
    %3188 = vmatpush1.msra.mxu0 0.0
    %3189 = vmatprep.subr.mxu0 0.0
    %3190 = vmatpush1.msra.mxu0 0.0
    %3191 = vmatprep.subr.mxu0 0.0
    %3192 = vmatpush1.msra.mxu0 0.0
    %3193 = vmatprep.subr.mxu0 0.0
    %3194 = vmatpush1.msra.mxu0 0.0
    %3195 = vmatprep.subr.mxu0 0.0
    %3196 = vmatpush1.msra.mxu0 0.0
    %3197 = vmatprep.subr.mxu0 0.0
    %3198 = vmatpush1.msra.mxu0 0.0
    %3199 = vmatprep.subr.mxu0 0.0
    %3200 = vmatpush1.msra.mxu0 0.0
    %3201 = vmatprep.subr.mxu0 0.0
    %3202 = vmatpush1.msra.mxu0 0.0
    %3203 = vmatprep.subr.mxu0 0.0
    %3204 = vmatpush1.msra.mxu0 0.0
    %3205 = vmatprep.subr.mxu0 0.0
    %3206 = vmatpush1.msra.mxu0 0.0
    %3207 = vmatprep.subr.mxu0 0.0
    %3208 = vmatpush1.msra.mxu0 0.0
    %3209 = vmatprep.subr.mxu0 0.0
    %3210 = vmatpush1.msra.mxu0 0.0
    %3211 = vmatprep.subr.mxu0 0.0
    %3212 = vmatpush1.msra.mxu0 0.0
    %3213 = vmatprep.subr.mxu0 0.0
    %3214 = vmatpush1.msra.mxu0 0.0
    %3215 = vmatprep.subr.mxu0 0.0
    %3216 = vmatpush1.msra.mxu0 0.0
    %3217 = vmatprep.subr.mxu0 0.0
    %3218 = vmatpush1.msra.mxu0 0.0
    %3219 = vmatprep.subr.mxu0 0.0
    %3220 = vmatpush1.msra.mxu0 0.0
    %3221 = vmatprep.subr.mxu0 0.0
    %3222 = vmatpush1.msra.mxu0 0.0
    %3223 = vmatprep.subr.mxu0 0.0
    %3224 = vmatpush1.msra.mxu0 0.0
    %3225 = vmatprep.subr.mxu0 0.0
    %3226 = vmatpush1.msra.mxu0 0.0
    %3227 = vmatprep.subr.mxu0 0.0
    %3228 = vmatpush1.msra.mxu0 0.0
    %3229 = vmatprep.subr.mxu0 0.0
    %3230 = vmatpush1.msra.mxu0 0.0
    %3231 = vmatprep.subr.mxu0 0.0
    %3232 = vmatpush1.msra.mxu0 0.0
    %3233 = vmatprep.subr.mxu0 0.0
    %3234 = vmatpush1.msra.mxu0 0.0
    %3235 = vmatprep.subr.mxu0 0.0
    %3236 = vmatpush1.msra.mxu0 0.0
    %3237 = vmatprep.subr.mxu0 0.0
    %3238 = vmatpush1.msra.mxu0 0.0
    %3239 = vmatprep.mubr.f32.mxu0 0.0
    %3240 = vmatmul.mubr.f32.gmra.mrb[0].mxu0 %v3170
    %v3241 = vpop.f32.mrb[0].mxu0
    %v3242 = vadd.f32 0.0, %v3241
    %v3243 = vpop.f32.mrb[0].mxu0
    %3244 = vmatprep.mubr.f32.mxu0 0.0
    %3245 = vmatmul.mubr.f32.gmra.mrb[0].mxu0 %v3173
    %v3246 = vpop.f32.mrb[0].mxu0
    %v3247 = vadd.f32 0.0, %v3246
    %v3248 = vpop.f32.mrb[0].mxu0
    %3249 = vdwg.mxu0
    %3252 = vrot.lane.b32.xlu0 %v2050, 32
    %v3253 = vpop.permute.xlu0 %3252
    %3254 = vrot.lane.b32.xlu0 %v2055, 32
    %v3255 = vpop.permute.xlu0 %3254
    %3260 = vrot.lane.b32.xlu0 %v2250, 64
    %v3261 = vpop.permute.xlu0 %3260
    %3262 = vrot.lane.b32.xlu0 %v2255, 64
    %v3263 = vpop.permute.xlu0 %3262
    %3268 = vrot.lane.b32.xlu0 %v2450, 96
    %v3269 = vpop.permute.xlu0 %3268
    %3270 = vrot.lane.b32.xlu0 %v2455, 96
    %v3271 = vpop.permute.xlu0 %3270
    %3276 = vrot.lane.b32.xlu0 %v2842, 32
    %v3277 = vpop.permute.xlu0 %3276
    %3278 = vrot.lane.b32.xlu0 %v2847, 32
    %v3279 = vpop.permute.xlu0 %3278
    %3284 = vrot.lane.b32.xlu0 %v3042, 64
    %v3285 = vpop.permute.xlu0 %3284
    %3286 = vrot.lane.b32.xlu0 %v3047, 64
    %v3287 = vpop.permute.xlu0 %3286
    %3292 = vrot.lane.b32.xlu0 %v3242, 96
    %v3293 = vpop.permute.xlu0 %3292
    %3294 = vrot.lane.b32.xlu0 %v3247, 96
    %v3295 = vpop.permute.xlu0 %3294
    %v3298 = vsel %vm1664, %v1848, %v3253
    %v3299 = vsel %vm1664, %v1853, %v3255
    %vm3300 = vcmask 523264
    %v3301 = vsel %vm3300, %v3298, %v3261
    %v3302 = vsel %vm3300, %v3299, %v3263
    %vm3303 = vcmask 785408
    %v3304 = vsel %vm3303, %v3301, %v3269
    %v3305 = vsel %vm3303, %v3302, %v3271
    %v3306 = vsel %vm1664, %v2640, %v3277
    %v3307 = vsel %vm1664, %v2645, %v3279
    %v3308 = vsel %vm3300, %v3306, %v3285
    %v3309 = vsel %vm3300, %v3307, %v3287
    %v3310 = vsel %vm3303, %v3308, %v3293
    %v3311 = vsel %vm3303, %v3309, %v3295
    %v3312 = vpack.c.bf16 %v3305, %v3304
    %v3313 = vpack.c.bf16 %v3311, %v3310
    %v3315 = vlaneseq
    %v3316 = vshrl.u32 %v3315, 7
    %v3317 = vsub.s32 0, %v3316
    %v3318 = vrot.slane %v1002, %v3317
    %v3319 = vlaneseq
    %v3320 = vshrl.u32 %v3319, 7
    %v3321 = vsub.s32 1, %v3320
    %v3322 = vrot.slane %v1002, %v3321
    %v3357 = vunpack.c.l.b16 %v969
    %v3358 = vunpack.c.h.b16 %v969
    %v3359 = vunpack.c.l.b16 %v970
    %v3360 = vunpack.c.h.b16 %v970
    %v3361 = vunpack.c.l.b16 %v971
    %v3362 = vunpack.c.h.b16 %v971
    %v3363 = vunpack.c.l.b16 %v972
    %v3364 = vunpack.c.h.b16 %v972
    %v3365 = vunpack.c.l.b16 %v973
    %v3366 = vunpack.c.h.b16 %v973
    %v3367 = vunpack.c.l.b16 %v974
    %v3368 = vunpack.c.h.b16 %v974
    %v3369 = vunpack.c.l.b16 %v975
    %v3370 = vunpack.c.h.b16 %v975
    %v3371 = vunpack.c.l.b16 %v976
    %v3372 = vunpack.c.h.b16 %v976
    %v3373 = vunpack.c.l.b16 %v977
    %v3374 = vunpack.c.h.b16 %v977
    %v3375 = vunpack.c.l.b16 %v978
    %v3376 = vunpack.c.h.b16 %v978
    %v3377 = vunpack.c.l.b16 %v979
    %v3378 = vunpack.c.h.b16 %v979
    %v3379 = vunpack.c.l.b16 %v980
    %v3380 = vunpack.c.h.b16 %v980
    %v3381 = vunpack.c.l.b16 %v981
    %v3382 = vunpack.c.h.b16 %v981
    %v3383 = vunpack.c.l.b16 %v982
    %v3384 = vunpack.c.h.b16 %v982
    %v3385 = vunpack.c.l.b16 %v983
    %v3386 = vunpack.c.h.b16 %v983
    %v3387 = vunpack.c.l.b16 %v984
    %v3388 = vunpack.c.h.b16 %v984
    %v3389 = vunpack.c.l.b16 %v985
    %v3390 = vunpack.c.h.b16 %v985
    %v3391 = vunpack.c.l.b16 %v986
    %v3392 = vunpack.c.h.b16 %v986
    %v3393 = vunpack.c.l.b16 %v987
    %v3394 = vunpack.c.h.b16 %v987
    %v3395 = vunpack.c.l.b16 %v988
    %v3396 = vunpack.c.h.b16 %v988
    %v3397 = vunpack.c.l.b16 %v989
    %v3398 = vunpack.c.h.b16 %v989
    %v3399 = vunpack.c.l.b16 %v990
    %v3400 = vunpack.c.h.b16 %v990
    %v3401 = vunpack.c.l.b16 %v991
    %v3402 = vunpack.c.h.b16 %v991
    %v3403 = vunpack.c.l.b16 %v992
    %v3404 = vunpack.c.h.b16 %v992
    %v3405 = vunpack.c.l.b16 %v993
    %v3406 = vunpack.c.h.b16 %v993
    %v3407 = vunpack.c.l.b16 %v994
    %v3408 = vunpack.c.h.b16 %v994
    %v3409 = vunpack.c.l.b16 %v995
    %v3410 = vunpack.c.h.b16 %v995
    %v3411 = vunpack.c.l.b16 %v996
    %v3412 = vunpack.c.h.b16 %v996
    %v3413 = vunpack.c.l.b16 %v997
    %v3414 = vunpack.c.h.b16 %v997
    %v3415 = vunpack.c.l.b16 %v998
    %v3416 = vunpack.c.h.b16 %v998
    %v3417 = vunpack.c.l.b16 %v999
    %v3418 = vunpack.c.h.b16 %v999
    %v3419 = vunpack.c.l.b16 %v1000
    %v3420 = vunpack.c.h.b16 %v1000
    %v3421 = vpack.c.b16 %v3359, %v3357
    %v3422 = vpack.c.b16 %v3360, %v3358
    %v3423 = vpack.c.b16 %v3363, %v3361
    %v3424 = vpack.c.b16 %v3364, %v3362
    %v3425 = vpack.c.b16 %v3367, %v3365
    %v3426 = vpack.c.b16 %v3368, %v3366
    %v3427 = vpack.c.b16 %v3371, %v3369
    %v3428 = vpack.c.b16 %v3372, %v3370
    %v3429 = vpack.c.b16 %v3375, %v3373
    %v3430 = vpack.c.b16 %v3376, %v3374
    %v3431 = vpack.c.b16 %v3379, %v3377
    %v3432 = vpack.c.b16 %v3380, %v3378
    %v3433 = vpack.c.b16 %v3383, %v3381
    %v3434 = vpack.c.b16 %v3384, %v3382
    %v3435 = vpack.c.b16 %v3387, %v3385
    %v3436 = vpack.c.b16 %v3388, %v3386
    %v3437 = vpack.c.b16 %v3391, %v3389
    %v3438 = vpack.c.b16 %v3392, %v3390
    %v3439 = vpack.c.b16 %v3395, %v3393
    %v3440 = vpack.c.b16 %v3396, %v3394
    %v3441 = vpack.c.b16 %v3399, %v3397
    %v3442 = vpack.c.b16 %v3400, %v3398
    %v3443 = vpack.c.b16 %v3403, %v3401
    %v3444 = vpack.c.b16 %v3404, %v3402
    %v3445 = vpack.c.b16 %v3407, %v3405
    %v3446 = vpack.c.b16 %v3408, %v3406
    %v3447 = vpack.c.b16 %v3411, %v3409
    %v3448 = vpack.c.b16 %v3412, %v3410
    %v3449 = vpack.c.b16 %v3415, %v3413
    %v3450 = vpack.c.b16 %v3416, %v3414
    %v3451 = vpack.c.b16 %v3419, %v3417
    %v3452 = vpack.c.b16 %v3420, %v3418
    %3485 = vmatprep.subr.bf16.mxu0 %v3422
    %3486 = vmatpush1.bf16.msra.mxu0 %v3421
    %3487 = vmatprep.subr.bf16.mxu0 %v3424
    %3488 = vmatpush1.bf16.msra.mxu0 %v3423
    %3489 = vmatprep.subr.bf16.mxu0 %v3426
    %3490 = vmatpush1.bf16.msra.mxu0 %v3425
    %3491 = vmatprep.subr.bf16.mxu0 %v3428
    %3492 = vmatpush1.bf16.msra.mxu0 %v3427
    %3493 = vmatprep.subr.bf16.mxu0 %v3430
    %3494 = vmatpush1.bf16.msra.mxu0 %v3429
    %3495 = vmatprep.subr.bf16.mxu0 %v3432
    %3496 = vmatpush1.bf16.msra.mxu0 %v3431
    %3497 = vmatprep.subr.bf16.mxu0 %v3434
    %3498 = vmatpush1.bf16.msra.mxu0 %v3433
    %3499 = vmatprep.subr.bf16.mxu0 %v3436
    %3500 = vmatpush1.bf16.msra.mxu0 %v3435
    %3501 = vmatprep.subr.bf16.mxu0 %v3438
    %3502 = vmatpush1.bf16.msra.mxu0 %v3437
    %3503 = vmatprep.subr.bf16.mxu0 %v3440
    %3504 = vmatpush1.bf16.msra.mxu0 %v3439
    %3505 = vmatprep.subr.bf16.mxu0 %v3442
    %3506 = vmatpush1.bf16.msra.mxu0 %v3441
    %3507 = vmatprep.subr.bf16.mxu0 %v3444
    %3508 = vmatpush1.bf16.msra.mxu0 %v3443
    %3509 = vmatprep.subr.bf16.mxu0 %v3446
    %3510 = vmatpush1.bf16.msra.mxu0 %v3445
    %3511 = vmatprep.subr.bf16.mxu0 %v3448
    %3512 = vmatpush1.bf16.msra.mxu0 %v3447
    %3513 = vmatprep.subr.bf16.mxu0 %v3450
    %3514 = vmatpush1.bf16.msra.mxu0 %v3449
    %3515 = vmatprep.subr.bf16.mxu0 %v3452
    %3516 = vmatpush1.bf16.msra.mxu0 %v3451
    %3517 = vmatprep.mubr.bf16.mxu0 %v3313
    %3518 = vmatmul.mubr.bf16.gmra.mrb[0].mxu0 %v3312
    %v3519 = vpop.f32.mrb[0].mxu0
    %v3520 = vadd.f32 %v3318, %v3519
    %v3521 = vpop.f32.mrb[0].mxu0
    %v3522 = vadd.f32 %v3322, %v3521
    %v3523 = vpop.f32.mrb[0].mxu0
    %v3524 = vpop.f32.mrb[0].mxu0
    %3525 = vdwg.mxu0
    %v3526 = vadd.f32 %v1051, %v3520
    %v3527 = vadd.f32 %v1052, %v3522
    %s3528 = smul.u32 4, 32
    %s3529 = smul.u32 %s3528, 20
    %s3530 = sshll.u32 %s3529, 4
    %3531 = dma.done [#allocation3], %s3530
    %v3532 = vld [vmem:[#allocation4 + $0x20] sm:$0x6]
    %v3533 = vld [vmem:[#allocation4 + $0x28] sm:$0x6]
    %v3536 = vrot.slane %v3532, 1
    %v3537 = vrot.slane %v3533, 1
    %s3540 = scalar_lea.vmem [#allocation4], 2
    %v3541 = vld [vmem:[%s3540] ss:$8 sm:$0x3]
    %s3542 = scalar_lea.vmem [#allocation4], 3
    %v3543 = vld [vmem:[%s3542] ss:$8 sm:$0x3]
    %v3544 = vld [vmem:[#allocation2] sm:$0xff]
    %v3545 = vld [vmem:[#allocation2 + $0x8] sm:$0xff]
    %v3546 = vld [vmem:[#allocation2 + $0x10] sm:$0xff]
    %v3547 = vld [vmem:[#allocation2 + $0x18] sm:$0xff]
    %v3548 = vld [vmem:[#allocation2 + $0x20] sm:$0xff]
    %v3549 = vld [vmem:[#allocation2 + $0x28] sm:$0xff]
    %v3550 = vld [vmem:[#allocation2 + $0xa0] sm:$0xff]
    %v3551 = vld [vmem:[#allocation2 + $0xa8] sm:$0xff]
    %v3552 = vld [vmem:[#allocation2 + $0xb0] sm:$0xff]
    %v3553 = vld [vmem:[#allocation2 + $0xb8] sm:$0xff]
    %v3554 = vld [vmem:[#allocation2 + $0xc0] sm:$0xff]
    %v3555 = vld [vmem:[#allocation2 + $0xc8] sm:$0xff]
    %v3556 = vld [vmem:[#allocation2 + $0x140] sm:$0xff]
    %v3557 = vld [vmem:[#allocation2 + $0x148] sm:$0xff]
    %v3558 = vld [vmem:[#allocation2 + $0x150] sm:$0xff]
    %v3559 = vld [vmem:[#allocation2 + $0x158] sm:$0xff]
    %v3560 = vld [vmem:[#allocation2 + $0x160] sm:$0xff]
    %v3561 = vld [vmem:[#allocation2 + $0x168] sm:$0xff]
    %v3562 = vld [vmem:[#allocation2 + $0x1e0] sm:$0xff]
    %v3563 = vld [vmem:[#allocation2 + $0x1e8] sm:$0xff]
    %v3564 = vld [vmem:[#allocation2 + $0x1f0] sm:$0xff]
    %v3565 = vld [vmem:[#allocation2 + $0x1f8] sm:$0xff]
    %v3566 = vld [vmem:[#allocation2 + $0x200] sm:$0xff]
    %v3567 = vld [vmem:[#allocation2 + $0x208] sm:$0xff]
    %v3568 = vld [vmem:[#allocation2 + $0x280] sm:$0xff]
    %v3569 = vld [vmem:[#allocation2 + $0x288] sm:$0xff]
    %v3570 = vld [vmem:[#allocation2 + $0x290] sm:$0xff]
    %v3571 = vld [vmem:[#allocation2 + $0x298] sm:$0xff]
    %v3572 = vld [vmem:[#allocation2 + $0x2a0] sm:$0xff]
    %v3573 = vld [vmem:[#allocation2 + $0x2a8] sm:$0xff]
    %v3574 = vld [vmem:[#allocation2 + $0x320] sm:$0xff]
    %v3575 = vld [vmem:[#allocation2 + $0x328] sm:$0xff]
    %v3576 = vld [vmem:[#allocation2 + $0x330] sm:$0xff]
    %v3577 = vld [vmem:[#allocation2 + $0x338] sm:$0xff]
    %v3578 = vld [vmem:[#allocation2 + $0x340] sm:$0xff]
    %v3579 = vld [vmem:[#allocation2 + $0x348] sm:$0xff]
    %v3580 = vld [vmem:[#allocation2 + $0x3c0] sm:$0xff]
    %v3581 = vld [vmem:[#allocation2 + $0x3c8] sm:$0xff]
    %v3582 = vld [vmem:[#allocation2 + $0x3d0] sm:$0xff]
    %v3583 = vld [vmem:[#allocation2 + $0x3d8] sm:$0xff]
    %v3584 = vld [vmem:[#allocation2 + $0x3e0] sm:$0xff]
    %v3585 = vld [vmem:[#allocation2 + $0x3e8] sm:$0xff]
    %v3586 = vld [vmem:[#allocation2 + $0x460] sm:$0xff]
    %v3587 = vld [vmem:[#allocation2 + $0x468] sm:$0xff]
    %v3588 = vld [vmem:[#allocation2 + $0x470] sm:$0xff]
    %v3589 = vld [vmem:[#allocation2 + $0x478] sm:$0xff]
    %v3590 = vld [vmem:[#allocation2 + $0x480] sm:$0xff]
    %v3591 = vld [vmem:[#allocation2 + $0x488] sm:$0xff]
    %v3592 = vld [vmem:[#allocation2 + $0x500] sm:$0xff]
    %v3593 = vld [vmem:[#allocation2 + $0x508] sm:$0xff]
    %v3594 = vld [vmem:[#allocation2 + $0x510] sm:$0xff]
    %v3595 = vld [vmem:[#allocation2 + $0x518] sm:$0xff]
    %v3596 = vld [vmem:[#allocation2 + $0x520] sm:$0xff]
    %v3597 = vld [vmem:[#allocation2 + $0x528] sm:$0xff]
    %v3598 = vld [vmem:[#allocation2 + $0x5a0] sm:$0xff]
    %v3599 = vld [vmem:[#allocation2 + $0x5a8] sm:$0xff]
    %v3600 = vld [vmem:[#allocation2 + $0x5b0] sm:$0xff]
    %v3601 = vld [vmem:[#allocation2 + $0x5b8] sm:$0xff]
    %v3602 = vld [vmem:[#allocation2 + $0x5c0] sm:$0xff]
    %v3603 = vld [vmem:[#allocation2 + $0x5c8] sm:$0xff]
    %v3604 = vld [vmem:[#allocation2 + $0x640] sm:$0xff]
    %v3605 = vld [vmem:[#allocation2 + $0x648] sm:$0xff]
    %v3606 = vld [vmem:[#allocation2 + $0x650] sm:$0xff]
    %v3607 = vld [vmem:[#allocation2 + $0x658] sm:$0xff]
    %v3608 = vld [vmem:[#allocation2 + $0x660] sm:$0xff]
    %v3609 = vld [vmem:[#allocation2 + $0x668] sm:$0xff]
    %v3610 = vld [vmem:[#allocation2 + $0x6e0] sm:$0xff]
    %v3611 = vld [vmem:[#allocation2 + $0x6e8] sm:$0xff]
    %v3612 = vld [vmem:[#allocation2 + $0x6f0] sm:$0xff]
    %v3613 = vld [vmem:[#allocation2 + $0x6f8] sm:$0xff]
    %v3614 = vld [vmem:[#allocation2 + $0x700] sm:$0xff]
    %v3615 = vld [vmem:[#allocation2 + $0x708] sm:$0xff]
    %v3616 = vld [vmem:[#allocation2 + $0x780] sm:$0xff]
    %v3617 = vld [vmem:[#allocation2 + $0x788] sm:$0xff]
    %v3618 = vld [vmem:[#allocation2 + $0x790] sm:$0xff]
    %v3619 = vld [vmem:[#allocation2 + $0x798] sm:$0xff]
    %v3620 = vld [vmem:[#allocation2 + $0x7a0] sm:$0xff]
    %v3621 = vld [vmem:[#allocation2 + $0x7a8] sm:$0xff]
    %v3622 = vld [vmem:[#allocation2 + $0x820] sm:$0xff]
    %v3623 = vld [vmem:[#allocation2 + $0x828] sm:$0xff]
    %v3624 = vld [vmem:[#allocation2 + $0x830] sm:$0xff]
    %v3625 = vld [vmem:[#allocation2 + $0x838] sm:$0xff]
    %v3626 = vld [vmem:[#allocation2 + $0x840] sm:$0xff]
    %v3627 = vld [vmem:[#allocation2 + $0x848] sm:$0xff]
    %v3628 = vld [vmem:[#allocation2 + $0x8c0] sm:$0xff]
    %v3629 = vld [vmem:[#allocation2 + $0x8c8] sm:$0xff]
    %v3630 = vld [vmem:[#allocation2 + $0x8d0] sm:$0xff]
    %v3631 = vld [vmem:[#allocation2 + $0x8d8] sm:$0xff]
    %v3632 = vld [vmem:[#allocation2 + $0x8e0] sm:$0xff]
    %v3633 = vld [vmem:[#allocation2 + $0x8e8] sm:$0xff]
    %v3634 = vld [vmem:[#allocation2 + $0x960] sm:$0xff]
    %v3635 = vld [vmem:[#allocation2 + $0x968] sm:$0xff]
    %v3636 = vld [vmem:[#allocation2 + $0x970] sm:$0xff]
    %v3637 = vld [vmem:[#allocation2 + $0x978] sm:$0xff]
    %v3638 = vld [vmem:[#allocation2 + $0x980] sm:$0xff]
    %v3639 = vld [vmem:[#allocation2 + $0x988] sm:$0xff]
    %v3640 = vld [vmem:[#allocation2 + $0x30] sm:$0xff]
    %v3641 = vld [vmem:[#allocation2 + $0x38] sm:$0xff]
    %v3642 = vld [vmem:[#allocation2 + $0xd0] sm:$0xff]
    %v3643 = vld [vmem:[#allocation2 + $0xd8] sm:$0xff]
    %v3644 = vld [vmem:[#allocation2 + $0x170] sm:$0xff]
    %v3645 = vld [vmem:[#allocation2 + $0x178] sm:$0xff]
    %v3646 = vld [vmem:[#allocation2 + $0x210] sm:$0xff]
    %v3647 = vld [vmem:[#allocation2 + $0x218] sm:$0xff]
    %v3648 = vld [vmem:[#allocation2 + $0x2b0] sm:$0xff]
    %v3649 = vld [vmem:[#allocation2 + $0x2b8] sm:$0xff]
    %v3650 = vld [vmem:[#allocation2 + $0x350] sm:$0xff]
    %v3651 = vld [vmem:[#allocation2 + $0x358] sm:$0xff]
    %v3652 = vld [vmem:[#allocation2 + $0x3f0] sm:$0xff]
    %v3653 = vld [vmem:[#allocation2 + $0x3f8] sm:$0xff]
    %v3654 = vld [vmem:[#allocation2 + $0x490] sm:$0xff]
    %v3655 = vld [vmem:[#allocation2 + $0x498] sm:$0xff]
    %v3656 = vld [vmem:[#allocation2 + $0x530] sm:$0xff]
    %v3657 = vld [vmem:[#allocation2 + $0x538] sm:$0xff]
    %v3658 = vld [vmem:[#allocation2 + $0x5d0] sm:$0xff]
    %v3659 = vld [vmem:[#allocation2 + $0x5d8] sm:$0xff]
    %v3660 = vld [vmem:[#allocation2 + $0x670] sm:$0xff]
    %v3661 = vld [vmem:[#allocation2 + $0x678] sm:$0xff]
    %v3662 = vld [vmem:[#allocation2 + $0x710] sm:$0xff]
    %v3663 = vld [vmem:[#allocation2 + $0x718] sm:$0xff]
    %v3664 = vld [vmem:[#allocation2 + $0x7b0] sm:$0xff]
    %v3665 = vld [vmem:[#allocation2 + $0x7b8] sm:$0xff]
    %v3666 = vld [vmem:[#allocation2 + $0x850] sm:$0xff]
    %v3667 = vld [vmem:[#allocation2 + $0x858] sm:$0xff]
    %v3668 = vld [vmem:[#allocation2 + $0x8f0] sm:$0xff]
    %v3669 = vld [vmem:[#allocation2 + $0x8f8] sm:$0xff]
    %v3670 = vld [vmem:[#allocation2 + $0x990] sm:$0xff]
    %v3671 = vld [vmem:[#allocation2 + $0x998] sm:$0xff]
    %s3672 = scalar_lea.vmem [#allocation4], 4
    %v3673 = vld [vmem:[%s3672] ss:$8 sm:$0x3]
    %s3674 = scalar_lea.vmem [#allocation4], 36
    %v3675 = vld [vmem:[%s3674] ss:$8 sm:$0x3]
    %v3676 = vadd.f32 %v84, %v85
    %3677 = vadd.xlane.f32.xlu0 %v3676
    %v3678 = vpop.xlane.xlu0 %3677
    %vm3679 = vcmask 1041408
    %v3680 = vsel %vm3679, %v3536, 0.0
    %v3681 = vsel %vm3679, %v3537, 0.0
    %v3682 = vadd.f32 %v3680, %v3681
    %3683 = vadd.xlane.f32.xlu0 %v3682
    %v3684 = vpop.xlane.xlu0 %3683
    %v3685 = vmul.f32 %v3678, %v341
    %v3686 = vmul.f32 %v3684, %v341
    %v3687 = vsub.f32 %v84, %v3685
    %v3688 = vsub.f32 %v85, %v3685
    %v3689 = vsub.f32 %v3536, %v3686
    %v3690 = vsub.f32 %v3537, %v3686
    %v3691 = vmul.f32 %v3687, %v3687
    %v3692 = vmul.f32 %v3688, %v3688
    %v3693 = vmul.f32 %v3689, %v3689
    %v3694 = vmul.f32 %v3690, %v3690
    %v3695 = vadd.f32 %v3691, %v3692
    %3696 = vadd.xlane.f32.xlu0 %v3695
    %v3697 = vpop.xlane.xlu0 %3696
    %v3698 = vsel %vm3679, %v3693, 0.0
    %v3699 = vsel %vm3679, %v3694, 0.0
    %v3700 = vadd.f32 %v3698, %v3699
    %3701 = vadd.xlane.f32.xlu0 %v3700
    %v3702 = vpop.xlane.xlu0 %3701
    %v3703 = vmul.f32 %v3697, %v341
    %v3704 = vmul.f32 %v3702, %v341
    %v3705 = vadd.f32 %v3703, 1e-05
    %v3706 = vadd.f32 %v3704, 1e-05
    %v3707 = vrsqrt.pop %v3705
    %v3708 = vrsqrt.pop %v3706
    %v3709 = vmul.f32 %v3687, %v3707
    %v3710 = vmul.f32 %v3688, %v3707
    %v3711 = vmul.f32 %v3689, %v3708
    %v3712 = vmul.f32 %v3690, %v3708
    %v3714 = vlaneseq
    %v3715 = vshrl.u32 %v3714, 7
    %v3716 = vsub.s32 0, %v3715
    %v3717 = vrot.slane %v3541, %v3716
    %v3718 = vlaneseq
    %v3719 = vshrl.u32 %v3718, 7
    %v3720 = vsub.s32 1, %v3719
    %v3721 = vrot.slane %v3541, %v3720
    %v3724 = vmul.f32 %v3709, %v3717
    %v3725 = vmul.f32 %v3710, %v3721
    %v3726 = vmul.f32 %v3711, %v3717
    %v3727 = vmul.f32 %v3712, %v3721
    %v3729 = vlaneseq
    %v3730 = vshrl.u32 %v3729, 7
    %v3731 = vsub.s32 0, %v3730
    %v3732 = vrot.slane %v3543, %v3731
    %v3733 = vlaneseq
    %v3734 = vshrl.u32 %v3733, 7
    %v3735 = vsub.s32 1, %v3734
    %v3736 = vrot.slane %v3543, %v3735
    %v3739 = vadd.f32 %v3724, %v3732
    %v3740 = vadd.f32 %v3725, %v3736
    %v3741 = vadd.f32 %v3726, %v3732
    %v3742 = vadd.f32 %v3727, %v3736
    %v3744 = vlaneseq
    %v3745 = vshrl.u32 %v3744, 7
    %v3746 = vsub.s32 0, %v3745
    %v3747 = vrot.slane %v3675, %v3746
    %v3748 = vlaneseq
    %v3749 = vshrl.u32 %v3748, 7
    %v3750 = vsub.s32 1, %v3749
    %v3751 = vrot.slane %v3675, %v3750
    %v3754 = vmul.f32 %v3536, %v3747
    %v3755 = vmul.f32 %v3537, %v3751
    %v3756 = vpack.c.bf16 %v3741, %v3739
    %v3757 = vpack.c.bf16 %v3742, %v3740
    %3758 = vmatprep.subr.bf16.mxu0 %v3545
    %3759 = vmatpush1.bf16.msra.mxu0 %v3544
    %3760 = vmatprep.subr.bf16.mxu0 %v3551
    %3761 = vmatpush1.bf16.msra.mxu0 %v3550
    %3762 = vmatprep.subr.bf16.mxu0 %v3557
    %3763 = vmatpush1.bf16.msra.mxu0 %v3556
    %3764 = vmatprep.subr.bf16.mxu0 %v3563
    %3765 = vmatpush1.bf16.msra.mxu0 %v3562
    %3766 = vmatprep.subr.bf16.mxu0 %v3569
    %3767 = vmatpush1.bf16.msra.mxu0 %v3568
    %3768 = vmatprep.subr.bf16.mxu0 %v3575
    %3769 = vmatpush1.bf16.msra.mxu0 %v3574
    %3770 = vmatprep.subr.bf16.mxu0 %v3581
    %3771 = vmatpush1.bf16.msra.mxu0 %v3580
    %3772 = vmatprep.subr.bf16.mxu0 %v3587
    %3773 = vmatpush1.bf16.msra.mxu0 %v3586
    %3774 = vmatprep.subr.bf16.mxu0 %v3593
    %3775 = vmatpush1.bf16.msra.mxu0 %v3592
    %3776 = vmatprep.subr.bf16.mxu0 %v3599
    %3777 = vmatpush1.bf16.msra.mxu0 %v3598
    %3778 = vmatprep.subr.bf16.mxu0 %v3605
    %3779 = vmatpush1.bf16.msra.mxu0 %v3604
    %3780 = vmatprep.subr.bf16.mxu0 %v3611
    %3781 = vmatpush1.bf16.msra.mxu0 %v3610
    %3782 = vmatprep.subr.bf16.mxu0 %v3617
    %3783 = vmatpush1.bf16.msra.mxu0 %v3616
    %3784 = vmatprep.subr.bf16.mxu0 %v3623
    %3785 = vmatpush1.bf16.msra.mxu0 %v3622
    %3786 = vmatprep.subr.bf16.mxu0 %v3629
    %3787 = vmatpush1.bf16.msra.mxu0 %v3628
    %3788 = vmatprep.subr.bf16.mxu0 %v3635
    %3789 = vmatpush1.bf16.msra.mxu0 %v3634
    %3790 = vmatprep.mubr.bf16.mxu0 %v3757
    %3791 = vmatmul.mubr.bf16.gmra.mrb[0].mxu0 %v3756
    %v3792 = vpop.f32.mrb[0].mxu0
    %v3793 = vadd.f32 0.0, %v3792
    %v3794 = vpop.f32.mrb[0].mxu0
    %v3795 = vadd.f32 0.0, %v3794
    %v3796 = vpop.f32.mrb[0].mxu0
    %v3797 = vadd.f32 0.0, %v3796
    %v3798 = vpop.f32.mrb[0].mxu0
    %v3799 = vadd.f32 0.0, %v3798
    %3800 = vdwg.mxu0
    %3801 = vmatprep.subr.bf16.mxu0 %v3547
    %3802 = vmatpush1.bf16.msra.mxu0 %v3546
    %3803 = vmatprep.subr.bf16.mxu0 %v3553
    %3804 = vmatpush1.bf16.msra.mxu0 %v3552
    %3805 = vmatprep.subr.bf16.mxu0 %v3559
    %3806 = vmatpush1.bf16.msra.mxu0 %v3558
    %3807 = vmatprep.subr.bf16.mxu0 %v3565
    %3808 = vmatpush1.bf16.msra.mxu0 %v3564
    %3809 = vmatprep.subr.bf16.mxu0 %v3571
    %3810 = vmatpush1.bf16.msra.mxu0 %v3570
    %3811 = vmatprep.subr.bf16.mxu0 %v3577
    %3812 = vmatpush1.bf16.msra.mxu0 %v3576
    %3813 = vmatprep.subr.bf16.mxu0 %v3583
    %3814 = vmatpush1.bf16.msra.mxu0 %v3582
    %3815 = vmatprep.subr.bf16.mxu0 %v3589
    %3816 = vmatpush1.bf16.msra.mxu0 %v3588
    %3817 = vmatprep.subr.bf16.mxu0 %v3595
    %3818 = vmatpush1.bf16.msra.mxu0 %v3594
    %3819 = vmatprep.subr.bf16.mxu0 %v3601
    %3820 = vmatpush1.bf16.msra.mxu0 %v3600
    %3821 = vmatprep.subr.bf16.mxu0 %v3607
    %3822 = vmatpush1.bf16.msra.mxu0 %v3606
    %3823 = vmatprep.subr.bf16.mxu0 %v3613
    %3824 = vmatpush1.bf16.msra.mxu0 %v3612
    %3825 = vmatprep.subr.bf16.mxu0 %v3619
    %3826 = vmatpush1.bf16.msra.mxu0 %v3618
    %3827 = vmatprep.subr.bf16.mxu0 %v3625
    %3828 = vmatpush1.bf16.msra.mxu0 %v3624
    %3829 = vmatprep.subr.bf16.mxu0 %v3631
    %3830 = vmatpush1.bf16.msra.mxu0 %v3630
    %3831 = vmatprep.subr.bf16.mxu0 %v3637
    %3832 = vmatpush1.bf16.msra.mxu0 %v3636
    %3833 = vmatprep.mubr.bf16.mxu0 %v3757
    %3834 = vmatmul.mubr.bf16.gmra.mrb[0].mxu0 %v3756
    %v3835 = vpop.f32.mrb[0].mxu0
    %v3836 = vadd.f32 0.0, %v3835
    %v3837 = vpop.f32.mrb[0].mxu0
    %v3838 = vadd.f32 0.0, %v3837
    %v3839 = vpop.f32.mrb[0].mxu0
    %v3840 = vadd.f32 0.0, %v3839
    %v3841 = vpop.f32.mrb[0].mxu0
    %v3842 = vadd.f32 0.0, %v3841
    %3843 = vdwg.mxu0
    %3844 = vmatprep.subr.bf16.mxu0 %v3549
    %3845 = vmatpush1.bf16.msra.mxu0 %v3548
    %3846 = vmatprep.subr.bf16.mxu0 %v3555
    %3847 = vmatpush1.bf16.msra.mxu0 %v3554
    %3848 = vmatprep.subr.bf16.mxu0 %v3561
    %3849 = vmatpush1.bf16.msra.mxu0 %v3560
    %3850 = vmatprep.subr.bf16.mxu0 %v3567
    %3851 = vmatpush1.bf16.msra.mxu0 %v3566
    %3852 = vmatprep.subr.bf16.mxu0 %v3573
    %3853 = vmatpush1.bf16.msra.mxu0 %v3572
    %3854 = vmatprep.subr.bf16.mxu0 %v3579
    %3855 = vmatpush1.bf16.msra.mxu0 %v3578
    %3856 = vmatprep.subr.bf16.mxu0 %v3585
    %3857 = vmatpush1.bf16.msra.mxu0 %v3584
    %3858 = vmatprep.subr.bf16.mxu0 %v3591
    %3859 = vmatpush1.bf16.msra.mxu0 %v3590
    %3860 = vmatprep.subr.bf16.mxu0 %v3597
    %3861 = vmatpush1.bf16.msra.mxu0 %v3596
    %3862 = vmatprep.subr.bf16.mxu0 %v3603
    %3863 = vmatpush1.bf16.msra.mxu0 %v3602
    %3864 = vmatprep.subr.bf16.mxu0 %v3609
    %3865 = vmatpush1.bf16.msra.mxu0 %v3608
    %3866 = vmatprep.subr.bf16.mxu0 %v3615
    %3867 = vmatpush1.bf16.msra.mxu0 %v3614
    %3868 = vmatprep.subr.bf16.mxu0 %v3621
    %3869 = vmatpush1.bf16.msra.mxu0 %v3620
    %3870 = vmatprep.subr.bf16.mxu0 %v3627
    %3871 = vmatpush1.bf16.msra.mxu0 %v3626
    %3872 = vmatprep.subr.bf16.mxu0 %v3633
    %3873 = vmatpush1.bf16.msra.mxu0 %v3632
    %3874 = vmatprep.subr.bf16.mxu0 %v3639
    %3875 = vmatpush1.bf16.msra.mxu0 %v3638
    %3876 = vmatprep.mubr.bf16.mxu0 %v3757
    %3877 = vmatmul.mubr.bf16.gmra.mrb[0].mxu0 %v3756
    %v3878 = vpop.f32.mrb[0].mxu0
    %v3879 = vadd.f32 0.0, %v3878
    %v3880 = vpop.f32.mrb[0].mxu0
    %v3881 = vadd.f32 0.0, %v3880
    %v3882 = vpop.f32.mrb[0].mxu0
    %v3883 = vadd.f32 0.0, %v3882
    %v3884 = vpop.f32.mrb[0].mxu0
    %v3885 = vadd.f32 0.0, %v3884
    %3886 = vdwg.mxu0
    %v3888 = vsel %vm1664, %v3793, 0
    %v3891 = vsel %vm1664, %v3797, 0
    %v3894 = vsel %vm1664, %v3836, 0
    %v3897 = vsel %vm1664, %v3840, 0
    %3899 = vmatprep.subr.mxu0 0.0
    %3900 = vmatpush1.xpose.msra.mxu0 %v3894
    %3901 = vmatprep.subr.mxu0 0.0
    %3902 = vmatpush1.xpose.msra.mxu0 %v3897
    %3903 = vmatprep.subr.mxu0 0.0
    %3904 = vmatpush1.xpose.msra.mxu0 0.0
    %3905 = vmatprep.subr.mxu0 0.0
    %3906 = vmatpush1.xpose.msra.mxu0 0.0
    %3907 = vmatprep.subr.mxu0 0.0
    %3908 = vmatpush1.xpose.msra.mxu0 0.0
    %3909 = vmatprep.subr.mxu0 0.0
    %3910 = vmatpush1.xpose.msra.mxu0 0.0
    %3911 = vmatprep.subr.mxu0 0.0
    %3912 = vmatpush1.xpose.msra.mxu0 0.0
    %3913 = vmatprep.subr.mxu0 0.0
    %3914 = vmatpush1.xpose.msra.mxu0 0.0
    %3915 = vmatprep.subr.mxu0 0.0
    %3916 = vmatpush1.xpose.msra.mxu0 0.0
    %3917 = vmatprep.subr.mxu0 0.0
    %3918 = vmatpush1.xpose.msra.mxu0 0.0
    %3919 = vmatprep.subr.mxu0 0.0
    %3920 = vmatpush1.xpose.msra.mxu0 0.0
    %3921 = vmatprep.subr.mxu0 0.0
    %3922 = vmatpush1.xpose.msra.mxu0 0.0
    %3923 = vmatprep.subr.mxu0 0.0
    %3924 = vmatpush1.xpose.msra.mxu0 0.0
    %3925 = vmatprep.subr.mxu0 0.0
    %3926 = vmatpush1.xpose.msra.mxu0 0.0
    %3927 = vmatprep.subr.mxu0 0.0
    %3928 = vmatpush1.xpose.msra.mxu0 0.0
    %3929 = vmatprep.subr.mxu0 0.0
    %3930 = vmatpush1.xpose.msra.mxu0 0.0
    %3931 = vmatprep.subr.mxu0 0.0
    %3932 = vmatpush1.xpose.msra.mxu0 0.0
    %3933 = vmatprep.subr.mxu0 0.0
    %3934 = vmatpush1.xpose.msra.mxu0 0.0
    %3935 = vmatprep.subr.mxu0 0.0
    %3936 = vmatpush1.xpose.msra.mxu0 0.0
    %3937 = vmatprep.subr.mxu0 0.0
    %3938 = vmatpush1.xpose.msra.mxu0 0.0
    %3939 = vmatprep.subr.mxu0 0.0
    %3940 = vmatpush1.xpose.msra.mxu0 0.0
    %3941 = vmatprep.subr.mxu0 0.0
    %3942 = vmatpush1.xpose.msra.mxu0 0.0
    %3943 = vmatprep.subr.mxu0 0.0
    %3944 = vmatpush1.xpose.msra.mxu0 0.0
    %3945 = vmatprep.subr.mxu0 0.0
    %3946 = vmatpush1.xpose.msra.mxu0 0.0
    %3947 = vmatprep.subr.mxu0 0.0
    %3948 = vmatpush1.xpose.msra.mxu0 0.0
    %3949 = vmatprep.subr.mxu0 0.0
    %3950 = vmatpush1.xpose.msra.mxu0 0.0
    %3951 = vmatprep.subr.mxu0 0.0
    %3952 = vmatpush1.xpose.msra.mxu0 0.0
    %3953 = vmatprep.subr.mxu0 0.0
    %3954 = vmatpush1.xpose.msra.mxu0 0.0
    %3955 = vmatprep.subr.mxu0 0.0
    %3956 = vmatpush1.xpose.msra.mxu0 0.0
    %3957 = vmatprep.subr.mxu0 0.0
    %3958 = vmatpush1.xpose.msra.mxu0 0.0
    %3959 = vmatprep.subr.mxu0 0.0
    %3960 = vmatpush1.xpose.msra.mxu0 0.0
    %3961 = vmatprep.subr.mxu0 0.0
    %3962 = vmatpush1.xpose.msra.mxu0 0.0
    %3963 = vmatprep.mubr.f32.mxu0 0.0
    %3964 = vmatmul.mubr.f32.gmra.mrb[0].mxu0 %v3888
    %v3965 = vpop.f32.mrb[0].mxu0
    %v3966 = vadd.f32 0.0, %v3965
    %v3967 = vpop.f32.mrb[0].mxu0
    %3968 = vmatprep.mubr.f32.mxu0 0.0
    %3969 = vmatmul.mubr.f32.gmra.mrb[0].mxu0 %v3891
    %v3970 = vpop.f32.mrb[0].mxu0
    %v3971 = vadd.f32 0.0, %v3970
    %v3972 = vpop.f32.mrb[0].mxu0
    %3973 = vdwg.mxu0
    %vm3974 = vcmask 80896
    %v3975 = vsel %vm3974, %v3966, -inf
    %3976 = vmax.xlane.f32.xlu0 %v3975
    %v3977 = vpop.xlane.xlu0 %3976
    %vm3978 = vcmask 74752
    %v3979 = vsel %vm3978, %v3971, -inf
    %3980 = vmax.xlane.f32.xlu0 %v3979
    %v3981 = vpop.xlane.xlu0 %3980
    %v3982 = vsub.f32 %v3966, %v3977
    %v3983 = vsub.f32 %v3971, %v3981
    %v3984 = vmul.f32 %v3982, 1.442695
    %v3985 = vpow.pop %v3984
    %v3986 = vmul.f32 %v3983, 1.442695
    %v3987 = vpow.pop %v3986
    %v3988 = vsel %vm3974, %v3985, 0.0
    %3989 = vadd.xlane.f32.xlu0 %v3988
    %v3990 = vpop.xlane.xlu0 %3989
    %v3991 = vsel %vm3978, %v3987, 0.0
    %3992 = vadd.xlane.f32.xlu0 %v3991
    %v3993 = vpop.xlane.xlu0 %3992
    %v3994 = vrcp.pop %v3990
    %v3995 = vmul.f32 %v3985, %v3994
    %v3996 = vrcp.pop %v3993
    %v3997 = vmul.f32 %v3987, %v3996
    %v3999 = vsel %vm3974, %v3995, 0
    %v4002 = vsel %vm3974, %v3997, 0
    %v4005 = vsel %vm3679, %v3883, 0
    %4007 = vmatprep.subr.mxu0 0.0
    %4008 = vmatpush1.msra.mxu0 %v3879
    %4009 = vmatprep.subr.mxu0 0.0
    %4010 = vmatpush1.msra.mxu0 %v4005
    %4011 = vmatprep.subr.mxu0 0.0
    %4012 = vmatpush1.msra.mxu0 0.0
    %4013 = vmatprep.subr.mxu0 0.0
    %4014 = vmatpush1.msra.mxu0 0.0
    %4015 = vmatprep.subr.mxu0 0.0
    %4016 = vmatpush1.msra.mxu0 0.0
    %4017 = vmatprep.subr.mxu0 0.0
    %4018 = vmatpush1.msra.mxu0 0.0
    %4019 = vmatprep.subr.mxu0 0.0
    %4020 = vmatpush1.msra.mxu0 0.0
    %4021 = vmatprep.subr.mxu0 0.0
    %4022 = vmatpush1.msra.mxu0 0.0
    %4023 = vmatprep.subr.mxu0 0.0
    %4024 = vmatpush1.msra.mxu0 0.0
    %4025 = vmatprep.subr.mxu0 0.0
    %4026 = vmatpush1.msra.mxu0 0.0
    %4027 = vmatprep.subr.mxu0 0.0
    %4028 = vmatpush1.msra.mxu0 0.0
    %4029 = vmatprep.subr.mxu0 0.0
    %4030 = vmatpush1.msra.mxu0 0.0
    %4031 = vmatprep.subr.mxu0 0.0
    %4032 = vmatpush1.msra.mxu0 0.0
    %4033 = vmatprep.subr.mxu0 0.0
    %4034 = vmatpush1.msra.mxu0 0.0
    %4035 = vmatprep.subr.mxu0 0.0
    %4036 = vmatpush1.msra.mxu0 0.0
    %4037 = vmatprep.subr.mxu0 0.0
    %4038 = vmatpush1.msra.mxu0 0.0
    %4039 = vmatprep.subr.mxu0 0.0
    %4040 = vmatpush1.msra.mxu0 0.0
    %4041 = vmatprep.subr.mxu0 0.0
    %4042 = vmatpush1.msra.mxu0 0.0
    %4043 = vmatprep.subr.mxu0 0.0
    %4044 = vmatpush1.msra.mxu0 0.0
    %4045 = vmatprep.subr.mxu0 0.0
    %4046 = vmatpush1.msra.mxu0 0.0
    %4047 = vmatprep.subr.mxu0 0.0
    %4048 = vmatpush1.msra.mxu0 0.0
    %4049 = vmatprep.subr.mxu0 0.0
    %4050 = vmatpush1.msra.mxu0 0.0
    %4051 = vmatprep.subr.mxu0 0.0
    %4052 = vmatpush1.msra.mxu0 0.0
    %4053 = vmatprep.subr.mxu0 0.0
    %4054 = vmatpush1.msra.mxu0 0.0
    %4055 = vmatprep.subr.mxu0 0.0
    %4056 = vmatpush1.msra.mxu0 0.0
    %4057 = vmatprep.subr.mxu0 0.0
    %4058 = vmatpush1.msra.mxu0 0.0
    %4059 = vmatprep.subr.mxu0 0.0
    %4060 = vmatpush1.msra.mxu0 0.0
    %4061 = vmatprep.subr.mxu0 0.0
    %4062 = vmatpush1.msra.mxu0 0.0
    %4063 = vmatprep.subr.mxu0 0.0
    %4064 = vmatpush1.msra.mxu0 0.0
    %4065 = vmatprep.subr.mxu0 0.0
    %4066 = vmatpush1.msra.mxu0 0.0
    %4067 = vmatprep.subr.mxu0 0.0
    %4068 = vmatpush1.msra.mxu0 0.0
    %4069 = vmatprep.subr.mxu0 0.0
    %4070 = vmatpush1.msra.mxu0 0.0
    %4071 = vmatprep.mubr.f32.mxu0 0.0
    %4072 = vmatmul.mubr.f32.gmra.mrb[0].mxu0 %v3999
    %v4073 = vpop.f32.mrb[0].mxu0
    %v4074 = vadd.f32 0.0, %v4073
    %v4075 = vpop.f32.mrb[0].mxu0
    %4076 = vmatprep.mubr.f32.mxu0 0.0
    %4077 = vmatmul.mubr.f32.gmra.mrb[0].mxu0 %v4002
    %v4078 = vpop.f32.mrb[0].mxu0
    %v4079 = vadd.f32 0.0, %v4078
    %v4080 = vpop.f32.mrb[0].mxu0
    %4081 = vdwg.mxu0
    %4082 = vrot.lane.b32.xlu0 %v3793, 96
    %v4083 = vpop.permute.xlu0 %4082
    %4084 = vrot.lane.b32.xlu0 %v3797, 96
    %v4085 = vpop.permute.xlu0 %4084
    %4086 = vrot.lane.b32.xlu0 %v3836, 96
    %v4087 = vpop.permute.xlu0 %4086
    %4088 = vrot.lane.b32.xlu0 %v3840, 96
    %v4089 = vpop.permute.xlu0 %4088
    %v4090 = vsel %vm1664, %v4083, 0
    %v4092 = vsel %vm1664, %v4085, 0
    %v4094 = vsel %vm1664, %v4087, 0
    %v4096 = vsel %vm1664, %v4089, 0
    %4098 = vmatprep.subr.mxu0 0.0
    %4099 = vmatpush1.xpose.msra.mxu0 %v4094
    %4100 = vmatprep.subr.mxu0 0.0
    %4101 = vmatpush1.xpose.msra.mxu0 %v4096
    %4102 = vmatprep.subr.mxu0 0.0
    %4103 = vmatpush1.xpose.msra.mxu0 0.0
    %4104 = vmatprep.subr.mxu0 0.0
    %4105 = vmatpush1.xpose.msra.mxu0 0.0
    %4106 = vmatprep.subr.mxu0 0.0
    %4107 = vmatpush1.xpose.msra.mxu0 0.0
    %4108 = vmatprep.subr.mxu0 0.0
    %4109 = vmatpush1.xpose.msra.mxu0 0.0
    %4110 = vmatprep.subr.mxu0 0.0
    %4111 = vmatpush1.xpose.msra.mxu0 0.0
    %4112 = vmatprep.subr.mxu0 0.0
    %4113 = vmatpush1.xpose.msra.mxu0 0.0
    %4114 = vmatprep.subr.mxu0 0.0
    %4115 = vmatpush1.xpose.msra.mxu0 0.0
    %4116 = vmatprep.subr.mxu0 0.0
    %4117 = vmatpush1.xpose.msra.mxu0 0.0
    %4118 = vmatprep.subr.mxu0 0.0
    %4119 = vmatpush1.xpose.msra.mxu0 0.0
    %4120 = vmatprep.subr.mxu0 0.0
    %4121 = vmatpush1.xpose.msra.mxu0 0.0
    %4122 = vmatprep.subr.mxu0 0.0
    %4123 = vmatpush1.xpose.msra.mxu0 0.0
    %4124 = vmatprep.subr.mxu0 0.0
    %4125 = vmatpush1.xpose.msra.mxu0 0.0
    %4126 = vmatprep.subr.mxu0 0.0
    %4127 = vmatpush1.xpose.msra.mxu0 0.0
    %4128 = vmatprep.subr.mxu0 0.0
    %4129 = vmatpush1.xpose.msra.mxu0 0.0
    %4130 = vmatprep.subr.mxu0 0.0
    %4131 = vmatpush1.xpose.msra.mxu0 0.0
    %4132 = vmatprep.subr.mxu0 0.0
    %4133 = vmatpush1.xpose.msra.mxu0 0.0
    %4134 = vmatprep.subr.mxu0 0.0
    %4135 = vmatpush1.xpose.msra.mxu0 0.0
    %4136 = vmatprep.subr.mxu0 0.0
    %4137 = vmatpush1.xpose.msra.mxu0 0.0
    %4138 = vmatprep.subr.mxu0 0.0
    %4139 = vmatpush1.xpose.msra.mxu0 0.0
    %4140 = vmatprep.subr.mxu0 0.0
    %4141 = vmatpush1.xpose.msra.mxu0 0.0
    %4142 = vmatprep.subr.mxu0 0.0
    %4143 = vmatpush1.xpose.msra.mxu0 0.0
    %4144 = vmatprep.subr.mxu0 0.0
    %4145 = vmatpush1.xpose.msra.mxu0 0.0
    %4146 = vmatprep.subr.mxu0 0.0
    %4147 = vmatpush1.xpose.msra.mxu0 0.0
    %4148 = vmatprep.subr.mxu0 0.0
    %4149 = vmatpush1.xpose.msra.mxu0 0.0
    %4150 = vmatprep.subr.mxu0 0.0
    %4151 = vmatpush1.xpose.msra.mxu0 0.0
    %4152 = vmatprep.subr.mxu0 0.0
    %4153 = vmatpush1.xpose.msra.mxu0 0.0
    %4154 = vmatprep.subr.mxu0 0.0
    %4155 = vmatpush1.xpose.msra.mxu0 0.0
    %4156 = vmatprep.subr.mxu0 0.0
    %4157 = vmatpush1.xpose.msra.mxu0 0.0
    %4158 = vmatprep.subr.mxu0 0.0
    %4159 = vmatpush1.xpose.msra.mxu0 0.0
    %4160 = vmatprep.subr.mxu0 0.0
    %4161 = vmatpush1.xpose.msra.mxu0 0.0
    %4162 = vmatprep.mubr.f32.mxu0 0.0
    %4163 = vmatmul.mubr.f32.gmra.mrb[0].mxu0 %v4090
    %v4164 = vpop.f32.mrb[0].mxu0
    %v4165 = vadd.f32 0.0, %v4164
    %v4166 = vpop.f32.mrb[0].mxu0
    %4167 = vmatprep.mubr.f32.mxu0 0.0
    %4168 = vmatmul.mubr.f32.gmra.mrb[0].mxu0 %v4092
    %v4169 = vpop.f32.mrb[0].mxu0
    %v4170 = vadd.f32 0.0, %v4169
    %v4171 = vpop.f32.mrb[0].mxu0
    %4172 = vdwg.mxu0
    %v4173 = vsel %vm3974, %v4165, -inf
    %4174 = vmax.xlane.f32.xlu0 %v4173
    %v4175 = vpop.xlane.xlu0 %4174
    %v4176 = vsel %vm3978, %v4170, -inf
    %4177 = vmax.xlane.f32.xlu0 %v4176
    %v4178 = vpop.xlane.xlu0 %4177
    %v4179 = vsub.f32 %v4165, %v4175
    %v4180 = vsub.f32 %v4170, %v4178
    %v4181 = vmul.f32 %v4179, 1.442695
    %v4182 = vpow.pop %v4181
    %v4183 = vmul.f32 %v4180, 1.442695
    %v4184 = vpow.pop %v4183
    %v4185 = vsel %vm3974, %v4182, 0.0
    %4186 = vadd.xlane.f32.xlu0 %v4185
    %v4187 = vpop.xlane.xlu0 %4186
    %v4188 = vsel %vm3978, %v4184, 0.0
    %4189 = vadd.xlane.f32.xlu0 %v4188
    %v4190 = vpop.xlane.xlu0 %4189
    %v4191 = vrcp.pop %v4187
    %v4192 = vmul.f32 %v4182, %v4191
    %v4193 = vrcp.pop %v4190
    %v4194 = vmul.f32 %v4184, %v4193
    %4196 = vrot.lane.b32.xlu0 %v3879, 96
    %v4197 = vpop.permute.xlu0 %4196
    %4198 = vrot.lane.b32.xlu0 %v3883, 96
    %v4199 = vpop.permute.xlu0 %4198
    %v4202 = vsel %vm3974, %v4192, 0
    %v4205 = vsel %vm3974, %v4194, 0
    %v4207 = vsel %vm3679, %v4199, 0
    %4209 = vmatprep.subr.mxu0 0.0
    %4210 = vmatpush1.msra.mxu0 %v4197
    %4211 = vmatprep.subr.mxu0 0.0
    %4212 = vmatpush1.msra.mxu0 %v4207
    %4213 = vmatprep.subr.mxu0 0.0
    %4214 = vmatpush1.msra.mxu0 0.0
    %4215 = vmatprep.subr.mxu0 0.0
    %4216 = vmatpush1.msra.mxu0 0.0
    %4217 = vmatprep.subr.mxu0 0.0
    %4218 = vmatpush1.msra.mxu0 0.0
    %4219 = vmatprep.subr.mxu0 0.0
    %4220 = vmatpush1.msra.mxu0 0.0
    %4221 = vmatprep.subr.mxu0 0.0
    %4222 = vmatpush1.msra.mxu0 0.0
    %4223 = vmatprep.subr.mxu0 0.0
    %4224 = vmatpush1.msra.mxu0 0.0
    %4225 = vmatprep.subr.mxu0 0.0
    %4226 = vmatpush1.msra.mxu0 0.0
    %4227 = vmatprep.subr.mxu0 0.0
    %4228 = vmatpush1.msra.mxu0 0.0
    %4229 = vmatprep.subr.mxu0 0.0
    %4230 = vmatpush1.msra.mxu0 0.0
    %4231 = vmatprep.subr.mxu0 0.0
    %4232 = vmatpush1.msra.mxu0 0.0
    %4233 = vmatprep.subr.mxu0 0.0
    %4234 = vmatpush1.msra.mxu0 0.0
    %4235 = vmatprep.subr.mxu0 0.0
    %4236 = vmatpush1.msra.mxu0 0.0
    %4237 = vmatprep.subr.mxu0 0.0
    %4238 = vmatpush1.msra.mxu0 0.0
    %4239 = vmatprep.subr.mxu0 0.0
    %4240 = vmatpush1.msra.mxu0 0.0
    %4241 = vmatprep.subr.mxu0 0.0
    %4242 = vmatpush1.msra.mxu0 0.0
    %4243 = vmatprep.subr.mxu0 0.0
    %4244 = vmatpush1.msra.mxu0 0.0
    %4245 = vmatprep.subr.mxu0 0.0
    %4246 = vmatpush1.msra.mxu0 0.0
    %4247 = vmatprep.subr.mxu0 0.0
    %4248 = vmatpush1.msra.mxu0 0.0
    %4249 = vmatprep.subr.mxu0 0.0
    %4250 = vmatpush1.msra.mxu0 0.0
    %4251 = vmatprep.subr.mxu0 0.0
    %4252 = vmatpush1.msra.mxu0 0.0
    %4253 = vmatprep.subr.mxu0 0.0
    %4254 = vmatpush1.msra.mxu0 0.0
    %4255 = vmatprep.subr.mxu0 0.0
    %4256 = vmatpush1.msra.mxu0 0.0
    %4257 = vmatprep.subr.mxu0 0.0
    %4258 = vmatpush1.msra.mxu0 0.0
    %4259 = vmatprep.subr.mxu0 0.0
    %4260 = vmatpush1.msra.mxu0 0.0
    %4261 = vmatprep.subr.mxu0 0.0
    %4262 = vmatpush1.msra.mxu0 0.0
    %4263 = vmatprep.subr.mxu0 0.0
    %4264 = vmatpush1.msra.mxu0 0.0
    %4265 = vmatprep.subr.mxu0 0.0
    %4266 = vmatpush1.msra.mxu0 0.0
    %4267 = vmatprep.subr.mxu0 0.0
    %4268 = vmatpush1.msra.mxu0 0.0
    %4269 = vmatprep.subr.mxu0 0.0
    %4270 = vmatpush1.msra.mxu0 0.0
    %4271 = vmatprep.subr.mxu0 0.0
    %4272 = vmatpush1.msra.mxu0 0.0
    %4273 = vmatprep.mubr.f32.mxu0 0.0
    %4274 = vmatmul.mubr.f32.gmra.mrb[0].mxu0 %v4202
    %v4275 = vpop.f32.mrb[0].mxu0
    %v4276 = vadd.f32 0.0, %v4275
    %v4277 = vpop.f32.mrb[0].mxu0
    %4278 = vmatprep.mubr.f32.mxu0 0.0
    %4279 = vmatmul.mubr.f32.gmra.mrb[0].mxu0 %v4205
    %v4280 = vpop.f32.mrb[0].mxu0
    %v4281 = vadd.f32 0.0, %v4280
    %v4282 = vpop.f32.mrb[0].mxu0
    %4283 = vdwg.mxu0
    %4284 = vrot.lane.b32.xlu0 %v3793, 64
    %v4285 = vpop.permute.xlu0 %4284
    %4286 = vrot.lane.b32.xlu0 %v3797, 64
    %v4287 = vpop.permute.xlu0 %4286
    %4288 = vrot.lane.b32.xlu0 %v3836, 64
    %v4289 = vpop.permute.xlu0 %4288
    %4290 = vrot.lane.b32.xlu0 %v3840, 64
    %v4291 = vpop.permute.xlu0 %4290
    %v4292 = vsel %vm1664, %v4285, 0
    %v4294 = vsel %vm1664, %v4287, 0
    %v4296 = vsel %vm1664, %v4289, 0
    %v4298 = vsel %vm1664, %v4291, 0
    %4300 = vmatprep.subr.mxu0 0.0
    %4301 = vmatpush1.xpose.msra.mxu0 %v4296
    %4302 = vmatprep.subr.mxu0 0.0
    %4303 = vmatpush1.xpose.msra.mxu0 %v4298
    %4304 = vmatprep.subr.mxu0 0.0
    %4305 = vmatpush1.xpose.msra.mxu0 0.0
    %4306 = vmatprep.subr.mxu0 0.0
    %4307 = vmatpush1.xpose.msra.mxu0 0.0
    %4308 = vmatprep.subr.mxu0 0.0
    %4309 = vmatpush1.xpose.msra.mxu0 0.0
    %4310 = vmatprep.subr.mxu0 0.0
    %4311 = vmatpush1.xpose.msra.mxu0 0.0
    %4312 = vmatprep.subr.mxu0 0.0
    %4313 = vmatpush1.xpose.msra.mxu0 0.0
    %4314 = vmatprep.subr.mxu0 0.0
    %4315 = vmatpush1.xpose.msra.mxu0 0.0
    %4316 = vmatprep.subr.mxu0 0.0
    %4317 = vmatpush1.xpose.msra.mxu0 0.0
    %4318 = vmatprep.subr.mxu0 0.0
    %4319 = vmatpush1.xpose.msra.mxu0 0.0
    %4320 = vmatprep.subr.mxu0 0.0
    %4321 = vmatpush1.xpose.msra.mxu0 0.0
    %4322 = vmatprep.subr.mxu0 0.0
    %4323 = vmatpush1.xpose.msra.mxu0 0.0
    %4324 = vmatprep.subr.mxu0 0.0
    %4325 = vmatpush1.xpose.msra.mxu0 0.0
    %4326 = vmatprep.subr.mxu0 0.0
    %4327 = vmatpush1.xpose.msra.mxu0 0.0
    %4328 = vmatprep.subr.mxu0 0.0
    %4329 = vmatpush1.xpose.msra.mxu0 0.0
    %4330 = vmatprep.subr.mxu0 0.0
    %4331 = vmatpush1.xpose.msra.mxu0 0.0
    %4332 = vmatprep.subr.mxu0 0.0
    %4333 = vmatpush1.xpose.msra.mxu0 0.0
    %4334 = vmatprep.subr.mxu0 0.0
    %4335 = vmatpush1.xpose.msra.mxu0 0.0
    %4336 = vmatprep.subr.mxu0 0.0
    %4337 = vmatpush1.xpose.msra.mxu0 0.0
    %4338 = vmatprep.subr.mxu0 0.0
    %4339 = vmatpush1.xpose.msra.mxu0 0.0
    %4340 = vmatprep.subr.mxu0 0.0
    %4341 = vmatpush1.xpose.msra.mxu0 0.0
    %4342 = vmatprep.subr.mxu0 0.0
    %4343 = vmatpush1.xpose.msra.mxu0 0.0
    %4344 = vmatprep.subr.mxu0 0.0
    %4345 = vmatpush1.xpose.msra.mxu0 0.0
    %4346 = vmatprep.subr.mxu0 0.0
    %4347 = vmatpush1.xpose.msra.mxu0 0.0
    %4348 = vmatprep.subr.mxu0 0.0
    %4349 = vmatpush1.xpose.msra.mxu0 0.0
    %4350 = vmatprep.subr.mxu0 0.0
    %4351 = vmatpush1.xpose.msra.mxu0 0.0
    %4352 = vmatprep.subr.mxu0 0.0
    %4353 = vmatpush1.xpose.msra.mxu0 0.0
    %4354 = vmatprep.subr.mxu0 0.0
    %4355 = vmatpush1.xpose.msra.mxu0 0.0
    %4356 = vmatprep.subr.mxu0 0.0
    %4357 = vmatpush1.xpose.msra.mxu0 0.0
    %4358 = vmatprep.subr.mxu0 0.0
    %4359 = vmatpush1.xpose.msra.mxu0 0.0
    %4360 = vmatprep.subr.mxu0 0.0
    %4361 = vmatpush1.xpose.msra.mxu0 0.0
    %4362 = vmatprep.subr.mxu0 0.0
    %4363 = vmatpush1.xpose.msra.mxu0 0.0
    %4364 = vmatprep.mubr.f32.mxu0 0.0
    %4365 = vmatmul.mubr.f32.gmra.mrb[0].mxu0 %v4292
    %v4366 = vpop.f32.mrb[0].mxu0
    %v4367 = vadd.f32 0.0, %v4366
    %v4368 = vpop.f32.mrb[0].mxu0
    %4369 = vmatprep.mubr.f32.mxu0 0.0
    %4370 = vmatmul.mubr.f32.gmra.mrb[0].mxu0 %v4294
    %v4371 = vpop.f32.mrb[0].mxu0
    %v4372 = vadd.f32 0.0, %v4371
    %v4373 = vpop.f32.mrb[0].mxu0
    %4374 = vdwg.mxu0
    %v4375 = vsel %vm3974, %v4367, -inf
    %4376 = vmax.xlane.f32.xlu0 %v4375
    %v4377 = vpop.xlane.xlu0 %4376
    %v4378 = vsel %vm3978, %v4372, -inf
    %4379 = vmax.xlane.f32.xlu0 %v4378
    %v4380 = vpop.xlane.xlu0 %4379
    %v4381 = vsub.f32 %v4367, %v4377
    %v4382 = vsub.f32 %v4372, %v4380
    %v4383 = vmul.f32 %v4381, 1.442695
    %v4384 = vpow.pop %v4383
    %v4385 = vmul.f32 %v4382, 1.442695
    %v4386 = vpow.pop %v4385
    %v4387 = vsel %vm3974, %v4384, 0.0
    %4388 = vadd.xlane.f32.xlu0 %v4387
    %v4389 = vpop.xlane.xlu0 %4388
    %v4390 = vsel %vm3978, %v4386, 0.0
    %4391 = vadd.xlane.f32.xlu0 %v4390
    %v4392 = vpop.xlane.xlu0 %4391
    %v4393 = vrcp.pop %v4389
    %v4394 = vmul.f32 %v4384, %v4393
    %v4395 = vrcp.pop %v4392
    %v4396 = vmul.f32 %v4386, %v4395
    %4397 = vrot.lane.b32.xlu0 %v3879, 64
    %v4398 = vpop.permute.xlu0 %4397
    %4399 = vrot.lane.b32.xlu0 %v3883, 64
    %v4400 = vpop.permute.xlu0 %4399
    %v4403 = vsel %vm3974, %v4394, 0
    %v4406 = vsel %vm3974, %v4396, 0
    %v4408 = vsel %vm3679, %v4400, 0
    %4410 = vmatprep.subr.mxu0 0.0
    %4411 = vmatpush1.msra.mxu0 %v4398
    %4412 = vmatprep.subr.mxu0 0.0
    %4413 = vmatpush1.msra.mxu0 %v4408
    %4414 = vmatprep.subr.mxu0 0.0
    %4415 = vmatpush1.msra.mxu0 0.0
    %4416 = vmatprep.subr.mxu0 0.0
    %4417 = vmatpush1.msra.mxu0 0.0
    %4418 = vmatprep.subr.mxu0 0.0
    %4419 = vmatpush1.msra.mxu0 0.0
    %4420 = vmatprep.subr.mxu0 0.0
    %4421 = vmatpush1.msra.mxu0 0.0
    %4422 = vmatprep.subr.mxu0 0.0
    %4423 = vmatpush1.msra.mxu0 0.0
    %4424 = vmatprep.subr.mxu0 0.0
    %4425 = vmatpush1.msra.mxu0 0.0
    %4426 = vmatprep.subr.mxu0 0.0
    %4427 = vmatpush1.msra.mxu0 0.0
    %4428 = vmatprep.subr.mxu0 0.0
    %4429 = vmatpush1.msra.mxu0 0.0
    %4430 = vmatprep.subr.mxu0 0.0
    %4431 = vmatpush1.msra.mxu0 0.0
    %4432 = vmatprep.subr.mxu0 0.0
    %4433 = vmatpush1.msra.mxu0 0.0
    %4434 = vmatprep.subr.mxu0 0.0
    %4435 = vmatpush1.msra.mxu0 0.0
    %4436 = vmatprep.subr.mxu0 0.0
    %4437 = vmatpush1.msra.mxu0 0.0
    %4438 = vmatprep.subr.mxu0 0.0
    %4439 = vmatpush1.msra.mxu0 0.0
    %4440 = vmatprep.subr.mxu0 0.0
    %4441 = vmatpush1.msra.mxu0 0.0
    %4442 = vmatprep.subr.mxu0 0.0
    %4443 = vmatpush1.msra.mxu0 0.0
    %4444 = vmatprep.subr.mxu0 0.0
    %4445 = vmatpush1.msra.mxu0 0.0
    %4446 = vmatprep.subr.mxu0 0.0
    %4447 = vmatpush1.msra.mxu0 0.0
    %4448 = vmatprep.subr.mxu0 0.0
    %4449 = vmatpush1.msra.mxu0 0.0
    %4450 = vmatprep.subr.mxu0 0.0
    %4451 = vmatpush1.msra.mxu0 0.0
    %4452 = vmatprep.subr.mxu0 0.0
    %4453 = vmatpush1.msra.mxu0 0.0
    %4454 = vmatprep.subr.mxu0 0.0
    %4455 = vmatpush1.msra.mxu0 0.0
    %4456 = vmatprep.subr.mxu0 0.0
    %4457 = vmatpush1.msra.mxu0 0.0
    %4458 = vmatprep.subr.mxu0 0.0
    %4459 = vmatpush1.msra.mxu0 0.0
    %4460 = vmatprep.subr.mxu0 0.0
    %4461 = vmatpush1.msra.mxu0 0.0
    %4462 = vmatprep.subr.mxu0 0.0
    %4463 = vmatpush1.msra.mxu0 0.0
    %4464 = vmatprep.subr.mxu0 0.0
    %4465 = vmatpush1.msra.mxu0 0.0
    %4466 = vmatprep.subr.mxu0 0.0
    %4467 = vmatpush1.msra.mxu0 0.0
    %4468 = vmatprep.subr.mxu0 0.0
    %4469 = vmatpush1.msra.mxu0 0.0
    %4470 = vmatprep.subr.mxu0 0.0
    %4471 = vmatpush1.msra.mxu0 0.0
    %4472 = vmatprep.subr.mxu0 0.0
    %4473 = vmatpush1.msra.mxu0 0.0
    %4474 = vmatprep.mubr.f32.mxu0 0.0
    %4475 = vmatmul.mubr.f32.gmra.mrb[0].mxu0 %v4403
    %v4476 = vpop.f32.mrb[0].mxu0
    %v4477 = vadd.f32 0.0, %v4476
    %v4478 = vpop.f32.mrb[0].mxu0
    %4479 = vmatprep.mubr.f32.mxu0 0.0
    %4480 = vmatmul.mubr.f32.gmra.mrb[0].mxu0 %v4406
    %v4481 = vpop.f32.mrb[0].mxu0
    %v4482 = vadd.f32 0.0, %v4481
    %v4483 = vpop.f32.mrb[0].mxu0
    %4484 = vdwg.mxu0
    %4485 = vrot.lane.b32.xlu0 %v3793, 32
    %v4486 = vpop.permute.xlu0 %4485
    %4487 = vrot.lane.b32.xlu0 %v3797, 32
    %v4488 = vpop.permute.xlu0 %4487
    %4489 = vrot.lane.b32.xlu0 %v3836, 32
    %v4490 = vpop.permute.xlu0 %4489
    %4491 = vrot.lane.b32.xlu0 %v3840, 32
    %v4492 = vpop.permute.xlu0 %4491
    %v4493 = vsel %vm1664, %v4486, 0
    %v4495 = vsel %vm1664, %v4488, 0
    %v4497 = vsel %vm1664, %v4490, 0
    %v4499 = vsel %vm1664, %v4492, 0
    %4501 = vmatprep.subr.mxu0 0.0
    %4502 = vmatpush1.xpose.msra.mxu0 %v4497
    %4503 = vmatprep.subr.mxu0 0.0
    %4504 = vmatpush1.xpose.msra.mxu0 %v4499
    %4505 = vmatprep.subr.mxu0 0.0
    %4506 = vmatpush1.xpose.msra.mxu0 0.0
    %4507 = vmatprep.subr.mxu0 0.0
    %4508 = vmatpush1.xpose.msra.mxu0 0.0
    %4509 = vmatprep.subr.mxu0 0.0
    %4510 = vmatpush1.xpose.msra.mxu0 0.0
    %4511 = vmatprep.subr.mxu0 0.0
    %4512 = vmatpush1.xpose.msra.mxu0 0.0
    %4513 = vmatprep.subr.mxu0 0.0
    %4514 = vmatpush1.xpose.msra.mxu0 0.0
    %4515 = vmatprep.subr.mxu0 0.0
    %4516 = vmatpush1.xpose.msra.mxu0 0.0
    %4517 = vmatprep.subr.mxu0 0.0
    %4518 = vmatpush1.xpose.msra.mxu0 0.0
    %4519 = vmatprep.subr.mxu0 0.0
    %4520 = vmatpush1.xpose.msra.mxu0 0.0
    %4521 = vmatprep.subr.mxu0 0.0
    %4522 = vmatpush1.xpose.msra.mxu0 0.0
    %4523 = vmatprep.subr.mxu0 0.0
    %4524 = vmatpush1.xpose.msra.mxu0 0.0
    %4525 = vmatprep.subr.mxu0 0.0
    %4526 = vmatpush1.xpose.msra.mxu0 0.0
    %4527 = vmatprep.subr.mxu0 0.0
    %4528 = vmatpush1.xpose.msra.mxu0 0.0
    %4529 = vmatprep.subr.mxu0 0.0
    %4530 = vmatpush1.xpose.msra.mxu0 0.0
    %4531 = vmatprep.subr.mxu0 0.0
    %4532 = vmatpush1.xpose.msra.mxu0 0.0
    %4533 = vmatprep.subr.mxu0 0.0
    %4534 = vmatpush1.xpose.msra.mxu0 0.0
    %4535 = vmatprep.subr.mxu0 0.0
    %4536 = vmatpush1.xpose.msra.mxu0 0.0
    %4537 = vmatprep.subr.mxu0 0.0
    %4538 = vmatpush1.xpose.msra.mxu0 0.0
    %4539 = vmatprep.subr.mxu0 0.0
    %4540 = vmatpush1.xpose.msra.mxu0 0.0
    %4541 = vmatprep.subr.mxu0 0.0
    %4542 = vmatpush1.xpose.msra.mxu0 0.0
    %4543 = vmatprep.subr.mxu0 0.0
    %4544 = vmatpush1.xpose.msra.mxu0 0.0
    %4545 = vmatprep.subr.mxu0 0.0
    %4546 = vmatpush1.xpose.msra.mxu0 0.0
    %4547 = vmatprep.subr.mxu0 0.0
    %4548 = vmatpush1.xpose.msra.mxu0 0.0
    %4549 = vmatprep.subr.mxu0 0.0
    %4550 = vmatpush1.xpose.msra.mxu0 0.0
    %4551 = vmatprep.subr.mxu0 0.0
    %4552 = vmatpush1.xpose.msra.mxu0 0.0
    %4553 = vmatprep.subr.mxu0 0.0
    %4554 = vmatpush1.xpose.msra.mxu0 0.0
    %4555 = vmatprep.subr.mxu0 0.0
    %4556 = vmatpush1.xpose.msra.mxu0 0.0
    %4557 = vmatprep.subr.mxu0 0.0
    %4558 = vmatpush1.xpose.msra.mxu0 0.0
    %4559 = vmatprep.subr.mxu0 0.0
    %4560 = vmatpush1.xpose.msra.mxu0 0.0
    %4561 = vmatprep.subr.mxu0 0.0
    %4562 = vmatpush1.xpose.msra.mxu0 0.0
    %4563 = vmatprep.subr.mxu0 0.0
    %4564 = vmatpush1.xpose.msra.mxu0 0.0
    %4565 = vmatprep.mubr.f32.mxu0 0.0
    %4566 = vmatmul.mubr.f32.gmra.mrb[0].mxu0 %v4493
    %v4567 = vpop.f32.mrb[0].mxu0
    %v4568 = vadd.f32 0.0, %v4567
    %v4569 = vpop.f32.mrb[0].mxu0
    %4570 = vmatprep.mubr.f32.mxu0 0.0
    %4571 = vmatmul.mubr.f32.gmra.mrb[0].mxu0 %v4495
    %v4572 = vpop.f32.mrb[0].mxu0
    %v4573 = vadd.f32 0.0, %v4572
    %v4574 = vpop.f32.mrb[0].mxu0
    %4575 = vdwg.mxu0
    %v4576 = vsel %vm3974, %v4568, -inf
    %4577 = vmax.xlane.f32.xlu0 %v4576
    %v4578 = vpop.xlane.xlu0 %4577
    %v4579 = vsel %vm3978, %v4573, -inf
    %4580 = vmax.xlane.f32.xlu0 %v4579
    %v4581 = vpop.xlane.xlu0 %4580
    %v4582 = vsub.f32 %v4568, %v4578
    %v4583 = vsub.f32 %v4573, %v4581
    %v4584 = vmul.f32 %v4582, 1.442695
    %v4585 = vpow.pop %v4584
    %v4586 = vmul.f32 %v4583, 1.442695
    %v4587 = vpow.pop %v4586
    %v4588 = vsel %vm3974, %v4585, 0.0
    %4589 = vadd.xlane.f32.xlu0 %v4588
    %v4590 = vpop.xlane.xlu0 %4589
    %v4591 = vsel %vm3978, %v4587, 0.0
    %4592 = vadd.xlane.f32.xlu0 %v4591
    %v4593 = vpop.xlane.xlu0 %4592
    %v4594 = vrcp.pop %v4590
    %v4595 = vmul.f32 %v4585, %v4594
    %v4596 = vrcp.pop %v4593
    %v4597 = vmul.f32 %v4587, %v4596
    %4598 = vrot.lane.b32.xlu0 %v3879, 32
    %v4599 = vpop.permute.xlu0 %4598
    %4600 = vrot.lane.b32.xlu0 %v3883, 32
    %v4601 = vpop.permute.xlu0 %4600
    %v4604 = vsel %vm3974, %v4595, 0
    %v4607 = vsel %vm3974, %v4597, 0
    %v4609 = vsel %vm3679, %v4601, 0
    %4611 = vmatprep.subr.mxu0 0.0
    %4612 = vmatpush1.msra.mxu0 %v4599
    %4613 = vmatprep.subr.mxu0 0.0
    %4614 = vmatpush1.msra.mxu0 %v4609
    %4615 = vmatprep.subr.mxu0 0.0
    %4616 = vmatpush1.msra.mxu0 0.0
    %4617 = vmatprep.subr.mxu0 0.0
    %4618 = vmatpush1.msra.mxu0 0.0
    %4619 = vmatprep.subr.mxu0 0.0
    %4620 = vmatpush1.msra.mxu0 0.0
    %4621 = vmatprep.subr.mxu0 0.0
    %4622 = vmatpush1.msra.mxu0 0.0
    %4623 = vmatprep.subr.mxu0 0.0
    %4624 = vmatpush1.msra.mxu0 0.0
    %4625 = vmatprep.subr.mxu0 0.0
    %4626 = vmatpush1.msra.mxu0 0.0
    %4627 = vmatprep.subr.mxu0 0.0
    %4628 = vmatpush1.msra.mxu0 0.0
    %4629 = vmatprep.subr.mxu0 0.0
    %4630 = vmatpush1.msra.mxu0 0.0
    %4631 = vmatprep.subr.mxu0 0.0
    %4632 = vmatpush1.msra.mxu0 0.0
    %4633 = vmatprep.subr.mxu0 0.0
    %4634 = vmatpush1.msra.mxu0 0.0
    %4635 = vmatprep.subr.mxu0 0.0
    %4636 = vmatpush1.msra.mxu0 0.0
    %4637 = vmatprep.subr.mxu0 0.0
    %4638 = vmatpush1.msra.mxu0 0.0
    %4639 = vmatprep.subr.mxu0 0.0
    %4640 = vmatpush1.msra.mxu0 0.0
    %4641 = vmatprep.subr.mxu0 0.0
    %4642 = vmatpush1.msra.mxu0 0.0
    %4643 = vmatprep.subr.mxu0 0.0
    %4644 = vmatpush1.msra.mxu0 0.0
    %4645 = vmatprep.subr.mxu0 0.0
    %4646 = vmatpush1.msra.mxu0 0.0
    %4647 = vmatprep.subr.mxu0 0.0
    %4648 = vmatpush1.msra.mxu0 0.0
    %4649 = vmatprep.subr.mxu0 0.0
    %4650 = vmatpush1.msra.mxu0 0.0
    %4651 = vmatprep.subr.mxu0 0.0
    %4652 = vmatpush1.msra.mxu0 0.0
    %4653 = vmatprep.subr.mxu0 0.0
    %4654 = vmatpush1.msra.mxu0 0.0
    %4655 = vmatprep.subr.mxu0 0.0
    %4656 = vmatpush1.msra.mxu0 0.0
    %4657 = vmatprep.subr.mxu0 0.0
    %4658 = vmatpush1.msra.mxu0 0.0
    %4659 = vmatprep.subr.mxu0 0.0
    %4660 = vmatpush1.msra.mxu0 0.0
    %4661 = vmatprep.subr.mxu0 0.0
    %4662 = vmatpush1.msra.mxu0 0.0
    %4663 = vmatprep.subr.mxu0 0.0
    %4664 = vmatpush1.msra.mxu0 0.0
    %4665 = vmatprep.subr.mxu0 0.0
    %4666 = vmatpush1.msra.mxu0 0.0
    %4667 = vmatprep.subr.mxu0 0.0
    %4668 = vmatpush1.msra.mxu0 0.0
    %4669 = vmatprep.subr.mxu0 0.0
    %4670 = vmatpush1.msra.mxu0 0.0
    %4671 = vmatprep.subr.mxu0 0.0
    %4672 = vmatpush1.msra.mxu0 0.0
    %4673 = vmatprep.subr.mxu0 0.0
    %4674 = vmatpush1.msra.mxu0 0.0
    %4675 = vmatprep.mubr.f32.mxu0 0.0
    %4676 = vmatmul.mubr.f32.gmra.mrb[0].mxu0 %v4604
    %v4677 = vpop.f32.mrb[0].mxu0
    %v4678 = vadd.f32 0.0, %v4677
    %v4679 = vpop.f32.mrb[0].mxu0
    %4680 = vmatprep.mubr.f32.mxu0 0.0
    %4681 = vmatmul.mubr.f32.gmra.mrb[0].mxu0 %v4607
    %v4682 = vpop.f32.mrb[0].mxu0
    %v4683 = vadd.f32 0.0, %v4682
    %v4684 = vpop.f32.mrb[0].mxu0
    %4685 = vdwg.mxu0
    %v4687 = vsel %vm1664, %v3795, 0
    %v4690 = vsel %vm1664, %v3799, 0
    %v4693 = vsel %vm1664, %v3838, 0
    %v4696 = vsel %vm1664, %v3842, 0
    %4698 = vmatprep.subr.mxu0 0.0
    %4699 = vmatpush1.xpose.msra.mxu0 %v4693
    %4700 = vmatprep.subr.mxu0 0.0
    %4701 = vmatpush1.xpose.msra.mxu0 %v4696
    %4702 = vmatprep.subr.mxu0 0.0
    %4703 = vmatpush1.xpose.msra.mxu0 0.0
    %4704 = vmatprep.subr.mxu0 0.0
    %4705 = vmatpush1.xpose.msra.mxu0 0.0
    %4706 = vmatprep.subr.mxu0 0.0
    %4707 = vmatpush1.xpose.msra.mxu0 0.0
    %4708 = vmatprep.subr.mxu0 0.0
    %4709 = vmatpush1.xpose.msra.mxu0 0.0
    %4710 = vmatprep.subr.mxu0 0.0
    %4711 = vmatpush1.xpose.msra.mxu0 0.0
    %4712 = vmatprep.subr.mxu0 0.0
    %4713 = vmatpush1.xpose.msra.mxu0 0.0
    %4714 = vmatprep.subr.mxu0 0.0
    %4715 = vmatpush1.xpose.msra.mxu0 0.0
    %4716 = vmatprep.subr.mxu0 0.0
    %4717 = vmatpush1.xpose.msra.mxu0 0.0
    %4718 = vmatprep.subr.mxu0 0.0
    %4719 = vmatpush1.xpose.msra.mxu0 0.0
    %4720 = vmatprep.subr.mxu0 0.0
    %4721 = vmatpush1.xpose.msra.mxu0 0.0
    %4722 = vmatprep.subr.mxu0 0.0
    %4723 = vmatpush1.xpose.msra.mxu0 0.0
    %4724 = vmatprep.subr.mxu0 0.0
    %4725 = vmatpush1.xpose.msra.mxu0 0.0
    %4726 = vmatprep.subr.mxu0 0.0
    %4727 = vmatpush1.xpose.msra.mxu0 0.0
    %4728 = vmatprep.subr.mxu0 0.0
    %4729 = vmatpush1.xpose.msra.mxu0 0.0
    %4730 = vmatprep.subr.mxu0 0.0
    %4731 = vmatpush1.xpose.msra.mxu0 0.0
    %4732 = vmatprep.subr.mxu0 0.0
    %4733 = vmatpush1.xpose.msra.mxu0 0.0
    %4734 = vmatprep.subr.mxu0 0.0
    %4735 = vmatpush1.xpose.msra.mxu0 0.0
    %4736 = vmatprep.subr.mxu0 0.0
    %4737 = vmatpush1.xpose.msra.mxu0 0.0
    %4738 = vmatprep.subr.mxu0 0.0
    %4739 = vmatpush1.xpose.msra.mxu0 0.0
    %4740 = vmatprep.subr.mxu0 0.0
    %4741 = vmatpush1.xpose.msra.mxu0 0.0
    %4742 = vmatprep.subr.mxu0 0.0
    %4743 = vmatpush1.xpose.msra.mxu0 0.0
    %4744 = vmatprep.subr.mxu0 0.0
    %4745 = vmatpush1.xpose.msra.mxu0 0.0
    %4746 = vmatprep.subr.mxu0 0.0
    %4747 = vmatpush1.xpose.msra.mxu0 0.0
    %4748 = vmatprep.subr.mxu0 0.0
    %4749 = vmatpush1.xpose.msra.mxu0 0.0
    %4750 = vmatprep.subr.mxu0 0.0
    %4751 = vmatpush1.xpose.msra.mxu0 0.0
    %4752 = vmatprep.subr.mxu0 0.0
    %4753 = vmatpush1.xpose.msra.mxu0 0.0
    %4754 = vmatprep.subr.mxu0 0.0
    %4755 = vmatpush1.xpose.msra.mxu0 0.0
    %4756 = vmatprep.subr.mxu0 0.0
    %4757 = vmatpush1.xpose.msra.mxu0 0.0
    %4758 = vmatprep.subr.mxu0 0.0
    %4759 = vmatpush1.xpose.msra.mxu0 0.0
    %4760 = vmatprep.subr.mxu0 0.0
    %4761 = vmatpush1.xpose.msra.mxu0 0.0
    %4762 = vmatprep.mubr.f32.mxu0 0.0
    %4763 = vmatmul.mubr.f32.gmra.mrb[0].mxu0 %v4687
    %v4764 = vpop.f32.mrb[0].mxu0
    %v4765 = vadd.f32 0.0, %v4764
    %v4766 = vpop.f32.mrb[0].mxu0
    %4767 = vmatprep.mubr.f32.mxu0 0.0
    %4768 = vmatmul.mubr.f32.gmra.mrb[0].mxu0 %v4690
    %v4769 = vpop.f32.mrb[0].mxu0
    %v4770 = vadd.f32 0.0, %v4769
    %v4771 = vpop.f32.mrb[0].mxu0
    %4772 = vdwg.mxu0
    %v4773 = vsel %vm3974, %v4765, -inf
    %4774 = vmax.xlane.f32.xlu0 %v4773
    %v4775 = vpop.xlane.xlu0 %4774
    %v4776 = vsel %vm3978, %v4770, -inf
    %4777 = vmax.xlane.f32.xlu0 %v4776
    %v4778 = vpop.xlane.xlu0 %4777
    %v4779 = vsub.f32 %v4765, %v4775
    %v4780 = vsub.f32 %v4770, %v4778
    %v4781 = vmul.f32 %v4779, 1.442695
    %v4782 = vpow.pop %v4781
    %v4783 = vmul.f32 %v4780, 1.442695
    %v4784 = vpow.pop %v4783
    %v4785 = vsel %vm3974, %v4782, 0.0
    %4786 = vadd.xlane.f32.xlu0 %v4785
    %v4787 = vpop.xlane.xlu0 %4786
    %v4788 = vsel %vm3978, %v4784, 0.0
    %4789 = vadd.xlane.f32.xlu0 %v4788
    %v4790 = vpop.xlane.xlu0 %4789
    %v4791 = vrcp.pop %v4787
    %v4792 = vmul.f32 %v4782, %v4791
    %v4793 = vrcp.pop %v4790
    %v4794 = vmul.f32 %v4784, %v4793
    %v4796 = vsel %vm3974, %v4792, 0
    %v4799 = vsel %vm3974, %v4794, 0
    %v4802 = vsel %vm3679, %v3885, 0
    %4804 = vmatprep.subr.mxu0 0.0
    %4805 = vmatpush1.msra.mxu0 %v3881
    %4806 = vmatprep.subr.mxu0 0.0
    %4807 = vmatpush1.msra.mxu0 %v4802
    %4808 = vmatprep.subr.mxu0 0.0
    %4809 = vmatpush1.msra.mxu0 0.0
    %4810 = vmatprep.subr.mxu0 0.0
    %4811 = vmatpush1.msra.mxu0 0.0
    %4812 = vmatprep.subr.mxu0 0.0
    %4813 = vmatpush1.msra.mxu0 0.0
    %4814 = vmatprep.subr.mxu0 0.0
    %4815 = vmatpush1.msra.mxu0 0.0
    %4816 = vmatprep.subr.mxu0 0.0
    %4817 = vmatpush1.msra.mxu0 0.0
    %4818 = vmatprep.subr.mxu0 0.0
    %4819 = vmatpush1.msra.mxu0 0.0
    %4820 = vmatprep.subr.mxu0 0.0
    %4821 = vmatpush1.msra.mxu0 0.0
    %4822 = vmatprep.subr.mxu0 0.0
    %4823 = vmatpush1.msra.mxu0 0.0
    %4824 = vmatprep.subr.mxu0 0.0
    %4825 = vmatpush1.msra.mxu0 0.0
    %4826 = vmatprep.subr.mxu0 0.0
    %4827 = vmatpush1.msra.mxu0 0.0
    %4828 = vmatprep.subr.mxu0 0.0
    %4829 = vmatpush1.msra.mxu0 0.0
    %4830 = vmatprep.subr.mxu0 0.0
    %4831 = vmatpush1.msra.mxu0 0.0
    %4832 = vmatprep.subr.mxu0 0.0
    %4833 = vmatpush1.msra.mxu0 0.0
    %4834 = vmatprep.subr.mxu0 0.0
    %4835 = vmatpush1.msra.mxu0 0.0
    %4836 = vmatprep.subr.mxu0 0.0
    %4837 = vmatpush1.msra.mxu0 0.0
    %4838 = vmatprep.subr.mxu0 0.0
    %4839 = vmatpush1.msra.mxu0 0.0
    %4840 = vmatprep.subr.mxu0 0.0
    %4841 = vmatpush1.msra.mxu0 0.0
    %4842 = vmatprep.subr.mxu0 0.0
    %4843 = vmatpush1.msra.mxu0 0.0
    %4844 = vmatprep.subr.mxu0 0.0
    %4845 = vmatpush1.msra.mxu0 0.0
    %4846 = vmatprep.subr.mxu0 0.0
    %4847 = vmatpush1.msra.mxu0 0.0
    %4848 = vmatprep.subr.mxu0 0.0
    %4849 = vmatpush1.msra.mxu0 0.0
    %4850 = vmatprep.subr.mxu0 0.0
    %4851 = vmatpush1.msra.mxu0 0.0
    %4852 = vmatprep.subr.mxu0 0.0
    %4853 = vmatpush1.msra.mxu0 0.0
    %4854 = vmatprep.subr.mxu0 0.0
    %4855 = vmatpush1.msra.mxu0 0.0
    %4856 = vmatprep.subr.mxu0 0.0
    %4857 = vmatpush1.msra.mxu0 0.0
    %4858 = vmatprep.subr.mxu0 0.0
    %4859 = vmatpush1.msra.mxu0 0.0
    %4860 = vmatprep.subr.mxu0 0.0
    %4861 = vmatpush1.msra.mxu0 0.0
    %4862 = vmatprep.subr.mxu0 0.0
    %4863 = vmatpush1.msra.mxu0 0.0
    %4864 = vmatprep.subr.mxu0 0.0
    %4865 = vmatpush1.msra.mxu0 0.0
    %4866 = vmatprep.subr.mxu0 0.0
    %4867 = vmatpush1.msra.mxu0 0.0
    %4868 = vmatprep.mubr.f32.mxu0 0.0
    %4869 = vmatmul.mubr.f32.gmra.mrb[0].mxu0 %v4796
    %v4870 = vpop.f32.mrb[0].mxu0
    %v4871 = vadd.f32 0.0, %v4870
    %v4872 = vpop.f32.mrb[0].mxu0
    %4873 = vmatprep.mubr.f32.mxu0 0.0
    %4874 = vmatmul.mubr.f32.gmra.mrb[0].mxu0 %v4799
    %v4875 = vpop.f32.mrb[0].mxu0
    %v4876 = vadd.f32 0.0, %v4875
    %v4877 = vpop.f32.mrb[0].mxu0
    %4878 = vdwg.mxu0
    %4879 = vrot.lane.b32.xlu0 %v3795, 96
    %v4880 = vpop.permute.xlu0 %4879
    %4881 = vrot.lane.b32.xlu0 %v3799, 96
    %v4882 = vpop.permute.xlu0 %4881
    %4883 = vrot.lane.b32.xlu0 %v3838, 96
    %v4884 = vpop.permute.xlu0 %4883
    %4885 = vrot.lane.b32.xlu0 %v3842, 96
    %v4886 = vpop.permute.xlu0 %4885
    %v4887 = vsel %vm1664, %v4880, 0
    %v4889 = vsel %vm1664, %v4882, 0
    %v4891 = vsel %vm1664, %v4884, 0
    %v4893 = vsel %vm1664, %v4886, 0
    %4895 = vmatprep.subr.mxu0 0.0
    %4896 = vmatpush1.xpose.msra.mxu0 %v4891
    %4897 = vmatprep.subr.mxu0 0.0
    %4898 = vmatpush1.xpose.msra.mxu0 %v4893
    %4899 = vmatprep.subr.mxu0 0.0
    %4900 = vmatpush1.xpose.msra.mxu0 0.0
    %4901 = vmatprep.subr.mxu0 0.0
    %4902 = vmatpush1.xpose.msra.mxu0 0.0
    %4903 = vmatprep.subr.mxu0 0.0
    %4904 = vmatpush1.xpose.msra.mxu0 0.0
    %4905 = vmatprep.subr.mxu0 0.0
    %4906 = vmatpush1.xpose.msra.mxu0 0.0
    %4907 = vmatprep.subr.mxu0 0.0
    %4908 = vmatpush1.xpose.msra.mxu0 0.0
    %4909 = vmatprep.subr.mxu0 0.0
    %4910 = vmatpush1.xpose.msra.mxu0 0.0
    %4911 = vmatprep.subr.mxu0 0.0
    %4912 = vmatpush1.xpose.msra.mxu0 0.0
    %4913 = vmatprep.subr.mxu0 0.0
    %4914 = vmatpush1.xpose.msra.mxu0 0.0
    %4915 = vmatprep.subr.mxu0 0.0
    %4916 = vmatpush1.xpose.msra.mxu0 0.0
    %4917 = vmatprep.subr.mxu0 0.0
    %4918 = vmatpush1.xpose.msra.mxu0 0.0
    %4919 = vmatprep.subr.mxu0 0.0
    %4920 = vmatpush1.xpose.msra.mxu0 0.0
    %4921 = vmatprep.subr.mxu0 0.0
    %4922 = vmatpush1.xpose.msra.mxu0 0.0
    %4923 = vmatprep.subr.mxu0 0.0
    %4924 = vmatpush1.xpose.msra.mxu0 0.0
    %4925 = vmatprep.subr.mxu0 0.0
    %4926 = vmatpush1.xpose.msra.mxu0 0.0
    %4927 = vmatprep.subr.mxu0 0.0
    %4928 = vmatpush1.xpose.msra.mxu0 0.0
    %4929 = vmatprep.subr.mxu0 0.0
    %4930 = vmatpush1.xpose.msra.mxu0 0.0
    %4931 = vmatprep.subr.mxu0 0.0
    %4932 = vmatpush1.xpose.msra.mxu0 0.0
    %4933 = vmatprep.subr.mxu0 0.0
    %4934 = vmatpush1.xpose.msra.mxu0 0.0
    %4935 = vmatprep.subr.mxu0 0.0
    %4936 = vmatpush1.xpose.msra.mxu0 0.0
    %4937 = vmatprep.subr.mxu0 0.0
    %4938 = vmatpush1.xpose.msra.mxu0 0.0
    %4939 = vmatprep.subr.mxu0 0.0
    %4940 = vmatpush1.xpose.msra.mxu0 0.0
    %4941 = vmatprep.subr.mxu0 0.0
    %4942 = vmatpush1.xpose.msra.mxu0 0.0
    %4943 = vmatprep.subr.mxu0 0.0
    %4944 = vmatpush1.xpose.msra.mxu0 0.0
    %4945 = vmatprep.subr.mxu0 0.0
    %4946 = vmatpush1.xpose.msra.mxu0 0.0
    %4947 = vmatprep.subr.mxu0 0.0
    %4948 = vmatpush1.xpose.msra.mxu0 0.0
    %4949 = vmatprep.subr.mxu0 0.0
    %4950 = vmatpush1.xpose.msra.mxu0 0.0
    %4951 = vmatprep.subr.mxu0 0.0
    %4952 = vmatpush1.xpose.msra.mxu0 0.0
    %4953 = vmatprep.subr.mxu0 0.0
    %4954 = vmatpush1.xpose.msra.mxu0 0.0
    %4955 = vmatprep.subr.mxu0 0.0
    %4956 = vmatpush1.xpose.msra.mxu0 0.0
    %4957 = vmatprep.subr.mxu0 0.0
    %4958 = vmatpush1.xpose.msra.mxu0 0.0
    %4959 = vmatprep.mubr.f32.mxu0 0.0
    %4960 = vmatmul.mubr.f32.gmra.mrb[0].mxu0 %v4887
    %v4961 = vpop.f32.mrb[0].mxu0
    %v4962 = vadd.f32 0.0, %v4961
    %v4963 = vpop.f32.mrb[0].mxu0
    %4964 = vmatprep.mubr.f32.mxu0 0.0
    %4965 = vmatmul.mubr.f32.gmra.mrb[0].mxu0 %v4889
    %v4966 = vpop.f32.mrb[0].mxu0
    %v4967 = vadd.f32 0.0, %v4966
    %v4968 = vpop.f32.mrb[0].mxu0
    %4969 = vdwg.mxu0
    %v4970 = vsel %vm3974, %v4962, -inf
    %4971 = vmax.xlane.f32.xlu0 %v4970
    %v4972 = vpop.xlane.xlu0 %4971
    %v4973 = vsel %vm3978, %v4967, -inf
    %4974 = vmax.xlane.f32.xlu0 %v4973
    %v4975 = vpop.xlane.xlu0 %4974
    %v4976 = vsub.f32 %v4962, %v4972
    %v4977 = vsub.f32 %v4967, %v4975
    %v4978 = vmul.f32 %v4976, 1.442695
    %v4979 = vpow.pop %v4978
    %v4980 = vmul.f32 %v4977, 1.442695
    %v4981 = vpow.pop %v4980
    %v4982 = vsel %vm3974, %v4979, 0.0
    %4983 = vadd.xlane.f32.xlu0 %v4982
    %v4984 = vpop.xlane.xlu0 %4983
    %v4985 = vsel %vm3978, %v4981, 0.0
    %4986 = vadd.xlane.f32.xlu0 %v4985
    %v4987 = vpop.xlane.xlu0 %4986
    %v4988 = vrcp.pop %v4984
    %v4989 = vmul.f32 %v4979, %v4988
    %v4990 = vrcp.pop %v4987
    %v4991 = vmul.f32 %v4981, %v4990
    %4993 = vrot.lane.b32.xlu0 %v3881, 96
    %v4994 = vpop.permute.xlu0 %4993
    %4995 = vrot.lane.b32.xlu0 %v3885, 96
    %v4996 = vpop.permute.xlu0 %4995
    %v4999 = vsel %vm3974, %v4989, 0
    %v5002 = vsel %vm3974, %v4991, 0
    %v5004 = vsel %vm3679, %v4996, 0
    %5006 = vmatprep.subr.mxu0 0.0
    %5007 = vmatpush1.msra.mxu0 %v4994
    %5008 = vmatprep.subr.mxu0 0.0
    %5009 = vmatpush1.msra.mxu0 %v5004
    %5010 = vmatprep.subr.mxu0 0.0
    %5011 = vmatpush1.msra.mxu0 0.0
    %5012 = vmatprep.subr.mxu0 0.0
    %5013 = vmatpush1.msra.mxu0 0.0
    %5014 = vmatprep.subr.mxu0 0.0
    %5015 = vmatpush1.msra.mxu0 0.0
    %5016 = vmatprep.subr.mxu0 0.0
    %5017 = vmatpush1.msra.mxu0 0.0
    %5018 = vmatprep.subr.mxu0 0.0
    %5019 = vmatpush1.msra.mxu0 0.0
    %5020 = vmatprep.subr.mxu0 0.0
    %5021 = vmatpush1.msra.mxu0 0.0
    %5022 = vmatprep.subr.mxu0 0.0
    %5023 = vmatpush1.msra.mxu0 0.0
    %5024 = vmatprep.subr.mxu0 0.0
    %5025 = vmatpush1.msra.mxu0 0.0
    %5026 = vmatprep.subr.mxu0 0.0
    %5027 = vmatpush1.msra.mxu0 0.0
    %5028 = vmatprep.subr.mxu0 0.0
    %5029 = vmatpush1.msra.mxu0 0.0
    %5030 = vmatprep.subr.mxu0 0.0
    %5031 = vmatpush1.msra.mxu0 0.0
    %5032 = vmatprep.subr.mxu0 0.0
    %5033 = vmatpush1.msra.mxu0 0.0
    %5034 = vmatprep.subr.mxu0 0.0
    %5035 = vmatpush1.msra.mxu0 0.0
    %5036 = vmatprep.subr.mxu0 0.0
    %5037 = vmatpush1.msra.mxu0 0.0
    %5038 = vmatprep.subr.mxu0 0.0
    %5039 = vmatpush1.msra.mxu0 0.0
    %5040 = vmatprep.subr.mxu0 0.0
    %5041 = vmatpush1.msra.mxu0 0.0
    %5042 = vmatprep.subr.mxu0 0.0
    %5043 = vmatpush1.msra.mxu0 0.0
    %5044 = vmatprep.subr.mxu0 0.0
    %5045 = vmatpush1.msra.mxu0 0.0
    %5046 = vmatprep.subr.mxu0 0.0
    %5047 = vmatpush1.msra.mxu0 0.0
    %5048 = vmatprep.subr.mxu0 0.0
    %5049 = vmatpush1.msra.mxu0 0.0
    %5050 = vmatprep.subr.mxu0 0.0
    %5051 = vmatpush1.msra.mxu0 0.0
    %5052 = vmatprep.subr.mxu0 0.0
    %5053 = vmatpush1.msra.mxu0 0.0
    %5054 = vmatprep.subr.mxu0 0.0
    %5055 = vmatpush1.msra.mxu0 0.0
    %5056 = vmatprep.subr.mxu0 0.0
    %5057 = vmatpush1.msra.mxu0 0.0
    %5058 = vmatprep.subr.mxu0 0.0
    %5059 = vmatpush1.msra.mxu0 0.0
    %5060 = vmatprep.subr.mxu0 0.0
    %5061 = vmatpush1.msra.mxu0 0.0
    %5062 = vmatprep.subr.mxu0 0.0
    %5063 = vmatpush1.msra.mxu0 0.0
    %5064 = vmatprep.subr.mxu0 0.0
    %5065 = vmatpush1.msra.mxu0 0.0
    %5066 = vmatprep.subr.mxu0 0.0
    %5067 = vmatpush1.msra.mxu0 0.0
    %5068 = vmatprep.subr.mxu0 0.0
    %5069 = vmatpush1.msra.mxu0 0.0
    %5070 = vmatprep.mubr.f32.mxu0 0.0
    %5071 = vmatmul.mubr.f32.gmra.mrb[0].mxu0 %v4999
    %v5072 = vpop.f32.mrb[0].mxu0
    %v5073 = vadd.f32 0.0, %v5072
    %v5074 = vpop.f32.mrb[0].mxu0
    %5075 = vmatprep.mubr.f32.mxu0 0.0
    %5076 = vmatmul.mubr.f32.gmra.mrb[0].mxu0 %v5002
    %v5077 = vpop.f32.mrb[0].mxu0
    %v5078 = vadd.f32 0.0, %v5077
    %v5079 = vpop.f32.mrb[0].mxu0
    %5080 = vdwg.mxu0
    %5081 = vrot.lane.b32.xlu0 %v3795, 64
    %v5082 = vpop.permute.xlu0 %5081
    %5083 = vrot.lane.b32.xlu0 %v3799, 64
    %v5084 = vpop.permute.xlu0 %5083
    %5085 = vrot.lane.b32.xlu0 %v3838, 64
    %v5086 = vpop.permute.xlu0 %5085
    %5087 = vrot.lane.b32.xlu0 %v3842, 64
    %v5088 = vpop.permute.xlu0 %5087
    %v5089 = vsel %vm1664, %v5082, 0
    %v5091 = vsel %vm1664, %v5084, 0
    %v5093 = vsel %vm1664, %v5086, 0
    %v5095 = vsel %vm1664, %v5088, 0
    %5097 = vmatprep.subr.mxu0 0.0
    %5098 = vmatpush1.xpose.msra.mxu0 %v5093
    %5099 = vmatprep.subr.mxu0 0.0
    %5100 = vmatpush1.xpose.msra.mxu0 %v5095
    %5101 = vmatprep.subr.mxu0 0.0
    %5102 = vmatpush1.xpose.msra.mxu0 0.0
    %5103 = vmatprep.subr.mxu0 0.0
    %5104 = vmatpush1.xpose.msra.mxu0 0.0
    %5105 = vmatprep.subr.mxu0 0.0
    %5106 = vmatpush1.xpose.msra.mxu0 0.0
    %5107 = vmatprep.subr.mxu0 0.0
    %5108 = vmatpush1.xpose.msra.mxu0 0.0
    %5109 = vmatprep.subr.mxu0 0.0
    %5110 = vmatpush1.xpose.msra.mxu0 0.0
    %5111 = vmatprep.subr.mxu0 0.0
    %5112 = vmatpush1.xpose.msra.mxu0 0.0
    %5113 = vmatprep.subr.mxu0 0.0
    %5114 = vmatpush1.xpose.msra.mxu0 0.0
    %5115 = vmatprep.subr.mxu0 0.0
    %5116 = vmatpush1.xpose.msra.mxu0 0.0
    %5117 = vmatprep.subr.mxu0 0.0
    %5118 = vmatpush1.xpose.msra.mxu0 0.0
    %5119 = vmatprep.subr.mxu0 0.0
    %5120 = vmatpush1.xpose.msra.mxu0 0.0
    %5121 = vmatprep.subr.mxu0 0.0
    %5122 = vmatpush1.xpose.msra.mxu0 0.0
    %5123 = vmatprep.subr.mxu0 0.0
    %5124 = vmatpush1.xpose.msra.mxu0 0.0
    %5125 = vmatprep.subr.mxu0 0.0
    %5126 = vmatpush1.xpose.msra.mxu0 0.0
    %5127 = vmatprep.subr.mxu0 0.0
    %5128 = vmatpush1.xpose.msra.mxu0 0.0
    %5129 = vmatprep.subr.mxu0 0.0
    %5130 = vmatpush1.xpose.msra.mxu0 0.0
    %5131 = vmatprep.subr.mxu0 0.0
    %5132 = vmatpush1.xpose.msra.mxu0 0.0
    %5133 = vmatprep.subr.mxu0 0.0
    %5134 = vmatpush1.xpose.msra.mxu0 0.0
    %5135 = vmatprep.subr.mxu0 0.0
    %5136 = vmatpush1.xpose.msra.mxu0 0.0
    %5137 = vmatprep.subr.mxu0 0.0
    %5138 = vmatpush1.xpose.msra.mxu0 0.0
    %5139 = vmatprep.subr.mxu0 0.0
    %5140 = vmatpush1.xpose.msra.mxu0 0.0
    %5141 = vmatprep.subr.mxu0 0.0
    %5142 = vmatpush1.xpose.msra.mxu0 0.0
    %5143 = vmatprep.subr.mxu0 0.0
    %5144 = vmatpush1.xpose.msra.mxu0 0.0
    %5145 = vmatprep.subr.mxu0 0.0
    %5146 = vmatpush1.xpose.msra.mxu0 0.0
    %5147 = vmatprep.subr.mxu0 0.0
    %5148 = vmatpush1.xpose.msra.mxu0 0.0
    %5149 = vmatprep.subr.mxu0 0.0
    %5150 = vmatpush1.xpose.msra.mxu0 0.0
    %5151 = vmatprep.subr.mxu0 0.0
    %5152 = vmatpush1.xpose.msra.mxu0 0.0
    %5153 = vmatprep.subr.mxu0 0.0
    %5154 = vmatpush1.xpose.msra.mxu0 0.0
    %5155 = vmatprep.subr.mxu0 0.0
    %5156 = vmatpush1.xpose.msra.mxu0 0.0
    %5157 = vmatprep.subr.mxu0 0.0
    %5158 = vmatpush1.xpose.msra.mxu0 0.0
    %5159 = vmatprep.subr.mxu0 0.0
    %5160 = vmatpush1.xpose.msra.mxu0 0.0
    %5161 = vmatprep.mubr.f32.mxu0 0.0
    %5162 = vmatmul.mubr.f32.gmra.mrb[0].mxu0 %v5089
    %v5163 = vpop.f32.mrb[0].mxu0
    %v5164 = vadd.f32 0.0, %v5163
    %v5165 = vpop.f32.mrb[0].mxu0
    %5166 = vmatprep.mubr.f32.mxu0 0.0
    %5167 = vmatmul.mubr.f32.gmra.mrb[0].mxu0 %v5091
    %v5168 = vpop.f32.mrb[0].mxu0
    %v5169 = vadd.f32 0.0, %v5168
    %v5170 = vpop.f32.mrb[0].mxu0
    %5171 = vdwg.mxu0
    %v5172 = vsel %vm3974, %v5164, -inf
    %5173 = vmax.xlane.f32.xlu0 %v5172
    %v5174 = vpop.xlane.xlu0 %5173
    %v5175 = vsel %vm3978, %v5169, -inf
    %5176 = vmax.xlane.f32.xlu0 %v5175
    %v5177 = vpop.xlane.xlu0 %5176
    %v5178 = vsub.f32 %v5164, %v5174
    %v5179 = vsub.f32 %v5169, %v5177
    %v5180 = vmul.f32 %v5178, 1.442695
    %v5181 = vpow.pop %v5180
    %v5182 = vmul.f32 %v5179, 1.442695
    %v5183 = vpow.pop %v5182
    %v5184 = vsel %vm3974, %v5181, 0.0
    %5185 = vadd.xlane.f32.xlu0 %v5184
    %v5186 = vpop.xlane.xlu0 %5185
    %v5187 = vsel %vm3978, %v5183, 0.0
    %5188 = vadd.xlane.f32.xlu0 %v5187
    %v5189 = vpop.xlane.xlu0 %5188
    %v5190 = vrcp.pop %v5186
    %v5191 = vmul.f32 %v5181, %v5190
    %v5192 = vrcp.pop %v5189
    %v5193 = vmul.f32 %v5183, %v5192
    %5194 = vrot.lane.b32.xlu0 %v3881, 64
    %v5195 = vpop.permute.xlu0 %5194
    %5196 = vrot.lane.b32.xlu0 %v3885, 64
    %v5197 = vpop.permute.xlu0 %5196
    %v5200 = vsel %vm3974, %v5191, 0
    %v5203 = vsel %vm3974, %v5193, 0
    %v5205 = vsel %vm3679, %v5197, 0
    %5207 = vmatprep.subr.mxu0 0.0
    %5208 = vmatpush1.msra.mxu0 %v5195
    %5209 = vmatprep.subr.mxu0 0.0
    %5210 = vmatpush1.msra.mxu0 %v5205
    %5211 = vmatprep.subr.mxu0 0.0
    %5212 = vmatpush1.msra.mxu0 0.0
    %5213 = vmatprep.subr.mxu0 0.0
    %5214 = vmatpush1.msra.mxu0 0.0
    %5215 = vmatprep.subr.mxu0 0.0
    %5216 = vmatpush1.msra.mxu0 0.0
    %5217 = vmatprep.subr.mxu0 0.0
    %5218 = vmatpush1.msra.mxu0 0.0
    %5219 = vmatprep.subr.mxu0 0.0
    %5220 = vmatpush1.msra.mxu0 0.0
    %5221 = vmatprep.subr.mxu0 0.0
    %5222 = vmatpush1.msra.mxu0 0.0
    %5223 = vmatprep.subr.mxu0 0.0
    %5224 = vmatpush1.msra.mxu0 0.0
    %5225 = vmatprep.subr.mxu0 0.0
    %5226 = vmatpush1.msra.mxu0 0.0
    %5227 = vmatprep.subr.mxu0 0.0
    %5228 = vmatpush1.msra.mxu0 0.0
    %5229 = vmatprep.subr.mxu0 0.0
    %5230 = vmatpush1.msra.mxu0 0.0
    %5231 = vmatprep.subr.mxu0 0.0
    %5232 = vmatpush1.msra.mxu0 0.0
    %5233 = vmatprep.subr.mxu0 0.0
    %5234 = vmatpush1.msra.mxu0 0.0
    %5235 = vmatprep.subr.mxu0 0.0
    %5236 = vmatpush1.msra.mxu0 0.0
    %5237 = vmatprep.subr.mxu0 0.0
    %5238 = vmatpush1.msra.mxu0 0.0
    %5239 = vmatprep.subr.mxu0 0.0
    %5240 = vmatpush1.msra.mxu0 0.0
    %5241 = vmatprep.subr.mxu0 0.0
    %5242 = vmatpush1.msra.mxu0 0.0
    %5243 = vmatprep.subr.mxu0 0.0
    %5244 = vmatpush1.msra.mxu0 0.0
    %5245 = vmatprep.subr.mxu0 0.0
    %5246 = vmatpush1.msra.mxu0 0.0
    %5247 = vmatprep.subr.mxu0 0.0
    %5248 = vmatpush1.msra.mxu0 0.0
    %5249 = vmatprep.subr.mxu0 0.0
    %5250 = vmatpush1.msra.mxu0 0.0
    %5251 = vmatprep.subr.mxu0 0.0
    %5252 = vmatpush1.msra.mxu0 0.0
    %5253 = vmatprep.subr.mxu0 0.0
    %5254 = vmatpush1.msra.mxu0 0.0
    %5255 = vmatprep.subr.mxu0 0.0
    %5256 = vmatpush1.msra.mxu0 0.0
    %5257 = vmatprep.subr.mxu0 0.0
    %5258 = vmatpush1.msra.mxu0 0.0
    %5259 = vmatprep.subr.mxu0 0.0
    %5260 = vmatpush1.msra.mxu0 0.0
    %5261 = vmatprep.subr.mxu0 0.0
    %5262 = vmatpush1.msra.mxu0 0.0
    %5263 = vmatprep.subr.mxu0 0.0
    %5264 = vmatpush1.msra.mxu0 0.0
    %5265 = vmatprep.subr.mxu0 0.0
    %5266 = vmatpush1.msra.mxu0 0.0
    %5267 = vmatprep.subr.mxu0 0.0
    %5268 = vmatpush1.msra.mxu0 0.0
    %5269 = vmatprep.subr.mxu0 0.0
    %5270 = vmatpush1.msra.mxu0 0.0
    %5271 = vmatprep.mubr.f32.mxu0 0.0
    %5272 = vmatmul.mubr.f32.gmra.mrb[0].mxu0 %v5200
    %v5273 = vpop.f32.mrb[0].mxu0
    %v5274 = vadd.f32 0.0, %v5273
    %v5275 = vpop.f32.mrb[0].mxu0
    %5276 = vmatprep.mubr.f32.mxu0 0.0
    %5277 = vmatmul.mubr.f32.gmra.mrb[0].mxu0 %v5203
    %v5278 = vpop.f32.mrb[0].mxu0
    %v5279 = vadd.f32 0.0, %v5278
    %v5280 = vpop.f32.mrb[0].mxu0
    %5281 = vdwg.mxu0
    %5282 = vrot.lane.b32.xlu0 %v3795, 32
    %v5283 = vpop.permute.xlu0 %5282
    %5284 = vrot.lane.b32.xlu0 %v3799, 32
    %v5285 = vpop.permute.xlu0 %5284
    %5286 = vrot.lane.b32.xlu0 %v3838, 32
    %v5287 = vpop.permute.xlu0 %5286
    %5288 = vrot.lane.b32.xlu0 %v3842, 32
    %v5289 = vpop.permute.xlu0 %5288
    %v5290 = vsel %vm1664, %v5283, 0
    %v5292 = vsel %vm1664, %v5285, 0
    %v5294 = vsel %vm1664, %v5287, 0
    %v5296 = vsel %vm1664, %v5289, 0
    %5298 = vmatprep.subr.mxu0 0.0
    %5299 = vmatpush1.xpose.msra.mxu0 %v5294
    %5300 = vmatprep.subr.mxu0 0.0
    %5301 = vmatpush1.xpose.msra.mxu0 %v5296
    %5302 = vmatprep.subr.mxu0 0.0
    %5303 = vmatpush1.xpose.msra.mxu0 0.0
    %5304 = vmatprep.subr.mxu0 0.0
    %5305 = vmatpush1.xpose.msra.mxu0 0.0
    %5306 = vmatprep.subr.mxu0 0.0
    %5307 = vmatpush1.xpose.msra.mxu0 0.0
    %5308 = vmatprep.subr.mxu0 0.0
    %5309 = vmatpush1.xpose.msra.mxu0 0.0
    %5310 = vmatprep.subr.mxu0 0.0
    %5311 = vmatpush1.xpose.msra.mxu0 0.0
    %5312 = vmatprep.subr.mxu0 0.0
    %5313 = vmatpush1.xpose.msra.mxu0 0.0
    %5314 = vmatprep.subr.mxu0 0.0
    %5315 = vmatpush1.xpose.msra.mxu0 0.0
    %5316 = vmatprep.subr.mxu0 0.0
    %5317 = vmatpush1.xpose.msra.mxu0 0.0
    %5318 = vmatprep.subr.mxu0 0.0
    %5319 = vmatpush1.xpose.msra.mxu0 0.0
    %5320 = vmatprep.subr.mxu0 0.0
    %5321 = vmatpush1.xpose.msra.mxu0 0.0
    %5322 = vmatprep.subr.mxu0 0.0
    %5323 = vmatpush1.xpose.msra.mxu0 0.0
    %5324 = vmatprep.subr.mxu0 0.0
    %5325 = vmatpush1.xpose.msra.mxu0 0.0
    %5326 = vmatprep.subr.mxu0 0.0
    %5327 = vmatpush1.xpose.msra.mxu0 0.0
    %5328 = vmatprep.subr.mxu0 0.0
    %5329 = vmatpush1.xpose.msra.mxu0 0.0
    %5330 = vmatprep.subr.mxu0 0.0
    %5331 = vmatpush1.xpose.msra.mxu0 0.0
    %5332 = vmatprep.subr.mxu0 0.0
    %5333 = vmatpush1.xpose.msra.mxu0 0.0
    %5334 = vmatprep.subr.mxu0 0.0
    %5335 = vmatpush1.xpose.msra.mxu0 0.0
    %5336 = vmatprep.subr.mxu0 0.0
    %5337 = vmatpush1.xpose.msra.mxu0 0.0
    %5338 = vmatprep.subr.mxu0 0.0
    %5339 = vmatpush1.xpose.msra.mxu0 0.0
    %5340 = vmatprep.subr.mxu0 0.0
    %5341 = vmatpush1.xpose.msra.mxu0 0.0
    %5342 = vmatprep.subr.mxu0 0.0
    %5343 = vmatpush1.xpose.msra.mxu0 0.0
    %5344 = vmatprep.subr.mxu0 0.0
    %5345 = vmatpush1.xpose.msra.mxu0 0.0
    %5346 = vmatprep.subr.mxu0 0.0
    %5347 = vmatpush1.xpose.msra.mxu0 0.0
    %5348 = vmatprep.subr.mxu0 0.0
    %5349 = vmatpush1.xpose.msra.mxu0 0.0
    %5350 = vmatprep.subr.mxu0 0.0
    %5351 = vmatpush1.xpose.msra.mxu0 0.0
    %5352 = vmatprep.subr.mxu0 0.0
    %5353 = vmatpush1.xpose.msra.mxu0 0.0
    %5354 = vmatprep.subr.mxu0 0.0
    %5355 = vmatpush1.xpose.msra.mxu0 0.0
    %5356 = vmatprep.subr.mxu0 0.0
    %5357 = vmatpush1.xpose.msra.mxu0 0.0
    %5358 = vmatprep.subr.mxu0 0.0
    %5359 = vmatpush1.xpose.msra.mxu0 0.0
    %5360 = vmatprep.subr.mxu0 0.0
    %5361 = vmatpush1.xpose.msra.mxu0 0.0
    %5362 = vmatprep.mubr.f32.mxu0 0.0
    %5363 = vmatmul.mubr.f32.gmra.mrb[0].mxu0 %v5290
    %v5364 = vpop.f32.mrb[0].mxu0
    %v5365 = vadd.f32 0.0, %v5364
    %v5366 = vpop.f32.mrb[0].mxu0
    %5367 = vmatprep.mubr.f32.mxu0 0.0
    %5368 = vmatmul.mubr.f32.gmra.mrb[0].mxu0 %v5292
    %v5369 = vpop.f32.mrb[0].mxu0
    %v5370 = vadd.f32 0.0, %v5369
    %v5371 = vpop.f32.mrb[0].mxu0
    %5372 = vdwg.mxu0
    %v5373 = vsel %vm3974, %v5365, -inf
    %5374 = vmax.xlane.f32.xlu0 %v5373
    %v5375 = vpop.xlane.xlu0 %5374
    %v5376 = vsel %vm3978, %v5370, -inf
    %5377 = vmax.xlane.f32.xlu0 %v5376
    %v5378 = vpop.xlane.xlu0 %5377
    %v5379 = vsub.f32 %v5365, %v5375
    %v5380 = vsub.f32 %v5370, %v5378
    %v5381 = vmul.f32 %v5379, 1.442695
    %v5382 = vpow.pop %v5381
    %v5383 = vmul.f32 %v5380, 1.442695
    %v5384 = vpow.pop %v5383
    %v5385 = vsel %vm3974, %v5382, 0.0
    %5386 = vadd.xlane.f32.xlu0 %v5385
    %v5387 = vpop.xlane.xlu0 %5386
    %v5388 = vsel %vm3978, %v5384, 0.0
    %5389 = vadd.xlane.f32.xlu0 %v5388
    %v5390 = vpop.xlane.xlu0 %5389
    %v5391 = vrcp.pop %v5387
    %v5392 = vmul.f32 %v5382, %v5391
    %v5393 = vrcp.pop %v5390
    %v5394 = vmul.f32 %v5384, %v5393
    %5395 = vrot.lane.b32.xlu0 %v3881, 32
    %v5396 = vpop.permute.xlu0 %5395
    %5397 = vrot.lane.b32.xlu0 %v3885, 32
    %v5398 = vpop.permute.xlu0 %5397
    %v5401 = vsel %vm3974, %v5392, 0
    %v5404 = vsel %vm3974, %v5394, 0
    %v5406 = vsel %vm3679, %v5398, 0
    %5408 = vmatprep.subr.mxu0 0.0
    %5409 = vmatpush1.msra.mxu0 %v5396
    %5410 = vmatprep.subr.mxu0 0.0
    %5411 = vmatpush1.msra.mxu0 %v5406
    %5412 = vmatprep.subr.mxu0 0.0
    %5413 = vmatpush1.msra.mxu0 0.0
    %5414 = vmatprep.subr.mxu0 0.0
    %5415 = vmatpush1.msra.mxu0 0.0
    %5416 = vmatprep.subr.mxu0 0.0
    %5417 = vmatpush1.msra.mxu0 0.0
    %5418 = vmatprep.subr.mxu0 0.0
    %5419 = vmatpush1.msra.mxu0 0.0
    %5420 = vmatprep.subr.mxu0 0.0
    %5421 = vmatpush1.msra.mxu0 0.0
    %5422 = vmatprep.subr.mxu0 0.0
    %5423 = vmatpush1.msra.mxu0 0.0
    %5424 = vmatprep.subr.mxu0 0.0
    %5425 = vmatpush1.msra.mxu0 0.0
    %5426 = vmatprep.subr.mxu0 0.0
    %5427 = vmatpush1.msra.mxu0 0.0
    %5428 = vmatprep.subr.mxu0 0.0
    %5429 = vmatpush1.msra.mxu0 0.0
    %5430 = vmatprep.subr.mxu0 0.0
    %5431 = vmatpush1.msra.mxu0 0.0
    %5432 = vmatprep.subr.mxu0 0.0
    %5433 = vmatpush1.msra.mxu0 0.0
    %5434 = vmatprep.subr.mxu0 0.0
    %5435 = vmatpush1.msra.mxu0 0.0
    %5436 = vmatprep.subr.mxu0 0.0
    %5437 = vmatpush1.msra.mxu0 0.0
    %5438 = vmatprep.subr.mxu0 0.0
    %5439 = vmatpush1.msra.mxu0 0.0
    %5440 = vmatprep.subr.mxu0 0.0
    %5441 = vmatpush1.msra.mxu0 0.0
    %5442 = vmatprep.subr.mxu0 0.0
    %5443 = vmatpush1.msra.mxu0 0.0
    %5444 = vmatprep.subr.mxu0 0.0
    %5445 = vmatpush1.msra.mxu0 0.0
    %5446 = vmatprep.subr.mxu0 0.0
    %5447 = vmatpush1.msra.mxu0 0.0
    %5448 = vmatprep.subr.mxu0 0.0
    %5449 = vmatpush1.msra.mxu0 0.0
    %5450 = vmatprep.subr.mxu0 0.0
    %5451 = vmatpush1.msra.mxu0 0.0
    %5452 = vmatprep.subr.mxu0 0.0
    %5453 = vmatpush1.msra.mxu0 0.0
    %5454 = vmatprep.subr.mxu0 0.0
    %5455 = vmatpush1.msra.mxu0 0.0
    %5456 = vmatprep.subr.mxu0 0.0
    %5457 = vmatpush1.msra.mxu0 0.0
    %5458 = vmatprep.subr.mxu0 0.0
    %5459 = vmatpush1.msra.mxu0 0.0
    %5460 = vmatprep.subr.mxu0 0.0
    %5461 = vmatpush1.msra.mxu0 0.0
    %5462 = vmatprep.subr.mxu0 0.0
    %5463 = vmatpush1.msra.mxu0 0.0
    %5464 = vmatprep.subr.mxu0 0.0
    %5465 = vmatpush1.msra.mxu0 0.0
    %5466 = vmatprep.subr.mxu0 0.0
    %5467 = vmatpush1.msra.mxu0 0.0
    %5468 = vmatprep.subr.mxu0 0.0
    %5469 = vmatpush1.msra.mxu0 0.0
    %5470 = vmatprep.subr.mxu0 0.0
    %5471 = vmatpush1.msra.mxu0 0.0
    %5472 = vmatprep.mubr.f32.mxu0 0.0
    %5473 = vmatmul.mubr.f32.gmra.mrb[0].mxu0 %v5401
    %v5474 = vpop.f32.mrb[0].mxu0
    %v5475 = vadd.f32 0.0, %v5474
    %v5476 = vpop.f32.mrb[0].mxu0
    %5477 = vmatprep.mubr.f32.mxu0 0.0
    %5478 = vmatmul.mubr.f32.gmra.mrb[0].mxu0 %v5404
    %v5479 = vpop.f32.mrb[0].mxu0
    %v5480 = vadd.f32 0.0, %v5479
    %v5481 = vpop.f32.mrb[0].mxu0
    %5482 = vdwg.mxu0
    %5485 = vrot.lane.b32.xlu0 %v4276, 32
    %v5486 = vpop.permute.xlu0 %5485
    %5487 = vrot.lane.b32.xlu0 %v4281, 32
    %v5488 = vpop.permute.xlu0 %5487
    %5493 = vrot.lane.b32.xlu0 %v4477, 64
    %v5494 = vpop.permute.xlu0 %5493
    %5495 = vrot.lane.b32.xlu0 %v4482, 64
    %v5496 = vpop.permute.xlu0 %5495
    %5501 = vrot.lane.b32.xlu0 %v4678, 96
    %v5502 = vpop.permute.xlu0 %5501
    %5503 = vrot.lane.b32.xlu0 %v4683, 96
    %v5504 = vpop.permute.xlu0 %5503
    %5509 = vrot.lane.b32.xlu0 %v5073, 32
    %v5510 = vpop.permute.xlu0 %5509
    %5511 = vrot.lane.b32.xlu0 %v5078, 32
    %v5512 = vpop.permute.xlu0 %5511
    %5517 = vrot.lane.b32.xlu0 %v5274, 64
    %v5518 = vpop.permute.xlu0 %5517
    %5519 = vrot.lane.b32.xlu0 %v5279, 64
    %v5520 = vpop.permute.xlu0 %5519
    %5525 = vrot.lane.b32.xlu0 %v5475, 96
    %v5526 = vpop.permute.xlu0 %5525
    %5527 = vrot.lane.b32.xlu0 %v5480, 96
    %v5528 = vpop.permute.xlu0 %5527
    %v5531 = vsel %vm1664, %v4074, %v5486
    %v5532 = vsel %vm1664, %v4079, %v5488
    %v5533 = vsel %vm3300, %v5531, %v5494
    %v5534 = vsel %vm3300, %v5532, %v5496
    %v5535 = vsel %vm3303, %v5533, %v5502
    %v5536 = vsel %vm3303, %v5534, %v5504
    %v5537 = vsel %vm1664, %v4871, %v5510
    %v5538 = vsel %vm1664, %v4876, %v5512
    %v5539 = vsel %vm3300, %v5537, %v5518
    %v5540 = vsel %vm3300, %v5538, %v5520
    %v5541 = vsel %vm3303, %v5539, %v5526
    %v5542 = vsel %vm3303, %v5540, %v5528
    %v5543 = vpack.c.bf16 %v5536, %v5535
    %v5544 = vpack.c.bf16 %v5542, %v5541
    %v5546 = vlaneseq
    %v5547 = vshrl.u32 %v5546, 7
    %v5548 = vsub.s32 0, %v5547
    %v5549 = vrot.slane %v3673, %v5548
    %v5550 = vlaneseq
    %v5551 = vshrl.u32 %v5550, 7
    %v5552 = vsub.s32 1, %v5551
    %v5553 = vrot.slane %v3673, %v5552
    %5556 = vmatprep.subr.bf16.mxu0 %v3641
    %5557 = vmatpush1.bf16.msra.mxu0 %v3640
    %5558 = vmatprep.subr.bf16.mxu0 %v3643
    %5559 = vmatpush1.bf16.msra.mxu0 %v3642
    %5560 = vmatprep.subr.bf16.mxu0 %v3645
    %5561 = vmatpush1.bf16.msra.mxu0 %v3644
    %5562 = vmatprep.subr.bf16.mxu0 %v3647
    %5563 = vmatpush1.bf16.msra.mxu0 %v3646
    %5564 = vmatprep.subr.bf16.mxu0 %v3649
    %5565 = vmatpush1.bf16.msra.mxu0 %v3648
    %5566 = vmatprep.subr.bf16.mxu0 %v3651
    %5567 = vmatpush1.bf16.msra.mxu0 %v3650
    %5568 = vmatprep.subr.bf16.mxu0 %v3653
    %5569 = vmatpush1.bf16.msra.mxu0 %v3652
    %5570 = vmatprep.subr.bf16.mxu0 %v3655
    %5571 = vmatpush1.bf16.msra.mxu0 %v3654
    %5572 = vmatprep.subr.bf16.mxu0 %v3657
    %5573 = vmatpush1.bf16.msra.mxu0 %v3656
    %5574 = vmatprep.subr.bf16.mxu0 %v3659
    %5575 = vmatpush1.bf16.msra.mxu0 %v3658
    %5576 = vmatprep.subr.bf16.mxu0 %v3661
    %5577 = vmatpush1.bf16.msra.mxu0 %v3660
    %5578 = vmatprep.subr.bf16.mxu0 %v3663
    %5579 = vmatpush1.bf16.msra.mxu0 %v3662
    %5580 = vmatprep.subr.bf16.mxu0 %v3665
    %5581 = vmatpush1.bf16.msra.mxu0 %v3664
    %5582 = vmatprep.subr.bf16.mxu0 %v3667
    %5583 = vmatpush1.bf16.msra.mxu0 %v3666
    %5584 = vmatprep.subr.bf16.mxu0 %v3669
    %5585 = vmatpush1.bf16.msra.mxu0 %v3668
    %5586 = vmatprep.subr.bf16.mxu0 %v3671
    %5587 = vmatpush1.bf16.msra.mxu0 %v3670
    %5588 = vmatprep.mubr.bf16.mxu0 %v5544
    %5589 = vmatmul.mubr.bf16.gmra.mrb[0].mxu0 %v5543
    %v5590 = vpop.f32.mrb[0].mxu0
    %v5591 = vpop.f32.mrb[0].mxu0
    %v5592 = vpop.f32.mrb[0].mxu0
    %v5593 = vadd.f32 %v5549, %v5592
    %v5594 = vpop.f32.mrb[0].mxu0
    %v5595 = vadd.f32 %v5553, %v5594
    %5596 = vdwg.mxu0
    %v5597 = vadd.f32 %v3754, %v5593
    %v5598 = vadd.f32 %v3755, %v5595
    %s5599 = scalar_lea.vmem [#allocation4], 5
    %v5600 = vld [vmem:[%s5599] ss:$8 sm:$0x3]
    %s5601 = scalar_lea.vmem [#allocation4], 6
    %v5602 = vld [vmem:[%s5601] ss:$8 sm:$0x3]
    %v5603 = vld [vmem:[#allocation2 + $0x40] sm:$0xff]
    %v5604 = vld [vmem:[#allocation2 + $0x48] sm:$0xff]
    %v5605 = vld [vmem:[#allocation2 + $0x50] sm:$0xff]
    %v5606 = vld [vmem:[#allocation2 + $0x58] sm:$0xff]
    %v5607 = vld [vmem:[#allocation2 + $0x60] sm:$0xff]
    %v5608 = vld [vmem:[#allocation2 + $0x68] sm:$0xff]
    %v5609 = vld [vmem:[#allocation2 + $0xe0] sm:$0xff]
    %v5610 = vld [vmem:[#allocation2 + $0xe8] sm:$0xff]
    %v5611 = vld [vmem:[#allocation2 + $0xf0] sm:$0xff]
    %v5612 = vld [vmem:[#allocation2 + $0xf8] sm:$0xff]
    %v5613 = vld [vmem:[#allocation2 + $0x100] sm:$0xff]
    %v5614 = vld [vmem:[#allocation2 + $0x108] sm:$0xff]
    %v5615 = vld [vmem:[#allocation2 + $0x180] sm:$0xff]
    %v5616 = vld [vmem:[#allocation2 + $0x188] sm:$0xff]
    %v5617 = vld [vmem:[#allocation2 + $0x190] sm:$0xff]
    %v5618 = vld [vmem:[#allocation2 + $0x198] sm:$0xff]
    %v5619 = vld [vmem:[#allocation2 + $0x1a0] sm:$0xff]
    %v5620 = vld [vmem:[#allocation2 + $0x1a8] sm:$0xff]
    %v5621 = vld [vmem:[#allocation2 + $0x220] sm:$0xff]
    %v5622 = vld [vmem:[#allocation2 + $0x228] sm:$0xff]
    %v5623 = vld [vmem:[#allocation2 + $0x230] sm:$0xff]
    %v5624 = vld [vmem:[#allocation2 + $0x238] sm:$0xff]
    %v5625 = vld [vmem:[#allocation2 + $0x240] sm:$0xff]
    %v5626 = vld [vmem:[#allocation2 + $0x248] sm:$0xff]
    %v5627 = vld [vmem:[#allocation2 + $0x2c0] sm:$0xff]
    %v5628 = vld [vmem:[#allocation2 + $0x2c8] sm:$0xff]
    %v5629 = vld [vmem:[#allocation2 + $0x2d0] sm:$0xff]
    %v5630 = vld [vmem:[#allocation2 + $0x2d8] sm:$0xff]
    %v5631 = vld [vmem:[#allocation2 + $0x2e0] sm:$0xff]
    %v5632 = vld [vmem:[#allocation2 + $0x2e8] sm:$0xff]
    %v5633 = vld [vmem:[#allocation2 + $0x360] sm:$0xff]
    %v5634 = vld [vmem:[#allocation2 + $0x368] sm:$0xff]
    %v5635 = vld [vmem:[#allocation2 + $0x370] sm:$0xff]
    %v5636 = vld [vmem:[#allocation2 + $0x378] sm:$0xff]
    %v5637 = vld [vmem:[#allocation2 + $0x380] sm:$0xff]
    %v5638 = vld [vmem:[#allocation2 + $0x388] sm:$0xff]
    %v5639 = vld [vmem:[#allocation2 + $0x400] sm:$0xff]
    %v5640 = vld [vmem:[#allocation2 + $0x408] sm:$0xff]
    %v5641 = vld [vmem:[#allocation2 + $0x410] sm:$0xff]
    %v5642 = vld [vmem:[#allocation2 + $0x418] sm:$0xff]
    %v5643 = vld [vmem:[#allocation2 + $0x420] sm:$0xff]
    %v5644 = vld [vmem:[#allocation2 + $0x428] sm:$0xff]
    %v5645 = vld [vmem:[#allocation2 + $0x4a0] sm:$0xff]
    %v5646 = vld [vmem:[#allocation2 + $0x4a8] sm:$0xff]
    %v5647 = vld [vmem:[#allocation2 + $0x4b0] sm:$0xff]
    %v5648 = vld [vmem:[#allocation2 + $0x4b8] sm:$0xff]
    %v5649 = vld [vmem:[#allocation2 + $0x4c0] sm:$0xff]
    %v5650 = vld [vmem:[#allocation2 + $0x4c8] sm:$0xff]
    %v5651 = vld [vmem:[#allocation2 + $0x540] sm:$0xff]
    %v5652 = vld [vmem:[#allocation2 + $0x548] sm:$0xff]
    %v5653 = vld [vmem:[#allocation2 + $0x550] sm:$0xff]
    %v5654 = vld [vmem:[#allocation2 + $0x558] sm:$0xff]
    %v5655 = vld [vmem:[#allocation2 + $0x560] sm:$0xff]
    %v5656 = vld [vmem:[#allocation2 + $0x568] sm:$0xff]
    %v5657 = vld [vmem:[#allocation2 + $0x5e0] sm:$0xff]
    %v5658 = vld [vmem:[#allocation2 + $0x5e8] sm:$0xff]
    %v5659 = vld [vmem:[#allocation2 + $0x5f0] sm:$0xff]
    %v5660 = vld [vmem:[#allocation2 + $0x5f8] sm:$0xff]
    %v5661 = vld [vmem:[#allocation2 + $0x600] sm:$0xff]
    %v5662 = vld [vmem:[#allocation2 + $0x608] sm:$0xff]
    %v5663 = vld [vmem:[#allocation2 + $0x680] sm:$0xff]
    %v5664 = vld [vmem:[#allocation2 + $0x688] sm:$0xff]
    %v5665 = vld [vmem:[#allocation2 + $0x690] sm:$0xff]
    %v5666 = vld [vmem:[#allocation2 + $0x698] sm:$0xff]
    %v5667 = vld [vmem:[#allocation2 + $0x6a0] sm:$0xff]
    %v5668 = vld [vmem:[#allocation2 + $0x6a8] sm:$0xff]
    %v5669 = vld [vmem:[#allocation2 + $0x720] sm:$0xff]
    %v5670 = vld [vmem:[#allocation2 + $0x728] sm:$0xff]
    %v5671 = vld [vmem:[#allocation2 + $0x730] sm:$0xff]
    %v5672 = vld [vmem:[#allocation2 + $0x738] sm:$0xff]
    %v5673 = vld [vmem:[#allocation2 + $0x740] sm:$0xff]
    %v5674 = vld [vmem:[#allocation2 + $0x748] sm:$0xff]
    %v5675 = vld [vmem:[#allocation2 + $0x7c0] sm:$0xff]
    %v5676 = vld [vmem:[#allocation2 + $0x7c8] sm:$0xff]
    %v5677 = vld [vmem:[#allocation2 + $0x7d0] sm:$0xff]
    %v5678 = vld [vmem:[#allocation2 + $0x7d8] sm:$0xff]
    %v5679 = vld [vmem:[#allocation2 + $0x7e0] sm:$0xff]
    %v5680 = vld [vmem:[#allocation2 + $0x7e8] sm:$0xff]
    %v5681 = vld [vmem:[#allocation2 + $0x860] sm:$0xff]
    %v5682 = vld [vmem:[#allocation2 + $0x868] sm:$0xff]
    %v5683 = vld [vmem:[#allocation2 + $0x870] sm:$0xff]
    %v5684 = vld [vmem:[#allocation2 + $0x878] sm:$0xff]
    %v5685 = vld [vmem:[#allocation2 + $0x880] sm:$0xff]
    %v5686 = vld [vmem:[#allocation2 + $0x888] sm:$0xff]
    %v5687 = vld [vmem:[#allocation2 + $0x900] sm:$0xff]
    %v5688 = vld [vmem:[#allocation2 + $0x908] sm:$0xff]
    %v5689 = vld [vmem:[#allocation2 + $0x910] sm:$0xff]
    %v5690 = vld [vmem:[#allocation2 + $0x918] sm:$0xff]
    %v5691 = vld [vmem:[#allocation2 + $0x920] sm:$0xff]
    %v5692 = vld [vmem:[#allocation2 + $0x928] sm:$0xff]
    %v5693 = vld [vmem:[#allocation2 + $0x9a0] sm:$0xff]
    %v5694 = vld [vmem:[#allocation2 + $0x9a8] sm:$0xff]
    %v5695 = vld [vmem:[#allocation2 + $0x9b0] sm:$0xff]
    %v5696 = vld [vmem:[#allocation2 + $0x9b8] sm:$0xff]
    %v5697 = vld [vmem:[#allocation2 + $0x9c0] sm:$0xff]
    %v5698 = vld [vmem:[#allocation2 + $0x9c8] sm:$0xff]
    %v5699 = vld [vmem:[#allocation2 + $0x70] sm:$0xff]
    %v5700 = vld [vmem:[#allocation2 + $0x78] sm:$0xff]
    %v5701 = vld [vmem:[#allocation2 + $0x110] sm:$0xff]
    %v5702 = vld [vmem:[#allocation2 + $0x118] sm:$0xff]
    %v5703 = vld [vmem:[#allocation2 + $0x1b0] sm:$0xff]
    %v5704 = vld [vmem:[#allocation2 + $0x1b8] sm:$0xff]
    %v5705 = vld [vmem:[#allocation2 + $0x250] sm:$0xff]
    %v5706 = vld [vmem:[#allocation2 + $0x258] sm:$0xff]
    %v5707 = vld [vmem:[#allocation2 + $0x2f0] sm:$0xff]
    %v5708 = vld [vmem:[#allocation2 + $0x2f8] sm:$0xff]
    %v5709 = vld [vmem:[#allocation2 + $0x390] sm:$0xff]
    %v5710 = vld [vmem:[#allocation2 + $0x398] sm:$0xff]
    %v5711 = vld [vmem:[#allocation2 + $0x430] sm:$0xff]
    %v5712 = vld [vmem:[#allocation2 + $0x438] sm:$0xff]
    %v5713 = vld [vmem:[#allocation2 + $0x4d0] sm:$0xff]
    %v5714 = vld [vmem:[#allocation2 + $0x4d8] sm:$0xff]
    %v5715 = vld [vmem:[#allocation2 + $0x570] sm:$0xff]
    %v5716 = vld [vmem:[#allocation2 + $0x578] sm:$0xff]
    %v5717 = vld [vmem:[#allocation2 + $0x610] sm:$0xff]
    %v5718 = vld [vmem:[#allocation2 + $0x618] sm:$0xff]
    %v5719 = vld [vmem:[#allocation2 + $0x6b0] sm:$0xff]
    %v5720 = vld [vmem:[#allocation2 + $0x6b8] sm:$0xff]
    %v5721 = vld [vmem:[#allocation2 + $0x750] sm:$0xff]
    %v5722 = vld [vmem:[#allocation2 + $0x758] sm:$0xff]
    %v5723 = vld [vmem:[#allocation2 + $0x7f0] sm:$0xff]
    %v5724 = vld [vmem:[#allocation2 + $0x7f8] sm:$0xff]
    %v5725 = vld [vmem:[#allocation2 + $0x890] sm:$0xff]
    %v5726 = vld [vmem:[#allocation2 + $0x898] sm:$0xff]
    %v5727 = vld [vmem:[#allocation2 + $0x930] sm:$0xff]
    %v5728 = vld [vmem:[#allocation2 + $0x938] sm:$0xff]
    %v5729 = vld [vmem:[#allocation2 + $0x9d0] sm:$0xff]
    %v5730 = vld [vmem:[#allocation2 + $0x9d8] sm:$0xff]
    %s5731 = scalar_lea.vmem [#allocation4], 7
    %v5732 = vld [vmem:[%s5731] ss:$8 sm:$0x3]
    %s5733 = scalar_lea.vmem [#allocation4], 37
    %v5734 = vld [vmem:[%s5733] ss:$8 sm:$0x3]
    %v5735 = vadd.f32 %v82, %v83
    %5736 = vadd.xlane.f32.xlu0 %v5735
    %v5737 = vpop.xlane.xlu0 %5736
    %v5738 = vsel %vm3679, %v5597, 0.0
    %v5739 = vsel %vm3679, %v5598, 0.0
    %v5740 = vadd.f32 %v5738, %v5739
    %5741 = vadd.xlane.f32.xlu0 %v5740
    %v5742 = vpop.xlane.xlu0 %5741
    %v5743 = vmul.f32 %v5737, %v341
    %v5744 = vmul.f32 %v5742, %v341
    %v5745 = vsub.f32 %v82, %v5743
    %v5746 = vsub.f32 %v83, %v5743
    %v5747 = vsub.f32 %v5597, %v5744
    %v5748 = vsub.f32 %v5598, %v5744
    %v5749 = vmul.f32 %v5745, %v5745
    %v5750 = vmul.f32 %v5746, %v5746
    %v5751 = vmul.f32 %v5747, %v5747
    %v5752 = vmul.f32 %v5748, %v5748
    %v5753 = vadd.f32 %v5749, %v5750
    %5754 = vadd.xlane.f32.xlu0 %v5753
    %v5755 = vpop.xlane.xlu0 %5754
    %v5756 = vsel %vm3679, %v5751, 0.0
    %v5757 = vsel %vm3679, %v5752, 0.0
    %v5758 = vadd.f32 %v5756, %v5757
    %5759 = vadd.xlane.f32.xlu0 %v5758
    %v5760 = vpop.xlane.xlu0 %5759
    %v5761 = vmul.f32 %v5755, %v341
    %v5762 = vmul.f32 %v5760, %v341
    %v5763 = vadd.f32 %v5761, 1e-05
    %v5764 = vadd.f32 %v5762, 1e-05
    %v5765 = vrsqrt.pop %v5763
    %v5766 = vrsqrt.pop %v5764
    %v5767 = vmul.f32 %v5745, %v5765
    %v5768 = vmul.f32 %v5746, %v5765
    %v5769 = vmul.f32 %v5747, %v5766
    %v5770 = vmul.f32 %v5748, %v5766
    %v5772 = vlaneseq
    %v5773 = vshrl.u32 %v5772, 7
    %v5774 = vsub.s32 0, %v5773
    %v5775 = vrot.slane %v5600, %v5774
    %v5776 = vlaneseq
    %v5777 = vshrl.u32 %v5776, 7
    %v5778 = vsub.s32 1, %v5777
    %v5779 = vrot.slane %v5600, %v5778
    %v5782 = vmul.f32 %v5767, %v5775
    %v5783 = vmul.f32 %v5768, %v5779
    %v5784 = vmul.f32 %v5769, %v5775
    %v5785 = vmul.f32 %v5770, %v5779
    %v5787 = vlaneseq
    %v5788 = vshrl.u32 %v5787, 7
    %v5789 = vsub.s32 0, %v5788
    %v5790 = vrot.slane %v5602, %v5789
    %v5791 = vlaneseq
    %v5792 = vshrl.u32 %v5791, 7
    %v5793 = vsub.s32 1, %v5792
    %v5794 = vrot.slane %v5602, %v5793
    %v5797 = vadd.f32 %v5782, %v5790
    %v5798 = vadd.f32 %v5783, %v5794
    %v5799 = vadd.f32 %v5784, %v5790
    %v5800 = vadd.f32 %v5785, %v5794
    %v5802 = vlaneseq
    %v5803 = vshrl.u32 %v5802, 7
    %v5804 = vsub.s32 0, %v5803
    %v5805 = vrot.slane %v5734, %v5804
    %v5806 = vlaneseq
    %v5807 = vshrl.u32 %v5806, 7
    %v5808 = vsub.s32 1, %v5807
    %v5809 = vrot.slane %v5734, %v5808
    %v5812 = vmul.f32 %v82, %v5805
    %v5813 = vmul.f32 %v83, %v5809
    %v5814 = vpack.c.bf16 %v5799, %v5797
    %v5815 = vpack.c.bf16 %v5800, %v5798
    %5816 = vmatprep.subr.bf16.mxu0 %v5604
    %5817 = vmatpush1.bf16.msra.mxu0 %v5603
    %5818 = vmatprep.subr.bf16.mxu0 %v5610
    %5819 = vmatpush1.bf16.msra.mxu0 %v5609
    %5820 = vmatprep.subr.bf16.mxu0 %v5616
    %5821 = vmatpush1.bf16.msra.mxu0 %v5615
    %5822 = vmatprep.subr.bf16.mxu0 %v5622
    %5823 = vmatpush1.bf16.msra.mxu0 %v5621
    %5824 = vmatprep.subr.bf16.mxu0 %v5628
    %5825 = vmatpush1.bf16.msra.mxu0 %v5627
    %5826 = vmatprep.subr.bf16.mxu0 %v5634
    %5827 = vmatpush1.bf16.msra.mxu0 %v5633
    %5828 = vmatprep.subr.bf16.mxu0 %v5640
    %5829 = vmatpush1.bf16.msra.mxu0 %v5639
    %5830 = vmatprep.subr.bf16.mxu0 %v5646
    %5831 = vmatpush1.bf16.msra.mxu0 %v5645
    %5832 = vmatprep.subr.bf16.mxu0 %v5652
    %5833 = vmatpush1.bf16.msra.mxu0 %v5651
    %5834 = vmatprep.subr.bf16.mxu0 %v5658
    %5835 = vmatpush1.bf16.msra.mxu0 %v5657
    %5836 = vmatprep.subr.bf16.mxu0 %v5664
    %5837 = vmatpush1.bf16.msra.mxu0 %v5663
    %5838 = vmatprep.subr.bf16.mxu0 %v5670
    %5839 = vmatpush1.bf16.msra.mxu0 %v5669
    %5840 = vmatprep.subr.bf16.mxu0 %v5676
    %5841 = vmatpush1.bf16.msra.mxu0 %v5675
    %5842 = vmatprep.subr.bf16.mxu0 %v5682
    %5843 = vmatpush1.bf16.msra.mxu0 %v5681
    %5844 = vmatprep.subr.bf16.mxu0 %v5688
    %5845 = vmatpush1.bf16.msra.mxu0 %v5687
    %5846 = vmatprep.subr.bf16.mxu0 %v5694
    %5847 = vmatpush1.bf16.msra.mxu0 %v5693
    %5848 = vmatprep.mubr.bf16.mxu0 %v5815
    %5849 = vmatmul.mubr.bf16.gmra.mrb[0].mxu0 %v5814
    %v5850 = vpop.f32.mrb[0].mxu0
    %v5851 = vadd.f32 0.0, %v5850
    %v5852 = vpop.f32.mrb[0].mxu0
    %v5853 = vadd.f32 0.0, %v5852
    %v5854 = vpop.f32.mrb[0].mxu0
    %v5855 = vadd.f32 0.0, %v5854
    %v5856 = vpop.f32.mrb[0].mxu0
    %v5857 = vadd.f32 0.0, %v5856
    %5858 = vdwg.mxu0
    %5859 = vmatprep.subr.bf16.mxu0 %v5606
    %5860 = vmatpush1.bf16.msra.mxu0 %v5605
    %5861 = vmatprep.subr.bf16.mxu0 %v5612
    %5862 = vmatpush1.bf16.msra.mxu0 %v5611
    %5863 = vmatprep.subr.bf16.mxu0 %v5618
    %5864 = vmatpush1.bf16.msra.mxu0 %v5617
    %5865 = vmatprep.subr.bf16.mxu0 %v5624
    %5866 = vmatpush1.bf16.msra.mxu0 %v5623
    %5867 = vmatprep.subr.bf16.mxu0 %v5630
    %5868 = vmatpush1.bf16.msra.mxu0 %v5629
    %5869 = vmatprep.subr.bf16.mxu0 %v5636
    %5870 = vmatpush1.bf16.msra.mxu0 %v5635
    %5871 = vmatprep.subr.bf16.mxu0 %v5642
    %5872 = vmatpush1.bf16.msra.mxu0 %v5641
    %5873 = vmatprep.subr.bf16.mxu0 %v5648
    %5874 = vmatpush1.bf16.msra.mxu0 %v5647
    %5875 = vmatprep.subr.bf16.mxu0 %v5654
    %5876 = vmatpush1.bf16.msra.mxu0 %v5653
    %5877 = vmatprep.subr.bf16.mxu0 %v5660
    %5878 = vmatpush1.bf16.msra.mxu0 %v5659
    %5879 = vmatprep.subr.bf16.mxu0 %v5666
    %5880 = vmatpush1.bf16.msra.mxu0 %v5665
    %5881 = vmatprep.subr.bf16.mxu0 %v5672
    %5882 = vmatpush1.bf16.msra.mxu0 %v5671
    %5883 = vmatprep.subr.bf16.mxu0 %v5678
    %5884 = vmatpush1.bf16.msra.mxu0 %v5677
    %5885 = vmatprep.subr.bf16.mxu0 %v5684
    %5886 = vmatpush1.bf16.msra.mxu0 %v5683
    %5887 = vmatprep.subr.bf16.mxu0 %v5690
    %5888 = vmatpush1.bf16.msra.mxu0 %v5689
    %5889 = vmatprep.subr.bf16.mxu0 %v5696
    %5890 = vmatpush1.bf16.msra.mxu0 %v5695
    %5891 = vmatprep.mubr.bf16.mxu0 %v5815
    %5892 = vmatmul.mubr.bf16.gmra.mrb[0].mxu0 %v5814
    %v5893 = vpop.f32.mrb[0].mxu0
    %v5894 = vadd.f32 0.0, %v5893
    %v5895 = vpop.f32.mrb[0].mxu0
    %v5896 = vadd.f32 0.0, %v5895
    %v5897 = vpop.f32.mrb[0].mxu0
    %v5898 = vadd.f32 0.0, %v5897
    %v5899 = vpop.f32.mrb[0].mxu0
    %v5900 = vadd.f32 0.0, %v5899
    %5901 = vdwg.mxu0
    %5902 = vmatprep.subr.bf16.mxu0 %v5608
    %5903 = vmatpush1.bf16.msra.mxu0 %v5607
    %5904 = vmatprep.subr.bf16.mxu0 %v5614
    %5905 = vmatpush1.bf16.msra.mxu0 %v5613
    %5906 = vmatprep.subr.bf16.mxu0 %v5620
    %5907 = vmatpush1.bf16.msra.mxu0 %v5619
    %5908 = vmatprep.subr.bf16.mxu0 %v5626
    %5909 = vmatpush1.bf16.msra.mxu0 %v5625
    %5910 = vmatprep.subr.bf16.mxu0 %v5632
    %5911 = vmatpush1.bf16.msra.mxu0 %v5631
    %5912 = vmatprep.subr.bf16.mxu0 %v5638
    %5913 = vmatpush1.bf16.msra.mxu0 %v5637
    %5914 = vmatprep.subr.bf16.mxu0 %v5644
    %5915 = vmatpush1.bf16.msra.mxu0 %v5643
    %5916 = vmatprep.subr.bf16.mxu0 %v5650
    %5917 = vmatpush1.bf16.msra.mxu0 %v5649
    %5918 = vmatprep.subr.bf16.mxu0 %v5656
    %5919 = vmatpush1.bf16.msra.mxu0 %v5655
    %5920 = vmatprep.subr.bf16.mxu0 %v5662
    %5921 = vmatpush1.bf16.msra.mxu0 %v5661
    %5922 = vmatprep.subr.bf16.mxu0 %v5668
    %5923 = vmatpush1.bf16.msra.mxu0 %v5667
    %5924 = vmatprep.subr.bf16.mxu0 %v5674
    %5925 = vmatpush1.bf16.msra.mxu0 %v5673
    %5926 = vmatprep.subr.bf16.mxu0 %v5680
    %5927 = vmatpush1.bf16.msra.mxu0 %v5679
    %5928 = vmatprep.subr.bf16.mxu0 %v5686
    %5929 = vmatpush1.bf16.msra.mxu0 %v5685
    %5930 = vmatprep.subr.bf16.mxu0 %v5692
    %5931 = vmatpush1.bf16.msra.mxu0 %v5691
    %5932 = vmatprep.subr.bf16.mxu0 %v5698
    %5933 = vmatpush1.bf16.msra.mxu0 %v5697
    %5934 = vmatprep.mubr.bf16.mxu0 %v5815
    %5935 = vmatmul.mubr.bf16.gmra.mrb[0].mxu0 %v5814
    %v5936 = vpop.f32.mrb[0].mxu0
    %v5937 = vadd.f32 0.0, %v5936
    %v5938 = vpop.f32.mrb[0].mxu0
    %v5939 = vadd.f32 0.0, %v5938
    %v5940 = vpop.f32.mrb[0].mxu0
    %v5941 = vadd.f32 0.0, %v5940
    %v5942 = vpop.f32.mrb[0].mxu0
    %v5943 = vadd.f32 0.0, %v5942
    %5944 = vdwg.mxu0
    %v5946 = vsel %vm1664, %v5851, 0
    %v5949 = vsel %vm1664, %v5855, 0
    %v5952 = vsel %vm1664, %v5894, 0
    %v5955 = vsel %vm1664, %v5898, 0
    %5957 = vmatprep.subr.mxu0 0.0
    %5958 = vmatpush1.xpose.msra.mxu0 %v5952
    %5959 = vmatprep.subr.mxu0 0.0
    %5960 = vmatpush1.xpose.msra.mxu0 %v5955
    %5961 = vmatprep.subr.mxu0 0.0
    %5962 = vmatpush1.xpose.msra.mxu0 0.0
    %5963 = vmatprep.subr.mxu0 0.0
    %5964 = vmatpush1.xpose.msra.mxu0 0.0
    %5965 = vmatprep.subr.mxu0 0.0
    %5966 = vmatpush1.xpose.msra.mxu0 0.0
    %5967 = vmatprep.subr.mxu0 0.0
    %5968 = vmatpush1.xpose.msra.mxu0 0.0
    %5969 = vmatprep.subr.mxu0 0.0
    %5970 = vmatpush1.xpose.msra.mxu0 0.0
    %5971 = vmatprep.subr.mxu0 0.0
    %5972 = vmatpush1.xpose.msra.mxu0 0.0
    %5973 = vmatprep.subr.mxu0 0.0
    %5974 = vmatpush1.xpose.msra.mxu0 0.0
    %5975 = vmatprep.subr.mxu0 0.0
    %5976 = vmatpush1.xpose.msra.mxu0 0.0
    %5977 = vmatprep.subr.mxu0 0.0
    %5978 = vmatpush1.xpose.msra.mxu0 0.0
    %5979 = vmatprep.subr.mxu0 0.0
    %5980 = vmatpush1.xpose.msra.mxu0 0.0
    %5981 = vmatprep.subr.mxu0 0.0
    %5982 = vmatpush1.xpose.msra.mxu0 0.0
    %5983 = vmatprep.subr.mxu0 0.0
    %5984 = vmatpush1.xpose.msra.mxu0 0.0
    %5985 = vmatprep.subr.mxu0 0.0
    %5986 = vmatpush1.xpose.msra.mxu0 0.0
    %5987 = vmatprep.subr.mxu0 0.0
    %5988 = vmatpush1.xpose.msra.mxu0 0.0
    %5989 = vmatprep.subr.mxu0 0.0
    %5990 = vmatpush1.xpose.msra.mxu0 0.0
    %5991 = vmatprep.subr.mxu0 0.0
    %5992 = vmatpush1.xpose.msra.mxu0 0.0
    %5993 = vmatprep.subr.mxu0 0.0
    %5994 = vmatpush1.xpose.msra.mxu0 0.0
    %5995 = vmatprep.subr.mxu0 0.0
    %5996 = vmatpush1.xpose.msra.mxu0 0.0
    %5997 = vmatprep.subr.mxu0 0.0
    %5998 = vmatpush1.xpose.msra.mxu0 0.0
    %5999 = vmatprep.subr.mxu0 0.0
    %6000 = vmatpush1.xpose.msra.mxu0 0.0
    %6001 = vmatprep.subr.mxu0 0.0
    %6002 = vmatpush1.xpose.msra.mxu0 0.0
    %6003 = vmatprep.subr.mxu0 0.0
    %6004 = vmatpush1.xpose.msra.mxu0 0.0
    %6005 = vmatprep.subr.mxu0 0.0
    %6006 = vmatpush1.xpose.msra.mxu0 0.0
    %6007 = vmatprep.subr.mxu0 0.0
    %6008 = vmatpush1.xpose.msra.mxu0 0.0
    %6009 = vmatprep.subr.mxu0 0.0
    %6010 = vmatpush1.xpose.msra.mxu0 0.0
    %6011 = vmatprep.subr.mxu0 0.0
    %6012 = vmatpush1.xpose.msra.mxu0 0.0
    %6013 = vmatprep.subr.mxu0 0.0
    %6014 = vmatpush1.xpose.msra.mxu0 0.0
    %6015 = vmatprep.subr.mxu0 0.0
    %6016 = vmatpush1.xpose.msra.mxu0 0.0
    %6017 = vmatprep.subr.mxu0 0.0
    %6018 = vmatpush1.xpose.msra.mxu0 0.0
    %6019 = vmatprep.subr.mxu0 0.0
    %6020 = vmatpush1.xpose.msra.mxu0 0.0
    %6021 = vmatprep.mubr.f32.mxu0 0.0
    %6022 = vmatmul.mubr.f32.gmra.mrb[0].mxu0 %v5946
    %v6023 = vpop.f32.mrb[0].mxu0
    %v6024 = vadd.f32 0.0, %v6023
    %v6025 = vpop.f32.mrb[0].mxu0
    %6026 = vmatprep.mubr.f32.mxu0 0.0
    %6027 = vmatmul.mubr.f32.gmra.mrb[0].mxu0 %v5949
    %v6028 = vpop.f32.mrb[0].mxu0
    %v6029 = vadd.f32 0.0, %v6028
    %v6030 = vpop.f32.mrb[0].mxu0
    %6031 = vdwg.mxu0
    %v6032 = vsel %vm3974, %v6024, -inf
    %6033 = vmax.xlane.f32.xlu0 %v6032
    %v6034 = vpop.xlane.xlu0 %6033
    %v6035 = vsel %vm3978, %v6029, -inf
    %6036 = vmax.xlane.f32.xlu0 %v6035
    %v6037 = vpop.xlane.xlu0 %6036
    %v6038 = vsub.f32 %v6024, %v6034
    %v6039 = vsub.f32 %v6029, %v6037
    %v6040 = vmul.f32 %v6038, 1.442695
    %v6041 = vpow.pop %v6040
    %v6042 = vmul.f32 %v6039, 1.442695
    %v6043 = vpow.pop %v6042
    %v6044 = vsel %vm3974, %v6041, 0.0
    %6045 = vadd.xlane.f32.xlu0 %v6044
    %v6046 = vpop.xlane.xlu0 %6045
    %v6047 = vsel %vm3978, %v6043, 0.0
    %6048 = vadd.xlane.f32.xlu0 %v6047
    %v6049 = vpop.xlane.xlu0 %6048
    %v6050 = vrcp.pop %v6046
    %v6051 = vmul.f32 %v6041, %v6050
    %v6052 = vrcp.pop %v6049
    %v6053 = vmul.f32 %v6043, %v6052
    %v6055 = vsel %vm3974, %v6051, 0
    %v6058 = vsel %vm3974, %v6053, 0
    %v6061 = vsel %vm3679, %v5941, 0
    %6063 = vmatprep.subr.mxu0 0.0
    %6064 = vmatpush1.msra.mxu0 %v5937
    %6065 = vmatprep.subr.mxu0 0.0
    %6066 = vmatpush1.msra.mxu0 %v6061
    %6067 = vmatprep.subr.mxu0 0.0
    %6068 = vmatpush1.msra.mxu0 0.0
    %6069 = vmatprep.subr.mxu0 0.0
    %6070 = vmatpush1.msra.mxu0 0.0
    %6071 = vmatprep.subr.mxu0 0.0
    %6072 = vmatpush1.msra.mxu0 0.0
    %6073 = vmatprep.subr.mxu0 0.0
    %6074 = vmatpush1.msra.mxu0 0.0
    %6075 = vmatprep.subr.mxu0 0.0
    %6076 = vmatpush1.msra.mxu0 0.0
    %6077 = vmatprep.subr.mxu0 0.0
    %6078 = vmatpush1.msra.mxu0 0.0
    %6079 = vmatprep.subr.mxu0 0.0
    %6080 = vmatpush1.msra.mxu0 0.0
    %6081 = vmatprep.subr.mxu0 0.0
    %6082 = vmatpush1.msra.mxu0 0.0
    %6083 = vmatprep.subr.mxu0 0.0
    %6084 = vmatpush1.msra.mxu0 0.0
    %6085 = vmatprep.subr.mxu0 0.0
    %6086 = vmatpush1.msra.mxu0 0.0
    %6087 = vmatprep.subr.mxu0 0.0
    %6088 = vmatpush1.msra.mxu0 0.0
    %6089 = vmatprep.subr.mxu0 0.0
    %6090 = vmatpush1.msra.mxu0 0.0
    %6091 = vmatprep.subr.mxu0 0.0
    %6092 = vmatpush1.msra.mxu0 0.0
    %6093 = vmatprep.subr.mxu0 0.0
    %6094 = vmatpush1.msra.mxu0 0.0
    %6095 = vmatprep.subr.mxu0 0.0
    %6096 = vmatpush1.msra.mxu0 0.0
    %6097 = vmatprep.subr.mxu0 0.0
    %6098 = vmatpush1.msra.mxu0 0.0
    %6099 = vmatprep.subr.mxu0 0.0
    %6100 = vmatpush1.msra.mxu0 0.0
    %6101 = vmatprep.subr.mxu0 0.0
    %6102 = vmatpush1.msra.mxu0 0.0
    %6103 = vmatprep.subr.mxu0 0.0
    %6104 = vmatpush1.msra.mxu0 0.0
    %6105 = vmatprep.subr.mxu0 0.0
    %6106 = vmatpush1.msra.mxu0 0.0
    %6107 = vmatprep.subr.mxu0 0.0
    %6108 = vmatpush1.msra.mxu0 0.0
    %6109 = vmatprep.subr.mxu0 0.0
    %6110 = vmatpush1.msra.mxu0 0.0
    %6111 = vmatprep.subr.mxu0 0.0
    %6112 = vmatpush1.msra.mxu0 0.0
    %6113 = vmatprep.subr.mxu0 0.0
    %6114 = vmatpush1.msra.mxu0 0.0
    %6115 = vmatprep.subr.mxu0 0.0
    %6116 = vmatpush1.msra.mxu0 0.0
    %6117 = vmatprep.subr.mxu0 0.0
    %6118 = vmatpush1.msra.mxu0 0.0
    %6119 = vmatprep.subr.mxu0 0.0
    %6120 = vmatpush1.msra.mxu0 0.0
    %6121 = vmatprep.subr.mxu0 0.0
    %6122 = vmatpush1.msra.mxu0 0.0
    %6123 = vmatprep.subr.mxu0 0.0
    %6124 = vmatpush1.msra.mxu0 0.0
    %6125 = vmatprep.subr.mxu0 0.0
    %6126 = vmatpush1.msra.mxu0 0.0
    %6127 = vmatprep.mubr.f32.mxu0 0.0
    %6128 = vmatmul.mubr.f32.gmra.mrb[0].mxu0 %v6055
    %v6129 = vpop.f32.mrb[0].mxu0
    %v6130 = vadd.f32 0.0, %v6129
    %v6131 = vpop.f32.mrb[0].mxu0
    %6132 = vmatprep.mubr.f32.mxu0 0.0
    %6133 = vmatmul.mubr.f32.gmra.mrb[0].mxu0 %v6058
    %v6134 = vpop.f32.mrb[0].mxu0
    %v6135 = vadd.f32 0.0, %v6134
    %v6136 = vpop.f32.mrb[0].mxu0
    %6137 = vdwg.mxu0
    %6138 = vrot.lane.b32.xlu0 %v5851, 96
    %v6139 = vpop.permute.xlu0 %6138
    %6140 = vrot.lane.b32.xlu0 %v5855, 96
    %v6141 = vpop.permute.xlu0 %6140
    %6142 = vrot.lane.b32.xlu0 %v5894, 96
    %v6143 = vpop.permute.xlu0 %6142
    %6144 = vrot.lane.b32.xlu0 %v5898, 96
    %v6145 = vpop.permute.xlu0 %6144
    %v6146 = vsel %vm1664, %v6139, 0
    %v6148 = vsel %vm1664, %v6141, 0
    %v6150 = vsel %vm1664, %v6143, 0
    %v6152 = vsel %vm1664, %v6145, 0
    %6154 = vmatprep.subr.mxu0 0.0
    %6155 = vmatpush1.xpose.msra.mxu0 %v6150
    %6156 = vmatprep.subr.mxu0 0.0
    %6157 = vmatpush1.xpose.msra.mxu0 %v6152
    %6158 = vmatprep.subr.mxu0 0.0
    %6159 = vmatpush1.xpose.msra.mxu0 0.0
    %6160 = vmatprep.subr.mxu0 0.0
    %6161 = vmatpush1.xpose.msra.mxu0 0.0
    %6162 = vmatprep.subr.mxu0 0.0
    %6163 = vmatpush1.xpose.msra.mxu0 0.0
    %6164 = vmatprep.subr.mxu0 0.0
    %6165 = vmatpush1.xpose.msra.mxu0 0.0
    %6166 = vmatprep.subr.mxu0 0.0
    %6167 = vmatpush1.xpose.msra.mxu0 0.0
    %6168 = vmatprep.subr.mxu0 0.0
    %6169 = vmatpush1.xpose.msra.mxu0 0.0
    %6170 = vmatprep.subr.mxu0 0.0
    %6171 = vmatpush1.xpose.msra.mxu0 0.0
    %6172 = vmatprep.subr.mxu0 0.0
    %6173 = vmatpush1.xpose.msra.mxu0 0.0
    %6174 = vmatprep.subr.mxu0 0.0
    %6175 = vmatpush1.xpose.msra.mxu0 0.0
    %6176 = vmatprep.subr.mxu0 0.0
    %6177 = vmatpush1.xpose.msra.mxu0 0.0
    %6178 = vmatprep.subr.mxu0 0.0
    %6179 = vmatpush1.xpose.msra.mxu0 0.0
    %6180 = vmatprep.subr.mxu0 0.0
    %6181 = vmatpush1.xpose.msra.mxu0 0.0
    %6182 = vmatprep.subr.mxu0 0.0
    %6183 = vmatpush1.xpose.msra.mxu0 0.0
    %6184 = vmatprep.subr.mxu0 0.0
    %6185 = vmatpush1.xpose.msra.mxu0 0.0
    %6186 = vmatprep.subr.mxu0 0.0
    %6187 = vmatpush1.xpose.msra.mxu0 0.0
    %6188 = vmatprep.subr.mxu0 0.0
    %6189 = vmatpush1.xpose.msra.mxu0 0.0
    %6190 = vmatprep.subr.mxu0 0.0
    %6191 = vmatpush1.xpose.msra.mxu0 0.0
    %6192 = vmatprep.subr.mxu0 0.0
    %6193 = vmatpush1.xpose.msra.mxu0 0.0
    %6194 = vmatprep.subr.mxu0 0.0
    %6195 = vmatpush1.xpose.msra.mxu0 0.0
    %6196 = vmatprep.subr.mxu0 0.0
    %6197 = vmatpush1.xpose.msra.mxu0 0.0
    %6198 = vmatprep.subr.mxu0 0.0
    %6199 = vmatpush1.xpose.msra.mxu0 0.0
    %6200 = vmatprep.subr.mxu0 0.0
    %6201 = vmatpush1.xpose.msra.mxu0 0.0
    %6202 = vmatprep.subr.mxu0 0.0
    %6203 = vmatpush1.xpose.msra.mxu0 0.0
    %6204 = vmatprep.subr.mxu0 0.0
    %6205 = vmatpush1.xpose.msra.mxu0 0.0
    %6206 = vmatprep.subr.mxu0 0.0
    %6207 = vmatpush1.xpose.msra.mxu0 0.0
    %6208 = vmatprep.subr.mxu0 0.0
    %6209 = vmatpush1.xpose.msra.mxu0 0.0
    %6210 = vmatprep.subr.mxu0 0.0
    %6211 = vmatpush1.xpose.msra.mxu0 0.0
    %6212 = vmatprep.subr.mxu0 0.0
    %6213 = vmatpush1.xpose.msra.mxu0 0.0
    %6214 = vmatprep.subr.mxu0 0.0
    %6215 = vmatpush1.xpose.msra.mxu0 0.0
    %6216 = vmatprep.subr.mxu0 0.0
    %6217 = vmatpush1.xpose.msra.mxu0 0.0
    %6218 = vmatprep.mubr.f32.mxu0 0.0
    %6219 = vmatmul.mubr.f32.gmra.mrb[0].mxu0 %v6146
    %v6220 = vpop.f32.mrb[0].mxu0
    %v6221 = vadd.f32 0.0, %v6220
    %v6222 = vpop.f32.mrb[0].mxu0
    %6223 = vmatprep.mubr.f32.mxu0 0.0
    %6224 = vmatmul.mubr.f32.gmra.mrb[0].mxu0 %v6148
    %v6225 = vpop.f32.mrb[0].mxu0
    %v6226 = vadd.f32 0.0, %v6225
    %v6227 = vpop.f32.mrb[0].mxu0
    %6228 = vdwg.mxu0
    %v6229 = vsel %vm3974, %v6221, -inf
    %6230 = vmax.xlane.f32.xlu0 %v6229
    %v6231 = vpop.xlane.xlu0 %6230
    %v6232 = vsel %vm3978, %v6226, -inf
    %6233 = vmax.xlane.f32.xlu0 %v6232
    %v6234 = vpop.xlane.xlu0 %6233
    %v6235 = vsub.f32 %v6221, %v6231
    %v6236 = vsub.f32 %v6226, %v6234
    %v6237 = vmul.f32 %v6235, 1.442695
    %v6238 = vpow.pop %v6237
    %v6239 = vmul.f32 %v6236, 1.442695
    %v6240 = vpow.pop %v6239
    %v6241 = vsel %vm3974, %v6238, 0.0
    %6242 = vadd.xlane.f32.xlu0 %v6241
    %v6243 = vpop.xlane.xlu0 %6242
    %v6244 = vsel %vm3978, %v6240, 0.0
    %6245 = vadd.xlane.f32.xlu0 %v6244
    %v6246 = vpop.xlane.xlu0 %6245
    %v6247 = vrcp.pop %v6243
    %v6248 = vmul.f32 %v6238, %v6247
    %v6249 = vrcp.pop %v6246
    %v6250 = vmul.f32 %v6240, %v6249
    %6252 = vrot.lane.b32.xlu0 %v5937, 96
    %v6253 = vpop.permute.xlu0 %6252
    %6254 = vrot.lane.b32.xlu0 %v5941, 96
    %v6255 = vpop.permute.xlu0 %6254
    %v6258 = vsel %vm3974, %v6248, 0
    %v6261 = vsel %vm3974, %v6250, 0
    %v6263 = vsel %vm3679, %v6255, 0
    %6265 = vmatprep.subr.mxu0 0.0
    %6266 = vmatpush1.msra.mxu0 %v6253
    %6267 = vmatprep.subr.mxu0 0.0
    %6268 = vmatpush1.msra.mxu0 %v6263
    %6269 = vmatprep.subr.mxu0 0.0
    %6270 = vmatpush1.msra.mxu0 0.0
    %6271 = vmatprep.subr.mxu0 0.0
    %6272 = vmatpush1.msra.mxu0 0.0
    %6273 = vmatprep.subr.mxu0 0.0
    %6274 = vmatpush1.msra.mxu0 0.0
    %6275 = vmatprep.subr.mxu0 0.0
    %6276 = vmatpush1.msra.mxu0 0.0
    %6277 = vmatprep.subr.mxu0 0.0
    %6278 = vmatpush1.msra.mxu0 0.0
    %6279 = vmatprep.subr.mxu0 0.0
    %6280 = vmatpush1.msra.mxu0 0.0
    %6281 = vmatprep.subr.mxu0 0.0
    %6282 = vmatpush1.msra.mxu0 0.0
    %6283 = vmatprep.subr.mxu0 0.0
    %6284 = vmatpush1.msra.mxu0 0.0
    %6285 = vmatprep.subr.mxu0 0.0
    %6286 = vmatpush1.msra.mxu0 0.0
    %6287 = vmatprep.subr.mxu0 0.0
    %6288 = vmatpush1.msra.mxu0 0.0
    %6289 = vmatprep.subr.mxu0 0.0
    %6290 = vmatpush1.msra.mxu0 0.0
    %6291 = vmatprep.subr.mxu0 0.0
    %6292 = vmatpush1.msra.mxu0 0.0
    %6293 = vmatprep.subr.mxu0 0.0
    %6294 = vmatpush1.msra.mxu0 0.0
    %6295 = vmatprep.subr.mxu0 0.0
    %6296 = vmatpush1.msra.mxu0 0.0
    %6297 = vmatprep.subr.mxu0 0.0
    %6298 = vmatpush1.msra.mxu0 0.0
    %6299 = vmatprep.subr.mxu0 0.0
    %6300 = vmatpush1.msra.mxu0 0.0
    %6301 = vmatprep.subr.mxu0 0.0
    %6302 = vmatpush1.msra.mxu0 0.0
    %6303 = vmatprep.subr.mxu0 0.0
    %6304 = vmatpush1.msra.mxu0 0.0
    %6305 = vmatprep.subr.mxu0 0.0
    %6306 = vmatpush1.msra.mxu0 0.0
    %6307 = vmatprep.subr.mxu0 0.0
    %6308 = vmatpush1.msra.mxu0 0.0
    %6309 = vmatprep.subr.mxu0 0.0
    %6310 = vmatpush1.msra.mxu0 0.0
    %6311 = vmatprep.subr.mxu0 0.0
    %6312 = vmatpush1.msra.mxu0 0.0
    %6313 = vmatprep.subr.mxu0 0.0
    %6314 = vmatpush1.msra.mxu0 0.0
    %6315 = vmatprep.subr.mxu0 0.0
    %6316 = vmatpush1.msra.mxu0 0.0
    %6317 = vmatprep.subr.mxu0 0.0
    %6318 = vmatpush1.msra.mxu0 0.0
    %6319 = vmatprep.subr.mxu0 0.0
    %6320 = vmatpush1.msra.mxu0 0.0
    %6321 = vmatprep.subr.mxu0 0.0
    %6322 = vmatpush1.msra.mxu0 0.0
    %6323 = vmatprep.subr.mxu0 0.0
    %6324 = vmatpush1.msra.mxu0 0.0
    %6325 = vmatprep.subr.mxu0 0.0
    %6326 = vmatpush1.msra.mxu0 0.0
    %6327 = vmatprep.subr.mxu0 0.0
    %6328 = vmatpush1.msra.mxu0 0.0
    %6329 = vmatprep.mubr.f32.mxu0 0.0
    %6330 = vmatmul.mubr.f32.gmra.mrb[0].mxu0 %v6258
    %v6331 = vpop.f32.mrb[0].mxu0
    %v6332 = vadd.f32 0.0, %v6331
    %v6333 = vpop.f32.mrb[0].mxu0
    %6334 = vmatprep.mubr.f32.mxu0 0.0
    %6335 = vmatmul.mubr.f32.gmra.mrb[0].mxu0 %v6261
    %v6336 = vpop.f32.mrb[0].mxu0
    %v6337 = vadd.f32 0.0, %v6336
    %v6338 = vpop.f32.mrb[0].mxu0
    %6339 = vdwg.mxu0
    %6340 = vrot.lane.b32.xlu0 %v5851, 64
    %v6341 = vpop.permute.xlu0 %6340
    %6342 = vrot.lane.b32.xlu0 %v5855, 64
    %v6343 = vpop.permute.xlu0 %6342
    %6344 = vrot.lane.b32.xlu0 %v5894, 64
    %v6345 = vpop.permute.xlu0 %6344
    %6346 = vrot.lane.b32.xlu0 %v5898, 64
    %v6347 = vpop.permute.xlu0 %6346
    %v6348 = vsel %vm1664, %v6341, 0
    %v6350 = vsel %vm1664, %v6343, 0
    %v6352 = vsel %vm1664, %v6345, 0
    %v6354 = vsel %vm1664, %v6347, 0
    %6356 = vmatprep.subr.mxu0 0.0
    %6357 = vmatpush1.xpose.msra.mxu0 %v6352
    %6358 = vmatprep.subr.mxu0 0.0
    %6359 = vmatpush1.xpose.msra.mxu0 %v6354
    %6360 = vmatprep.subr.mxu0 0.0
    %6361 = vmatpush1.xpose.msra.mxu0 0.0
    %6362 = vmatprep.subr.mxu0 0.0
    %6363 = vmatpush1.xpose.msra.mxu0 0.0
    %6364 = vmatprep.subr.mxu0 0.0
    %6365 = vmatpush1.xpose.msra.mxu0 0.0
    %6366 = vmatprep.subr.mxu0 0.0
    %6367 = vmatpush1.xpose.msra.mxu0 0.0
    %6368 = vmatprep.subr.mxu0 0.0
    %6369 = vmatpush1.xpose.msra.mxu0 0.0
    %6370 = vmatprep.subr.mxu0 0.0
    %6371 = vmatpush1.xpose.msra.mxu0 0.0
    %6372 = vmatprep.subr.mxu0 0.0
    %6373 = vmatpush1.xpose.msra.mxu0 0.0
    %6374 = vmatprep.subr.mxu0 0.0
    %6375 = vmatpush1.xpose.msra.mxu0 0.0
    %6376 = vmatprep.subr.mxu0 0.0
    %6377 = vmatpush1.xpose.msra.mxu0 0.0
    %6378 = vmatprep.subr.mxu0 0.0
    %6379 = vmatpush1.xpose.msra.mxu0 0.0
    %6380 = vmatprep.subr.mxu0 0.0
    %6381 = vmatpush1.xpose.msra.mxu0 0.0
    %6382 = vmatprep.subr.mxu0 0.0
    %6383 = vmatpush1.xpose.msra.mxu0 0.0
    %6384 = vmatprep.subr.mxu0 0.0
    %6385 = vmatpush1.xpose.msra.mxu0 0.0
    %6386 = vmatprep.subr.mxu0 0.0
    %6387 = vmatpush1.xpose.msra.mxu0 0.0
    %6388 = vmatprep.subr.mxu0 0.0
    %6389 = vmatpush1.xpose.msra.mxu0 0.0
    %6390 = vmatprep.subr.mxu0 0.0
    %6391 = vmatpush1.xpose.msra.mxu0 0.0
    %6392 = vmatprep.subr.mxu0 0.0
    %6393 = vmatpush1.xpose.msra.mxu0 0.0
    %6394 = vmatprep.subr.mxu0 0.0
    %6395 = vmatpush1.xpose.msra.mxu0 0.0
    %6396 = vmatprep.subr.mxu0 0.0
    %6397 = vmatpush1.xpose.msra.mxu0 0.0
    %6398 = vmatprep.subr.mxu0 0.0
    %6399 = vmatpush1.xpose.msra.mxu0 0.0
    %6400 = vmatprep.subr.mxu0 0.0
    %6401 = vmatpush1.xpose.msra.mxu0 0.0
    %6402 = vmatprep.subr.mxu0 0.0
    %6403 = vmatpush1.xpose.msra.mxu0 0.0
    %6404 = vmatprep.subr.mxu0 0.0
    %6405 = vmatpush1.xpose.msra.mxu0 0.0
    %6406 = vmatprep.subr.mxu0 0.0
    %6407 = vmatpush1.xpose.msra.mxu0 0.0
    %6408 = vmatprep.subr.mxu0 0.0
    %6409 = vmatpush1.xpose.msra.mxu0 0.0
    %6410 = vmatprep.subr.mxu0 0.0
    %6411 = vmatpush1.xpose.msra.mxu0 0.0
    %6412 = vmatprep.subr.mxu0 0.0
    %6413 = vmatpush1.xpose.msra.mxu0 0.0
    %6414 = vmatprep.subr.mxu0 0.0
    %6415 = vmatpush1.xpose.msra.mxu0 0.0
    %6416 = vmatprep.subr.mxu0 0.0
    %6417 = vmatpush1.xpose.msra.mxu0 0.0
    %6418 = vmatprep.subr.mxu0 0.0
    %6419 = vmatpush1.xpose.msra.mxu0 0.0
    %6420 = vmatprep.mubr.f32.mxu0 0.0
    %6421 = vmatmul.mubr.f32.gmra.mrb[0].mxu0 %v6348
    %v6422 = vpop.f32.mrb[0].mxu0
    %v6423 = vadd.f32 0.0, %v6422
    %v6424 = vpop.f32.mrb[0].mxu0
    %6425 = vmatprep.mubr.f32.mxu0 0.0
    %6426 = vmatmul.mubr.f32.gmra.mrb[0].mxu0 %v6350
    %v6427 = vpop.f32.mrb[0].mxu0
    %v6428 = vadd.f32 0.0, %v6427
    %v6429 = vpop.f32.mrb[0].mxu0
    %6430 = vdwg.mxu0
    %v6431 = vsel %vm3974, %v6423, -inf
    %6432 = vmax.xlane.f32.xlu0 %v6431
    %v6433 = vpop.xlane.xlu0 %6432
    %v6434 = vsel %vm3978, %v6428, -inf
    %6435 = vmax.xlane.f32.xlu0 %v6434
    %v6436 = vpop.xlane.xlu0 %6435
    %v6437 = vsub.f32 %v6423, %v6433
    %v6438 = vsub.f32 %v6428, %v6436
    %v6439 = vmul.f32 %v6437, 1.442695
    %v6440 = vpow.pop %v6439
    %v6441 = vmul.f32 %v6438, 1.442695
    %v6442 = vpow.pop %v6441
    %v6443 = vsel %vm3974, %v6440, 0.0
    %6444 = vadd.xlane.f32.xlu0 %v6443
    %v6445 = vpop.xlane.xlu0 %6444
    %v6446 = vsel %vm3978, %v6442, 0.0
    %6447 = vadd.xlane.f32.xlu0 %v6446
    %v6448 = vpop.xlane.xlu0 %6447
    %v6449 = vrcp.pop %v6445
    %v6450 = vmul.f32 %v6440, %v6449
    %v6451 = vrcp.pop %v6448
    %v6452 = vmul.f32 %v6442, %v6451
    %6453 = vrot.lane.b32.xlu0 %v5937, 64
    %v6454 = vpop.permute.xlu0 %6453
    %6455 = vrot.lane.b32.xlu0 %v5941, 64
    %v6456 = vpop.permute.xlu0 %6455
    %v6459 = vsel %vm3974, %v6450, 0
    %v6462 = vsel %vm3974, %v6452, 0
    %v6464 = vsel %vm3679, %v6456, 0
    %6466 = vmatprep.subr.mxu0 0.0
    %6467 = vmatpush1.msra.mxu0 %v6454
    %6468 = vmatprep.subr.mxu0 0.0
    %6469 = vmatpush1.msra.mxu0 %v6464
    %6470 = vmatprep.subr.mxu0 0.0
    %6471 = vmatpush1.msra.mxu0 0.0
    %6472 = vmatprep.subr.mxu0 0.0
    %6473 = vmatpush1.msra.mxu0 0.0
    %6474 = vmatprep.subr.mxu0 0.0
    %6475 = vmatpush1.msra.mxu0 0.0
    %6476 = vmatprep.subr.mxu0 0.0
    %6477 = vmatpush1.msra.mxu0 0.0
    %6478 = vmatprep.subr.mxu0 0.0
    %6479 = vmatpush1.msra.mxu0 0.0
    %6480 = vmatprep.subr.mxu0 0.0
    %6481 = vmatpush1.msra.mxu0 0.0
    %6482 = vmatprep.subr.mxu0 0.0
    %6483 = vmatpush1.msra.mxu0 0.0
    %6484 = vmatprep.subr.mxu0 0.0
    %6485 = vmatpush1.msra.mxu0 0.0
    %6486 = vmatprep.subr.mxu0 0.0
    %6487 = vmatpush1.msra.mxu0 0.0
    %6488 = vmatprep.subr.mxu0 0.0
    %6489 = vmatpush1.msra.mxu0 0.0
    %6490 = vmatprep.subr.mxu0 0.0
    %6491 = vmatpush1.msra.mxu0 0.0
    %6492 = vmatprep.subr.mxu0 0.0
    %6493 = vmatpush1.msra.mxu0 0.0
    %6494 = vmatprep.subr.mxu0 0.0
    %6495 = vmatpush1.msra.mxu0 0.0
    %6496 = vmatprep.subr.mxu0 0.0
    %6497 = vmatpush1.msra.mxu0 0.0
    %6498 = vmatprep.subr.mxu0 0.0
    %6499 = vmatpush1.msra.mxu0 0.0
    %6500 = vmatprep.subr.mxu0 0.0
    %6501 = vmatpush1.msra.mxu0 0.0
    %6502 = vmatprep.subr.mxu0 0.0
    %6503 = vmatpush1.msra.mxu0 0.0
    %6504 = vmatprep.subr.mxu0 0.0
    %6505 = vmatpush1.msra.mxu0 0.0
    %6506 = vmatprep.subr.mxu0 0.0
    %6507 = vmatpush1.msra.mxu0 0.0
    %6508 = vmatprep.subr.mxu0 0.0
    %6509 = vmatpush1.msra.mxu0 0.0
    %6510 = vmatprep.subr.mxu0 0.0
    %6511 = vmatpush1.msra.mxu0 0.0
    %6512 = vmatprep.subr.mxu0 0.0
    %6513 = vmatpush1.msra.mxu0 0.0
    %6514 = vmatprep.subr.mxu0 0.0
    %6515 = vmatpush1.msra.mxu0 0.0
    %6516 = vmatprep.subr.mxu0 0.0
    %6517 = vmatpush1.msra.mxu0 0.0
    %6518 = vmatprep.subr.mxu0 0.0
    %6519 = vmatpush1.msra.mxu0 0.0
    %6520 = vmatprep.subr.mxu0 0.0
    %6521 = vmatpush1.msra.mxu0 0.0
    %6522 = vmatprep.subr.mxu0 0.0
    %6523 = vmatpush1.msra.mxu0 0.0
    %6524 = vmatprep.subr.mxu0 0.0
    %6525 = vmatpush1.msra.mxu0 0.0
    %6526 = vmatprep.subr.mxu0 0.0
    %6527 = vmatpush1.msra.mxu0 0.0
    %6528 = vmatprep.subr.mxu0 0.0
    %6529 = vmatpush1.msra.mxu0 0.0
    %6530 = vmatprep.mubr.f32.mxu0 0.0
    %6531 = vmatmul.mubr.f32.gmra.mrb[0].mxu0 %v6459
    %v6532 = vpop.f32.mrb[0].mxu0
    %v6533 = vadd.f32 0.0, %v6532
    %v6534 = vpop.f32.mrb[0].mxu0
    %6535 = vmatprep.mubr.f32.mxu0 0.0
    %6536 = vmatmul.mubr.f32.gmra.mrb[0].mxu0 %v6462
    %v6537 = vpop.f32.mrb[0].mxu0
    %v6538 = vadd.f32 0.0, %v6537
    %v6539 = vpop.f32.mrb[0].mxu0
    %6540 = vdwg.mxu0
    %6541 = vrot.lane.b32.xlu0 %v5851, 32
    %v6542 = vpop.permute.xlu0 %6541
    %6543 = vrot.lane.b32.xlu0 %v5855, 32
    %v6544 = vpop.permute.xlu0 %6543
    %6545 = vrot.lane.b32.xlu0 %v5894, 32
    %v6546 = vpop.permute.xlu0 %6545
    %6547 = vrot.lane.b32.xlu0 %v5898, 32
    %v6548 = vpop.permute.xlu0 %6547
    %v6549 = vsel %vm1664, %v6542, 0
    %v6551 = vsel %vm1664, %v6544, 0
    %v6553 = vsel %vm1664, %v6546, 0
    %v6555 = vsel %vm1664, %v6548, 0
    %6557 = vmatprep.subr.mxu0 0.0
    %6558 = vmatpush1.xpose.msra.mxu0 %v6553
    %6559 = vmatprep.subr.mxu0 0.0
    %6560 = vmatpush1.xpose.msra.mxu0 %v6555
    %6561 = vmatprep.subr.mxu0 0.0
    %6562 = vmatpush1.xpose.msra.mxu0 0.0
    %6563 = vmatprep.subr.mxu0 0.0
    %6564 = vmatpush1.xpose.msra.mxu0 0.0
    %6565 = vmatprep.subr.mxu0 0.0
    %6566 = vmatpush1.xpose.msra.mxu0 0.0
    %6567 = vmatprep.subr.mxu0 0.0
    %6568 = vmatpush1.xpose.msra.mxu0 0.0
    %6569 = vmatprep.subr.mxu0 0.0
    %6570 = vmatpush1.xpose.msra.mxu0 0.0
    %6571 = vmatprep.subr.mxu0 0.0
    %6572 = vmatpush1.xpose.msra.mxu0 0.0
    %6573 = vmatprep.subr.mxu0 0.0
    %6574 = vmatpush1.xpose.msra.mxu0 0.0
    %6575 = vmatprep.subr.mxu0 0.0
    %6576 = vmatpush1.xpose.msra.mxu0 0.0
    %6577 = vmatprep.subr.mxu0 0.0
    %6578 = vmatpush1.xpose.msra.mxu0 0.0
    %6579 = vmatprep.subr.mxu0 0.0
    %6580 = vmatpush1.xpose.msra.mxu0 0.0
    %6581 = vmatprep.subr.mxu0 0.0
    %6582 = vmatpush1.xpose.msra.mxu0 0.0
    %6583 = vmatprep.subr.mxu0 0.0
    %6584 = vmatpush1.xpose.msra.mxu0 0.0
    %6585 = vmatprep.subr.mxu0 0.0
    %6586 = vmatpush1.xpose.msra.mxu0 0.0
    %6587 = vmatprep.subr.mxu0 0.0
    %6588 = vmatpush1.xpose.msra.mxu0 0.0
    %6589 = vmatprep.subr.mxu0 0.0
    %6590 = vmatpush1.xpose.msra.mxu0 0.0
    %6591 = vmatprep.subr.mxu0 0.0
    %6592 = vmatpush1.xpose.msra.mxu0 0.0
    %6593 = vmatprep.subr.mxu0 0.0
    %6594 = vmatpush1.xpose.msra.mxu0 0.0
    %6595 = vmatprep.subr.mxu0 0.0
    %6596 = vmatpush1.xpose.msra.mxu0 0.0
    %6597 = vmatprep.subr.mxu0 0.0
    %6598 = vmatpush1.xpose.msra.mxu0 0.0
    %6599 = vmatprep.subr.mxu0 0.0
    %6600 = vmatpush1.xpose.msra.mxu0 0.0
    %6601 = vmatprep.subr.mxu0 0.0
    %6602 = vmatpush1.xpose.msra.mxu0 0.0
    %6603 = vmatprep.subr.mxu0 0.0
    %6604 = vmatpush1.xpose.msra.mxu0 0.0
    %6605 = vmatprep.subr.mxu0 0.0
    %6606 = vmatpush1.xpose.msra.mxu0 0.0
    %6607 = vmatprep.subr.mxu0 0.0
    %6608 = vmatpush1.xpose.msra.mxu0 0.0
    %6609 = vmatprep.subr.mxu0 0.0
    %6610 = vmatpush1.xpose.msra.mxu0 0.0
    %6611 = vmatprep.subr.mxu0 0.0
    %6612 = vmatpush1.xpose.msra.mxu0 0.0
    %6613 = vmatprep.subr.mxu0 0.0
    %6614 = vmatpush1.xpose.msra.mxu0 0.0
    %6615 = vmatprep.subr.mxu0 0.0
    %6616 = vmatpush1.xpose.msra.mxu0 0.0
    %6617 = vmatprep.subr.mxu0 0.0
    %6618 = vmatpush1.xpose.msra.mxu0 0.0
    %6619 = vmatprep.subr.mxu0 0.0
    %6620 = vmatpush1.xpose.msra.mxu0 0.0
    %6621 = vmatprep.mubr.f32.mxu0 0.0
    %6622 = vmatmul.mubr.f32.gmra.mrb[0].mxu0 %v6549
    %v6623 = vpop.f32.mrb[0].mxu0
    %v6624 = vadd.f32 0.0, %v6623
    %v6625 = vpop.f32.mrb[0].mxu0
    %6626 = vmatprep.mubr.f32.mxu0 0.0
    %6627 = vmatmul.mubr.f32.gmra.mrb[0].mxu0 %v6551
    %v6628 = vpop.f32.mrb[0].mxu0
    %v6629 = vadd.f32 0.0, %v6628
    %v6630 = vpop.f32.mrb[0].mxu0
    %6631 = vdwg.mxu0
    %v6632 = vsel %vm3974, %v6624, -inf
    %6633 = vmax.xlane.f32.xlu0 %v6632
    %v6634 = vpop.xlane.xlu0 %6633
    %v6635 = vsel %vm3978, %v6629, -inf
    %6636 = vmax.xlane.f32.xlu0 %v6635
    %v6637 = vpop.xlane.xlu0 %6636
    %v6638 = vsub.f32 %v6624, %v6634
    %v6639 = vsub.f32 %v6629, %v6637
    %v6640 = vmul.f32 %v6638, 1.442695
    %v6641 = vpow.pop %v6640
    %v6642 = vmul.f32 %v6639, 1.442695
    %v6643 = vpow.pop %v6642
    %v6644 = vsel %vm3974, %v6641, 0.0
    %6645 = vadd.xlane.f32.xlu0 %v6644
    %v6646 = vpop.xlane.xlu0 %6645
    %v6647 = vsel %vm3978, %v6643, 0.0
    %6648 = vadd.xlane.f32.xlu0 %v6647
    %v6649 = vpop.xlane.xlu0 %6648
    %v6650 = vrcp.pop %v6646
    %v6651 = vmul.f32 %v6641, %v6650
    %v6652 = vrcp.pop %v6649
    %v6653 = vmul.f32 %v6643, %v6652
    %6654 = vrot.lane.b32.xlu0 %v5937, 32
    %v6655 = vpop.permute.xlu0 %6654
    %6656 = vrot.lane.b32.xlu0 %v5941, 32
    %v6657 = vpop.permute.xlu0 %6656
    %v6660 = vsel %vm3974, %v6651, 0
    %v6663 = vsel %vm3974, %v6653, 0
    %v6665 = vsel %vm3679, %v6657, 0
    %6667 = vmatprep.subr.mxu0 0.0
    %6668 = vmatpush1.msra.mxu0 %v6655
    %6669 = vmatprep.subr.mxu0 0.0
    %6670 = vmatpush1.msra.mxu0 %v6665
    %6671 = vmatprep.subr.mxu0 0.0
    %6672 = vmatpush1.msra.mxu0 0.0
    %6673 = vmatprep.subr.mxu0 0.0
    %6674 = vmatpush1.msra.mxu0 0.0
    %6675 = vmatprep.subr.mxu0 0.0
    %6676 = vmatpush1.msra.mxu0 0.0
    %6677 = vmatprep.subr.mxu0 0.0
    %6678 = vmatpush1.msra.mxu0 0.0
    %6679 = vmatprep.subr.mxu0 0.0
    %6680 = vmatpush1.msra.mxu0 0.0
    %6681 = vmatprep.subr.mxu0 0.0
    %6682 = vmatpush1.msra.mxu0 0.0
    %6683 = vmatprep.subr.mxu0 0.0
    %6684 = vmatpush1.msra.mxu0 0.0
    %6685 = vmatprep.subr.mxu0 0.0
    %6686 = vmatpush1.msra.mxu0 0.0
    %6687 = vmatprep.subr.mxu0 0.0
    %6688 = vmatpush1.msra.mxu0 0.0
    %6689 = vmatprep.subr.mxu0 0.0
    %6690 = vmatpush1.msra.mxu0 0.0
    %6691 = vmatprep.subr.mxu0 0.0
    %6692 = vmatpush1.msra.mxu0 0.0
    %6693 = vmatprep.subr.mxu0 0.0
    %6694 = vmatpush1.msra.mxu0 0.0
    %6695 = vmatprep.subr.mxu0 0.0
    %6696 = vmatpush1.msra.mxu0 0.0
    %6697 = vmatprep.subr.mxu0 0.0
    %6698 = vmatpush1.msra.mxu0 0.0
    %6699 = vmatprep.subr.mxu0 0.0
    %6700 = vmatpush1.msra.mxu0 0.0
    %6701 = vmatprep.subr.mxu0 0.0
    %6702 = vmatpush1.msra.mxu0 0.0
    %6703 = vmatprep.subr.mxu0 0.0
    %6704 = vmatpush1.msra.mxu0 0.0
    %6705 = vmatprep.subr.mxu0 0.0
    %6706 = vmatpush1.msra.mxu0 0.0
    %6707 = vmatprep.subr.mxu0 0.0
    %6708 = vmatpush1.msra.mxu0 0.0
    %6709 = vmatprep.subr.mxu0 0.0
    %6710 = vmatpush1.msra.mxu0 0.0
    %6711 = vmatprep.subr.mxu0 0.0
    %6712 = vmatpush1.msra.mxu0 0.0
    %6713 = vmatprep.subr.mxu0 0.0
    %6714 = vmatpush1.msra.mxu0 0.0
    %6715 = vmatprep.subr.mxu0 0.0
    %6716 = vmatpush1.msra.mxu0 0.0
    %6717 = vmatprep.subr.mxu0 0.0
    %6718 = vmatpush1.msra.mxu0 0.0
    %6719 = vmatprep.subr.mxu0 0.0
    %6720 = vmatpush1.msra.mxu0 0.0
    %6721 = vmatprep.subr.mxu0 0.0
    %6722 = vmatpush1.msra.mxu0 0.0
    %6723 = vmatprep.subr.mxu0 0.0
    %6724 = vmatpush1.msra.mxu0 0.0
    %6725 = vmatprep.subr.mxu0 0.0
    %6726 = vmatpush1.msra.mxu0 0.0
    %6727 = vmatprep.subr.mxu0 0.0
    %6728 = vmatpush1.msra.mxu0 0.0
    %6729 = vmatprep.subr.mxu0 0.0
    %6730 = vmatpush1.msra.mxu0 0.0
    %6731 = vmatprep.mubr.f32.mxu0 0.0
    %6732 = vmatmul.mubr.f32.gmra.mrb[0].mxu0 %v6660
    %v6733 = vpop.f32.mrb[0].mxu0
    %v6734 = vadd.f32 0.0, %v6733
    %v6735 = vpop.f32.mrb[0].mxu0
    %6736 = vmatprep.mubr.f32.mxu0 0.0
    %6737 = vmatmul.mubr.f32.gmra.mrb[0].mxu0 %v6663
    %v6738 = vpop.f32.mrb[0].mxu0
    %v6739 = vadd.f32 0.0, %v6738
    %v6740 = vpop.f32.mrb[0].mxu0
    %6741 = vdwg.mxu0
    %v6743 = vsel %vm1664, %v5853, 0
    %v6746 = vsel %vm1664, %v5857, 0
    %v6749 = vsel %vm1664, %v5896, 0
    %v6752 = vsel %vm1664, %v5900, 0
    %6754 = vmatprep.subr.mxu0 0.0
    %6755 = vmatpush1.xpose.msra.mxu0 %v6749
    %6756 = vmatprep.subr.mxu0 0.0
    %6757 = vmatpush1.xpose.msra.mxu0 %v6752
    %6758 = vmatprep.subr.mxu0 0.0
    %6759 = vmatpush1.xpose.msra.mxu0 0.0
    %6760 = vmatprep.subr.mxu0 0.0
    %6761 = vmatpush1.xpose.msra.mxu0 0.0
    %6762 = vmatprep.subr.mxu0 0.0
    %6763 = vmatpush1.xpose.msra.mxu0 0.0
    %6764 = vmatprep.subr.mxu0 0.0
    %6765 = vmatpush1.xpose.msra.mxu0 0.0
    %6766 = vmatprep.subr.mxu0 0.0
    %6767 = vmatpush1.xpose.msra.mxu0 0.0
    %6768 = vmatprep.subr.mxu0 0.0
    %6769 = vmatpush1.xpose.msra.mxu0 0.0
    %6770 = vmatprep.subr.mxu0 0.0
    %6771 = vmatpush1.xpose.msra.mxu0 0.0
    %6772 = vmatprep.subr.mxu0 0.0
    %6773 = vmatpush1.xpose.msra.mxu0 0.0
    %6774 = vmatprep.subr.mxu0 0.0
    %6775 = vmatpush1.xpose.msra.mxu0 0.0
    %6776 = vmatprep.subr.mxu0 0.0
    %6777 = vmatpush1.xpose.msra.mxu0 0.0
    %6778 = vmatprep.subr.mxu0 0.0
    %6779 = vmatpush1.xpose.msra.mxu0 0.0
    %6780 = vmatprep.subr.mxu0 0.0
    %6781 = vmatpush1.xpose.msra.mxu0 0.0
    %6782 = vmatprep.subr.mxu0 0.0
    %6783 = vmatpush1.xpose.msra.mxu0 0.0
    %6784 = vmatprep.subr.mxu0 0.0
    %6785 = vmatpush1.xpose.msra.mxu0 0.0
    %6786 = vmatprep.subr.mxu0 0.0
    %6787 = vmatpush1.xpose.msra.mxu0 0.0
    %6788 = vmatprep.subr.mxu0 0.0
    %6789 = vmatpush1.xpose.msra.mxu0 0.0
    %6790 = vmatprep.subr.mxu0 0.0
    %6791 = vmatpush1.xpose.msra.mxu0 0.0
    %6792 = vmatprep.subr.mxu0 0.0
    %6793 = vmatpush1.xpose.msra.mxu0 0.0
    %6794 = vmatprep.subr.mxu0 0.0
    %6795 = vmatpush1.xpose.msra.mxu0 0.0
    %6796 = vmatprep.subr.mxu0 0.0
    %6797 = vmatpush1.xpose.msra.mxu0 0.0
    %6798 = vmatprep.subr.mxu0 0.0
    %6799 = vmatpush1.xpose.msra.mxu0 0.0
    %6800 = vmatprep.subr.mxu0 0.0
    %6801 = vmatpush1.xpose.msra.mxu0 0.0
    %6802 = vmatprep.subr.mxu0 0.0
    %6803 = vmatpush1.xpose.msra.mxu0 0.0
    %6804 = vmatprep.subr.mxu0 0.0
    %6805 = vmatpush1.xpose.msra.mxu0 0.0
    %6806 = vmatprep.subr.mxu0 0.0
    %6807 = vmatpush1.xpose.msra.mxu0 0.0
    %6808 = vmatprep.subr.mxu0 0.0
    %6809 = vmatpush1.xpose.msra.mxu0 0.0
    %6810 = vmatprep.subr.mxu0 0.0
    %6811 = vmatpush1.xpose.msra.mxu0 0.0
    %6812 = vmatprep.subr.mxu0 0.0
    %6813 = vmatpush1.xpose.msra.mxu0 0.0
    %6814 = vmatprep.subr.mxu0 0.0
    %6815 = vmatpush1.xpose.msra.mxu0 0.0
    %6816 = vmatprep.subr.mxu0 0.0
    %6817 = vmatpush1.xpose.msra.mxu0 0.0
    %6818 = vmatprep.mubr.f32.mxu0 0.0
    %6819 = vmatmul.mubr.f32.gmra.mrb[0].mxu0 %v6743
    %v6820 = vpop.f32.mrb[0].mxu0
    %v6821 = vadd.f32 0.0, %v6820
    %v6822 = vpop.f32.mrb[0].mxu0
    %6823 = vmatprep.mubr.f32.mxu0 0.0
    %6824 = vmatmul.mubr.f32.gmra.mrb[0].mxu0 %v6746
    %v6825 = vpop.f32.mrb[0].mxu0
    %v6826 = vadd.f32 0.0, %v6825
    %v6827 = vpop.f32.mrb[0].mxu0
    %6828 = vdwg.mxu0
    %v6829 = vsel %vm3974, %v6821, -inf
    %6830 = vmax.xlane.f32.xlu0 %v6829
    %v6831 = vpop.xlane.xlu0 %6830
    %v6832 = vsel %vm3978, %v6826, -inf
    %6833 = vmax.xlane.f32.xlu0 %v6832
    %v6834 = vpop.xlane.xlu0 %6833
    %v6835 = vsub.f32 %v6821, %v6831
    %v6836 = vsub.f32 %v6826, %v6834
    %v6837 = vmul.f32 %v6835, 1.442695
    %v6838 = vpow.pop %v6837
    %v6839 = vmul.f32 %v6836, 1.442695
    %v6840 = vpow.pop %v6839
    %v6841 = vsel %vm3974, %v6838, 0.0
    %6842 = vadd.xlane.f32.xlu0 %v6841
    %v6843 = vpop.xlane.xlu0 %6842
    %v6844 = vsel %vm3978, %v6840, 0.0
    %6845 = vadd.xlane.f32.xlu0 %v6844
    %v6846 = vpop.xlane.xlu0 %6845
    %v6847 = vrcp.pop %v6843
    %v6848 = vmul.f32 %v6838, %v6847
    %v6849 = vrcp.pop %v6846
    %v6850 = vmul.f32 %v6840, %v6849
    %v6852 = vsel %vm3974, %v6848, 0
    %v6855 = vsel %vm3974, %v6850, 0
    %v6858 = vsel %vm3679, %v5943, 0
    %6860 = vmatprep.subr.mxu0 0.0
    %6861 = vmatpush1.msra.mxu0 %v5939
    %6862 = vmatprep.subr.mxu0 0.0
    %6863 = vmatpush1.msra.mxu0 %v6858
    %6864 = vmatprep.subr.mxu0 0.0
    %6865 = vmatpush1.msra.mxu0 0.0
    %6866 = vmatprep.subr.mxu0 0.0
    %6867 = vmatpush1.msra.mxu0 0.0
    %6868 = vmatprep.subr.mxu0 0.0
    %6869 = vmatpush1.msra.mxu0 0.0
    %6870 = vmatprep.subr.mxu0 0.0
    %6871 = vmatpush1.msra.mxu0 0.0
    %6872 = vmatprep.subr.mxu0 0.0
    %6873 = vmatpush1.msra.mxu0 0.0
    %6874 = vmatprep.subr.mxu0 0.0
    %6875 = vmatpush1.msra.mxu0 0.0
    %6876 = vmatprep.subr.mxu0 0.0
    %6877 = vmatpush1.msra.mxu0 0.0
    %6878 = vmatprep.subr.mxu0 0.0
    %6879 = vmatpush1.msra.mxu0 0.0
    %6880 = vmatprep.subr.mxu0 0.0
    %6881 = vmatpush1.msra.mxu0 0.0
    %6882 = vmatprep.subr.mxu0 0.0
    %6883 = vmatpush1.msra.mxu0 0.0
    %6884 = vmatprep.subr.mxu0 0.0
    %6885 = vmatpush1.msra.mxu0 0.0
    %6886 = vmatprep.subr.mxu0 0.0
    %6887 = vmatpush1.msra.mxu0 0.0
    %6888 = vmatprep.subr.mxu0 0.0
    %6889 = vmatpush1.msra.mxu0 0.0
    %6890 = vmatprep.subr.mxu0 0.0
    %6891 = vmatpush1.msra.mxu0 0.0
    %6892 = vmatprep.subr.mxu0 0.0
    %6893 = vmatpush1.msra.mxu0 0.0
    %6894 = vmatprep.subr.mxu0 0.0
    %6895 = vmatpush1.msra.mxu0 0.0
    %6896 = vmatprep.subr.mxu0 0.0
    %6897 = vmatpush1.msra.mxu0 0.0
    %6898 = vmatprep.subr.mxu0 0.0
    %6899 = vmatpush1.msra.mxu0 0.0
    %6900 = vmatprep.subr.mxu0 0.0
    %6901 = vmatpush1.msra.mxu0 0.0
    %6902 = vmatprep.subr.mxu0 0.0
    %6903 = vmatpush1.msra.mxu0 0.0
    %6904 = vmatprep.subr.mxu0 0.0
    %6905 = vmatpush1.msra.mxu0 0.0
    %6906 = vmatprep.subr.mxu0 0.0
    %6907 = vmatpush1.msra.mxu0 0.0
    %6908 = vmatprep.subr.mxu0 0.0
    %6909 = vmatpush1.msra.mxu0 0.0
    %6910 = vmatprep.subr.mxu0 0.0
    %6911 = vmatpush1.msra.mxu0 0.0
    %6912 = vmatprep.subr.mxu0 0.0
    %6913 = vmatpush1.msra.mxu0 0.0
    %6914 = vmatprep.subr.mxu0 0.0
    %6915 = vmatpush1.msra.mxu0 0.0
    %6916 = vmatprep.subr.mxu0 0.0
    %6917 = vmatpush1.msra.mxu0 0.0
    %6918 = vmatprep.subr.mxu0 0.0
    %6919 = vmatpush1.msra.mxu0 0.0
    %6920 = vmatprep.subr.mxu0 0.0
    %6921 = vmatpush1.msra.mxu0 0.0
    %6922 = vmatprep.subr.mxu0 0.0
    %6923 = vmatpush1.msra.mxu0 0.0
    %6924 = vmatprep.mubr.f32.mxu0 0.0
    %6925 = vmatmul.mubr.f32.gmra.mrb[0].mxu0 %v6852
    %v6926 = vpop.f32.mrb[0].mxu0
    %v6927 = vadd.f32 0.0, %v6926
    %v6928 = vpop.f32.mrb[0].mxu0
    %6929 = vmatprep.mubr.f32.mxu0 0.0
    %6930 = vmatmul.mubr.f32.gmra.mrb[0].mxu0 %v6855
    %v6931 = vpop.f32.mrb[0].mxu0
    %v6932 = vadd.f32 0.0, %v6931
    %v6933 = vpop.f32.mrb[0].mxu0
    %6934 = vdwg.mxu0
    %6935 = vrot.lane.b32.xlu0 %v5853, 96
    %v6936 = vpop.permute.xlu0 %6935
    %6937 = vrot.lane.b32.xlu0 %v5857, 96
    %v6938 = vpop.permute.xlu0 %6937
    %6939 = vrot.lane.b32.xlu0 %v5896, 96
    %v6940 = vpop.permute.xlu0 %6939
    %6941 = vrot.lane.b32.xlu0 %v5900, 96
    %v6942 = vpop.permute.xlu0 %6941
    %v6943 = vsel %vm1664, %v6936, 0
    %v6945 = vsel %vm1664, %v6938, 0
    %v6947 = vsel %vm1664, %v6940, 0
    %v6949 = vsel %vm1664, %v6942, 0
    %6951 = vmatprep.subr.mxu0 0.0
    %6952 = vmatpush1.xpose.msra.mxu0 %v6947
    %6953 = vmatprep.subr.mxu0 0.0
    %6954 = vmatpush1.xpose.msra.mxu0 %v6949
    %6955 = vmatprep.subr.mxu0 0.0
    %6956 = vmatpush1.xpose.msra.mxu0 0.0
    %6957 = vmatprep.subr.mxu0 0.0
    %6958 = vmatpush1.xpose.msra.mxu0 0.0
    %6959 = vmatprep.subr.mxu0 0.0
    %6960 = vmatpush1.xpose.msra.mxu0 0.0
    %6961 = vmatprep.subr.mxu0 0.0
    %6962 = vmatpush1.xpose.msra.mxu0 0.0
    %6963 = vmatprep.subr.mxu0 0.0
    %6964 = vmatpush1.xpose.msra.mxu0 0.0
    %6965 = vmatprep.subr.mxu0 0.0
    %6966 = vmatpush1.xpose.msra.mxu0 0.0
    %6967 = vmatprep.subr.mxu0 0.0
    %6968 = vmatpush1.xpose.msra.mxu0 0.0
    %6969 = vmatprep.subr.mxu0 0.0
    %6970 = vmatpush1.xpose.msra.mxu0 0.0
    %6971 = vmatprep.subr.mxu0 0.0
    %6972 = vmatpush1.xpose.msra.mxu0 0.0
    %6973 = vmatprep.subr.mxu0 0.0
    %6974 = vmatpush1.xpose.msra.mxu0 0.0
    %6975 = vmatprep.subr.mxu0 0.0
    %6976 = vmatpush1.xpose.msra.mxu0 0.0
    %6977 = vmatprep.subr.mxu0 0.0
    %6978 = vmatpush1.xpose.msra.mxu0 0.0
    %6979 = vmatprep.subr.mxu0 0.0
    %6980 = vmatpush1.xpose.msra.mxu0 0.0
    %6981 = vmatprep.subr.mxu0 0.0
    %6982 = vmatpush1.xpose.msra.mxu0 0.0
    %6983 = vmatprep.subr.mxu0 0.0
    %6984 = vmatpush1.xpose.msra.mxu0 0.0
    %6985 = vmatprep.subr.mxu0 0.0
    %6986 = vmatpush1.xpose.msra.mxu0 0.0
    %6987 = vmatprep.subr.mxu0 0.0
    %6988 = vmatpush1.xpose.msra.mxu0 0.0
    %6989 = vmatprep.subr.mxu0 0.0
    %6990 = vmatpush1.xpose.msra.mxu0 0.0
    %6991 = vmatprep.subr.mxu0 0.0
    %6992 = vmatpush1.xpose.msra.mxu0 0.0
    %6993 = vmatprep.subr.mxu0 0.0
    %6994 = vmatpush1.xpose.msra.mxu0 0.0
    %6995 = vmatprep.subr.mxu0 0.0
    %6996 = vmatpush1.xpose.msra.mxu0 0.0
    %6997 = vmatprep.subr.mxu0 0.0
    %6998 = vmatpush1.xpose.msra.mxu0 0.0
    %6999 = vmatprep.subr.mxu0 0.0
    %7000 = vmatpush1.xpose.msra.mxu0 0.0
    %7001 = vmatprep.subr.mxu0 0.0
    %7002 = vmatpush1.xpose.msra.mxu0 0.0
    %7003 = vmatprep.subr.mxu0 0.0
    %7004 = vmatpush1.xpose.msra.mxu0 0.0
    %7005 = vmatprep.subr.mxu0 0.0
    %7006 = vmatpush1.xpose.msra.mxu0 0.0
    %7007 = vmatprep.subr.mxu0 0.0
    %7008 = vmatpush1.xpose.msra.mxu0 0.0
    %7009 = vmatprep.subr.mxu0 0.0
    %7010 = vmatpush1.xpose.msra.mxu0 0.0
    %7011 = vmatprep.subr.mxu0 0.0
    %7012 = vmatpush1.xpose.msra.mxu0 0.0
    %7013 = vmatprep.subr.mxu0 0.0
    %7014 = vmatpush1.xpose.msra.mxu0 0.0
    %7015 = vmatprep.mubr.f32.mxu0 0.0
    %7016 = vmatmul.mubr.f32.gmra.mrb[0].mxu0 %v6943
    %v7017 = vpop.f32.mrb[0].mxu0
    %v7018 = vadd.f32 0.0, %v7017
    %v7019 = vpop.f32.mrb[0].mxu0
    %7020 = vmatprep.mubr.f32.mxu0 0.0
    %7021 = vmatmul.mubr.f32.gmra.mrb[0].mxu0 %v6945
    %v7022 = vpop.f32.mrb[0].mxu0
    %v7023 = vadd.f32 0.0, %v7022
    %v7024 = vpop.f32.mrb[0].mxu0
    %7025 = vdwg.mxu0
    %v7026 = vsel %vm3974, %v7018, -inf
    %7027 = vmax.xlane.f32.xlu0 %v7026
    %v7028 = vpop.xlane.xlu0 %7027
    %v7029 = vsel %vm3978, %v7023, -inf
    %7030 = vmax.xlane.f32.xlu0 %v7029
    %v7031 = vpop.xlane.xlu0 %7030
    %v7032 = vsub.f32 %v7018, %v7028
    %v7033 = vsub.f32 %v7023, %v7031
    %v7034 = vmul.f32 %v7032, 1.442695
    %v7035 = vpow.pop %v7034
    %v7036 = vmul.f32 %v7033, 1.442695
    %v7037 = vpow.pop %v7036
    %v7038 = vsel %vm3974, %v7035, 0.0
    %7039 = vadd.xlane.f32.xlu0 %v7038
    %v7040 = vpop.xlane.xlu0 %7039
    %v7041 = vsel %vm3978, %v7037, 0.0
    %7042 = vadd.xlane.f32.xlu0 %v7041
    %v7043 = vpop.xlane.xlu0 %7042
    %v7044 = vrcp.pop %v7040
    %v7045 = vmul.f32 %v7035, %v7044
    %v7046 = vrcp.pop %v7043
    %v7047 = vmul.f32 %v7037, %v7046
    %7049 = vrot.lane.b32.xlu0 %v5939, 96
    %v7050 = vpop.permute.xlu0 %7049
    %7051 = vrot.lane.b32.xlu0 %v5943, 96
    %v7052 = vpop.permute.xlu0 %7051
    %v7055 = vsel %vm3974, %v7045, 0
    %v7058 = vsel %vm3974, %v7047, 0
    %v7060 = vsel %vm3679, %v7052, 0
    %7062 = vmatprep.subr.mxu0 0.0
    %7063 = vmatpush1.msra.mxu0 %v7050
    %7064 = vmatprep.subr.mxu0 0.0
    %7065 = vmatpush1.msra.mxu0 %v7060
    %7066 = vmatprep.subr.mxu0 0.0
    %7067 = vmatpush1.msra.mxu0 0.0
    %7068 = vmatprep.subr.mxu0 0.0
    %7069 = vmatpush1.msra.mxu0 0.0
    %7070 = vmatprep.subr.mxu0 0.0
    %7071 = vmatpush1.msra.mxu0 0.0
    %7072 = vmatprep.subr.mxu0 0.0
    %7073 = vmatpush1.msra.mxu0 0.0
    %7074 = vmatprep.subr.mxu0 0.0
    %7075 = vmatpush1.msra.mxu0 0.0
    %7076 = vmatprep.subr.mxu0 0.0
    %7077 = vmatpush1.msra.mxu0 0.0
    %7078 = vmatprep.subr.mxu0 0.0
    %7079 = vmatpush1.msra.mxu0 0.0
    %7080 = vmatprep.subr.mxu0 0.0
    %7081 = vmatpush1.msra.mxu0 0.0
    %7082 = vmatprep.subr.mxu0 0.0
    %7083 = vmatpush1.msra.mxu0 0.0
    %7084 = vmatprep.subr.mxu0 0.0
    %7085 = vmatpush1.msra.mxu0 0.0
    %7086 = vmatprep.subr.mxu0 0.0
    %7087 = vmatpush1.msra.mxu0 0.0
    %7088 = vmatprep.subr.mxu0 0.0
    %7089 = vmatpush1.msra.mxu0 0.0
    %7090 = vmatprep.subr.mxu0 0.0
    %7091 = vmatpush1.msra.mxu0 0.0
    %7092 = vmatprep.subr.mxu0 0.0
    %7093 = vmatpush1.msra.mxu0 0.0
    %7094 = vmatprep.subr.mxu0 0.0
    %7095 = vmatpush1.msra.mxu0 0.0
    %7096 = vmatprep.subr.mxu0 0.0
    %7097 = vmatpush1.msra.mxu0 0.0
    %7098 = vmatprep.subr.mxu0 0.0
    %7099 = vmatpush1.msra.mxu0 0.0
    %7100 = vmatprep.subr.mxu0 0.0
    %7101 = vmatpush1.msra.mxu0 0.0
    %7102 = vmatprep.subr.mxu0 0.0
    %7103 = vmatpush1.msra.mxu0 0.0
    %7104 = vmatprep.subr.mxu0 0.0
    %7105 = vmatpush1.msra.mxu0 0.0
    %7106 = vmatprep.subr.mxu0 0.0
    %7107 = vmatpush1.msra.mxu0 0.0
    %7108 = vmatprep.subr.mxu0 0.0
    %7109 = vmatpush1.msra.mxu0 0.0
    %7110 = vmatprep.subr.mxu0 0.0
    %7111 = vmatpush1.msra.mxu0 0.0
    %7112 = vmatprep.subr.mxu0 0.0
    %7113 = vmatpush1.msra.mxu0 0.0
    %7114 = vmatprep.subr.mxu0 0.0
    %7115 = vmatpush1.msra.mxu0 0.0
    %7116 = vmatprep.subr.mxu0 0.0
    %7117 = vmatpush1.msra.mxu0 0.0
    %7118 = vmatprep.subr.mxu0 0.0
    %7119 = vmatpush1.msra.mxu0 0.0
    %7120 = vmatprep.subr.mxu0 0.0
    %7121 = vmatpush1.msra.mxu0 0.0
    %7122 = vmatprep.subr.mxu0 0.0
    %7123 = vmatpush1.msra.mxu0 0.0
    %7124 = vmatprep.subr.mxu0 0.0
    %7125 = vmatpush1.msra.mxu0 0.0
    %7126 = vmatprep.mubr.f32.mxu0 0.0
    %7127 = vmatmul.mubr.f32.gmra.mrb[0].mxu0 %v7055
    %v7128 = vpop.f32.mrb[0].mxu0
    %v7129 = vadd.f32 0.0, %v7128
    %v7130 = vpop.f32.mrb[0].mxu0
    %7131 = vmatprep.mubr.f32.mxu0 0.0
    %7132 = vmatmul.mubr.f32.gmra.mrb[0].mxu0 %v7058
    %v7133 = vpop.f32.mrb[0].mxu0
    %v7134 = vadd.f32 0.0, %v7133
    %v7135 = vpop.f32.mrb[0].mxu0
    %7136 = vdwg.mxu0
    %7137 = vrot.lane.b32.xlu0 %v5853, 64
    %v7138 = vpop.permute.xlu0 %7137
    %7139 = vrot.lane.b32.xlu0 %v5857, 64
    %v7140 = vpop.permute.xlu0 %7139
    %7141 = vrot.lane.b32.xlu0 %v5896, 64
    %v7142 = vpop.permute.xlu0 %7141
    %7143 = vrot.lane.b32.xlu0 %v5900, 64
    %v7144 = vpop.permute.xlu0 %7143
    %v7145 = vsel %vm1664, %v7138, 0
    %v7147 = vsel %vm1664, %v7140, 0
    %v7149 = vsel %vm1664, %v7142, 0
    %v7151 = vsel %vm1664, %v7144, 0
    %7153 = vmatprep.subr.mxu0 0.0
    %7154 = vmatpush1.xpose.msra.mxu0 %v7149
    %7155 = vmatprep.subr.mxu0 0.0
    %7156 = vmatpush1.xpose.msra.mxu0 %v7151
    %7157 = vmatprep.subr.mxu0 0.0
    %7158 = vmatpush1.xpose.msra.mxu0 0.0
    %7159 = vmatprep.subr.mxu0 0.0
    %7160 = vmatpush1.xpose.msra.mxu0 0.0
    %7161 = vmatprep.subr.mxu0 0.0
    %7162 = vmatpush1.xpose.msra.mxu0 0.0
    %7163 = vmatprep.subr.mxu0 0.0
    %7164 = vmatpush1.xpose.msra.mxu0 0.0
    %7165 = vmatprep.subr.mxu0 0.0
    %7166 = vmatpush1.xpose.msra.mxu0 0.0
    %7167 = vmatprep.subr.mxu0 0.0
    %7168 = vmatpush1.xpose.msra.mxu0 0.0
    %7169 = vmatprep.subr.mxu0 0.0
    %7170 = vmatpush1.xpose.msra.mxu0 0.0
    %7171 = vmatprep.subr.mxu0 0.0
    %7172 = vmatpush1.xpose.msra.mxu0 0.0
    %7173 = vmatprep.subr.mxu0 0.0
    %7174 = vmatpush1.xpose.msra.mxu0 0.0
    %7175 = vmatprep.subr.mxu0 0.0
    %7176 = vmatpush1.xpose.msra.mxu0 0.0
    %7177 = vmatprep.subr.mxu0 0.0
    %7178 = vmatpush1.xpose.msra.mxu0 0.0
    %7179 = vmatprep.subr.mxu0 0.0
    %7180 = vmatpush1.xpose.msra.mxu0 0.0
    %7181 = vmatprep.subr.mxu0 0.0
    %7182 = vmatpush1.xpose.msra.mxu0 0.0
    %7183 = vmatprep.subr.mxu0 0.0
    %7184 = vmatpush1.xpose.msra.mxu0 0.0
    %7185 = vmatprep.subr.mxu0 0.0
    %7186 = vmatpush1.xpose.msra.mxu0 0.0
    %7187 = vmatprep.subr.mxu0 0.0
    %7188 = vmatpush1.xpose.msra.mxu0 0.0
    %7189 = vmatprep.subr.mxu0 0.0
    %7190 = vmatpush1.xpose.msra.mxu0 0.0
    %7191 = vmatprep.subr.mxu0 0.0
    %7192 = vmatpush1.xpose.msra.mxu0 0.0
    %7193 = vmatprep.subr.mxu0 0.0
    %7194 = vmatpush1.xpose.msra.mxu0 0.0
    %7195 = vmatprep.subr.mxu0 0.0
    %7196 = vmatpush1.xpose.msra.mxu0 0.0
    %7197 = vmatprep.subr.mxu0 0.0
    %7198 = vmatpush1.xpose.msra.mxu0 0.0
    %7199 = vmatprep.subr.mxu0 0.0
    %7200 = vmatpush1.xpose.msra.mxu0 0.0
    %7201 = vmatprep.subr.mxu0 0.0
    %7202 = vmatpush1.xpose.msra.mxu0 0.0
    %7203 = vmatprep.subr.mxu0 0.0
    %7204 = vmatpush1.xpose.msra.mxu0 0.0
    %7205 = vmatprep.subr.mxu0 0.0
    %7206 = vmatpush1.xpose.msra.mxu0 0.0
    %7207 = vmatprep.subr.mxu0 0.0
    %7208 = vmatpush1.xpose.msra.mxu0 0.0
    %7209 = vmatprep.subr.mxu0 0.0
    %7210 = vmatpush1.xpose.msra.mxu0 0.0
    %7211 = vmatprep.subr.mxu0 0.0
    %7212 = vmatpush1.xpose.msra.mxu0 0.0
    %7213 = vmatprep.subr.mxu0 0.0
    %7214 = vmatpush1.xpose.msra.mxu0 0.0
    %7215 = vmatprep.subr.mxu0 0.0
    %7216 = vmatpush1.xpose.msra.mxu0 0.0
    %7217 = vmatprep.mubr.f32.mxu0 0.0
    %7218 = vmatmul.mubr.f32.gmra.mrb[0].mxu0 %v7145
    %v7219 = vpop.f32.mrb[0].mxu0
    %v7220 = vadd.f32 0.0, %v7219
    %v7221 = vpop.f32.mrb[0].mxu0
    %7222 = vmatprep.mubr.f32.mxu0 0.0
    %7223 = vmatmul.mubr.f32.gmra.mrb[0].mxu0 %v7147
    %v7224 = vpop.f32.mrb[0].mxu0
    %v7225 = vadd.f32 0.0, %v7224
    %v7226 = vpop.f32.mrb[0].mxu0
    %7227 = vdwg.mxu0
    %v7228 = vsel %vm3974, %v7220, -inf
    %7229 = vmax.xlane.f32.xlu0 %v7228
    %v7230 = vpop.xlane.xlu0 %7229
    %v7231 = vsel %vm3978, %v7225, -inf
    %7232 = vmax.xlane.f32.xlu0 %v7231
    %v7233 = vpop.xlane.xlu0 %7232
    %v7234 = vsub.f32 %v7220, %v7230
    %v7235 = vsub.f32 %v7225, %v7233
    %v7236 = vmul.f32 %v7234, 1.442695
    %v7237 = vpow.pop %v7236
    %v7238 = vmul.f32 %v7235, 1.442695
    %v7239 = vpow.pop %v7238
    %v7240 = vsel %vm3974, %v7237, 0.0
    %7241 = vadd.xlane.f32.xlu0 %v7240
    %v7242 = vpop.xlane.xlu0 %7241
    %v7243 = vsel %vm3978, %v7239, 0.0
    %7244 = vadd.xlane.f32.xlu0 %v7243
    %v7245 = vpop.xlane.xlu0 %7244
    %v7246 = vrcp.pop %v7242
    %v7247 = vmul.f32 %v7237, %v7246
    %v7248 = vrcp.pop %v7245
    %v7249 = vmul.f32 %v7239, %v7248
    %7250 = vrot.lane.b32.xlu0 %v5939, 64
    %v7251 = vpop.permute.xlu0 %7250
    %7252 = vrot.lane.b32.xlu0 %v5943, 64
    %v7253 = vpop.permute.xlu0 %7252
    %v7256 = vsel %vm3974, %v7247, 0
    %v7259 = vsel %vm3974, %v7249, 0
    %v7261 = vsel %vm3679, %v7253, 0
    %7263 = vmatprep.subr.mxu0 0.0
    %7264 = vmatpush1.msra.mxu0 %v7251
    %7265 = vmatprep.subr.mxu0 0.0
    %7266 = vmatpush1.msra.mxu0 %v7261
    %7267 = vmatprep.subr.mxu0 0.0
    %7268 = vmatpush1.msra.mxu0 0.0
    %7269 = vmatprep.subr.mxu0 0.0
    %7270 = vmatpush1.msra.mxu0 0.0
    %7271 = vmatprep.subr.mxu0 0.0
    %7272 = vmatpush1.msra.mxu0 0.0
    %7273 = vmatprep.subr.mxu0 0.0
    %7274 = vmatpush1.msra.mxu0 0.0
    %7275 = vmatprep.subr.mxu0 0.0
    %7276 = vmatpush1.msra.mxu0 0.0
    %7277 = vmatprep.subr.mxu0 0.0
    %7278 = vmatpush1.msra.mxu0 0.0
    %7279 = vmatprep.subr.mxu0 0.0
    %7280 = vmatpush1.msra.mxu0 0.0
    %7281 = vmatprep.subr.mxu0 0.0
    %7282 = vmatpush1.msra.mxu0 0.0
    %7283 = vmatprep.subr.mxu0 0.0
    %7284 = vmatpush1.msra.mxu0 0.0
    %7285 = vmatprep.subr.mxu0 0.0
    %7286 = vmatpush1.msra.mxu0 0.0
    %7287 = vmatprep.subr.mxu0 0.0
    %7288 = vmatpush1.msra.mxu0 0.0
    %7289 = vmatprep.subr.mxu0 0.0
    %7290 = vmatpush1.msra.mxu0 0.0
    %7291 = vmatprep.subr.mxu0 0.0
    %7292 = vmatpush1.msra.mxu0 0.0
    %7293 = vmatprep.subr.mxu0 0.0
    %7294 = vmatpush1.msra.mxu0 0.0
    %7295 = vmatprep.subr.mxu0 0.0
    %7296 = vmatpush1.msra.mxu0 0.0
    %7297 = vmatprep.subr.mxu0 0.0
    %7298 = vmatpush1.msra.mxu0 0.0
    %7299 = vmatprep.subr.mxu0 0.0
    %7300 = vmatpush1.msra.mxu0 0.0
    %7301 = vmatprep.subr.mxu0 0.0
    %7302 = vmatpush1.msra.mxu0 0.0
    %7303 = vmatprep.subr.mxu0 0.0
    %7304 = vmatpush1.msra.mxu0 0.0
    %7305 = vmatprep.subr.mxu0 0.0
    %7306 = vmatpush1.msra.mxu0 0.0
    %7307 = vmatprep.subr.mxu0 0.0
    %7308 = vmatpush1.msra.mxu0 0.0
    %7309 = vmatprep.subr.mxu0 0.0
    %7310 = vmatpush1.msra.mxu0 0.0
    %7311 = vmatprep.subr.mxu0 0.0
    %7312 = vmatpush1.msra.mxu0 0.0
    %7313 = vmatprep.subr.mxu0 0.0
    %7314 = vmatpush1.msra.mxu0 0.0
    %7315 = vmatprep.subr.mxu0 0.0
    %7316 = vmatpush1.msra.mxu0 0.0
    %7317 = vmatprep.subr.mxu0 0.0
    %7318 = vmatpush1.msra.mxu0 0.0
    %7319 = vmatprep.subr.mxu0 0.0
    %7320 = vmatpush1.msra.mxu0 0.0
    %7321 = vmatprep.subr.mxu0 0.0
    %7322 = vmatpush1.msra.mxu0 0.0
    %7323 = vmatprep.subr.mxu0 0.0
    %7324 = vmatpush1.msra.mxu0 0.0
    %7325 = vmatprep.subr.mxu0 0.0
    %7326 = vmatpush1.msra.mxu0 0.0
    %7327 = vmatprep.mubr.f32.mxu0 0.0
    %7328 = vmatmul.mubr.f32.gmra.mrb[0].mxu0 %v7256
    %v7329 = vpop.f32.mrb[0].mxu0
    %v7330 = vadd.f32 0.0, %v7329
    %v7331 = vpop.f32.mrb[0].mxu0
    %7332 = vmatprep.mubr.f32.mxu0 0.0
    %7333 = vmatmul.mubr.f32.gmra.mrb[0].mxu0 %v7259
    %v7334 = vpop.f32.mrb[0].mxu0
    %v7335 = vadd.f32 0.0, %v7334
    %v7336 = vpop.f32.mrb[0].mxu0
    %7337 = vdwg.mxu0
    %7338 = vrot.lane.b32.xlu0 %v5853, 32
    %v7339 = vpop.permute.xlu0 %7338
    %7340 = vrot.lane.b32.xlu0 %v5857, 32
    %v7341 = vpop.permute.xlu0 %7340
    %7342 = vrot.lane.b32.xlu0 %v5896, 32
    %v7343 = vpop.permute.xlu0 %7342
    %7344 = vrot.lane.b32.xlu0 %v5900, 32
    %v7345 = vpop.permute.xlu0 %7344
    %v7346 = vsel %vm1664, %v7339, 0
    %v7348 = vsel %vm1664, %v7341, 0
    %v7350 = vsel %vm1664, %v7343, 0
    %v7352 = vsel %vm1664, %v7345, 0
    %7354 = vmatprep.subr.mxu0 0.0
    %7355 = vmatpush1.xpose.msra.mxu0 %v7350
    %7356 = vmatprep.subr.mxu0 0.0
    %7357 = vmatpush1.xpose.msra.mxu0 %v7352
    %7358 = vmatprep.subr.mxu0 0.0
    %7359 = vmatpush1.xpose.msra.mxu0 0.0
    %7360 = vmatprep.subr.mxu0 0.0
    %7361 = vmatpush1.xpose.msra.mxu0 0.0
    %7362 = vmatprep.subr.mxu0 0.0
    %7363 = vmatpush1.xpose.msra.mxu0 0.0
    %7364 = vmatprep.subr.mxu0 0.0
    %7365 = vmatpush1.xpose.msra.mxu0 0.0
    %7366 = vmatprep.subr.mxu0 0.0
    %7367 = vmatpush1.xpose.msra.mxu0 0.0
    %7368 = vmatprep.subr.mxu0 0.0
    %7369 = vmatpush1.xpose.msra.mxu0 0.0
    %7370 = vmatprep.subr.mxu0 0.0
    %7371 = vmatpush1.xpose.msra.mxu0 0.0
    %7372 = vmatprep.subr.mxu0 0.0
    %7373 = vmatpush1.xpose.msra.mxu0 0.0
    %7374 = vmatprep.subr.mxu0 0.0
    %7375 = vmatpush1.xpose.msra.mxu0 0.0
    %7376 = vmatprep.subr.mxu0 0.0
    %7377 = vmatpush1.xpose.msra.mxu0 0.0
    %7378 = vmatprep.subr.mxu0 0.0
    %7379 = vmatpush1.xpose.msra.mxu0 0.0
    %7380 = vmatprep.subr.mxu0 0.0
    %7381 = vmatpush1.xpose.msra.mxu0 0.0
    %7382 = vmatprep.subr.mxu0 0.0
    %7383 = vmatpush1.xpose.msra.mxu0 0.0
    %7384 = vmatprep.subr.mxu0 0.0
    %7385 = vmatpush1.xpose.msra.mxu0 0.0
    %7386 = vmatprep.subr.mxu0 0.0
    %7387 = vmatpush1.xpose.msra.mxu0 0.0
    %7388 = vmatprep.subr.mxu0 0.0
    %7389 = vmatpush1.xpose.msra.mxu0 0.0
    %7390 = vmatprep.subr.mxu0 0.0
    %7391 = vmatpush1.xpose.msra.mxu0 0.0
    %7392 = vmatprep.subr.mxu0 0.0
    %7393 = vmatpush1.xpose.msra.mxu0 0.0
    %7394 = vmatprep.subr.mxu0 0.0
    %7395 = vmatpush1.xpose.msra.mxu0 0.0
    %7396 = vmatprep.subr.mxu0 0.0
    %7397 = vmatpush1.xpose.msra.mxu0 0.0
    %7398 = vmatprep.subr.mxu0 0.0
    %7399 = vmatpush1.xpose.msra.mxu0 0.0
    %7400 = vmatprep.subr.mxu0 0.0
    %7401 = vmatpush1.xpose.msra.mxu0 0.0
    %7402 = vmatprep.subr.mxu0 0.0
    %7403 = vmatpush1.xpose.msra.mxu0 0.0
    %7404 = vmatprep.subr.mxu0 0.0
    %7405 = vmatpush1.xpose.msra.mxu0 0.0
    %7406 = vmatprep.subr.mxu0 0.0
    %7407 = vmatpush1.xpose.msra.mxu0 0.0
    %7408 = vmatprep.subr.mxu0 0.0
    %7409 = vmatpush1.xpose.msra.mxu0 0.0
    %7410 = vmatprep.subr.mxu0 0.0
    %7411 = vmatpush1.xpose.msra.mxu0 0.0
    %7412 = vmatprep.subr.mxu0 0.0
    %7413 = vmatpush1.xpose.msra.mxu0 0.0
    %7414 = vmatprep.subr.mxu0 0.0
    %7415 = vmatpush1.xpose.msra.mxu0 0.0
    %7416 = vmatprep.subr.mxu0 0.0
    %7417 = vmatpush1.xpose.msra.mxu0 0.0
    %7418 = vmatprep.mubr.f32.mxu0 0.0
    %7419 = vmatmul.mubr.f32.gmra.mrb[0].mxu0 %v7346
    %v7420 = vpop.f32.mrb[0].mxu0
    %v7421 = vadd.f32 0.0, %v7420
    %v7422 = vpop.f32.mrb[0].mxu0
    %7423 = vmatprep.mubr.f32.mxu0 0.0
    %7424 = vmatmul.mubr.f32.gmra.mrb[0].mxu0 %v7348
    %v7425 = vpop.f32.mrb[0].mxu0
    %v7426 = vadd.f32 0.0, %v7425
    %v7427 = vpop.f32.mrb[0].mxu0
    %7428 = vdwg.mxu0
    %v7429 = vsel %vm3974, %v7421, -inf
    %7430 = vmax.xlane.f32.xlu0 %v7429
    %v7431 = vpop.xlane.xlu0 %7430
    %v7432 = vsel %vm3978, %v7426, -inf
    %7433 = vmax.xlane.f32.xlu0 %v7432
    %v7434 = vpop.xlane.xlu0 %7433
    %v7435 = vsub.f32 %v7421, %v7431
    %v7436 = vsub.f32 %v7426, %v7434
    %v7437 = vmul.f32 %v7435, 1.442695
    %v7438 = vpow.pop %v7437
    %v7439 = vmul.f32 %v7436, 1.442695
    %v7440 = vpow.pop %v7439
    %v7441 = vsel %vm3974, %v7438, 0.0
    %7442 = vadd.xlane.f32.xlu0 %v7441
    %v7443 = vpop.xlane.xlu0 %7442
    %v7444 = vsel %vm3978, %v7440, 0.0
    %7445 = vadd.xlane.f32.xlu0 %v7444
    %v7446 = vpop.xlane.xlu0 %7445
    %v7447 = vrcp.pop %v7443
    %v7448 = vmul.f32 %v7438, %v7447
    %v7449 = vrcp.pop %v7446
    %v7450 = vmul.f32 %v7440, %v7449
    %7451 = vrot.lane.b32.xlu0 %v5939, 32
    %v7452 = vpop.permute.xlu0 %7451
    %7453 = vrot.lane.b32.xlu0 %v5943, 32
    %v7454 = vpop.permute.xlu0 %7453
    %v7457 = vsel %vm3974, %v7448, 0
    %v7460 = vsel %vm3974, %v7450, 0
    %v7462 = vsel %vm3679, %v7454, 0
    %7464 = vmatprep.subr.mxu0 0.0
    %7465 = vmatpush1.msra.mxu0 %v7452
    %7466 = vmatprep.subr.mxu0 0.0
    %7467 = vmatpush1.msra.mxu0 %v7462
    %7468 = vmatprep.subr.mxu0 0.0
    %7469 = vmatpush1.msra.mxu0 0.0
    %7470 = vmatprep.subr.mxu0 0.0
    %7471 = vmatpush1.msra.mxu0 0.0
    %7472 = vmatprep.subr.mxu0 0.0
    %7473 = vmatpush1.msra.mxu0 0.0
    %7474 = vmatprep.subr.mxu0 0.0
    %7475 = vmatpush1.msra.mxu0 0.0
    %7476 = vmatprep.subr.mxu0 0.0
    %7477 = vmatpush1.msra.mxu0 0.0
    %7478 = vmatprep.subr.mxu0 0.0
    %7479 = vmatpush1.msra.mxu0 0.0
    %7480 = vmatprep.subr.mxu0 0.0
    %7481 = vmatpush1.msra.mxu0 0.0
    %7482 = vmatprep.subr.mxu0 0.0
    %7483 = vmatpush1.msra.mxu0 0.0
    %7484 = vmatprep.subr.mxu0 0.0
    %7485 = vmatpush1.msra.mxu0 0.0
    %7486 = vmatprep.subr.mxu0 0.0
    %7487 = vmatpush1.msra.mxu0 0.0
    %7488 = vmatprep.subr.mxu0 0.0
    %7489 = vmatpush1.msra.mxu0 0.0
    %7490 = vmatprep.subr.mxu0 0.0
    %7491 = vmatpush1.msra.mxu0 0.0
    %7492 = vmatprep.subr.mxu0 0.0
    %7493 = vmatpush1.msra.mxu0 0.0
    %7494 = vmatprep.subr.mxu0 0.0
    %7495 = vmatpush1.msra.mxu0 0.0
    %7496 = vmatprep.subr.mxu0 0.0
    %7497 = vmatpush1.msra.mxu0 0.0
    %7498 = vmatprep.subr.mxu0 0.0
    %7499 = vmatpush1.msra.mxu0 0.0
    %7500 = vmatprep.subr.mxu0 0.0
    %7501 = vmatpush1.msra.mxu0 0.0
    %7502 = vmatprep.subr.mxu0 0.0
    %7503 = vmatpush1.msra.mxu0 0.0
    %7504 = vmatprep.subr.mxu0 0.0
    %7505 = vmatpush1.msra.mxu0 0.0
    %7506 = vmatprep.subr.mxu0 0.0
    %7507 = vmatpush1.msra.mxu0 0.0
    %7508 = vmatprep.subr.mxu0 0.0
    %7509 = vmatpush1.msra.mxu0 0.0
    %7510 = vmatprep.subr.mxu0 0.0
    %7511 = vmatpush1.msra.mxu0 0.0
    %7512 = vmatprep.subr.mxu0 0.0
    %7513 = vmatpush1.msra.mxu0 0.0
    %7514 = vmatprep.subr.mxu0 0.0
    %7515 = vmatpush1.msra.mxu0 0.0
    %7516 = vmatprep.subr.mxu0 0.0
    %7517 = vmatpush1.msra.mxu0 0.0
    %7518 = vmatprep.subr.mxu0 0.0
    %7519 = vmatpush1.msra.mxu0 0.0
    %7520 = vmatprep.subr.mxu0 0.0
    %7521 = vmatpush1.msra.mxu0 0.0
    %7522 = vmatprep.subr.mxu0 0.0
    %7523 = vmatpush1.msra.mxu0 0.0
    %7524 = vmatprep.subr.mxu0 0.0
    %7525 = vmatpush1.msra.mxu0 0.0
    %7526 = vmatprep.subr.mxu0 0.0
    %7527 = vmatpush1.msra.mxu0 0.0
    %7528 = vmatprep.mubr.f32.mxu0 0.0
    %7529 = vmatmul.mubr.f32.gmra.mrb[0].mxu0 %v7457
    %v7530 = vpop.f32.mrb[0].mxu0
    %v7531 = vadd.f32 0.0, %v7530
    %v7532 = vpop.f32.mrb[0].mxu0
    %7533 = vmatprep.mubr.f32.mxu0 0.0
    %7534 = vmatmul.mubr.f32.gmra.mrb[0].mxu0 %v7460
    %v7535 = vpop.f32.mrb[0].mxu0
    %v7536 = vadd.f32 0.0, %v7535
    %v7537 = vpop.f32.mrb[0].mxu0
    %7538 = vdwg.mxu0
    %7541 = vrot.lane.b32.xlu0 %v6332, 32
    %v7542 = vpop.permute.xlu0 %7541
    %7543 = vrot.lane.b32.xlu0 %v6337, 32
    %v7544 = vpop.permute.xlu0 %7543
    %7549 = vrot.lane.b32.xlu0 %v6533, 64
    %v7550 = vpop.permute.xlu0 %7549
    %7551 = vrot.lane.b32.xlu0 %v6538, 64
    %v7552 = vpop.permute.xlu0 %7551
    %7557 = vrot.lane.b32.xlu0 %v6734, 96
    %v7558 = vpop.permute.xlu0 %7557
    %7559 = vrot.lane.b32.xlu0 %v6739, 96
    %v7560 = vpop.permute.xlu0 %7559
    %7565 = vrot.lane.b32.xlu0 %v7129, 32
    %v7566 = vpop.permute.xlu0 %7565
    %7567 = vrot.lane.b32.xlu0 %v7134, 32
    %v7568 = vpop.permute.xlu0 %7567
    %7573 = vrot.lane.b32.xlu0 %v7330, 64
    %v7574 = vpop.permute.xlu0 %7573
    %7575 = vrot.lane.b32.xlu0 %v7335, 64
    %v7576 = vpop.permute.xlu0 %7575
    %7581 = vrot.lane.b32.xlu0 %v7531, 96
    %v7582 = vpop.permute.xlu0 %7581
    %7583 = vrot.lane.b32.xlu0 %v7536, 96
    %v7584 = vpop.permute.xlu0 %7583
    %v7587 = vsel %vm1664, %v6130, %v7542
    %v7588 = vsel %vm1664, %v6135, %v7544
    %v7589 = vsel %vm3300, %v7587, %v7550
    %v7590 = vsel %vm3300, %v7588, %v7552
    %v7591 = vsel %vm3303, %v7589, %v7558
    %v7592 = vsel %vm3303, %v7590, %v7560
    %v7593 = vsel %vm1664, %v6927, %v7566
    %v7594 = vsel %vm1664, %v6932, %v7568
    %v7595 = vsel %vm3300, %v7593, %v7574
    %v7596 = vsel %vm3300, %v7594, %v7576
    %v7597 = vsel %vm3303, %v7595, %v7582
    %v7598 = vsel %vm3303, %v7596, %v7584
    %v7599 = vpack.c.bf16 %v7592, %v7591
    %v7600 = vpack.c.bf16 %v7598, %v7597
    %v7602 = vlaneseq
    %v7603 = vshrl.u32 %v7602, 7
    %v7604 = vsub.s32 0, %v7603
    %v7605 = vrot.slane %v5732, %v7604
    %v7606 = vlaneseq
    %v7607 = vshrl.u32 %v7606, 7
    %v7608 = vsub.s32 1, %v7607
    %v7609 = vrot.slane %v5732, %v7608
    %7612 = vmatprep.subr.bf16.mxu0 %v5700
    %7613 = vmatpush1.bf16.msra.mxu0 %v5699
    %7614 = vmatprep.subr.bf16.mxu0 %v5702
    %7615 = vmatpush1.bf16.msra.mxu0 %v5701
    %7616 = vmatprep.subr.bf16.mxu0 %v5704
    %7617 = vmatpush1.bf16.msra.mxu0 %v5703
    %7618 = vmatprep.subr.bf16.mxu0 %v5706
    %7619 = vmatpush1.bf16.msra.mxu0 %v5705
    %7620 = vmatprep.subr.bf16.mxu0 %v5708
    %7621 = vmatpush1.bf16.msra.mxu0 %v5707
    %7622 = vmatprep.subr.bf16.mxu0 %v5710
    %7623 = vmatpush1.bf16.msra.mxu0 %v5709
    %7624 = vmatprep.subr.bf16.mxu0 %v5712
    %7625 = vmatpush1.bf16.msra.mxu0 %v5711
    %7626 = vmatprep.subr.bf16.mxu0 %v5714
    %7627 = vmatpush1.bf16.msra.mxu0 %v5713
    %7628 = vmatprep.subr.bf16.mxu0 %v5716
    %7629 = vmatpush1.bf16.msra.mxu0 %v5715
    %7630 = vmatprep.subr.bf16.mxu0 %v5718
    %7631 = vmatpush1.bf16.msra.mxu0 %v5717
    %7632 = vmatprep.subr.bf16.mxu0 %v5720
    %7633 = vmatpush1.bf16.msra.mxu0 %v5719
    %7634 = vmatprep.subr.bf16.mxu0 %v5722
    %7635 = vmatpush1.bf16.msra.mxu0 %v5721
    %7636 = vmatprep.subr.bf16.mxu0 %v5724
    %7637 = vmatpush1.bf16.msra.mxu0 %v5723
    %7638 = vmatprep.subr.bf16.mxu0 %v5726
    %7639 = vmatpush1.bf16.msra.mxu0 %v5725
    %7640 = vmatprep.subr.bf16.mxu0 %v5728
    %7641 = vmatpush1.bf16.msra.mxu0 %v5727
    %7642 = vmatprep.subr.bf16.mxu0 %v5730
    %7643 = vmatpush1.bf16.msra.mxu0 %v5729
    %7644 = vmatprep.mubr.bf16.mxu0 %v7600
    %7645 = vmatmul.mubr.bf16.gmra.mrb[0].mxu0 %v7599
    %v7646 = vpop.f32.mrb[0].mxu0
    %v7647 = vadd.f32 %v7605, %v7646
    %v7648 = vpop.f32.mrb[0].mxu0
    %v7649 = vadd.f32 %v7609, %v7648
    %v7650 = vpop.f32.mrb[0].mxu0
    %v7651 = vpop.f32.mrb[0].mxu0
    %7652 = vdwg.mxu0
    %v7653 = vadd.f32 %v5812, %v7647
    %v7654 = vadd.f32 %v5813, %v7649
    %s7655 = scalar_lea.vmem [#allocation4], 16
    %v7656 = vld [vmem:[%s7655] ss:$8 sm:$0x3]
    %v7658 = vlaneseq
    %v7659 = vshrl.u32 %v7658, 7
    %v7660 = vsub.s32 0, %v7659
    %v7661 = vrot.slane %v7656, %v7660
    %v7662 = vlaneseq
    %v7663 = vshrl.u32 %v7662, 7
    %v7664 = vsub.s32 1, %v7663
    %v7665 = vrot.slane %v7656, %v7664
    %v7668 = vmul.f32 %v1021, %v7661
    %v7669 = vmul.f32 %v1022, %v7665
    %v7670 = vld [vmem:[#allocation2 + $0x80] sm:$0xff]
    %v7671 = vld [vmem:[#allocation2 + $0x88] sm:$0xff]
    %v7672 = vld [vmem:[#allocation2 + $0x120] sm:$0xff]
    %v7673 = vld [vmem:[#allocation2 + $0x128] sm:$0xff]
    %v7674 = vld [vmem:[#allocation2 + $0x1c0] sm:$0xff]
    %v7675 = vld [vmem:[#allocation2 + $0x1c8] sm:$0xff]
    %v7676 = vld [vmem:[#allocation2 + $0x260] sm:$0xff]
    %v7677 = vld [vmem:[#allocation2 + $0x268] sm:$0xff]
    %v7678 = vld [vmem:[#allocation2 + $0x300] sm:$0xff]
    %v7679 = vld [vmem:[#allocation2 + $0x308] sm:$0xff]
    %v7680 = vld [vmem:[#allocation2 + $0x3a0] sm:$0xff]
    %v7681 = vld [vmem:[#allocation2 + $0x3a8] sm:$0xff]
    %v7682 = vld [vmem:[#allocation2 + $0x440] sm:$0xff]
    %v7683 = vld [vmem:[#allocation2 + $0x448] sm:$0xff]
    %v7684 = vld [vmem:[#allocation2 + $0x4e0] sm:$0xff]
    %v7685 = vld [vmem:[#allocation2 + $0x4e8] sm:$0xff]
    %v7686 = vld [vmem:[#allocation2 + $0x580] sm:$0xff]
    %v7687 = vld [vmem:[#allocation2 + $0x588] sm:$0xff]
    %v7688 = vld [vmem:[#allocation2 + $0x620] sm:$0xff]
    %v7689 = vld [vmem:[#allocation2 + $0x628] sm:$0xff]
    %v7690 = vld [vmem:[#allocation2 + $0x6c0] sm:$0xff]
    %v7691 = vld [vmem:[#allocation2 + $0x6c8] sm:$0xff]
    %v7692 = vld [vmem:[#allocation2 + $0x760] sm:$0xff]
    %v7693 = vld [vmem:[#allocation2 + $0x768] sm:$0xff]
    %v7694 = vld [vmem:[#allocation2 + $0x800] sm:$0xff]
    %v7695 = vld [vmem:[#allocation2 + $0x808] sm:$0xff]
    %v7696 = vld [vmem:[#allocation2 + $0x8a0] sm:$0xff]
    %v7697 = vld [vmem:[#allocation2 + $0x8a8] sm:$0xff]
    %v7698 = vld [vmem:[#allocation2 + $0x940] sm:$0xff]
    %v7699 = vld [vmem:[#allocation2 + $0x948] sm:$0xff]
    %v7700 = vld [vmem:[#allocation2 + $0x9e0] sm:$0xff]
    %v7701 = vld [vmem:[#allocation2 + $0x9e8] sm:$0xff]
    %v7702 = vpack.c.bf16 %v7668, %v7668
    %v7703 = vpack.c.bf16 %v7669, %v7669
    %s7704 = scalar_lea.vmem [#allocation4], 18
    %v7705 = vld [vmem:[%s7704] ss:$8 sm:$0x3]
    %v7707 = vlaneseq
    %v7708 = vshrl.u32 %v7707, 7
    %v7709 = vsub.s32 0, %v7708
    %v7710 = vrot.slane %v7705, %v7709
    %v7711 = vlaneseq
    %v7712 = vshrl.u32 %v7711, 7
    %v7713 = vsub.s32 1, %v7712
    %v7714 = vrot.slane %v7705, %v7713
    %7717 = vmatprep.subr.bf16.mxu0 %v7671
    %7718 = vmatpush1.bf16.msra.mxu0 %v7670
    %7719 = vmatprep.subr.bf16.mxu0 %v7673
    %7720 = vmatpush1.bf16.msra.mxu0 %v7672
    %7721 = vmatprep.subr.bf16.mxu0 %v7675
    %7722 = vmatpush1.bf16.msra.mxu0 %v7674
    %7723 = vmatprep.subr.bf16.mxu0 %v7677
    %7724 = vmatpush1.bf16.msra.mxu0 %v7676
    %7725 = vmatprep.subr.bf16.mxu0 %v7679
    %7726 = vmatpush1.bf16.msra.mxu0 %v7678
    %7727 = vmatprep.subr.bf16.mxu0 %v7681
    %7728 = vmatpush1.bf16.msra.mxu0 %v7680
    %7729 = vmatprep.subr.bf16.mxu0 %v7683
    %7730 = vmatpush1.bf16.msra.mxu0 %v7682
    %7731 = vmatprep.subr.bf16.mxu0 %v7685
    %7732 = vmatpush1.bf16.msra.mxu0 %v7684
    %7733 = vmatprep.subr.bf16.mxu0 %v7687
    %7734 = vmatpush1.bf16.msra.mxu0 %v7686
    %7735 = vmatprep.subr.bf16.mxu0 %v7689
    %7736 = vmatpush1.bf16.msra.mxu0 %v7688
    %7737 = vmatprep.subr.bf16.mxu0 %v7691
    %7738 = vmatpush1.bf16.msra.mxu0 %v7690
    %7739 = vmatprep.subr.bf16.mxu0 %v7693
    %7740 = vmatpush1.bf16.msra.mxu0 %v7692
    %7741 = vmatprep.subr.bf16.mxu0 %v7695
    %7742 = vmatpush1.bf16.msra.mxu0 %v7694
    %7743 = vmatprep.subr.bf16.mxu0 %v7697
    %7744 = vmatpush1.bf16.msra.mxu0 %v7696
    %7745 = vmatprep.subr.bf16.mxu0 %v7699
    %7746 = vmatpush1.bf16.msra.mxu0 %v7698
    %7747 = vmatprep.subr.bf16.mxu0 %v7701
    %7748 = vmatpush1.bf16.msra.mxu0 %v7700
    %7749 = vmatprep.mubr.bf16.mxu0 %v7703
    %7750 = vmatmul.mubr.bf16.gmra.mrb[0].mxu0 %v7702
    %v7751 = vpop.f32.mrb[0].mxu0
    %v7752 = vadd.f32 %v7710, %v7751
    %v7753 = vpop.f32.mrb[0].mxu0
    %v7754 = vadd.f32 %v7714, %v7753
    %v7755 = vpop.f32.mrb[0].mxu0
    %v7756 = vpop.f32.mrb[0].mxu0
    %7757 = vdwg.mxu0
    %vm7758 = vcmp.gt.f32.partialorder %v7752, 0.0
    %vm7759 = vcmp.gt.f32.partialorder %v7754, 0.0
    %v7760 = vmul.f32 %v7752, 1.442695
    %v7761 = vpow.pop %v7760
    %v7762 = vmul.f32 %v7754, 1.442695
    %v7763 = vpow.pop %v7762
    %v7764 = vsub.f32 %v7761, 1.0
    %v7765 = vsub.f32 %v7763, 1.0
    %v7766 = vsel %vm7758, %v7752, %v7764
    %v7767 = vsel %vm7759, %v7754, %v7765
    %s7768 = scalar_lea.vmem [#allocation4], 17
    %v7769 = vld [vmem:[%s7768] ss:$8 sm:$0x3]
    %v7771 = vlaneseq
    %v7772 = vshrl.u32 %v7771, 7
    %v7773 = vsub.s32 0, %v7772
    %v7774 = vrot.slane %v7769, %v7773
    %v7775 = vlaneseq
    %v7776 = vshrl.u32 %v7775, 7
    %v7777 = vsub.s32 1, %v7776
    %v7778 = vrot.slane %v7769, %v7777
    %v7781 = vmul.f32 %v1023, %v7774
    %v7782 = vmul.f32 %v1024, %v7778
    %v7783 = vld [vmem:[#allocation2 + $0x90] sm:$0xff]
    %v7784 = vld [vmem:[#allocation2 + $0x98] sm:$0xff]
    %v7785 = vld [vmem:[#allocation2 + $0x130] sm:$0xff]
    %v7786 = vld [vmem:[#allocation2 + $0x138] sm:$0xff]
    %v7787 = vld [vmem:[#allocation2 + $0x1d0] sm:$0xff]
    %v7788 = vld [vmem:[#allocation2 + $0x1d8] sm:$0xff]
    %v7789 = vld [vmem:[#allocation2 + $0x270] sm:$0xff]
    %v7790 = vld [vmem:[#allocation2 + $0x278] sm:$0xff]
    %v7791 = vld [vmem:[#allocation2 + $0x310] sm:$0xff]
    %v7792 = vld [vmem:[#allocation2 + $0x318] sm:$0xff]
    %v7793 = vld [vmem:[#allocation2 + $0x3b0] sm:$0xff]
    %v7794 = vld [vmem:[#allocation2 + $0x3b8] sm:$0xff]
    %v7795 = vld [vmem:[#allocation2 + $0x450] sm:$0xff]
    %v7796 = vld [vmem:[#allocation2 + $0x458] sm:$0xff]
    %v7797 = vld [vmem:[#allocation2 + $0x4f0] sm:$0xff]
    %v7798 = vld [vmem:[#allocation2 + $0x4f8] sm:$0xff]
    %v7799 = vld [vmem:[#allocation2 + $0x590] sm:$0xff]
    %v7800 = vld [vmem:[#allocation2 + $0x598] sm:$0xff]
    %v7801 = vld [vmem:[#allocation2 + $0x630] sm:$0xff]
    %v7802 = vld [vmem:[#allocation2 + $0x638] sm:$0xff]
    %v7803 = vld [vmem:[#allocation2 + $0x6d0] sm:$0xff]
    %v7804 = vld [vmem:[#allocation2 + $0x6d8] sm:$0xff]
    %v7805 = vld [vmem:[#allocation2 + $0x770] sm:$0xff]
    %v7806 = vld [vmem:[#allocation2 + $0x778] sm:$0xff]
    %v7807 = vld [vmem:[#allocation2 + $0x810] sm:$0xff]
    %v7808 = vld [vmem:[#allocation2 + $0x818] sm:$0xff]
    %v7809 = vld [vmem:[#allocation2 + $0x8b0] sm:$0xff]
    %v7810 = vld [vmem:[#allocation2 + $0x8b8] sm:$0xff]
    %v7811 = vld [vmem:[#allocation2 + $0x950] sm:$0xff]
    %v7812 = vld [vmem:[#allocation2 + $0x958] sm:$0xff]
    %v7813 = vld [vmem:[#allocation2 + $0x9f0] sm:$0xff]
    %v7814 = vld [vmem:[#allocation2 + $0x9f8] sm:$0xff]
    %v7815 = vpack.c.bf16 %v7781, %v7781
    %v7816 = vpack.c.bf16 %v7782, %v7782
    %s7817 = scalar_lea.vmem [#allocation4], 19
    %v7818 = vld [vmem:[%s7817] ss:$8 sm:$0x3]
    %v7820 = vlaneseq
    %v7821 = vshrl.u32 %v7820, 7
    %v7822 = vsub.s32 0, %v7821
    %v7823 = vrot.slane %v7818, %v7822
    %v7824 = vlaneseq
    %v7825 = vshrl.u32 %v7824, 7
    %v7826 = vsub.s32 1, %v7825
    %v7827 = vrot.slane %v7818, %v7826
    %7830 = vmatprep.subr.bf16.mxu0 %v7784
    %7831 = vmatpush1.bf16.msra.mxu0 %v7783
    %7832 = vmatprep.subr.bf16.mxu0 %v7786
    %7833 = vmatpush1.bf16.msra.mxu0 %v7785
    %7834 = vmatprep.subr.bf16.mxu0 %v7788
    %7835 = vmatpush1.bf16.msra.mxu0 %v7787
    %7836 = vmatprep.subr.bf16.mxu0 %v7790
    %7837 = vmatpush1.bf16.msra.mxu0 %v7789
    %7838 = vmatprep.subr.bf16.mxu0 %v7792
    %7839 = vmatpush1.bf16.msra.mxu0 %v7791
    %7840 = vmatprep.subr.bf16.mxu0 %v7794
    %7841 = vmatpush1.bf16.msra.mxu0 %v7793
    %7842 = vmatprep.subr.bf16.mxu0 %v7796
    %7843 = vmatpush1.bf16.msra.mxu0 %v7795
    %7844 = vmatprep.subr.bf16.mxu0 %v7798
    %7845 = vmatpush1.bf16.msra.mxu0 %v7797
    %7846 = vmatprep.subr.bf16.mxu0 %v7800
    %7847 = vmatpush1.bf16.msra.mxu0 %v7799
    %7848 = vmatprep.subr.bf16.mxu0 %v7802
    %7849 = vmatpush1.bf16.msra.mxu0 %v7801
    %7850 = vmatprep.subr.bf16.mxu0 %v7804
    %7851 = vmatpush1.bf16.msra.mxu0 %v7803
    %7852 = vmatprep.subr.bf16.mxu0 %v7806
    %7853 = vmatpush1.bf16.msra.mxu0 %v7805
    %7854 = vmatprep.subr.bf16.mxu0 %v7808
    %7855 = vmatpush1.bf16.msra.mxu0 %v7807
    %7856 = vmatprep.subr.bf16.mxu0 %v7810
    %7857 = vmatpush1.bf16.msra.mxu0 %v7809
    %7858 = vmatprep.subr.bf16.mxu0 %v7812
    %7859 = vmatpush1.bf16.msra.mxu0 %v7811
    %7860 = vmatprep.subr.bf16.mxu0 %v7814
    %7861 = vmatpush1.bf16.msra.mxu0 %v7813
    %7862 = vmatprep.mubr.bf16.mxu0 %v7816
    %7863 = vmatmul.mubr.bf16.gmra.mrb[0].mxu0 %v7815
    %v7864 = vpop.f32.mrb[0].mxu0
    %v7865 = vadd.f32 %v7823, %v7864
    %v7866 = vpop.f32.mrb[0].mxu0
    %v7867 = vadd.f32 %v7827, %v7866
    %v7868 = vpop.f32.mrb[0].mxu0
    %v7869 = vpop.f32.mrb[0].mxu0
    %7870 = vdwg.mxu0
    %vm7871 = vcmp.gt.f32.partialorder %v7865, 0.0
    %vm7872 = vcmp.gt.f32.partialorder %v7867, 0.0
    %v7873 = vmul.f32 %v7865, 1.442695
    %v7874 = vpow.pop %v7873
    %v7875 = vmul.f32 %v7867, 1.442695
    %v7876 = vpow.pop %v7875
    %v7877 = vsub.f32 %v7874, 1.0
    %v7878 = vsub.f32 %v7876, 1.0
    %v7879 = vsel %vm7871, %v7865, %v7877
    %v7880 = vsel %vm7872, %v7867, %v7878
    %v7881 = vrot.slane %v7879, 4
    %v7882 = vadd.f32 %v7879, %v7881
    %v7883 = vrot.slane %v7882, 2
    %v7884 = vadd.f32 %v7882, %v7883
    %v7885 = vrot.slane %v7884, 1
    %v7886 = vadd.f32 %v7884, %v7885
    %v7887 = vrot.slane %v7880, 4
    %v7888 = vadd.f32 %v7880, %v7887
    %v7889 = vrot.slane %v7888, 2
    %v7890 = vadd.f32 %v7888, %v7889
    %v7891 = vrot.slane %v7890, 1
    %v7892 = vadd.f32 %v7890, %v7891
    %v7893 = vmul.f32 %v7886, %v665
    %v7894 = vmul.f32 %v7892, %v665
    %v7895 = vadd.f32 %v7766, %v7893
    %v7896 = vadd.f32 %v7767, %v7894
    %v7897 = vadd.f32 %v3526, %v7653
    %v7898 = vadd.f32 %v3527, %v7654
    %v7899 = vadd.f32 %v7897, %v7895
    %v7900 = vadd.f32 %v7898, %v7896
    %v7901 = vadd.f32 %v7899, %v82
    %v7902 = vadd.f32 %v7900, %v83
    %7903 = vst [vmem:[#allocation9] sm:$0xff] %v7901
    %7904 = vst [vmem:[#allocation9 + $0x8] sm:$0xff] %v7902
    // Predicated region
    $region22: #{mome_forward.1} parent=1 // pred_check
      _
    $region23: #{mome_forward.1} parent=1 // pred_check_branch
      %7906 = sbr.rel (0) target = $region25
    $region24: #{mome_forward.1} parent=1 // pred_region
      %s7908 = ssub.s32 256, 256
      %7909 = vsyncadd [#allocation6], %s7908
      %s7911 = sshll.u32 [#allocation9], 4
      %s7912 = int_to_ptr.vmem [resolvable:$true] %s7911
      %7914 = dma.vmem_to_hbm [thread:$0]  %s7912, 256, %s4, [#allocation6]
    $region25: #{mome_forward.1} parent=1 // pred_fallthru
      _
    // Predicated region
    $region26: #{mome_forward.1} parent=1 // pred_check
      _
    $region27: #{mome_forward.1} parent=1 // pred_check_branch
      %7916 = sbr.rel (0) target = $region29
    $region28: #{mome_forward.1} parent=1 // pred_region
      _
    $region29: #{mome_forward.1} parent=1 // pred_fallthru
      _
    // Predicated region
    $region30: #{mome_forward.1} parent=1 // pred_check
      _
    $region31: #{mome_forward.1} parent=1 // pred_check_branch
      %7918 = sbr.rel (0) target = $region33
    $region32: #{mome_forward.1} parent=1 // pred_region
      %7919 = dma.done [#allocation6], 256
    $region33: #{mome_forward.1} parent=1 // pred_fallthru
      _
    // Predicated region
    $region34: #{mome_forward.1} parent=1 // pred_check
      _
    $region35: #{mome_forward.1} parent=1 // pred_check_branch
      %7921 = sbr.rel (0) target = $region37
    $region36: #{mome_forward.1} parent=1 // pred_region
      _
    $region37: #{mome_forward.1} parent=1 // pred_fallthru
      _
    %7922 = vsyncpa [#allocation5], 1
    %7923 = vsyncpa [#allocation8], 1
    %7924 = vsyncpa [#allocation6], 1
  %7925 = vsyncmov [#allocation3]
  %s7926 = vpop.sfrf %7925
  %p7927 = scmp.eq.s32.totalorder %s7926, 0
  %p7928 = pneg %p7927
  %7930 = shalt.err (%p7928)

</llo_original>
